<compile_context>
chip_gen: v6e
topology: v6e:2x2x1
jax: 0.10.0
libtpu: 0.0.40
codegen_flags: <defaults>
</compile_context>

<pallas_src>
import jax
import jax.numpy as jnp
from jax.experimental import pallas as pl
from jax.experimental.pallas import tpu as pltpu

INPUT_SIZE = 28   # n_inputs
N_STEPS = 28      # n_steps
HIDDEN = 64
OUT_DIM = 10

HP = 128          # hidden padded so each gate block is one 128-lane group
OP = 128          # output padded to a lane-dense store width


def lstm_kernel(x_ref, wih_ref, whh_ref, b_ref, wout_ref, bout_ref,
                out_ref, xw_ref):
    """Single-shot LSTM forward (whole sequence in one invocation).

    x_ref:    (T*B, I)    time-major flattened input
    wih_ref:  (I, 4*HP)   input->gates weights, gate blocks 128-lane aligned,
                          i/f/o gate columns pre-scaled by 0.5 (tanh-sigmoid)
    whh_ref:  (HP, 4*HP)  hidden->gates weights (rows >= H zero, same scaling)
    b_ref:    (1, 4*HP)   b_ih + b_hh, gate-aligned, i/f/o pre-scaled by 0.5,
                          zero in padded lanes
    wout_ref: (HP, OP)    final Linear weight (padded)
    bout_ref: (1, OP)     final Linear bias (padded)
    out_ref:  (B, OP)     logits for the last timestep (lanes >= OUT junk-free)
    xw_ref:   (T*B, 4*HP) VMEM scratch: hoisted input projection
    """
    B = out_ref.shape[0]
    Hp = whh_ref.shape[0]
    T = xw_ref.shape[0] // B

    # Hoisted input projection: one big MXU matmul for all timesteps at once
    # (only h @ W_hh remains on the sequential critical path).
    xw_ref[...] = (jnp.dot(x_ref[...], wih_ref[...],
                           preferred_element_type=jnp.float32)
                   + b_ref[...])

    # h / c live in vregs across the (statically unrolled) recurrence.
    h = jnp.zeros((B, Hp), jnp.float32)
    c = jnp.zeros((B, Hp), jnp.float32)

    for t in range(T):  # T = 28, static unroll (no spills at these shapes)
        gates = (xw_ref[t * B:(t + 1) * B, :]
                 + jnp.dot(h, whh_ref[...],
                           preferred_element_type=jnp.float32))  # (B, 4*Hp)
        # PyTorch gate order: i, f, g, o — each slice is 128-lane aligned.
        # i/f/o columns were pre-scaled by 0.5, so
        #   sigmoid(x) = 0.5 + 0.5 * tanh(0.5 * x) = 0.5 + 0.5 * tanh(gates)
        # -> nonlinearity stays entirely on the EUP tanh slot.
        i_g = 0.5 + 0.5 * jnp.tanh(gates[:, 0 * Hp:1 * Hp])
        f_g = 0.5 + 0.5 * jnp.tanh(gates[:, 1 * Hp:2 * Hp])
        g_g = jnp.tanh(gates[:, 2 * Hp:3 * Hp])
        o_g = 0.5 + 0.5 * jnp.tanh(gates[:, 3 * Hp:4 * Hp])
        c = f_g * c + i_g * g_g
        h = o_g * jnp.tanh(c)
        # Padded lanes: gates==0 -> i=f=o=0.5, g=0 -> c,h stay exactly 0.

    # Final Linear(64 -> 10), padded to a lane-dense (B, 128) store.
    out_ref[...] = (jnp.dot(h, wout_ref[...],
                            preferred_element_type=jnp.float32)
                    + bout_ref[...]).astype(out_ref.dtype)


def prepare_params(w_ih, w_hh, b_ih, b_hh, w_out, b_out):
    """One-time weight re-layout (hoisted out of the per-call forward path).

    Gate k of PyTorch's packed (4H, ...) weights is placed in lanes
    [k*HP, k*HP + H) so every gate slice in the kernel is whole-vreg aligned.
    The sigmoid gates (i, f, o) are pre-scaled by 0.5 so the kernel can use the
    tanh form of sigmoid with no extra per-step multiply.
    """
    I = w_ih.shape[1]
    H = w_hh.shape[1]
    O = w_out.shape[0]
    G = 4 * HP

    bias = b_ih + b_hh
    wih_p = jnp.zeros((I, G), jnp.float32)
    whh_p = jnp.zeros((HP, G), jnp.float32)
    bias_p = jnp.zeros((1, G), jnp.float32)
    gate_scale = (0.5, 0.5, 1.0, 0.5)   # i, f, g, o
    for k in range(4):
        s = gate_scale[k]
        wih_p = wih_p.at[:, k * HP:k * HP + H].set(
            s * w_ih[k * H:(k + 1) * H, :].T)
        whh_p = whh_p.at[:H, k * HP:k * HP + H].set(
            s * w_hh[k * H:(k + 1) * H, :].T)
        bias_p = bias_p.at[0, k * HP:k * HP + H].set(
            s * bias[k * H:(k + 1) * H])

    wout_p = jnp.zeros((HP, OP), jnp.float32).at[:H, :O].set(w_out.T)
    bout_p = jnp.zeros((1, OP), jnp.float32).at[0, :O].set(b_out)
    return wih_p, whh_p, bias_p, wout_p, bout_p


def rnn_forward(x, padded_params, out_dim=OUT_DIM):
    """x: (B, T, I) float32, batch_first like the PyTorch module.

    padded_params: output of prepare_params (precomputed once for static
    weights — the per-call path is just a transpose/reshape + one pallas_call).
    """
    wih_p, whh_p, bias_p, wout_p, bout_p = padded_params
    B, T, I = x.shape
    assert B % 8 == 0, "batch must be a multiple of 8 (sublane alignment)"
    G = wih_p.shape[1]

    # Time-major, flattened so the input projection is one matmul.
    x_flat = jnp.transpose(x, (1, 0, 2)).reshape(T * B, I)

    vmem = pltpu.MemorySpace.VMEM
    out_p = pl.pallas_call(
        lstm_kernel,
        out_shape=jax.ShapeDtypeStruct((B, OP), jnp.float32),
        # No grid: whole-array VMEM residency, no double-buffer / pipeline
        # bookkeeping for a single-step kernel.
        in_specs=[
            pl.BlockSpec(memory_space=vmem),   # x_flat
            pl.BlockSpec(memory_space=vmem),   # wih_p
            pl.BlockSpec(memory_space=vmem),   # whh_p
            pl.BlockSpec(memory_space=vmem),   # bias_p
            pl.BlockSpec(memory_space=vmem),   # wout_p
            pl.BlockSpec(memory_space=vmem),   # bout_p
        ],
        out_specs=pl.BlockSpec(memory_space=vmem),
        scratch_shapes=[
            pltpu.VMEM((T * B, G), jnp.float32),  # hoisted input projection
        ],
    )(x_flat, wih_p, whh_p, bias_p, wout_p, bout_p)

    return out_p[:, :out_dim]


def rnn_reference(x, w_ih, w_hh, b_ih, b_hh, w_out, b_out):
    """Pure-JAX reference matching torch.nn.LSTM + Linear."""
    B, T, I = x.shape
    H = w_hh.shape[1]
    h = jnp.zeros((B, H), jnp.float32)
    c = jnp.zeros((B, H), jnp.float32)

    def step(carry, x_t):
        h, c = carry
        gates = x_t @ w_ih.T + h @ w_hh.T + b_ih + b_hh
        i_g = jax.nn.sigmoid(gates[:, 0 * H:1 * H])
        f_g = jax.nn.sigmoid(gates[:, 1 * H:2 * H])
        g_g = jnp.tanh(gates[:, 2 * H:3 * H])
        o_g = jax.nn.sigmoid(gates[:, 3 * H:4 * H])
        c = f_g * c + i_g * g_g
        h = o_g * jnp.tanh(c)
        return (h, c), None

    (h, c), _ = jax.lax.scan(step, (h, c), jnp.transpose(x, (1, 0, 2)))
    return h @ w_out.T + b_out


if __name__ == "__main__":
    key = jax.random.PRNGKey(0)
    B, T, I, H, O = 8, N_STEPS, INPUT_SIZE, HIDDEN, OUT_DIM

    ks = jax.random.split(key, 8)
    bound = 1.0 / jnp.sqrt(H)
    x = jax.random.normal(ks[0], (B, T, I), jnp.float32)
    w_ih = jax.random.uniform(ks[1], (4 * H, I), jnp.float32, -bound, bound)
    w_hh = jax.random.uniform(ks[2], (4 * H, H), jnp.float32, -bound, bound)
    b_ih = jax.random.uniform(ks[3], (4 * H,), jnp.float32, -bound, bound)
    b_hh = jax.random.uniform(ks[4], (4 * H,), jnp.float32, -bound, bound)
    w_out = jax.random.uniform(ks[5], (O, H), jnp.float32, -bound, bound)
    b_out = jax.random.uniform(ks[6], (O,), jnp.float32, -bound, bound)

    # Static-weight re-layout: done once, outside the per-call forward path.
    padded_params = prepare_params(w_ih, w_hh, b_ih, b_hh, w_out, b_out)
    padded_params = jax.block_until_ready(padded_params)

    out = rnn_forward(x, padded_params)
    out = jax.block_until_ready(out)

    ref = rnn_reference(x, w_ih, w_hh, b_ih, b_hh, w_out, b_out)
    assert out.shape == (B, O)
    assert jnp.allclose(out, ref, atol=1e-4, rtol=1e-4), "mismatch vs reference"

    print("KERNEL_OK")
</pallas_src>

<mosaic_0001>
module attributes {stable_mosaic.version = 11 : i64} {
  func.func @lstm_kernel(%arg0: memref<224x28xf32, #tpu.memory_space<vmem>>, %arg1: memref<28x512xf32, #tpu.memory_space<vmem>>, %arg2: memref<128x512xf32, #tpu.memory_space<vmem>>, %arg3: memref<1x512xf32, #tpu.memory_space<vmem>>, %arg4: memref<128x128xf32, #tpu.memory_space<vmem>>, %arg5: memref<1x128xf32, #tpu.memory_space<vmem>>, %arg6: memref<8x128xf32, #tpu.memory_space<vmem>>, %arg7: memref<224x512xf32, #tpu.memory_space<vmem>>) attributes {dimension_semantics = [], scalar_prefetch = 0 : i64, scratch_operands = 1 : i64, tpu.core_type = #tpu.core_type<tc>} {
    %c0 = arith.constant 0 : index
    %c0_0 = arith.constant 0 : index
    %0 = vector.load %arg0[%c0, %c0_0] : memref<224x28xf32, #tpu.memory_space<vmem>>, vector<224x28xf32>
    %c0_1 = arith.constant 0 : index
    %c0_2 = arith.constant 0 : index
    %1 = vector.load %arg1[%c0_1, %c0_2] : memref<28x512xf32, #tpu.memory_space<vmem>>, vector<28x512xf32>
    %cst = arith.constant dense<0.000000e+00> : vector<224x512xf32>
    %2 = tpu.matmul %0, %1, %cst {dimension_numbers = #tpu.dot_dimension_numbers<[1], [0], [0], [1], [0, 0, 1, 1], [], []>} : vector<224x28xf32>, vector<28x512xf32>, vector<224x512xf32> -> vector<224x512xf32>
    %c0_3 = arith.constant 0 : index
    %c0_4 = arith.constant 0 : index
    %3 = vector.load %arg3[%c0_3, %c0_4] : memref<1x512xf32, #tpu.memory_space<vmem>>, vector<1x512xf32>
    %4 = vector.broadcast %3 : vector<1x512xf32> to vector<224x512xf32>
    %5 = arith.addf %2, %4 : vector<224x512xf32>
    %c0_5 = arith.constant 0 : index
    %c0_6 = arith.constant 0 : index
    %6 = vector.load %arg7[%c0_5, %c0_6] : memref<224x512xf32, #tpu.memory_space<vmem>>, vector<224x512xf32>
    tpu.vector_store %arg7[%c0_5, %c0_6], %5 {strides = array<i32>} : memref<224x512xf32, #tpu.memory_space<vmem>>, vector<224x512xf32>,
    %cst_7 = arith.constant 0.000000e+00 : f32
    %7 = vector.broadcast %cst_7 : f32 to vector<8x128xf32>
    %cst_8 = arith.constant 0.000000e+00 : f32
    %8 = vector.broadcast %cst_8 : f32 to vector<8x128xf32>
    %c0_9 = arith.constant 0 : index
    %c0_10 = arith.constant 0 : index
    %9 = vector.load %arg7[%c0_9, %c0_10] : memref<224x512xf32, #tpu.memory_space<vmem>>, vector<8x512xf32>
    %c0_11 = arith.constant 0 : index
    %c0_12 = arith.constant 0 : index
    %10 = vector.load %arg2[%c0_11, %c0_12] : memref<128x512xf32, #tpu.memory_space<vmem>>, vector<128x512xf32>
    %cst_13 = arith.constant dense<0.000000e+00> : vector<8x512xf32>
    %11 = tpu.matmul %7, %10, %cst_13 {dimension_numbers = #tpu.dot_dimension_numbers<[1], [0], [0], [1], [0, 0, 1, 1], [], []>} : vector<8x128xf32>, vector<128x512xf32>, vector<8x512xf32> -> vector<8x512xf32>
    %12 = arith.addf %9, %11 : vector<8x512xf32>
    %13 = vector.extract_strided_slice %12 {offsets = [0, 0], sizes = [8, 128], strides = [1, 1]} : vector<8x512xf32> to vector<8x128xf32>
    %14 = math.tanh %13 : vector<8x128xf32>
    %cst_14 = arith.constant 5.000000e-01 : f32
    %15 = vector.broadcast %cst_14 : f32 to vector<8x128xf32>
    %16 = arith.mulf %15, %14 : vector<8x128xf32>
    %cst_15 = arith.constant 5.000000e-01 : f32
    %17 = vector.broadcast %cst_15 : f32 to vector<8x128xf32>
    %18 = arith.addf %17, %16 : vector<8x128xf32>
    %19 = vector.extract_strided_slice %12 {offsets = [0, 128], sizes = [8, 128], strides = [1, 1]} : vector<8x512xf32> to vector<8x128xf32>
    %20 = math.tanh %19 : vector<8x128xf32>
    %cst_16 = arith.constant 5.000000e-01 : f32
    %21 = vector.broadcast %cst_16 : f32 to vector<8x128xf32>
    %22 = arith.mulf %21, %20 : vector<8x128xf32>
    %cst_17 = arith.constant 5.000000e-01 : f32
    %23 = vector.broadcast %cst_17 : f32 to vector<8x128xf32>
    %24 = arith.addf %23, %22 : vector<8x128xf32>
    %25 = vector.extract_strided_slice %12 {offsets = [0, 256], sizes = [8, 128], strides = [1, 1]} : vector<8x512xf32> to vector<8x128xf32>
    %26 = math.tanh %25 : vector<8x128xf32>
    %27 = vector.extract_strided_slice %12 {offsets = [0, 384], sizes = [8, 128], strides = [1, 1]} : vector<8x512xf32> to vector<8x128xf32>
    %28 = math.tanh %27 : vector<8x128xf32>
    %cst_18 = arith.constant 5.000000e-01 : f32
    %29 = vector.broadcast %cst_18 : f32 to vector<8x128xf32>
    %30 = arith.mulf %29, %28 : vector<8x128xf32>
    %cst_19 = arith.constant 5.000000e-01 : f32
    %31 = vector.broadcast %cst_19 : f32 to vector<8x128xf32>
    %32 = arith.addf %31, %30 : vector<8x128xf32>
    %33 = arith.mulf %24, %8 : vector<8x128xf32>
    %34 = arith.mulf %18, %26 : vector<8x128xf32>
    %35 = arith.addf %33, %34 : vector<8x128xf32>
    %36 = math.tanh %35 : vector<8x128xf32>
    %37 = arith.mulf %32, %36 : vector<8x128xf32>
    %c8 = arith.constant 8 : index
    %c0_20 = arith.constant 0 : index
    %38 = vector.load %arg7[%c8, %c0_20] : memref<224x512xf32, #tpu.memory_space<vmem>>, vector<8x512xf32>
    %c0_21 = arith.constant 0 : index
    %c0_22 = arith.constant 0 : index
    %39 = vector.load %arg2[%c0_21, %c0_22] : memref<128x512xf32, #tpu.memory_space<vmem>>, vector<128x512xf32>
    %cst_23 = arith.constant dense<0.000000e+00> : vector<8x512xf32>
    %40 = tpu.matmul %37, %39, %cst_23 {dimension_numbers = #tpu.dot_dimension_numbers<[1], [0], [0], [1], [0, 0, 1, 1], [], []>} : vector<8x128xf32>, vector<128x512xf32>, vector<8x512xf32> -> vector<8x512xf32>
    %41 = arith.addf %38, %40 : vector<8x512xf32>
    %42 = vector.extract_strided_slice %41 {offsets = [0, 0], sizes = [8, 128], strides = [1, 1]} : vector<8x512xf32> to vector<8x128xf32>
    %43 = math.tanh %42 : vector<8x128xf32>
    %cst_24 = arith.constant 5.000000e-01 : f32
    %44 = vector.broadcast %cst_24 : f32 to vector<8x128xf32>
    %45 = arith.mulf %44, %43 : vector<8x128xf32>
    %cst_25 = arith.constant 5.000000e-01 : f32
    %46 = vector.broadcast %cst_25 : f32 to vector<8x128xf32>
    %47 = arith.addf %46, %45 : vector<8x128xf32>
    %48 = vector.extract_strided_slice %41 {offsets = [0, 128], sizes = [8, 128], strides = [1, 1]} : vector<8x512xf32> to vector<8x128xf32>
    %49 = math.tanh %48 : vector<8x128xf32>
    %cst_26 = arith.constant 5.000000e-01 : f32
    %50 = vector.broadcast %cst_26 : f32 to vector<8x128xf32>
    %51 = arith.mulf %50, %49 : vector<8x128xf32>
    %cst_27 = arith.constant 5.000000e-01 : f32
    %52 = vector.broadcast %cst_27 : f32 to vector<8x128xf32>
    %53 = arith.addf %52, %51 : vector<8x128xf32>
    %54 = vector.extract_strided_slice %41 {offsets = [0, 256], sizes = [8, 128], strides = [1, 1]} : vector<8x512xf32> to vector<8x128xf32>
    %55 = math.tanh %54 : vector<8x128xf32>
    %56 = vector.extract_strided_slice %41 {offsets = [0, 384], sizes = [8, 128], strides = [1, 1]} : vector<8x512xf32> to vector<8x128xf32>
    %57 = math.tanh %56 : vector<8x128xf32>
    %cst_28 = arith.constant 5.000000e-01 : f32
    %58 = vector.broadcast %cst_28 : f32 to vector<8x128xf32>
    %59 = arith.mulf %58, %57 : vector<8x128xf32>
    %cst_29 = arith.constant 5.000000e-01 : f32
    %60 = vector.broadcast %cst_29 : f32 to vector<8x128xf32>
    %61 = arith.addf %60, %59 : vector<8x128xf32>
    %62 = arith.mulf %53, %35 : vector<8x128xf32>
    %63 = arith.mulf %47, %55 : vector<8x128xf32>
    %64 = arith.addf %62, %63 : vector<8x128xf32>
    %65 = math.tanh %64 : vector<8x128xf32>
    %66 = arith.mulf %61, %65 : vector<8x128xf32>
    %c16 = arith.constant 16 : index
    %c0_30 = arith.constant 0 : index
    %67 = vector.load %arg7[%c16, %c0_30] : memref<224x512xf32, #tpu.memory_space<vmem>>, vector<8x512xf32>
    %c0_31 = arith.constant 0 : index
    %c0_32 = arith.constant 0 : index
    %68 = vector.load %arg2[%c0_31, %c0_32] : memref<128x512xf32, #tpu.memory_space<vmem>>, vector<128x512xf32>
    %cst_33 = arith.constant dense<0.000000e+00> : vector<8x512xf32>
    %69 = tpu.matmul %66, %68, %cst_33 {dimension_numbers = #tpu.dot_dimension_numbers<[1], [0], [0], [1], [0, 0, 1, 1], [], []>} : vector<8x128xf32>, vector<128x512xf32>, vector<8x512xf32> -> vector<8x512xf32>
    %70 = arith.addf %67, %69 : vector<8x512xf32>
    %71 = vector.extract_strided_slice %70 {offsets = [0, 0], sizes = [8, 128], strides = [1, 1]} : vector<8x512xf32> to vector<8x128xf32>
    %72 = math.tanh %71 : vector<8x128xf32>
    %cst_34 = arith.constant 5.000000e-01 : f32
    %73 = vector.broadcast %cst_34 : f32 to vector<8x128xf32>
    %74 = arith.mulf %73, %72 : vector<8x128xf32>
    %cst_35 = arith.constant 5.000000e-01 : f32
    %75 = vector.broadcast %cst_35 : f32 to vector<8x128xf32>
    %76 = arith.addf %75, %74 : vector<8x128xf32>
    %77 = vector.extract_strided_slice %70 {offsets = [0, 128], sizes = [8, 128], strides = [1, 1]} : vector<8x512xf32> to vector<8x128xf32>
    %78 = math.tanh %77 : vector<8x128xf32>
    %cst_36 = arith.constant 5.000000e-01 : f32
    %79 = vector.broadcast %cst_36 : f32 to vector<8x128xf32>
    %80 = arith.mulf %79, %78 : vector<8x128xf32>
    %cst_37 = arith.constant 5.000000e-01 : f32
    %81 = vector.broadcast %cst_37 : f32 to vector<8x128xf32>
    %82 = arith.addf %81, %80 : vector<8x128xf32>
    %83 = vector.extract_strided_slice %70 {offsets = [0, 256], sizes = [8, 128], strides = [1, 1]} : vector<8x512xf32> to vector<8x128xf32>
    %84 = math.tanh %83 : vector<8x128xf32>
    %85 = vector.extract_strided_slice %70 {offsets = [0, 384], sizes = [8, 128], strides = [1, 1]} : vector<8x512xf32> to vector<8x128xf32>
    %86 = math.tanh %85 : vector<8x128xf32>
    %cst_38 = arith.constant 5.000000e-01 : f32
    %87 = vector.broadcast %cst_38 : f32 to vector<8x128xf32>
    %88 = arith.mulf %87, %86 : vector<8x128xf32>
    %cst_39 = arith.constant 5.000000e-01 : f32
    %89 = vector.broadcast %cst_39 : f32 to vector<8x128xf32>
    %90 = arith.addf %89, %88 : vector<8x128xf32>
    %91 = arith.mulf %82, %64 : vector<8x128xf32>
    %92 = arith.mulf %76, %84 : vector<8x128xf32>
    %93 = arith.addf %91, %92 : vector<8x128xf32>
    %94 = math.tanh %93 : vector<8x128xf32>
    %95 = arith.mulf %90, %94 : vector<8x128xf32>
    %c24 = arith.constant 24 : index
    %c0_40 = arith.constant 0 : index
    %96 = vector.load %arg7[%c24, %c0_40] : memref<224x512xf32, #tpu.memory_space<vmem>>, vector<8x512xf32>
    %c0_41 = arith.constant 0 : index
    %c0_42 = arith.constant 0 : index
    %97 = vector.load %arg2[%c0_41, %c0_42] : memref<128x512xf32, #tpu.memory_space<vmem>>, vector<128x512xf32>
    %cst_43 = arith.constant dense<0.000000e+00> : vector<8x512xf32>
    %98 = tpu.matmul %95, %97, %cst_43 {dimension_numbers = #tpu.dot_dimension_numbers<[1], [0], [0], [1], [0, 0, 1, 1], [], []>} : vector<8x128xf32>, vector<128x512xf32>, vector<8x512xf32> -> vector<8x512xf32>
    %99 = arith.addf %96, %98 : vector<8x512xf32>
    %100 = vector.extract_strided_slice %99 {offsets = [0, 0], sizes = [8, 128], strides = [1, 1]} : vector<8x512xf32> to vector<8x128xf32>
    %101 = math.tanh %100 : vector<8x128xf32>
    %cst_44 = arith.constant 5.000000e-01 : f32
    %102 = vector.broadcast %cst_44 : f32 to vector<8x128xf32>
    %103 = arith.mulf %102, %101 : vector<8x128xf32>
    %cst_45 = arith.constant 5.000000e-01 : f32
    %104 = vector.broadcast %cst_45 : f32 to vector<8x128xf32>
    %105 = arith.addf %104, %103 : vector<8x128xf32>
    %106 = vector.extract_strided_slice %99 {offsets = [0, 128], sizes = [8, 128], strides = [1, 1]} : vector<8x512xf32> to vector<8x128xf32>
    %107 = math.tanh %106 : vector<8x128xf32>
    %cst_46 = arith.constant 5.000000e-01 : f32
    %108 = vector.broadcast %cst_46 : f32 to vector<8x128xf32>
    %109 = arith.mulf %108, %107 : vector<8x128xf32>
    %cst_47 = arith.constant 5.000000e-01 : f32
    %110 = vector.broadcast %cst_47 : f32 to vector<8x128xf32>
    %111 = arith.addf %110, %109 : vector<8x128xf32>
    %112 = vector.extract_strided_slice %99 {offsets = [0, 256], sizes = [8, 128], strides = [1, 1]} : vector<8x512xf32> to vector<8x128xf32>
    %113 = math.tanh %112 : vector<8x128xf32>
    %114 = vector.extract_strided_slice %99 {offsets = [0, 384], sizes = [8, 128], strides = [1, 1]} : vector<8x512xf32> to vector<8x128xf32>
    %115 = math.tanh %114 : vector<8x128xf32>
    %cst_48 = arith.constant 5.000000e-01 : f32
    %116 = vector.broadcast %cst_48 : f32 to vector<8x128xf32>
    %117 = arith.mulf %116, %115 : vector<8x128xf32>
    %cst_49 = arith.constant 5.000000e-01 : f32
    %118 = vector.broadcast %cst_49 : f32 to vector<8x128xf32>
    %119 = arith.addf %118, %117 : vector<8x128xf32>
    %120 = arith.mulf %111, %93 : vector<8x128xf32>
    %121 = arith.mulf %105, %113 : vector<8x128xf32>
    %122 = arith.addf %120, %121 : vector<8x128xf32>
    %123 = math.tanh %122 : vector<8x128xf32>
    %124 = arith.mulf %119, %123 : vector<8x128xf32>
    %c32 = arith.constant 32 : index
    %c0_50 = arith.constant 0 : index
    %125 = vector.load %arg7[%c32, %c0_50] : memref<224x512xf32, #tpu.memory_space<vmem>>, vector<8x512xf32>
    %c0_51 = arith.constant 0 : index
    %c0_52 = arith.constant 0 : index
    %126 = vector.load %arg2[%c0_51, %c0_52] : memref<128x512xf32, #tpu.memory_space<vmem>>, vector<128x512xf32>
    %cst_53 = arith.constant dense<0.000000e+00> : vector<8x512xf32>
    %127 = tpu.matmul %124, %126, %cst_53 {dimension_numbers = #tpu.dot_dimension_numbers<[1], [0], [0], [1], [0, 0, 1, 1], [], []>} : vector<8x128xf32>, vector<128x512xf32>, vector<8x512xf32> -> vector<8x512xf32>
    %128 = arith.addf %125, %127 : vector<8x512xf32>
    %129 = vector.extract_strided_slice %128 {offsets = [0, 0], sizes = [8, 128], strides = [1, 1]} : vector<8x512xf32> to vector<8x128xf32>
    %130 = math.tanh %129 : vector<8x128xf32>
    %cst_54 = arith.constant 5.000000e-01 : f32
    %131 = vector.broadcast %cst_54 : f32 to vector<8x128xf32>
    %132 = arith.mulf %131, %130 : vector<8x128xf32>
    %cst_55 = arith.constant 5.000000e-01 : f32
    %133 = vector.broadcast %cst_55 : f32 to vector<8x128xf32>
    %134 = arith.addf %133, %132 : vector<8x128xf32>
    %135 = vector.extract_strided_slice %128 {offsets = [0, 128], sizes = [8, 128], strides = [1, 1]} : vector<8x512xf32> to vector<8x128xf32>
    %136 = math.tanh %135 : vector<8x128xf32>
    %cst_56 = arith.constant 5.000000e-01 : f32
    %137 = vector.broadcast %cst_56 : f32 to vector<8x128xf32>
    %138 = arith.mulf %137, %136 : vector<8x128xf32>
    %cst_57 = arith.constant 5.000000e-01 : f32
    %139 = vector.broadcast %cst_57 : f32 to vector<8x128xf32>
    %140 = arith.addf %139, %138 : vector<8x128xf32>
    %141 = vector.extract_strided_slice %128 {offsets = [0, 256], sizes = [8, 128], strides = [1, 1]} : vector<8x512xf32> to vector<8x128xf32>
    %142 = math.tanh %141 : vector<8x128xf32>
    %143 = vector.extract_strided_slice %128 {offsets = [0, 384], sizes = [8, 128], strides = [1, 1]} : vector<8x512xf32> to vector<8x128xf32>
    %144 = math.tanh %143 : vector<8x128xf32>
    %cst_58 = arith.constant 5.000000e-01 : f32
    %145 = vector.broadcast %cst_58 : f32 to vector<8x128xf32>
    %146 = arith.mulf %145, %144 : vector<8x128xf32>
    %cst_59 = arith.constant 5.000000e-01 : f32
    %147 = vector.broadcast %cst_59 : f32 to vector<8x128xf32>
    %148 = arith.addf %147, %146 : vector<8x128xf32>
    %149 = arith.mulf %140, %122 : vector<8x128xf32>
    %150 = arith.mulf %134, %142 : vector<8x128xf32>
    %151 = arith.addf %149, %150 : vector<8x128xf32>
    %152 = math.tanh %151 : vector<8x128xf32>
    %153 = arith.mulf %148, %152 : vector<8x128xf32>
    %c40 = arith.constant 40 : index
    %c0_60 = arith.constant 0 : index
    %154 = vector.load %arg7[%c40, %c0_60] : memref<224x512xf32, #tpu.memory_space<vmem>>, vector<8x512xf32>
    %c0_61 = arith.constant 0 : index
    %c0_62 = arith.constant 0 : index
    %155 = vector.load %arg2[%c0_61, %c0_62] : memref<128x512xf32, #tpu.memory_space<vmem>>, vector<128x512xf32>
    %cst_63 = arith.constant dense<0.000000e+00> : vector<8x512xf32>
    %156 = tpu.matmul %153, %155, %cst_63 {dimension_numbers = #tpu.dot_dimension_numbers<[1], [0], [0], [1], [0, 0, 1, 1], [], []>} : vector<8x128xf32>, vector<128x512xf32>, vector<8x512xf32> -> vector<8x512xf32>
    %157 = arith.addf %154, %156 : vector<8x512xf32>
    %158 = vector.extract_strided_slice %157 {offsets = [0, 0], sizes = [8, 128], strides = [1, 1]} : vector<8x512xf32> to vector<8x128xf32>
    %159 = math.tanh %158 : vector<8x128xf32>
    %cst_64 = arith.constant 5.000000e-01 : f32
    %160 = vector.broadcast %cst_64 : f32 to vector<8x128xf32>
    %161 = arith.mulf %160, %159 : vector<8x128xf32>
    %cst_65 = arith.constant 5.000000e-01 : f32
    %162 = vector.broadcast %cst_65 : f32 to vector<8x128xf32>
    %163 = arith.addf %162, %161 : vector<8x128xf32>
    %164 = vector.extract_strided_slice %157 {offsets = [0, 128], sizes = [8, 128], strides = [1, 1]} : vector<8x512xf32> to vector<8x128xf32>
    %165 = math.tanh %164 : vector<8x128xf32>
    %cst_66 = arith.constant 5.000000e-01 : f32
    %166 = vector.broadcast %cst_66 : f32 to vector<8x128xf32>
    %167 = arith.mulf %166, %165 : vector<8x128xf32>
    %cst_67 = arith.constant 5.000000e-01 : f32
    %168 = vector.broadcast %cst_67 : f32 to vector<8x128xf32>
    %169 = arith.addf %168, %167 : vector<8x128xf32>
    %170 = vector.extract_strided_slice %157 {offsets = [0, 256], sizes = [8, 128], strides = [1, 1]} : vector<8x512xf32> to vector<8x128xf32>
    %171 = math.tanh %170 : vector<8x128xf32>
    %172 = vector.extract_strided_slice %157 {offsets = [0, 384], sizes = [8, 128], strides = [1, 1]} : vector<8x512xf32> to vector<8x128xf32>
    %173 = math.tanh %172 : vector<8x128xf32>
    %cst_68 = arith.constant 5.000000e-01 : f32
    %174 = vector.broadcast %cst_68 : f32 to vector<8x128xf32>
    %175 = arith.mulf %174, %173 : vector<8x128xf32>
    %cst_69 = arith.constant 5.000000e-01 : f32
    %176 = vector.broadcast %cst_69 : f32 to vector<8x128xf32>
    %177 = arith.addf %176, %175 : vector<8x128xf32>
    %178 = arith.mulf %169, %151 : vector<8x128xf32>
    %179 = arith.mulf %163, %171 : vector<8x128xf32>
    %180 = arith.addf %178, %179 : vector<8x128xf32>
    %181 = math.tanh %180 : vector<8x128xf32>
    %182 = arith.mulf %177, %181 : vector<8x128xf32>
    %c48 = arith.constant 48 : index
    %c0_70 = arith.constant 0 : index
    %183 = vector.load %arg7[%c48, %c0_70] : memref<224x512xf32, #tpu.memory_space<vmem>>, vector<8x512xf32>
    %c0_71 = arith.constant 0 : index
    %c0_72 = arith.constant 0 : index
    %184 = vector.load %arg2[%c0_71, %c0_72] : memref<128x512xf32, #tpu.memory_space<vmem>>, vector<128x512xf32>
    %cst_73 = arith.constant dense<0.000000e+00> : vector<8x512xf32>
    %185 = tpu.matmul %182, %184, %cst_73 {dimension_numbers = #tpu.dot_dimension_numbers<[1], [0], [0], [1], [0, 0, 1, 1], [], []>} : vector<8x128xf32>, vector<128x512xf32>, vector<8x512xf32> -> vector<8x512xf32>
    %186 = arith.addf %183, %185 : vector<8x512xf32>
    %187 = vector.extract_strided_slice %186 {offsets = [0, 0], sizes = [8, 128], strides = [1, 1]} : vector<8x512xf32> to vector<8x128xf32>
    %188 = math.tanh %187 : vector<8x128xf32>
    %cst_74 = arith.constant 5.000000e-01 : f32
    %189 = vector.broadcast %cst_74 : f32 to vector<8x128xf32>
    %190 = arith.mulf %189, %188 : vector<8x128xf32>
    %cst_75 = arith.constant 5.000000e-01 : f32
    %191 = vector.broadcast %cst_75 : f32 to vector<8x128xf32>
    %192 = arith.addf %191, %190 : vector<8x128xf32>
    %193 = vector.extract_strided_slice %186 {offsets = [0, 128], sizes = [8, 128], strides = [1, 1]} : vector<8x512xf32> to vector<8x128xf32>
    %194 = math.tanh %193 : vector<8x128xf32>
    %cst_76 = arith.constant 5.000000e-01 : f32
    %195 = vector.broadcast %cst_76 : f32 to vector<8x128xf32>
    %196 = arith.mulf %195, %194 : vector<8x128xf32>
    %cst_77 = arith.constant 5.000000e-01 : f32
    %197 = vector.broadcast %cst_77 : f32 to vector<8x128xf32>
    %198 = arith.addf %197, %196 : vector<8x128xf32>
    %199 = vector.extract_strided_slice %186 {offsets = [0, 256], sizes = [8, 128], strides = [1, 1]} : vector<8x512xf32> to vector<8x128xf32>
    %200 = math.tanh %199 : vector<8x128xf32>
    %201 = vector.extract_strided_slice %186 {offsets = [0, 384], sizes = [8, 128], strides = [1, 1]} : vector<8x512xf32> to vector<8x128xf32>
    %202 = math.tanh %201 : vector<8x128xf32>
    %cst_78 = arith.constant 5.000000e-01 : f32
    %203 = vector.broadcast %cst_78 : f32 to vector<8x128xf32>
    %204 = arith.mulf %203, %202 : vector<8x128xf32>
    %cst_79 = arith.constant 5.000000e-01 : f32
    %205 = vector.broadcast %cst_79 : f32 to vector<8x128xf32>
    %206 = arith.addf %205, %204 : vector<8x128xf32>
    %207 = arith.mulf %198, %180 : vector<8x128xf32>
    %208 = arith.mulf %192, %200 : vector<8x128xf32>
    %209 = arith.addf %207, %208 : vector<8x128xf32>
    %210 = math.tanh %209 : vector<8x128xf32>
    %211 = arith.mulf %206, %210 : vector<8x128xf32>
    %c56 = arith.constant 56 : index
    %c0_80 = arith.constant 0 : index
    %212 = vector.load %arg7[%c56, %c0_80] : memref<224x512xf32, #tpu.memory_space<vmem>>, vector<8x512xf32>
    %c0_81 = arith.constant 0 : index
    %c0_82 = arith.constant 0 : index
    %213 = vector.load %arg2[%c0_81, %c0_82] : memref<128x512xf32, #tpu.memory_space<vmem>>, vector<128x512xf32>
    %cst_83 = arith.constant dense<0.000000e+00> : vector<8x512xf32>
    %214 = tpu.matmul %211, %213, %cst_83 {dimension_numbers = #tpu.dot_dimension_numbers<[1], [0], [0], [1], [0, 0, 1, 1], [], []>} : vector<8x128xf32>, vector<128x512xf32>, vector<8x512xf32> -> vector<8x512xf32>
    %215 = arith.addf %212, %214 : vector<8x512xf32>
    %216 = vector.extract_strided_slice %215 {offsets = [0, 0], sizes = [8, 128], strides = [1, 1]} : vector<8x512xf32> to vector<8x128xf32>
    %217 = math.tanh %216 : vector<8x128xf32>
    %cst_84 = arith.constant 5.000000e-01 : f32
    %218 = vector.broadcast %cst_84 : f32 to vector<8x128xf32>
    %219 = arith.mulf %218, %217 : vector<8x128xf32>
    %cst_85 = arith.constant 5.000000e-01 : f32
    %220 = vector.broadcast %cst_85 : f32 to vector<8x128xf32>
    %221 = arith.addf %220, %219 : vector<8x128xf32>
    %222 = vector.extract_strided_slice %215 {offsets = [0, 128], sizes = [8, 128], strides = [1, 1]} : vector<8x512xf32> to vector<8x128xf32>
    %223 = math.tanh %222 : vector<8x128xf32>
    %cst_86 = arith.constant 5.000000e-01 : f32
    %224 = vector.broadcast %cst_86 : f32 to vector<8x128xf32>
    %225 = arith.mulf %224, %223 : vector<8x128xf32>
    %cst_87 = arith.constant 5.000000e-01 : f32
    %226 = vector.broadcast %cst_87 : f32 to vector<8x128xf32>
    %227 = arith.addf %226, %225 : vector<8x128xf32>
    %228 = vector.extract_strided_slice %215 {offsets = [0, 256], sizes = [8, 128], strides = [1, 1]} : vector<8x512xf32> to vector<8x128xf32>
    %229 = math.tanh %228 : vector<8x128xf32>
    %230 = vector.extract_strided_slice %215 {offsets = [0, 384], sizes = [8, 128], strides = [1, 1]} : vector<8x512xf32> to vector<8x128xf32>
    %231 = math.tanh %230 : vector<8x128xf32>
    %cst_88 = arith.constant 5.000000e-01 : f32
    %232 = vector.broadcast %cst_88 : f32 to vector<8x128xf32>
    %233 = arith.mulf %232, %231 : vector<8x128xf32>
    %cst_89 = arith.constant 5.000000e-01 : f32
    %234 = vector.broadcast %cst_89 : f32 to vector<8x128xf32>
    %235 = arith.addf %234, %233 : vector<8x128xf32>
    %236 = arith.mulf %227, %209 : vector<8x128xf32>
    %237 = arith.mulf %221, %229 : vector<8x128xf32>
    %238 = arith.addf %236, %237 : vector<8x128xf32>
    %239 = math.tanh %238 : vector<8x128xf32>
    %240 = arith.mulf %235, %239 : vector<8x128xf32>
    %c64 = arith.constant 64 : index
    %c0_90 = arith.constant 0 : index
    %241 = vector.load %arg7[%c64, %c0_90] : memref<224x512xf32, #tpu.memory_space<vmem>>, vector<8x512xf32>
    %c0_91 = arith.constant 0 : index
    %c0_92 = arith.constant 0 : index
    %242 = vector.load %arg2[%c0_91, %c0_92] : memref<128x512xf32, #tpu.memory_space<vmem>>, vector<128x512xf32>
    %cst_93 = arith.constant dense<0.000000e+00> : vector<8x512xf32>
    %243 = tpu.matmul %240, %242, %cst_93 {dimension_numbers = #tpu.dot_dimension_numbers<[1], [0], [0], [1], [0, 0, 1, 1], [], []>} : vector<8x128xf32>, vector<128x512xf32>, vector<8x512xf32> -> vector<8x512xf32>
    %244 = arith.addf %241, %243 : vector<8x512xf32>
    %245 = vector.extract_strided_slice %244 {offsets = [0, 0], sizes = [8, 128], strides = [1, 1]} : vector<8x512xf32> to vector<8x128xf32>
    %246 = math.tanh %245 : vector<8x128xf32>
    %cst_94 = arith.constant 5.000000e-01 : f32
    %247 = vector.broadcast %cst_94 : f32 to vector<8x128xf32>
    %248 = arith.mulf %247, %246 : vector<8x128xf32>
    %cst_95 = arith.constant 5.000000e-01 : f32
    %249 = vector.broadcast %cst_95 : f32 to vector<8x128xf32>
    %250 = arith.addf %249, %248 : vector<8x128xf32>
    %251 = vector.extract_strided_slice %244 {offsets = [0, 128], sizes = [8, 128], strides = [1, 1]} : vector<8x512xf32> to vector<8x128xf32>
    %252 = math.tanh %251 : vector<8x128xf32>
    %cst_96 = arith.constant 5.000000e-01 : f32
    %253 = vector.broadcast %cst_96 : f32 to vector<8x128xf32>
    %254 = arith.mulf %253, %252 : vector<8x128xf32>
    %cst_97 = arith.constant 5.000000e-01 : f32
    %255 = vector.broadcast %cst_97 : f32 to vector<8x128xf32>
    %256 = arith.addf %255, %254 : vector<8x128xf32>
    %257 = vector.extract_strided_slice %244 {offsets = [0, 256], sizes = [8, 128], strides = [1, 1]} : vector<8x512xf32> to vector<8x128xf32>
    %258 = math.tanh %257 : vector<8x128xf32>
    %259 = vector.extract_strided_slice %244 {offsets = [0, 384], sizes = [8, 128], strides = [1, 1]} : vector<8x512xf32> to vector<8x128xf32>
    %260 = math.tanh %259 : vector<8x128xf32>
    %cst_98 = arith.constant 5.000000e-01 : f32
    %261 = vector.broadcast %cst_98 : f32 to vector<8x128xf32>
    %262 = arith.mulf %261, %260 : vector<8x128xf32>
    %cst_99 = arith.constant 5.000000e-01 : f32
    %263 = vector.broadcast %cst_99 : f32 to vector<8x128xf32>
    %264 = arith.addf %263, %262 : vector<8x128xf32>
    %265 = arith.mulf %256, %238 : vector<8x128xf32>
    %266 = arith.mulf %250, %258 : vector<8x128xf32>
    %267 = arith.addf %265, %266 : vector<8x128xf32>
    %268 = math.tanh %267 : vector<8x128xf32>
    %269 = arith.mulf %264, %268 : vector<8x128xf32>
    %c72 = arith.constant 72 : index
    %c0_100 = arith.constant 0 : index
    %270 = vector.load %arg7[%c72, %c0_100] : memref<224x512xf32, #tpu.memory_space<vmem>>, vector<8x512xf32>
    %c0_101 = arith.constant 0 : index
    %c0_102 = arith.constant 0 : index
    %271 = vector.load %arg2[%c0_101, %c0_102] : memref<128x512xf32, #tpu.memory_space<vmem>>, vector<128x512xf32>
    %cst_103 = arith.constant dense<0.000000e+00> : vector<8x512xf32>
    %272 = tpu.matmul %269, %271, %cst_103 {dimension_numbers = #tpu.dot_dimension_numbers<[1], [0], [0], [1], [0, 0, 1, 1], [], []>} : vector<8x128xf32>, vector<128x512xf32>, vector<8x512xf32> -> vector<8x512xf32>
    %273 = arith.addf %270, %272 : vector<8x512xf32>
    %274 = vector.extract_strided_slice %273 {offsets = [0, 0], sizes = [8, 128], strides = [1, 1]} : vector<8x512xf32> to vector<8x128xf32>
    %275 = math.tanh %274 : vector<8x128xf32>
    %cst_104 = arith.constant 5.000000e-01 : f32
    %276 = vector.broadcast %cst_104 : f32 to vector<8x128xf32>
    %277 = arith.mulf %276, %275 : vector<8x128xf32>
    %cst_105 = arith.constant 5.000000e-01 : f32
    %278 = vector.broadcast %cst_105 : f32 to vector<8x128xf32>
    %279 = arith.addf %278, %277 : vector<8x128xf32>
    %280 = vector.extract_strided_slice %273 {offsets = [0, 128], sizes = [8, 128], strides = [1, 1]} : vector<8x512xf32> to vector<8x128xf32>
    %281 = math.tanh %280 : vector<8x128xf32>
    %cst_106 = arith.constant 5.000000e-01 : f32
    %282 = vector.broadcast %cst_106 : f32 to vector<8x128xf32>
    %283 = arith.mulf %282, %281 : vector<8x128xf32>
    %cst_107 = arith.constant 5.000000e-01 : f32
    %284 = vector.broadcast %cst_107 : f32 to vector<8x128xf32>
    %285 = arith.addf %284, %283 : vector<8x128xf32>
    %286 = vector.extract_strided_slice %273 {offsets = [0, 256], sizes = [8, 128], strides = [1, 1]} : vector<8x512xf32> to vector<8x128xf32>
    %287 = math.tanh %286 : vector<8x128xf32>
    %288 = vector.extract_strided_slice %273 {offsets = [0, 384], sizes = [8, 128], strides = [1, 1]} : vector<8x512xf32> to vector<8x128xf32>
    %289 = math.tanh %288 : vector<8x128xf32>
    %cst_108 = arith.constant 5.000000e-01 : f32
    %290 = vector.broadcast %cst_108 : f32 to vector<8x128xf32>
    %291 = arith.mulf %290, %289 : vector<8x128xf32>
    %cst_109 = arith.constant 5.000000e-01 : f32
    %292 = vector.broadcast %cst_109 : f32 to vector<8x128xf32>
    %293 = arith.addf %292, %291 : vector<8x128xf32>
    %294 = arith.mulf %285, %267 : vector<8x128xf32>
    %295 = arith.mulf %279, %287 : vector<8x128xf32>
    %296 = arith.addf %294, %295 : vector<8x128xf32>
    %297 = math.tanh %296 : vector<8x128xf32>
    %298 = arith.mulf %293, %297 : vector<8x128xf32>
    %c80 = arith.constant 80 : index
    %c0_110 = arith.constant 0 : index
    %299 = vector.load %arg7[%c80, %c0_110] : memref<224x512xf32, #tpu.memory_space<vmem>>, vector<8x512xf32>
    %c0_111 = arith.constant 0 : index
    %c0_112 = arith.constant 0 : index
    %300 = vector.load %arg2[%c0_111, %c0_112] : memref<128x512xf32, #tpu.memory_space<vmem>>, vector<128x512xf32>
    %cst_113 = arith.constant dense<0.000000e+00> : vector<8x512xf32>
    %301 = tpu.matmul %298, %300, %cst_113 {dimension_numbers = #tpu.dot_dimension_numbers<[1], [0], [0], [1], [0, 0, 1, 1], [], []>} : vector<8x128xf32>, vector<128x512xf32>, vector<8x512xf32> -> vector<8x512xf32>
    %302 = arith.addf %299, %301 : vector<8x512xf32>
    %303 = vector.extract_strided_slice %302 {offsets = [0, 0], sizes = [8, 128], strides = [1, 1]} : vector<8x512xf32> to vector<8x128xf32>
    %304 = math.tanh %303 : vector<8x128xf32>
    %cst_114 = arith.constant 5.000000e-01 : f32
    %305 = vector.broadcast %cst_114 : f32 to vector<8x128xf32>
    %306 = arith.mulf %305, %304 : vector<8x128xf32>
    %cst_115 = arith.constant 5.000000e-01 : f32
    %307 = vector.broadcast %cst_115 : f32 to vector<8x128xf32>
    %308 = arith.addf %307, %306 : vector<8x128xf32>
    %309 = vector.extract_strided_slice %302 {offsets = [0, 128], sizes = [8, 128], strides = [1, 1]} : vector<8x512xf32> to vector<8x128xf32>
    %310 = math.tanh %309 : vector<8x128xf32>
    %cst_116 = arith.constant 5.000000e-01 : f32
    %311 = vector.broadcast %cst_116 : f32 to vector<8x128xf32>
    %312 = arith.mulf %311, %310 : vector<8x128xf32>
    %cst_117 = arith.constant 5.000000e-01 : f32
    %313 = vector.broadcast %cst_117 : f32 to vector<8x128xf32>
    %314 = arith.addf %313, %312 : vector<8x128xf32>
    %315 = vector.extract_strided_slice %302 {offsets = [0, 256], sizes = [8, 128], strides = [1, 1]} : vector<8x512xf32> to vector<8x128xf32>
    %316 = math.tanh %315 : vector<8x128xf32>
    %317 = vector.extract_strided_slice %302 {offsets = [0, 384], sizes = [8, 128], strides = [1, 1]} : vector<8x512xf32> to vector<8x128xf32>
    %318 = math.tanh %317 : vector<8x128xf32>
    %cst_118 = arith.constant 5.000000e-01 : f32
    %319 = vector.broadcast %cst_118 : f32 to vector<8x128xf32>
    %320 = arith.mulf %319, %318 : vector<8x128xf32>
    %cst_119 = arith.constant 5.000000e-01 : f32
    %321 = vector.broadcast %cst_119 : f32 to vector<8x128xf32>
    %322 = arith.addf %321, %320 : vector<8x128xf32>
    %323 = arith.mulf %314, %296 : vector<8x128xf32>
    %324 = arith.mulf %308, %316 : vector<8x128xf32>
    %325 = arith.addf %323, %324 : vector<8x128xf32>
    %326 = math.tanh %325 : vector<8x128xf32>
    %327 = arith.mulf %322, %326 : vector<8x128xf32>
    %c88 = arith.constant 88 : index
    %c0_120 = arith.constant 0 : index
    %328 = vector.load %arg7[%c88, %c0_120] : memref<224x512xf32, #tpu.memory_space<vmem>>, vector<8x512xf32>
    %c0_121 = arith.constant 0 : index
    %c0_122 = arith.constant 0 : index
    %329 = vector.load %arg2[%c0_121, %c0_122] : memref<128x512xf32, #tpu.memory_space<vmem>>, vector<128x512xf32>
    %cst_123 = arith.constant dense<0.000000e+00> : vector<8x512xf32>
    %330 = tpu.matmul %327, %329, %cst_123 {dimension_numbers = #tpu.dot_dimension_numbers<[1], [0], [0], [1], [0, 0, 1, 1], [], []>} : vector<8x128xf32>, vector<128x512xf32>, vector<8x512xf32> -> vector<8x512xf32>
    %331 = arith.addf %328, %330 : vector<8x512xf32>
    %332 = vector.extract_strided_slice %331 {offsets = [0, 0], sizes = [8, 128], strides = [1, 1]} : vector<8x512xf32> to vector<8x128xf32>
    %333 = math.tanh %332 : vector<8x128xf32>
    %cst_124 = arith.constant 5.000000e-01 : f32
    %334 = vector.broadcast %cst_124 : f32 to vector<8x128xf32>
    %335 = arith.mulf %334, %333 : vector<8x128xf32>
    %cst_125 = arith.constant 5.000000e-01 : f32
    %336 = vector.broadcast %cst_125 : f32 to vector<8x128xf32>
    %337 = arith.addf %336, %335 : vector<8x128xf32>
    %338 = vector.extract_strided_slice %331 {offsets = [0, 128], sizes = [8, 128], strides = [1, 1]} : vector<8x512xf32> to vector<8x128xf32>
    %339 = math.tanh %338 : vector<8x128xf32>
    %cst_126 = arith.constant 5.000000e-01 : f32
    %340 = vector.broadcast %cst_126 : f32 to vector<8x128xf32>
    %341 = arith.mulf %340, %339 : vector<8x128xf32>
    %cst_127 = arith.constant 5.000000e-01 : f32
    %342 = vector.broadcast %cst_127 : f32 to vector<8x128xf32>
    %343 = arith.addf %342, %341 : vector<8x128xf32>
    %344 = vector.extract_strided_slice %331 {offsets = [0, 256], sizes = [8, 128], strides = [1, 1]} : vector<8x512xf32> to vector<8x128xf32>
    %345 = math.tanh %344 : vector<8x128xf32>
    %346 = vector.extract_strided_slice %331 {offsets = [0, 384], sizes = [8, 128], strides = [1, 1]} : vector<8x512xf32> to vector<8x128xf32>
    %347 = math.tanh %346 : vector<8x128xf32>
    %cst_128 = arith.constant 5.000000e-01 : f32
    %348 = vector.broadcast %cst_128 : f32 to vector<8x128xf32>
    %349 = arith.mulf %348, %347 : vector<8x128xf32>
    %cst_129 = arith.constant 5.000000e-01 : f32
    %350 = vector.broadcast %cst_129 : f32 to vector<8x128xf32>
    %351 = arith.addf %350, %349 : vector<8x128xf32>
    %352 = arith.mulf %343, %325 : vector<8x128xf32>
    %353 = arith.mulf %337, %345 : vector<8x128xf32>
    %354 = arith.addf %352, %353 : vector<8x128xf32>
    %355 = math.tanh %354 : vector<8x128xf32>
    %356 = arith.mulf %351, %355 : vector<8x128xf32>
    %c96 = arith.constant 96 : index
    %c0_130 = arith.constant 0 : index
    %357 = vector.load %arg7[%c96, %c0_130] : memref<224x512xf32, #tpu.memory_space<vmem>>, vector<8x512xf32>
    %c0_131 = arith.constant 0 : index
    %c0_132 = arith.constant 0 : index
    %358 = vector.load %arg2[%c0_131, %c0_132] : memref<128x512xf32, #tpu.memory_space<vmem>>, vector<128x512xf32>
    %cst_133 = arith.constant dense<0.000000e+00> : vector<8x512xf32>
    %359 = tpu.matmul %356, %358, %cst_133 {dimension_numbers = #tpu.dot_dimension_numbers<[1], [0], [0], [1], [0, 0, 1, 1], [], []>} : vector<8x128xf32>, vector<128x512xf32>, vector<8x512xf32> -> vector<8x512xf32>
    %360 = arith.addf %357, %359 : vector<8x512xf32>
    %361 = vector.extract_strided_slice %360 {offsets = [0, 0], sizes = [8, 128], strides = [1, 1]} : vector<8x512xf32> to vector<8x128xf32>
    %362 = math.tanh %361 : vector<8x128xf32>
    %cst_134 = arith.constant 5.000000e-01 : f32
    %363 = vector.broadcast %cst_134 : f32 to vector<8x128xf32>
    %364 = arith.mulf %363, %362 : vector<8x128xf32>
    %cst_135 = arith.constant 5.000000e-01 : f32
    %365 = vector.broadcast %cst_135 : f32 to vector<8x128xf32>
    %366 = arith.addf %365, %364 : vector<8x128xf32>
    %367 = vector.extract_strided_slice %360 {offsets = [0, 128], sizes = [8, 128], strides = [1, 1]} : vector<8x512xf32> to vector<8x128xf32>
    %368 = math.tanh %367 : vector<8x128xf32>
    %cst_136 = arith.constant 5.000000e-01 : f32
    %369 = vector.broadcast %cst_136 : f32 to vector<8x128xf32>
    %370 = arith.mulf %369, %368 : vector<8x128xf32>
    %cst_137 = arith.constant 5.000000e-01 : f32
    %371 = vector.broadcast %cst_137 : f32 to vector<8x128xf32>
    %372 = arith.addf %371, %370 : vector<8x128xf32>
    %373 = vector.extract_strided_slice %360 {offsets = [0, 256], sizes = [8, 128], strides = [1, 1]} : vector<8x512xf32> to vector<8x128xf32>
    %374 = math.tanh %373 : vector<8x128xf32>
    %375 = vector.extract_strided_slice %360 {offsets = [0, 384], sizes = [8, 128], strides = [1, 1]} : vector<8x512xf32> to vector<8x128xf32>
    %376 = math.tanh %375 : vector<8x128xf32>
    %cst_138 = arith.constant 5.000000e-01 : f32
    %377 = vector.broadcast %cst_138 : f32 to vector<8x128xf32>
    %378 = arith.mulf %377, %376 : vector<8x128xf32>
    %cst_139 = arith.constant 5.000000e-01 : f32
    %379 = vector.broadcast %cst_139 : f32 to vector<8x128xf32>
    %380 = arith.addf %379, %378 : vector<8x128xf32>
    %381 = arith.mulf %372, %354 : vector<8x128xf32>
    %382 = arith.mulf %366, %374 : vector<8x128xf32>
    %383 = arith.addf %381, %382 : vector<8x128xf32>
    %384 = math.tanh %383 : vector<8x128xf32>
    %385 = arith.mulf %380, %384 : vector<8x128xf32>
    %c104 = arith.constant 104 : index
    %c0_140 = arith.constant 0 : index
    %386 = vector.load %arg7[%c104, %c0_140] : memref<224x512xf32, #tpu.memory_space<vmem>>, vector<8x512xf32>
    %c0_141 = arith.constant 0 : index
    %c0_142 = arith.constant 0 : index
    %387 = vector.load %arg2[%c0_141, %c0_142] : memref<128x512xf32, #tpu.memory_space<vmem>>, vector<128x512xf32>
    %cst_143 = arith.constant dense<0.000000e+00> : vector<8x512xf32>
    %388 = tpu.matmul %385, %387, %cst_143 {dimension_numbers = #tpu.dot_dimension_numbers<[1], [0], [0], [1], [0, 0, 1, 1], [], []>} : vector<8x128xf32>, vector<128x512xf32>, vector<8x512xf32> -> vector<8x512xf32>
    %389 = arith.addf %386, %388 : vector<8x512xf32>
    %390 = vector.extract_strided_slice %389 {offsets = [0, 0], sizes = [8, 128], strides = [1, 1]} : vector<8x512xf32> to vector<8x128xf32>
    %391 = math.tanh %390 : vector<8x128xf32>
    %cst_144 = arith.constant 5.000000e-01 : f32
    %392 = vector.broadcast %cst_144 : f32 to vector<8x128xf32>
    %393 = arith.mulf %392, %391 : vector<8x128xf32>
    %cst_145 = arith.constant 5.000000e-01 : f32
    %394 = vector.broadcast %cst_145 : f32 to vector<8x128xf32>
    %395 = arith.addf %394, %393 : vector<8x128xf32>
    %396 = vector.extract_strided_slice %389 {offsets = [0, 128], sizes = [8, 128], strides = [1, 1]} : vector<8x512xf32> to vector<8x128xf32>
    %397 = math.tanh %396 : vector<8x128xf32>
    %cst_146 = arith.constant 5.000000e-01 : f32
    %398 = vector.broadcast %cst_146 : f32 to vector<8x128xf32>
    %399 = arith.mulf %398, %397 : vector<8x128xf32>
    %cst_147 = arith.constant 5.000000e-01 : f32
    %400 = vector.broadcast %cst_147 : f32 to vector<8x128xf32>
    %401 = arith.addf %400, %399 : vector<8x128xf32>
    %402 = vector.extract_strided_slice %389 {offsets = [0, 256], sizes = [8, 128], strides = [1, 1]} : vector<8x512xf32> to vector<8x128xf32>
    %403 = math.tanh %402 : vector<8x128xf32>
    %404 = vector.extract_strided_slice %389 {offsets = [0, 384], sizes = [8, 128], strides = [1, 1]} : vector<8x512xf32> to vector<8x128xf32>
    %405 = math.tanh %404 : vector<8x128xf32>
    %cst_148 = arith.constant 5.000000e-01 : f32
    %406 = vector.broadcast %cst_148 : f32 to vector<8x128xf32>
    %407 = arith.mulf %406, %405 : vector<8x128xf32>
    %cst_149 = arith.constant 5.000000e-01 : f32
    %408 = vector.broadcast %cst_149 : f32 to vector<8x128xf32>
    %409 = arith.addf %408, %407 : vector<8x128xf32>
    %410 = arith.mulf %401, %383 : vector<8x128xf32>
    %411 = arith.mulf %395, %403 : vector<8x128xf32>
    %412 = arith.addf %410, %411 : vector<8x128xf32>
    %413 = math.tanh %412 : vector<8x128xf32>
    %414 = arith.mulf %409, %413 : vector<8x128xf32>
    %c112 = arith.constant 112 : index
    %c0_150 = arith.constant 0 : index
    %415 = vector.load %arg7[%c112, %c0_150] : memref<224x512xf32, #tpu.memory_space<vmem>>, vector<8x512xf32>
    %c0_151 = arith.constant 0 : index
    %c0_152 = arith.constant 0 : index
    %416 = vector.load %arg2[%c0_151, %c0_152] : memref<128x512xf32, #tpu.memory_space<vmem>>, vector<128x512xf32>
    %cst_153 = arith.constant dense<0.000000e+00> : vector<8x512xf32>
    %417 = tpu.matmul %414, %416, %cst_153 {dimension_numbers = #tpu.dot_dimension_numbers<[1], [0], [0], [1], [0, 0, 1, 1], [], []>} : vector<8x128xf32>, vector<128x512xf32>, vector<8x512xf32> -> vector<8x512xf32>
    %418 = arith.addf %415, %417 : vector<8x512xf32>
    %419 = vector.extract_strided_slice %418 {offsets = [0, 0], sizes = [8, 128], strides = [1, 1]} : vector<8x512xf32> to vector<8x128xf32>
    %420 = math.tanh %419 : vector<8x128xf32>
    %cst_154 = arith.constant 5.000000e-01 : f32
    %421 = vector.broadcast %cst_154 : f32 to vector<8x128xf32>
    %422 = arith.mulf %421, %420 : vector<8x128xf32>
    %cst_155 = arith.constant 5.000000e-01 : f32
    %423 = vector.broadcast %cst_155 : f32 to vector<8x128xf32>
    %424 = arith.addf %423, %422 : vector<8x128xf32>
    %425 = vector.extract_strided_slice %418 {offsets = [0, 128], sizes = [8, 128], strides = [1, 1]} : vector<8x512xf32> to vector<8x128xf32>
    %426 = math.tanh %425 : vector<8x128xf32>
    %cst_156 = arith.constant 5.000000e-01 : f32
    %427 = vector.broadcast %cst_156 : f32 to vector<8x128xf32>
    %428 = arith.mulf %427, %426 : vector<8x128xf32>
    %cst_157 = arith.constant 5.000000e-01 : f32
    %429 = vector.broadcast %cst_157 : f32 to vector<8x128xf32>
    %430 = arith.addf %429, %428 : vector<8x128xf32>
    %431 = vector.extract_strided_slice %418 {offsets = [0, 256], sizes = [8, 128], strides = [1, 1]} : vector<8x512xf32> to vector<8x128xf32>
    %432 = math.tanh %431 : vector<8x128xf32>
    %433 = vector.extract_strided_slice %418 {offsets = [0, 384], sizes = [8, 128], strides = [1, 1]} : vector<8x512xf32> to vector<8x128xf32>
    %434 = math.tanh %433 : vector<8x128xf32>
    %cst_158 = arith.constant 5.000000e-01 : f32
    %435 = vector.broadcast %cst_158 : f32 to vector<8x128xf32>
    %436 = arith.mulf %435, %434 : vector<8x128xf32>
    %cst_159 = arith.constant 5.000000e-01 : f32
    %437 = vector.broadcast %cst_159 : f32 to vector<8x128xf32>
    %438 = arith.addf %437, %436 : vector<8x128xf32>
    %439 = arith.mulf %430, %412 : vector<8x128xf32>
    %440 = arith.mulf %424, %432 : vector<8x128xf32>
    %441 = arith.addf %439, %440 : vector<8x128xf32>
    %442 = math.tanh %441 : vector<8x128xf32>
    %443 = arith.mulf %438, %442 : vector<8x128xf32>
    %c120 = arith.constant 120 : index
    %c0_160 = arith.constant 0 : index
    %444 = vector.load %arg7[%c120, %c0_160] : memref<224x512xf32, #tpu.memory_space<vmem>>, vector<8x512xf32>
    %c0_161 = arith.constant 0 : index
    %c0_162 = arith.constant 0 : index
    %445 = vector.load %arg2[%c0_161, %c0_162] : memref<128x512xf32, #tpu.memory_space<vmem>>, vector<128x512xf32>
    %cst_163 = arith.constant dense<0.000000e+00> : vector<8x512xf32>
    %446 = tpu.matmul %443, %445, %cst_163 {dimension_numbers = #tpu.dot_dimension_numbers<[1], [0], [0], [1], [0, 0, 1, 1], [], []>} : vector<8x128xf32>, vector<128x512xf32>, vector<8x512xf32> -> vector<8x512xf32>
    %447 = arith.addf %444, %446 : vector<8x512xf32>
    %448 = vector.extract_strided_slice %447 {offsets = [0, 0], sizes = [8, 128], strides = [1, 1]} : vector<8x512xf32> to vector<8x128xf32>
    %449 = math.tanh %448 : vector<8x128xf32>
    %cst_164 = arith.constant 5.000000e-01 : f32
    %450 = vector.broadcast %cst_164 : f32 to vector<8x128xf32>
    %451 = arith.mulf %450, %449 : vector<8x128xf32>
    %cst_165 = arith.constant 5.000000e-01 : f32
    %452 = vector.broadcast %cst_165 : f32 to vector<8x128xf32>
    %453 = arith.addf %452, %451 : vector<8x128xf32>
    %454 = vector.extract_strided_slice %447 {offsets = [0, 128], sizes = [8, 128], strides = [1, 1]} : vector<8x512xf32> to vector<8x128xf32>
    %455 = math.tanh %454 : vector<8x128xf32>
    %cst_166 = arith.constant 5.000000e-01 : f32
    %456 = vector.broadcast %cst_166 : f32 to vector<8x128xf32>
    %457 = arith.mulf %456, %455 : vector<8x128xf32>
    %cst_167 = arith.constant 5.000000e-01 : f32
    %458 = vector.broadcast %cst_167 : f32 to vector<8x128xf32>
    %459 = arith.addf %458, %457 : vector<8x128xf32>
    %460 = vector.extract_strided_slice %447 {offsets = [0, 256], sizes = [8, 128], strides = [1, 1]} : vector<8x512xf32> to vector<8x128xf32>
    %461 = math.tanh %460 : vector<8x128xf32>
    %462 = vector.extract_strided_slice %447 {offsets = [0, 384], sizes = [8, 128], strides = [1, 1]} : vector<8x512xf32> to vector<8x128xf32>
    %463 = math.tanh %462 : vector<8x128xf32>
    %cst_168 = arith.constant 5.000000e-01 : f32
    %464 = vector.broadcast %cst_168 : f32 to vector<8x128xf32>
    %465 = arith.mulf %464, %463 : vector<8x128xf32>
    %cst_169 = arith.constant 5.000000e-01 : f32
    %466 = vector.broadcast %cst_169 : f32 to vector<8x128xf32>
    %467 = arith.addf %466, %465 : vector<8x128xf32>
    %468 = arith.mulf %459, %441 : vector<8x128xf32>
    %469 = arith.mulf %453, %461 : vector<8x128xf32>
    %470 = arith.addf %468, %469 : vector<8x128xf32>
    %471 = math.tanh %470 : vector<8x128xf32>
    %472 = arith.mulf %467, %471 : vector<8x128xf32>
    %c128 = arith.constant 128 : index
    %c0_170 = arith.constant 0 : index
    %473 = vector.load %arg7[%c128, %c0_170] : memref<224x512xf32, #tpu.memory_space<vmem>>, vector<8x512xf32>
    %c0_171 = arith.constant 0 : index
    %c0_172 = arith.constant 0 : index
    %474 = vector.load %arg2[%c0_171, %c0_172] : memref<128x512xf32, #tpu.memory_space<vmem>>, vector<128x512xf32>
    %cst_173 = arith.constant dense<0.000000e+00> : vector<8x512xf32>
    %475 = tpu.matmul %472, %474, %cst_173 {dimension_numbers = #tpu.dot_dimension_numbers<[1], [0], [0], [1], [0, 0, 1, 1], [], []>} : vector<8x128xf32>, vector<128x512xf32>, vector<8x512xf32> -> vector<8x512xf32>
    %476 = arith.addf %473, %475 : vector<8x512xf32>
    %477 = vector.extract_strided_slice %476 {offsets = [0, 0], sizes = [8, 128], strides = [1, 1]} : vector<8x512xf32> to vector<8x128xf32>
    %478 = math.tanh %477 : vector<8x128xf32>
    %cst_174 = arith.constant 5.000000e-01 : f32
    %479 = vector.broadcast %cst_174 : f32 to vector<8x128xf32>
    %480 = arith.mulf %479, %478 : vector<8x128xf32>
    %cst_175 = arith.constant 5.000000e-01 : f32
    %481 = vector.broadcast %cst_175 : f32 to vector<8x128xf32>
    %482 = arith.addf %481, %480 : vector<8x128xf32>
    %483 = vector.extract_strided_slice %476 {offsets = [0, 128], sizes = [8, 128], strides = [1, 1]} : vector<8x512xf32> to vector<8x128xf32>
    %484 = math.tanh %483 : vector<8x128xf32>
    %cst_176 = arith.constant 5.000000e-01 : f32
    %485 = vector.broadcast %cst_176 : f32 to vector<8x128xf32>
    %486 = arith.mulf %485, %484 : vector<8x128xf32>
    %cst_177 = arith.constant 5.000000e-01 : f32
    %487 = vector.broadcast %cst_177 : f32 to vector<8x128xf32>
    %488 = arith.addf %487, %486 : vector<8x128xf32>
    %489 = vector.extract_strided_slice %476 {offsets = [0, 256], sizes = [8, 128], strides = [1, 1]} : vector<8x512xf32> to vector<8x128xf32>
    %490 = math.tanh %489 : vector<8x128xf32>
    %491 = vector.extract_strided_slice %476 {offsets = [0, 384], sizes = [8, 128], strides = [1, 1]} : vector<8x512xf32> to vector<8x128xf32>
    %492 = math.tanh %491 : vector<8x128xf32>
    %cst_178 = arith.constant 5.000000e-01 : f32
    %493 = vector.broadcast %cst_178 : f32 to vector<8x128xf32>
    %494 = arith.mulf %493, %492 : vector<8x128xf32>
    %cst_179 = arith.constant 5.000000e-01 : f32
    %495 = vector.broadcast %cst_179 : f32 to vector<8x128xf32>
    %496 = arith.addf %495, %494 : vector<8x128xf32>
    %497 = arith.mulf %488, %470 : vector<8x128xf32>
    %498 = arith.mulf %482, %490 : vector<8x128xf32>
    %499 = arith.addf %497, %498 : vector<8x128xf32>
    %500 = math.tanh %499 : vector<8x128xf32>
    %501 = arith.mulf %496, %500 : vector<8x128xf32>
    %c136 = arith.constant 136 : index
    %c0_180 = arith.constant 0 : index
    %502 = vector.load %arg7[%c136, %c0_180] : memref<224x512xf32, #tpu.memory_space<vmem>>, vector<8x512xf32>
    %c0_181 = arith.constant 0 : index
    %c0_182 = arith.constant 0 : index
    %503 = vector.load %arg2[%c0_181, %c0_182] : memref<128x512xf32, #tpu.memory_space<vmem>>, vector<128x512xf32>
    %cst_183 = arith.constant dense<0.000000e+00> : vector<8x512xf32>
    %504 = tpu.matmul %501, %503, %cst_183 {dimension_numbers = #tpu.dot_dimension_numbers<[1], [0], [0], [1], [0, 0, 1, 1], [], []>} : vector<8x128xf32>, vector<128x512xf32>, vector<8x512xf32> -> vector<8x512xf32>
    %505 = arith.addf %502, %504 : vector<8x512xf32>
    %506 = vector.extract_strided_slice %505 {offsets = [0, 0], sizes = [8, 128], strides = [1, 1]} : vector<8x512xf32> to vector<8x128xf32>
    %507 = math.tanh %506 : vector<8x128xf32>
    %cst_184 = arith.constant 5.000000e-01 : f32
    %508 = vector.broadcast %cst_184 : f32 to vector<8x128xf32>
    %509 = arith.mulf %508, %507 : vector<8x128xf32>
    %cst_185 = arith.constant 5.000000e-01 : f32
    %510 = vector.broadcast %cst_185 : f32 to vector<8x128xf32>
    %511 = arith.addf %510, %509 : vector<8x128xf32>
    %512 = vector.extract_strided_slice %505 {offsets = [0, 128], sizes = [8, 128], strides = [1, 1]} : vector<8x512xf32> to vector<8x128xf32>
    %513 = math.tanh %512 : vector<8x128xf32>
    %cst_186 = arith.constant 5.000000e-01 : f32
    %514 = vector.broadcast %cst_186 : f32 to vector<8x128xf32>
    %515 = arith.mulf %514, %513 : vector<8x128xf32>
    %cst_187 = arith.constant 5.000000e-01 : f32
    %516 = vector.broadcast %cst_187 : f32 to vector<8x128xf32>
    %517 = arith.addf %516, %515 : vector<8x128xf32>
    %518 = vector.extract_strided_slice %505 {offsets = [0, 256], sizes = [8, 128], strides = [1, 1]} : vector<8x512xf32> to vector<8x128xf32>
    %519 = math.tanh %518 : vector<8x128xf32>
    %520 = vector.extract_strided_slice %505 {offsets = [0, 384], sizes = [8, 128], strides = [1, 1]} : vector<8x512xf32> to vector<8x128xf32>
    %521 = math.tanh %520 : vector<8x128xf32>
    %cst_188 = arith.constant 5.000000e-01 : f32
    %522 = vector.broadcast %cst_188 : f32 to vector<8x128xf32>
    %523 = arith.mulf %522, %521 : vector<8x128xf32>
    %cst_189 = arith.constant 5.000000e-01 : f32
    %524 = vector.broadcast %cst_189 : f32 to vector<8x128xf32>
    %525 = arith.addf %524, %523 : vector<8x128xf32>
    %526 = arith.mulf %517, %499 : vector<8x128xf32>
    %527 = arith.mulf %511, %519 : vector<8x128xf32>
    %528 = arith.addf %526, %527 : vector<8x128xf32>
    %529 = math.tanh %528 : vector<8x128xf32>
    %530 = arith.mulf %525, %529 : vector<8x128xf32>
    %c144 = arith.constant 144 : index
    %c0_190 = arith.constant 0 : index
    %531 = vector.load %arg7[%c144, %c0_190] : memref<224x512xf32, #tpu.memory_space<vmem>>, vector<8x512xf32>
    %c0_191 = arith.constant 0 : index
    %c0_192 = arith.constant 0 : index
    %532 = vector.load %arg2[%c0_191, %c0_192] : memref<128x512xf32, #tpu.memory_space<vmem>>, vector<128x512xf32>
    %cst_193 = arith.constant dense<0.000000e+00> : vector<8x512xf32>
    %533 = tpu.matmul %530, %532, %cst_193 {dimension_numbers = #tpu.dot_dimension_numbers<[1], [0], [0], [1], [0, 0, 1, 1], [], []>} : vector<8x128xf32>, vector<128x512xf32>, vector<8x512xf32> -> vector<8x512xf32>
    %534 = arith.addf %531, %533 : vector<8x512xf32>
    %535 = vector.extract_strided_slice %534 {offsets = [0, 0], sizes = [8, 128], strides = [1, 1]} : vector<8x512xf32> to vector<8x128xf32>
    %536 = math.tanh %535 : vector<8x128xf32>
    %cst_194 = arith.constant 5.000000e-01 : f32
    %537 = vector.broadcast %cst_194 : f32 to vector<8x128xf32>
    %538 = arith.mulf %537, %536 : vector<8x128xf32>
    %cst_195 = arith.constant 5.000000e-01 : f32
    %539 = vector.broadcast %cst_195 : f32 to vector<8x128xf32>
    %540 = arith.addf %539, %538 : vector<8x128xf32>
    %541 = vector.extract_strided_slice %534 {offsets = [0, 128], sizes = [8, 128], strides = [1, 1]} : vector<8x512xf32> to vector<8x128xf32>
    %542 = math.tanh %541 : vector<8x128xf32>
    %cst_196 = arith.constant 5.000000e-01 : f32
    %543 = vector.broadcast %cst_196 : f32 to vector<8x128xf32>
    %544 = arith.mulf %543, %542 : vector<8x128xf32>
    %cst_197 = arith.constant 5.000000e-01 : f32
    %545 = vector.broadcast %cst_197 : f32 to vector<8x128xf32>
    %546 = arith.addf %545, %544 : vector<8x128xf32>
    %547 = vector.extract_strided_slice %534 {offsets = [0, 256], sizes = [8, 128], strides = [1, 1]} : vector<8x512xf32> to vector<8x128xf32>
    %548 = math.tanh %547 : vector<8x128xf32>
    %549 = vector.extract_strided_slice %534 {offsets = [0, 384], sizes = [8, 128], strides = [1, 1]} : vector<8x512xf32> to vector<8x128xf32>
    %550 = math.tanh %549 : vector<8x128xf32>
    %cst_198 = arith.constant 5.000000e-01 : f32
    %551 = vector.broadcast %cst_198 : f32 to vector<8x128xf32>
    %552 = arith.mulf %551, %550 : vector<8x128xf32>
    %cst_199 = arith.constant 5.000000e-01 : f32
    %553 = vector.broadcast %cst_199 : f32 to vector<8x128xf32>
    %554 = arith.addf %553, %552 : vector<8x128xf32>
    %555 = arith.mulf %546, %528 : vector<8x128xf32>
    %556 = arith.mulf %540, %548 : vector<8x128xf32>
    %557 = arith.addf %555, %556 : vector<8x128xf32>
    %558 = math.tanh %557 : vector<8x128xf32>
    %559 = arith.mulf %554, %558 : vector<8x128xf32>
    %c152 = arith.constant 152 : index
    %c0_200 = arith.constant 0 : index
    %560 = vector.load %arg7[%c152, %c0_200] : memref<224x512xf32, #tpu.memory_space<vmem>>, vector<8x512xf32>
    %c0_201 = arith.constant 0 : index
    %c0_202 = arith.constant 0 : index
    %561 = vector.load %arg2[%c0_201, %c0_202] : memref<128x512xf32, #tpu.memory_space<vmem>>, vector<128x512xf32>
    %cst_203 = arith.constant dense<0.000000e+00> : vector<8x512xf32>
    %562 = tpu.matmul %559, %561, %cst_203 {dimension_numbers = #tpu.dot_dimension_numbers<[1], [0], [0], [1], [0, 0, 1, 1], [], []>} : vector<8x128xf32>, vector<128x512xf32>, vector<8x512xf32> -> vector<8x512xf32>
    %563 = arith.addf %560, %562 : vector<8x512xf32>
    %564 = vector.extract_strided_slice %563 {offsets = [0, 0], sizes = [8, 128], strides = [1, 1]} : vector<8x512xf32> to vector<8x128xf32>
    %565 = math.tanh %564 : vector<8x128xf32>
    %cst_204 = arith.constant 5.000000e-01 : f32
    %566 = vector.broadcast %cst_204 : f32 to vector<8x128xf32>
    %567 = arith.mulf %566, %565 : vector<8x128xf32>
    %cst_205 = arith.constant 5.000000e-01 : f32
    %568 = vector.broadcast %cst_205 : f32 to vector<8x128xf32>
    %569 = arith.addf %568, %567 : vector<8x128xf32>
    %570 = vector.extract_strided_slice %563 {offsets = [0, 128], sizes = [8, 128], strides = [1, 1]} : vector<8x512xf32> to vector<8x128xf32>
    %571 = math.tanh %570 : vector<8x128xf32>
    %cst_206 = arith.constant 5.000000e-01 : f32
    %572 = vector.broadcast %cst_206 : f32 to vector<8x128xf32>
    %573 = arith.mulf %572, %571 : vector<8x128xf32>
    %cst_207 = arith.constant 5.000000e-01 : f32
    %574 = vector.broadcast %cst_207 : f32 to vector<8x128xf32>
    %575 = arith.addf %574, %573 : vector<8x128xf32>
    %576 = vector.extract_strided_slice %563 {offsets = [0, 256], sizes = [8, 128], strides = [1, 1]} : vector<8x512xf32> to vector<8x128xf32>
    %577 = math.tanh %576 : vector<8x128xf32>
    %578 = vector.extract_strided_slice %563 {offsets = [0, 384], sizes = [8, 128], strides = [1, 1]} : vector<8x512xf32> to vector<8x128xf32>
    %579 = math.tanh %578 : vector<8x128xf32>
    %cst_208 = arith.constant 5.000000e-01 : f32
    %580 = vector.broadcast %cst_208 : f32 to vector<8x128xf32>
    %581 = arith.mulf %580, %579 : vector<8x128xf32>
    %cst_209 = arith.constant 5.000000e-01 : f32
    %582 = vector.broadcast %cst_209 : f32 to vector<8x128xf32>
    %583 = arith.addf %582, %581 : vector<8x128xf32>
    %584 = arith.mulf %575, %557 : vector<8x128xf32>
    %585 = arith.mulf %569, %577 : vector<8x128xf32>
    %586 = arith.addf %584, %585 : vector<8x128xf32>
    %587 = math.tanh %586 : vector<8x128xf32>
    %588 = arith.mulf %583, %587 : vector<8x128xf32>
    %c160 = arith.constant 160 : index
    %c0_210 = arith.constant 0 : index
    %589 = vector.load %arg7[%c160, %c0_210] : memref<224x512xf32, #tpu.memory_space<vmem>>, vector<8x512xf32>
    %c0_211 = arith.constant 0 : index
    %c0_212 = arith.constant 0 : index
    %590 = vector.load %arg2[%c0_211, %c0_212] : memref<128x512xf32, #tpu.memory_space<vmem>>, vector<128x512xf32>
    %cst_213 = arith.constant dense<0.000000e+00> : vector<8x512xf32>
    %591 = tpu.matmul %588, %590, %cst_213 {dimension_numbers = #tpu.dot_dimension_numbers<[1], [0], [0], [1], [0, 0, 1, 1], [], []>} : vector<8x128xf32>, vector<128x512xf32>, vector<8x512xf32> -> vector<8x512xf32>
    %592 = arith.addf %589, %591 : vector<8x512xf32>
    %593 = vector.extract_strided_slice %592 {offsets = [0, 0], sizes = [8, 128], strides = [1, 1]} : vector<8x512xf32> to vector<8x128xf32>
    %594 = math.tanh %593 : vector<8x128xf32>
    %cst_214 = arith.constant 5.000000e-01 : f32
    %595 = vector.broadcast %cst_214 : f32 to vector<8x128xf32>
    %596 = arith.mulf %595, %594 : vector<8x128xf32>
    %cst_215 = arith.constant 5.000000e-01 : f32
    %597 = vector.broadcast %cst_215 : f32 to vector<8x128xf32>
    %598 = arith.addf %597, %596 : vector<8x128xf32>
    %599 = vector.extract_strided_slice %592 {offsets = [0, 128], sizes = [8, 128], strides = [1, 1]} : vector<8x512xf32> to vector<8x128xf32>
    %600 = math.tanh %599 : vector<8x128xf32>
    %cst_216 = arith.constant 5.000000e-01 : f32
    %601 = vector.broadcast %cst_216 : f32 to vector<8x128xf32>
    %602 = arith.mulf %601, %600 : vector<8x128xf32>
    %cst_217 = arith.constant 5.000000e-01 : f32
    %603 = vector.broadcast %cst_217 : f32 to vector<8x128xf32>
    %604 = arith.addf %603, %602 : vector<8x128xf32>
    %605 = vector.extract_strided_slice %592 {offsets = [0, 256], sizes = [8, 128], strides = [1, 1]} : vector<8x512xf32> to vector<8x128xf32>
    %606 = math.tanh %605 : vector<8x128xf32>
    %607 = vector.extract_strided_slice %592 {offsets = [0, 384], sizes = [8, 128], strides = [1, 1]} : vector<8x512xf32> to vector<8x128xf32>
    %608 = math.tanh %607 : vector<8x128xf32>
    %cst_218 = arith.constant 5.000000e-01 : f32
    %609 = vector.broadcast %cst_218 : f32 to vector<8x128xf32>
    %610 = arith.mulf %609, %608 : vector<8x128xf32>
    %cst_219 = arith.constant 5.000000e-01 : f32
    %611 = vector.broadcast %cst_219 : f32 to vector<8x128xf32>
    %612 = arith.addf %611, %610 : vector<8x128xf32>
    %613 = arith.mulf %604, %586 : vector<8x128xf32>
    %614 = arith.mulf %598, %606 : vector<8x128xf32>
    %615 = arith.addf %613, %614 : vector<8x128xf32>
    %616 = math.tanh %615 : vector<8x128xf32>
    %617 = arith.mulf %612, %616 : vector<8x128xf32>
    %c168 = arith.constant 168 : index
    %c0_220 = arith.constant 0 : index
    %618 = vector.load %arg7[%c168, %c0_220] : memref<224x512xf32, #tpu.memory_space<vmem>>, vector<8x512xf32>
    %c0_221 = arith.constant 0 : index
    %c0_222 = arith.constant 0 : index
    %619 = vector.load %arg2[%c0_221, %c0_222] : memref<128x512xf32, #tpu.memory_space<vmem>>, vector<128x512xf32>
    %cst_223 = arith.constant dense<0.000000e+00> : vector<8x512xf32>
    %620 = tpu.matmul %617, %619, %cst_223 {dimension_numbers = #tpu.dot_dimension_numbers<[1], [0], [0], [1], [0, 0, 1, 1], [], []>} : vector<8x128xf32>, vector<128x512xf32>, vector<8x512xf32> -> vector<8x512xf32>
    %621 = arith.addf %618, %620 : vector<8x512xf32>
    %622 = vector.extract_strided_slice %621 {offsets = [0, 0], sizes = [8, 128], strides = [1, 1]} : vector<8x512xf32> to vector<8x128xf32>
    %623 = math.tanh %622 : vector<8x128xf32>
    %cst_224 = arith.constant 5.000000e-01 : f32
    %624 = vector.broadcast %cst_224 : f32 to vector<8x128xf32>
    %625 = arith.mulf %624, %623 : vector<8x128xf32>
    %cst_225 = arith.constant 5.000000e-01 : f32
    %626 = vector.broadcast %cst_225 : f32 to vector<8x128xf32>
    %627 = arith.addf %626, %625 : vector<8x128xf32>
    %628 = vector.extract_strided_slice %621 {offsets = [0, 128], sizes = [8, 128], strides = [1, 1]} : vector<8x512xf32> to vector<8x128xf32>
    %629 = math.tanh %628 : vector<8x128xf32>
    %cst_226 = arith.constant 5.000000e-01 : f32
    %630 = vector.broadcast %cst_226 : f32 to vector<8x128xf32>
    %631 = arith.mulf %630, %629 : vector<8x128xf32>
    %cst_227 = arith.constant 5.000000e-01 : f32
    %632 = vector.broadcast %cst_227 : f32 to vector<8x128xf32>
    %633 = arith.addf %632, %631 : vector<8x128xf32>
    %634 = vector.extract_strided_slice %621 {offsets = [0, 256], sizes = [8, 128], strides = [1, 1]} : vector<8x512xf32> to vector<8x128xf32>
    %635 = math.tanh %634 : vector<8x128xf32>
    %636 = vector.extract_strided_slice %621 {offsets = [0, 384], sizes = [8, 128], strides = [1, 1]} : vector<8x512xf32> to vector<8x128xf32>
    %637 = math.tanh %636 : vector<8x128xf32>
    %cst_228 = arith.constant 5.000000e-01 : f32
    %638 = vector.broadcast %cst_228 : f32 to vector<8x128xf32>
    %639 = arith.mulf %638, %637 : vector<8x128xf32>
    %cst_229 = arith.constant 5.000000e-01 : f32
    %640 = vector.broadcast %cst_229 : f32 to vector<8x128xf32>
    %641 = arith.addf %640, %639 : vector<8x128xf32>
    %642 = arith.mulf %633, %615 : vector<8x128xf32>
    %643 = arith.mulf %627, %635 : vector<8x128xf32>
    %644 = arith.addf %642, %643 : vector<8x128xf32>
    %645 = math.tanh %644 : vector<8x128xf32>
    %646 = arith.mulf %641, %645 : vector<8x128xf32>
    %c176 = arith.constant 176 : index
    %c0_230 = arith.constant 0 : index
    %647 = vector.load %arg7[%c176, %c0_230] : memref<224x512xf32, #tpu.memory_space<vmem>>, vector<8x512xf32>
    %c0_231 = arith.constant 0 : index
    %c0_232 = arith.constant 0 : index
    %648 = vector.load %arg2[%c0_231, %c0_232] : memref<128x512xf32, #tpu.memory_space<vmem>>, vector<128x512xf32>
    %cst_233 = arith.constant dense<0.000000e+00> : vector<8x512xf32>
    %649 = tpu.matmul %646, %648, %cst_233 {dimension_numbers = #tpu.dot_dimension_numbers<[1], [0], [0], [1], [0, 0, 1, 1], [], []>} : vector<8x128xf32>, vector<128x512xf32>, vector<8x512xf32> -> vector<8x512xf32>
    %650 = arith.addf %647, %649 : vector<8x512xf32>
    %651 = vector.extract_strided_slice %650 {offsets = [0, 0], sizes = [8, 128], strides = [1, 1]} : vector<8x512xf32> to vector<8x128xf32>
    %652 = math.tanh %651 : vector<8x128xf32>
    %cst_234 = arith.constant 5.000000e-01 : f32
    %653 = vector.broadcast %cst_234 : f32 to vector<8x128xf32>
    %654 = arith.mulf %653, %652 : vector<8x128xf32>
    %cst_235 = arith.constant 5.000000e-01 : f32
    %655 = vector.broadcast %cst_235 : f32 to vector<8x128xf32>
    %656 = arith.addf %655, %654 : vector<8x128xf32>
    %657 = vector.extract_strided_slice %650 {offsets = [0, 128], sizes = [8, 128], strides = [1, 1]} : vector<8x512xf32> to vector<8x128xf32>
    %658 = math.tanh %657 : vector<8x128xf32>
    %cst_236 = arith.constant 5.000000e-01 : f32
    %659 = vector.broadcast %cst_236 : f32 to vector<8x128xf32>
    %660 = arith.mulf %659, %658 : vector<8x128xf32>
    %cst_237 = arith.constant 5.000000e-01 : f32
    %661 = vector.broadcast %cst_237 : f32 to vector<8x128xf32>
    %662 = arith.addf %661, %660 : vector<8x128xf32>
    %663 = vector.extract_strided_slice %650 {offsets = [0, 256], sizes = [8, 128], strides = [1, 1]} : vector<8x512xf32> to vector<8x128xf32>
    %664 = math.tanh %663 : vector<8x128xf32>
    %665 = vector.extract_strided_slice %650 {offsets = [0, 384], sizes = [8, 128], strides = [1, 1]} : vector<8x512xf32> to vector<8x128xf32>
    %666 = math.tanh %665 : vector<8x128xf32>
    %cst_238 = arith.constant 5.000000e-01 : f32
    %667 = vector.broadcast %cst_238 : f32 to vector<8x128xf32>
    %668 = arith.mulf %667, %666 : vector<8x128xf32>
    %cst_239 = arith.constant 5.000000e-01 : f32
    %669 = vector.broadcast %cst_239 : f32 to vector<8x128xf32>
    %670 = arith.addf %669, %668 : vector<8x128xf32>
    %671 = arith.mulf %662, %644 : vector<8x128xf32>
    %672 = arith.mulf %656, %664 : vector<8x128xf32>
    %673 = arith.addf %671, %672 : vector<8x128xf32>
    %674 = math.tanh %673 : vector<8x128xf32>
    %675 = arith.mulf %670, %674 : vector<8x128xf32>
    %c184 = arith.constant 184 : index
    %c0_240 = arith.constant 0 : index
    %676 = vector.load %arg7[%c184, %c0_240] : memref<224x512xf32, #tpu.memory_space<vmem>>, vector<8x512xf32>
    %c0_241 = arith.constant 0 : index
    %c0_242 = arith.constant 0 : index
    %677 = vector.load %arg2[%c0_241, %c0_242] : memref<128x512xf32, #tpu.memory_space<vmem>>, vector<128x512xf32>
    %cst_243 = arith.constant dense<0.000000e+00> : vector<8x512xf32>
    %678 = tpu.matmul %675, %677, %cst_243 {dimension_numbers = #tpu.dot_dimension_numbers<[1], [0], [0], [1], [0, 0, 1, 1], [], []>} : vector<8x128xf32>, vector<128x512xf32>, vector<8x512xf32> -> vector<8x512xf32>
    %679 = arith.addf %676, %678 : vector<8x512xf32>
    %680 = vector.extract_strided_slice %679 {offsets = [0, 0], sizes = [8, 128], strides = [1, 1]} : vector<8x512xf32> to vector<8x128xf32>
    %681 = math.tanh %680 : vector<8x128xf32>
    %cst_244 = arith.constant 5.000000e-01 : f32
    %682 = vector.broadcast %cst_244 : f32 to vector<8x128xf32>
    %683 = arith.mulf %682, %681 : vector<8x128xf32>
    %cst_245 = arith.constant 5.000000e-01 : f32
    %684 = vector.broadcast %cst_245 : f32 to vector<8x128xf32>
    %685 = arith.addf %684, %683 : vector<8x128xf32>
    %686 = vector.extract_strided_slice %679 {offsets = [0, 128], sizes = [8, 128], strides = [1, 1]} : vector<8x512xf32> to vector<8x128xf32>
    %687 = math.tanh %686 : vector<8x128xf32>
    %cst_246 = arith.constant 5.000000e-01 : f32
    %688 = vector.broadcast %cst_246 : f32 to vector<8x128xf32>
    %689 = arith.mulf %688, %687 : vector<8x128xf32>
    %cst_247 = arith.constant 5.000000e-01 : f32
    %690 = vector.broadcast %cst_247 : f32 to vector<8x128xf32>
    %691 = arith.addf %690, %689 : vector<8x128xf32>
    %692 = vector.extract_strided_slice %679 {offsets = [0, 256], sizes = [8, 128], strides = [1, 1]} : vector<8x512xf32> to vector<8x128xf32>
    %693 = math.tanh %692 : vector<8x128xf32>
    %694 = vector.extract_strided_slice %679 {offsets = [0, 384], sizes = [8, 128], strides = [1, 1]} : vector<8x512xf32> to vector<8x128xf32>
    %695 = math.tanh %694 : vector<8x128xf32>
    %cst_248 = arith.constant 5.000000e-01 : f32
    %696 = vector.broadcast %cst_248 : f32 to vector<8x128xf32>
    %697 = arith.mulf %696, %695 : vector<8x128xf32>
    %cst_249 = arith.constant 5.000000e-01 : f32
    %698 = vector.broadcast %cst_249 : f32 to vector<8x128xf32>
    %699 = arith.addf %698, %697 : vector<8x128xf32>
    %700 = arith.mulf %691, %673 : vector<8x128xf32>
    %701 = arith.mulf %685, %693 : vector<8x128xf32>
    %702 = arith.addf %700, %701 : vector<8x128xf32>
    %703 = math.tanh %702 : vector<8x128xf32>
    %704 = arith.mulf %699, %703 : vector<8x128xf32>
    %c192 = arith.constant 192 : index
    %c0_250 = arith.constant 0 : index
    %705 = vector.load %arg7[%c192, %c0_250] : memref<224x512xf32, #tpu.memory_space<vmem>>, vector<8x512xf32>
    %c0_251 = arith.constant 0 : index
    %c0_252 = arith.constant 0 : index
    %706 = vector.load %arg2[%c0_251, %c0_252] : memref<128x512xf32, #tpu.memory_space<vmem>>, vector<128x512xf32>
    %cst_253 = arith.constant dense<0.000000e+00> : vector<8x512xf32>
    %707 = tpu.matmul %704, %706, %cst_253 {dimension_numbers = #tpu.dot_dimension_numbers<[1], [0], [0], [1], [0, 0, 1, 1], [], []>} : vector<8x128xf32>, vector<128x512xf32>, vector<8x512xf32> -> vector<8x512xf32>
    %708 = arith.addf %705, %707 : vector<8x512xf32>
    %709 = vector.extract_strided_slice %708 {offsets = [0, 0], sizes = [8, 128], strides = [1, 1]} : vector<8x512xf32> to vector<8x128xf32>
    %710 = math.tanh %709 : vector<8x128xf32>
    %cst_254 = arith.constant 5.000000e-01 : f32
    %711 = vector.broadcast %cst_254 : f32 to vector<8x128xf32>
    %712 = arith.mulf %711, %710 : vector<8x128xf32>
    %cst_255 = arith.constant 5.000000e-01 : f32
    %713 = vector.broadcast %cst_255 : f32 to vector<8x128xf32>
    %714 = arith.addf %713, %712 : vector<8x128xf32>
    %715 = vector.extract_strided_slice %708 {offsets = [0, 128], sizes = [8, 128], strides = [1, 1]} : vector<8x512xf32> to vector<8x128xf32>
    %716 = math.tanh %715 : vector<8x128xf32>
    %cst_256 = arith.constant 5.000000e-01 : f32
    %717 = vector.broadcast %cst_256 : f32 to vector<8x128xf32>
    %718 = arith.mulf %717, %716 : vector<8x128xf32>
    %cst_257 = arith.constant 5.000000e-01 : f32
    %719 = vector.broadcast %cst_257 : f32 to vector<8x128xf32>
    %720 = arith.addf %719, %718 : vector<8x128xf32>
    %721 = vector.extract_strided_slice %708 {offsets = [0, 256], sizes = [8, 128], strides = [1, 1]} : vector<8x512xf32> to vector<8x128xf32>
    %722 = math.tanh %721 : vector<8x128xf32>
    %723 = vector.extract_strided_slice %708 {offsets = [0, 384], sizes = [8, 128], strides = [1, 1]} : vector<8x512xf32> to vector<8x128xf32>
    %724 = math.tanh %723 : vector<8x128xf32>
    %cst_258 = arith.constant 5.000000e-01 : f32
    %725 = vector.broadcast %cst_258 : f32 to vector<8x128xf32>
    %726 = arith.mulf %725, %724 : vector<8x128xf32>
    %cst_259 = arith.constant 5.000000e-01 : f32
    %727 = vector.broadcast %cst_259 : f32 to vector<8x128xf32>
    %728 = arith.addf %727, %726 : vector<8x128xf32>
    %729 = arith.mulf %720, %702 : vector<8x128xf32>
    %730 = arith.mulf %714, %722 : vector<8x128xf32>
    %731 = arith.addf %729, %730 : vector<8x128xf32>
    %732 = math.tanh %731 : vector<8x128xf32>
    %733 = arith.mulf %728, %732 : vector<8x128xf32>
    %c200 = arith.constant 200 : index
    %c0_260 = arith.constant 0 : index
    %734 = vector.load %arg7[%c200, %c0_260] : memref<224x512xf32, #tpu.memory_space<vmem>>, vector<8x512xf32>
    %c0_261 = arith.constant 0 : index
    %c0_262 = arith.constant 0 : index
    %735 = vector.load %arg2[%c0_261, %c0_262] : memref<128x512xf32, #tpu.memory_space<vmem>>, vector<128x512xf32>
    %cst_263 = arith.constant dense<0.000000e+00> : vector<8x512xf32>
    %736 = tpu.matmul %733, %735, %cst_263 {dimension_numbers = #tpu.dot_dimension_numbers<[1], [0], [0], [1], [0, 0, 1, 1], [], []>} : vector<8x128xf32>, vector<128x512xf32>, vector<8x512xf32> -> vector<8x512xf32>
    %737 = arith.addf %734, %736 : vector<8x512xf32>
    %738 = vector.extract_strided_slice %737 {offsets = [0, 0], sizes = [8, 128], strides = [1, 1]} : vector<8x512xf32> to vector<8x128xf32>
    %739 = math.tanh %738 : vector<8x128xf32>
    %cst_264 = arith.constant 5.000000e-01 : f32
    %740 = vector.broadcast %cst_264 : f32 to vector<8x128xf32>
    %741 = arith.mulf %740, %739 : vector<8x128xf32>
    %cst_265 = arith.constant 5.000000e-01 : f32
    %742 = vector.broadcast %cst_265 : f32 to vector<8x128xf32>
    %743 = arith.addf %742, %741 : vector<8x128xf32>
    %744 = vector.extract_strided_slice %737 {offsets = [0, 128], sizes = [8, 128], strides = [1, 1]} : vector<8x512xf32> to vector<8x128xf32>
    %745 = math.tanh %744 : vector<8x128xf32>
    %cst_266 = arith.constant 5.000000e-01 : f32
    %746 = vector.broadcast %cst_266 : f32 to vector<8x128xf32>
    %747 = arith.mulf %746, %745 : vector<8x128xf32>
    %cst_267 = arith.constant 5.000000e-01 : f32
    %748 = vector.broadcast %cst_267 : f32 to vector<8x128xf32>
    %749 = arith.addf %748, %747 : vector<8x128xf32>
    %750 = vector.extract_strided_slice %737 {offsets = [0, 256], sizes = [8, 128], strides = [1, 1]} : vector<8x512xf32> to vector<8x128xf32>
    %751 = math.tanh %750 : vector<8x128xf32>
    %752 = vector.extract_strided_slice %737 {offsets = [0, 384], sizes = [8, 128], strides = [1, 1]} : vector<8x512xf32> to vector<8x128xf32>
    %753 = math.tanh %752 : vector<8x128xf32>
    %cst_268 = arith.constant 5.000000e-01 : f32
    %754 = vector.broadcast %cst_268 : f32 to vector<8x128xf32>
    %755 = arith.mulf %754, %753 : vector<8x128xf32>
    %cst_269 = arith.constant 5.000000e-01 : f32
    %756 = vector.broadcast %cst_269 : f32 to vector<8x128xf32>
    %757 = arith.addf %756, %755 : vector<8x128xf32>
    %758 = arith.mulf %749, %731 : vector<8x128xf32>
    %759 = arith.mulf %743, %751 : vector<8x128xf32>
    %760 = arith.addf %758, %759 : vector<8x128xf32>
    %761 = math.tanh %760 : vector<8x128xf32>
    %762 = arith.mulf %757, %761 : vector<8x128xf32>
    %c208 = arith.constant 208 : index
    %c0_270 = arith.constant 0 : index
    %763 = vector.load %arg7[%c208, %c0_270] : memref<224x512xf32, #tpu.memory_space<vmem>>, vector<8x512xf32>
    %c0_271 = arith.constant 0 : index
    %c0_272 = arith.constant 0 : index
    %764 = vector.load %arg2[%c0_271, %c0_272] : memref<128x512xf32, #tpu.memory_space<vmem>>, vector<128x512xf32>
    %cst_273 = arith.constant dense<0.000000e+00> : vector<8x512xf32>
    %765 = tpu.matmul %762, %764, %cst_273 {dimension_numbers = #tpu.dot_dimension_numbers<[1], [0], [0], [1], [0, 0, 1, 1], [], []>} : vector<8x128xf32>, vector<128x512xf32>, vector<8x512xf32> -> vector<8x512xf32>
    %766 = arith.addf %763, %765 : vector<8x512xf32>
    %767 = vector.extract_strided_slice %766 {offsets = [0, 0], sizes = [8, 128], strides = [1, 1]} : vector<8x512xf32> to vector<8x128xf32>
    %768 = math.tanh %767 : vector<8x128xf32>
    %cst_274 = arith.constant 5.000000e-01 : f32
    %769 = vector.broadcast %cst_274 : f32 to vector<8x128xf32>
    %770 = arith.mulf %769, %768 : vector<8x128xf32>
    %cst_275 = arith.constant 5.000000e-01 : f32
    %771 = vector.broadcast %cst_275 : f32 to vector<8x128xf32>
    %772 = arith.addf %771, %770 : vector<8x128xf32>
    %773 = vector.extract_strided_slice %766 {offsets = [0, 128], sizes = [8, 128], strides = [1, 1]} : vector<8x512xf32> to vector<8x128xf32>
    %774 = math.tanh %773 : vector<8x128xf32>
    %cst_276 = arith.constant 5.000000e-01 : f32
    %775 = vector.broadcast %cst_276 : f32 to vector<8x128xf32>
    %776 = arith.mulf %775, %774 : vector<8x128xf32>
    %cst_277 = arith.constant 5.000000e-01 : f32
    %777 = vector.broadcast %cst_277 : f32 to vector<8x128xf32>
    %778 = arith.addf %777, %776 : vector<8x128xf32>
    %779 = vector.extract_strided_slice %766 {offsets = [0, 256], sizes = [8, 128], strides = [1, 1]} : vector<8x512xf32> to vector<8x128xf32>
    %780 = math.tanh %779 : vector<8x128xf32>
    %781 = vector.extract_strided_slice %766 {offsets = [0, 384], sizes = [8, 128], strides = [1, 1]} : vector<8x512xf32> to vector<8x128xf32>
    %782 = math.tanh %781 : vector<8x128xf32>
    %cst_278 = arith.constant 5.000000e-01 : f32
    %783 = vector.broadcast %cst_278 : f32 to vector<8x128xf32>
    %784 = arith.mulf %783, %782 : vector<8x128xf32>
    %cst_279 = arith.constant 5.000000e-01 : f32
    %785 = vector.broadcast %cst_279 : f32 to vector<8x128xf32>
    %786 = arith.addf %785, %784 : vector<8x128xf32>
    %787 = arith.mulf %778, %760 : vector<8x128xf32>
    %788 = arith.mulf %772, %780 : vector<8x128xf32>
    %789 = arith.addf %787, %788 : vector<8x128xf32>
    %790 = math.tanh %789 : vector<8x128xf32>
    %791 = arith.mulf %786, %790 : vector<8x128xf32>
    %c216 = arith.constant 216 : index
    %c0_280 = arith.constant 0 : index
    %792 = vector.load %arg7[%c216, %c0_280] : memref<224x512xf32, #tpu.memory_space<vmem>>, vector<8x512xf32>
    %c0_281 = arith.constant 0 : index
    %c0_282 = arith.constant 0 : index
    %793 = vector.load %arg2[%c0_281, %c0_282] : memref<128x512xf32, #tpu.memory_space<vmem>>, vector<128x512xf32>
    %cst_283 = arith.constant dense<0.000000e+00> : vector<8x512xf32>
    %794 = tpu.matmul %791, %793, %cst_283 {dimension_numbers = #tpu.dot_dimension_numbers<[1], [0], [0], [1], [0, 0, 1, 1], [], []>} : vector<8x128xf32>, vector<128x512xf32>, vector<8x512xf32> -> vector<8x512xf32>
    %795 = arith.addf %792, %794 : vector<8x512xf32>
    %796 = vector.extract_strided_slice %795 {offsets = [0, 0], sizes = [8, 128], strides = [1, 1]} : vector<8x512xf32> to vector<8x128xf32>
    %797 = math.tanh %796 : vector<8x128xf32>
    %cst_284 = arith.constant 5.000000e-01 : f32
    %798 = vector.broadcast %cst_284 : f32 to vector<8x128xf32>
    %799 = arith.mulf %798, %797 : vector<8x128xf32>
    %cst_285 = arith.constant 5.000000e-01 : f32
    %800 = vector.broadcast %cst_285 : f32 to vector<8x128xf32>
    %801 = arith.addf %800, %799 : vector<8x128xf32>
    %802 = vector.extract_strided_slice %795 {offsets = [0, 128], sizes = [8, 128], strides = [1, 1]} : vector<8x512xf32> to vector<8x128xf32>
    %803 = math.tanh %802 : vector<8x128xf32>
    %cst_286 = arith.constant 5.000000e-01 : f32
    %804 = vector.broadcast %cst_286 : f32 to vector<8x128xf32>
    %805 = arith.mulf %804, %803 : vector<8x128xf32>
    %cst_287 = arith.constant 5.000000e-01 : f32
    %806 = vector.broadcast %cst_287 : f32 to vector<8x128xf32>
    %807 = arith.addf %806, %805 : vector<8x128xf32>
    %808 = vector.extract_strided_slice %795 {offsets = [0, 256], sizes = [8, 128], strides = [1, 1]} : vector<8x512xf32> to vector<8x128xf32>
    %809 = math.tanh %808 : vector<8x128xf32>
    %810 = vector.extract_strided_slice %795 {offsets = [0, 384], sizes = [8, 128], strides = [1, 1]} : vector<8x512xf32> to vector<8x128xf32>
    %811 = math.tanh %810 : vector<8x128xf32>
    %cst_288 = arith.constant 5.000000e-01 : f32
    %812 = vector.broadcast %cst_288 : f32 to vector<8x128xf32>
    %813 = arith.mulf %812, %811 : vector<8x128xf32>
    %cst_289 = arith.constant 5.000000e-01 : f32
    %814 = vector.broadcast %cst_289 : f32 to vector<8x128xf32>
    %815 = arith.addf %814, %813 : vector<8x128xf32>
    %816 = arith.mulf %807, %789 : vector<8x128xf32>
    %817 = arith.mulf %801, %809 : vector<8x128xf32>
    %818 = arith.addf %816, %817 : vector<8x128xf32>
    %819 = math.tanh %818 : vector<8x128xf32>
    %820 = arith.mulf %815, %819 : vector<8x128xf32>
    %c0_290 = arith.constant 0 : index
    %c0_291 = arith.constant 0 : index
    %821 = vector.load %arg4[%c0_290, %c0_291] : memref<128x128xf32, #tpu.memory_space<vmem>>, vector<128x128xf32>
    %cst_292 = arith.constant dense<0.000000e+00> : vector<8x128xf32>
    %822 = tpu.matmul %820, %821, %cst_292 {dimension_numbers = #tpu.dot_dimension_numbers<[1], [0], [0], [1], [0, 0, 1, 1], [], []>} : vector<8x128xf32>, vector<128x128xf32>, vector<8x128xf32> -> vector<8x128xf32>
    %c0_293 = arith.constant 0 : index
    %c0_294 = arith.constant 0 : index
    %823 = vector.load %arg5[%c0_293, %c0_294] : memref<1x128xf32, #tpu.memory_space<vmem>>, vector<1x128xf32>
    %824 = vector.broadcast %823 : vector<1x128xf32> to vector<8x128xf32>
    %825 = arith.addf %822, %824 : vector<8x128xf32>
    %c0_295 = arith.constant 0 : index
    %c0_296 = arith.constant 0 : index
    %826 = vector.load %arg6[%c0_295, %c0_296] : memref<8x128xf32, #tpu.memory_space<vmem>>, vector<8x128xf32>
    tpu.vector_store %arg6[%c0_295, %c0_296], %825 {strides = array<i32>} : memref<8x128xf32, #tpu.memory_space<vmem>>, vector<8x128xf32>,
    return
  }
}

</mosaic_0001>

<llo_original>
// kernel: tpu_custom_call.1
$region0: #{tpu_custom_call.1}
  #allocation0 [shape = 'u32[]', space=smem, size = 0x4, offset = 0x4, fixed_abs, tag = 'smem constant byte address 0x4 - core index']
  #allocation1 [shape = 'u32[144,128]{1,0:T(1,128)}', space=vmem, size = 0x12000, scoped, tag = 'internal scratch']
  #allocation2 [shape = 'f32[224,512]{1,0:T(8,128)}', space=vmem, size = 0x70000, scoped, tag = 'scratch operand']
  %s0 = inlined_call_operand.vmem [shape: f32[224,28], index: 0, kind: input, shape index: {}]
  %s1 = inlined_call_operand.vmem [shape: f32[28,512], index: 1, kind: input, shape index: {}]
  %s2 = inlined_call_operand.hbm [shape: f32[128,512], index: 2, kind: input, shape index: {}]
  %s3 = inlined_call_operand.vmem [shape: f32[1,512], index: 3, kind: input, shape index: {}]
  %s4 = inlined_call_operand.vmem [shape: f32[128,128], index: 4, kind: input, shape index: {}]
  %s5 = inlined_call_operand.vmem [shape: f32[1,128], index: 5, kind: input, shape index: {}]
  %s6 = inlined_call_operand.hbm [shape: f32[8,128], index: 6, kind: output, shape index: {}]
  %s7 = sld [smem:[#allocation0]]
  $region38: #{tpu_custom_call.1} parent=0
    _
  %s9 = ssub.s32 1, %s7
  %s10 = scalar_select 0, %s9, %s7
  $region1: #{tpu_custom_call.1} parent=0
    #allocation3 [shape = 'u8[262144]{0}', space=vmem, size = 0x40000, scoped, tag = 'input window, operand 2, single buffered']
    #allocation4 [shape = 's32[1]{0}', space=sflag, size = 0x4, scoped, tag = 'scoped memory for tpu_custom_call.1']
    #allocation5 [shape = 's32[1]{0}', space=sflag, size = 0x4, scoped, tag = 'scoped memory for tpu_custom_call.1']
    #allocation6 [shape = 'u8[4096]{0}', space=vmem, size = 0x1000, scoped, tag = 'output window, operand 0, single buffered']
    %11 = vsyncpa [#allocation4], 0
    %12 = vsyncpa [#allocation5], 0
    // Predicated region
    $region2: #{tpu_custom_call.1} parent=1 // pred_check
      _
    $region3: #{tpu_custom_call.1} parent=1 // pred_check_branch
      %14 = sbr.rel (0) target = $region5
    $region4: #{tpu_custom_call.1} parent=1 // pred_region
      _
    $region5: #{tpu_custom_call.1} parent=1 // pred_fallthru
      _
    // Predicated region
    $region6: #{tpu_custom_call.1} parent=1 // pred_check
      _
    $region7: #{tpu_custom_call.1} parent=1 // pred_check_branch
      %16 = sbr.rel (0) target = $region9
    $region8: #{tpu_custom_call.1} parent=1 // pred_region
      _
    $region9: #{tpu_custom_call.1} parent=1 // pred_fallthru
      _
    // Predicated region
    $region10: #{tpu_custom_call.1} parent=1 // pred_check
      _
    $region11: #{tpu_custom_call.1} parent=1 // pred_check_branch
      %18 = sbr.rel (0) target = $region13
    $region12: #{tpu_custom_call.1} parent=1 // pred_region
      %s20 = ssub.s32 8192, 8192
      %21 = vsyncadd [#allocation4], %s20
      %s22 = sshll.u32 [#allocation3], 4
      %s23 = int_to_ptr.vmem [resolvable:$true] %s22
      %28 = dma.hbm_to_vmem [thread:$0]  %s2, 8192, %s23, [#allocation4], 512, 512, 32
    $region13: #{tpu_custom_call.1} parent=1 // pred_fallthru
      _
    // Predicated region
    $region14: #{tpu_custom_call.1} parent=1 // pred_check
      _
    $region15: #{tpu_custom_call.1} parent=1 // pred_check_branch
      %30 = sbr.rel (0) target = $region17
    $region16: #{tpu_custom_call.1} parent=1 // pred_region
      _
    $region17: #{tpu_custom_call.1} parent=1 // pred_fallthru
      _
    // Predicated region
    $region18: #{tpu_custom_call.1} parent=1 // pred_check
      _
    $region19: #{tpu_custom_call.1} parent=1 // pred_check_branch
      %32 = sbr.rel (0) target = $region21
    $region20: #{tpu_custom_call.1} parent=1 // pred_region
      _
    $region21: #{tpu_custom_call.1} parent=1 // pred_fallthru
      _
    // Predicated region
    $region22: #{tpu_custom_call.1} parent=1 // pred_check
      _
    $region23: #{tpu_custom_call.1} parent=1 // pred_check_branch
      %34 = sbr.rel (0) target = $region25
    $region24: #{tpu_custom_call.1} parent=1 // pred_region
      _
    $region25: #{tpu_custom_call.1} parent=1 // pred_fallthru
      _
    // Predicated region
    $region26: #{tpu_custom_call.1} parent=1 // pred_check
      _
    $region27: #{tpu_custom_call.1} parent=1 // pred_check_branch
      %36 = sbr.rel (0) target = $region29
    $region28: #{tpu_custom_call.1} parent=1 // pred_region
      %37 = dma.done [#allocation4], 8192
    $region29: #{tpu_custom_call.1} parent=1 // pred_fallthru
      _
    %v38 = vld [vmem:[%s0] sm:$0xff]
    %v39 = vld [vmem:[%s0 + $0x8] sm:$0xff]
    %v40 = vld [vmem:[%s0 + $0x10] sm:$0xff]
    %v41 = vld [vmem:[%s0 + $0x18] sm:$0xff]
    %v42 = vld [vmem:[%s0 + $0x20] sm:$0xff]
    %v43 = vld [vmem:[%s0 + $0x28] sm:$0xff]
    %v44 = vld [vmem:[%s0 + $0x30] sm:$0xff]
    %v45 = vld [vmem:[%s0 + $0x38] sm:$0xff]
    %v46 = vld [vmem:[%s0 + $0x40] sm:$0xff]
    %v47 = vld [vmem:[%s0 + $0x48] sm:$0xff]
    %v48 = vld [vmem:[%s0 + $0x50] sm:$0xff]
    %v49 = vld [vmem:[%s0 + $0x58] sm:$0xff]
    %v50 = vld [vmem:[%s0 + $0x60] sm:$0xff]
    %v51 = vld [vmem:[%s0 + $0x68] sm:$0xff]
    %v52 = vld [vmem:[%s0 + $0x70] sm:$0xff]
    %v53 = vld [vmem:[%s0 + $0x78] sm:$0xff]
    %v54 = vld [vmem:[%s0 + $0x80] sm:$0xff]
    %v55 = vld [vmem:[%s0 + $0x88] sm:$0xff]
    %v56 = vld [vmem:[%s0 + $0x90] sm:$0xff]
    %v57 = vld [vmem:[%s0 + $0x98] sm:$0xff]
    %v58 = vld [vmem:[%s0 + $0xa0] sm:$0xff]
    %v59 = vld [vmem:[%s0 + $0xa8] sm:$0xff]
    %v60 = vld [vmem:[%s0 + $0xb0] sm:$0xff]
    %v61 = vld [vmem:[%s0 + $0xb8] sm:$0xff]
    %v62 = vld [vmem:[%s0 + $0xc0] sm:$0xff]
    %v63 = vld [vmem:[%s0 + $0xc8] sm:$0xff]
    %v64 = vld [vmem:[%s0 + $0xd0] sm:$0xff]
    %v65 = vld [vmem:[%s0 + $0xd8] sm:$0xff]
    %v66 = vld [vmem:[%s1] sm:$0xff]
    %v67 = vld [vmem:[%s1 + $0x8] sm:$0xff]
    %v68 = vld [vmem:[%s1 + $0x10] sm:$0xff]
    %v69 = vld [vmem:[%s1 + $0x18] sm:$0xff]
    %v70 = vld [vmem:[%s1 + $0x20] sm:$0xff]
    %v71 = vld [vmem:[%s1 + $0x28] sm:$0xff]
    %v72 = vld [vmem:[%s1 + $0x30] sm:$0xff]
    %v73 = vld [vmem:[%s1 + $0x38] sm:$0xff]
    %v74 = vld [vmem:[%s1 + $0x40] sm:$0xff]
    %v75 = vld [vmem:[%s1 + $0x48] sm:$0xff]
    %v76 = vld [vmem:[%s1 + $0x50] sm:$0xff]
    %v77 = vld [vmem:[%s1 + $0x58] sm:$0xff]
    %v78 = vld [vmem:[%s1 + $0x60] sm:$0xf]
    %v79 = vld [vmem:[%s1 + $0x68] sm:$0xf]
    %v80 = vld [vmem:[%s1 + $0x70] sm:$0xf]
    %v81 = vld [vmem:[%s1 + $0x78] sm:$0xf]
    %v82 = vld [vmem:[%s3] sm:$0xf]
    %v84 = vlaneseq
    %v85 = vshrl.u32 %v84, 7
    %v86 = vsub.s32 0, %v85
    %v87 = vrot.slane %v82, %v86
    %v88 = vlaneseq
    %v89 = vshrl.u32 %v88, 7
    %v90 = vsub.s32 1, %v89
    %v91 = vrot.slane %v82, %v90
    %v92 = vlaneseq
    %v93 = vshrl.u32 %v92, 7
    %v94 = vsub.s32 2, %v93
    %v95 = vrot.slane %v82, %v94
    %v96 = vlaneseq
    %v97 = vshrl.u32 %v96, 7
    %v98 = vsub.s32 3, %v97
    %v99 = vrot.slane %v82, %v98
    %vm104 = vcmask 228352
    %v106 = vsel %vm104, %v38, 0
    %v109 = vsel %vm104, %v39, 0
    %v112 = vsel %vm104, %v40, 0
    %v115 = vsel %vm104, %v41, 0
    %v118 = vsel %vm104, %v42, 0
    %v121 = vsel %vm104, %v43, 0
    %v124 = vsel %vm104, %v44, 0
    %v127 = vsel %vm104, %v45, 0
    %v130 = vsel %vm104, %v46, 0
    %v133 = vsel %vm104, %v47, 0
    %v136 = vsel %vm104, %v48, 0
    %v139 = vsel %vm104, %v49, 0
    %v142 = vsel %vm104, %v50, 0
    %v145 = vsel %vm104, %v51, 0
    %v148 = vsel %vm104, %v52, 0
    %v151 = vsel %vm104, %v53, 0
    %v154 = vsel %vm104, %v54, 0
    %v157 = vsel %vm104, %v55, 0
    %v160 = vsel %vm104, %v56, 0
    %v163 = vsel %vm104, %v57, 0
    %v166 = vsel %vm104, %v58, 0
    %v169 = vsel %vm104, %v59, 0
    %v172 = vsel %vm104, %v60, 0
    %v175 = vsel %vm104, %v61, 0
    %v178 = vsel %vm104, %v62, 0
    %v181 = vsel %vm104, %v63, 0
    %v184 = vsel %vm104, %v64, 0
    %v187 = vsel %vm104, %v65, 0
    %vm189 = vcmask 1043456
    %v191 = vsel %vm189, %v78, 0
    %v194 = vsel %vm189, %v79, 0
    %v197 = vsel %vm189, %v80, 0
    %v200 = vsel %vm189, %v81, 0
    %202 = vmatprep.subr.mxu0 0.0
    %203 = vmatpush1.msra.mxu0 0.0
    %204 = vmatprep.subr.mxu0 0.0
    %205 = vmatpush1.msra.mxu0 0.0
    %206 = vmatprep.subr.mxu0 0.0
    %207 = vmatpush1.msra.mxu0 0.0
    %208 = vmatprep.subr.mxu0 0.0
    %209 = vmatpush1.msra.mxu0 0.0
    %210 = vmatprep.subr.mxu0 0.0
    %211 = vmatpush1.msra.mxu0 0.0
    %212 = vmatprep.subr.mxu0 0.0
    %213 = vmatpush1.msra.mxu0 0.0
    %214 = vmatprep.subr.mxu0 0.0
    %215 = vmatpush1.msra.mxu0 0.0
    %216 = vmatprep.subr.mxu0 0.0
    %217 = vmatpush1.msra.mxu0 0.0
    %218 = vmatprep.subr.mxu0 0.0
    %219 = vmatpush1.msra.mxu0 0.0
    %220 = vmatprep.subr.mxu0 0.0
    %221 = vmatpush1.msra.mxu0 0.0
    %222 = vmatprep.subr.mxu0 0.0
    %223 = vmatpush1.msra.mxu0 0.0
    %224 = vmatprep.subr.mxu0 0.0
    %225 = vmatpush1.msra.mxu0 0.0
    %226 = vmatprep.subr.mxu0 %v194
    %227 = vmatpush1.msra.mxu0 %v191
    %228 = vmatprep.subr.mxu0 %v75
    %229 = vmatpush1.msra.mxu0 %v74
    %230 = vmatprep.subr.mxu0 %v71
    %231 = vmatpush1.msra.mxu0 %v70
    %232 = vmatprep.subr.mxu0 %v67
    %233 = vmatpush1.msra.mxu0 %v66
    %234 = vmatprep.subr.mxu0 0.0
    %235 = vmatpush2.msra.mxu0 0.0
    %236 = vmatprep.subr.mxu0 0.0
    %237 = vmatpush2.msra.mxu0 0.0
    %238 = vmatprep.subr.mxu0 0.0
    %239 = vmatpush2.msra.mxu0 0.0
    %240 = vmatprep.subr.mxu0 0.0
    %241 = vmatpush2.msra.mxu0 0.0
    %242 = vmatprep.subr.mxu0 0.0
    %243 = vmatpush2.msra.mxu0 0.0
    %244 = vmatprep.subr.mxu0 0.0
    %245 = vmatpush2.msra.mxu0 0.0
    %246 = vmatprep.subr.mxu0 0.0
    %247 = vmatpush2.msra.mxu0 0.0
    %248 = vmatprep.subr.mxu0 0.0
    %249 = vmatpush2.msra.mxu0 0.0
    %250 = vmatprep.subr.mxu0 0.0
    %251 = vmatpush2.msra.mxu0 0.0
    %252 = vmatprep.subr.mxu0 0.0
    %253 = vmatpush2.msra.mxu0 0.0
    %254 = vmatprep.subr.mxu0 0.0
    %255 = vmatpush2.msra.mxu0 0.0
    %256 = vmatprep.subr.mxu0 0.0
    %257 = vmatpush2.msra.mxu0 0.0
    %258 = vmatprep.subr.mxu0 0.0
    %259 = vmatpush2.msra.mxu0 0.0
    %260 = vmatprep.subr.mxu0 0.0
    %261 = vmatpush2.msra.mxu0 0.0
    %262 = vmatprep.subr.mxu0 0.0
    %263 = vmatpush2.msra.mxu0 0.0
    %264 = vmatprep.subr.mxu0 0.0
    %265 = vmatpush2.msra.mxu0 0.0
    %266 = vmatprep.mubr.f32.mxu0 0.0
    %267 = vmatmul.mubr.f32.gmra.mxu0 %v106
    %v268 = vpop.f32.mrf.mxu0
    %v269 = vadd.f32 %v87, %v268
    %v270 = vpop.f32.mrf.mxu0
    %v271 = vadd.f32 %v91, %v270
    %272 = vmatprep.mubr.f32.mxu0 0.0
    %273 = vmatmul.mubr.f32.gmra.mxu0 %v109
    %v274 = vpop.f32.mrf.mxu0
    %v275 = vadd.f32 %v87, %v274
    %v276 = vpop.f32.mrf.mxu0
    %v277 = vadd.f32 %v91, %v276
    %278 = vmatprep.mubr.f32.mxu0 0.0
    %279 = vmatmul.mubr.f32.gmra.mxu0 %v112
    %v280 = vpop.f32.mrf.mxu0
    %v281 = vadd.f32 %v87, %v280
    %v282 = vpop.f32.mrf.mxu0
    %v283 = vadd.f32 %v91, %v282
    %284 = vmatprep.mubr.f32.mxu0 0.0
    %285 = vmatmul.mubr.f32.gmra.mxu0 %v115
    %v286 = vpop.f32.mrf.mxu0
    %v287 = vadd.f32 %v87, %v286
    %v288 = vpop.f32.mrf.mxu0
    %v289 = vadd.f32 %v91, %v288
    %290 = vmatprep.mubr.f32.mxu0 0.0
    %291 = vmatmul.mubr.f32.gmra.mxu0 %v118
    %v292 = vpop.f32.mrf.mxu0
    %v293 = vadd.f32 %v87, %v292
    %v294 = vpop.f32.mrf.mxu0
    %v295 = vadd.f32 %v91, %v294
    %296 = vmatprep.mubr.f32.mxu0 0.0
    %297 = vmatmul.mubr.f32.gmra.mxu0 %v121
    %v298 = vpop.f32.mrf.mxu0
    %v299 = vadd.f32 %v87, %v298
    %v300 = vpop.f32.mrf.mxu0
    %v301 = vadd.f32 %v91, %v300
    %302 = vmatprep.mubr.f32.mxu0 0.0
    %303 = vmatmul.mubr.f32.gmra.mxu0 %v124
    %v304 = vpop.f32.mrf.mxu0
    %v305 = vadd.f32 %v87, %v304
    %v306 = vpop.f32.mrf.mxu0
    %v307 = vadd.f32 %v91, %v306
    %308 = vmatprep.mubr.f32.mxu0 0.0
    %309 = vmatmul.mubr.f32.gmra.mxu0 %v127
    %v310 = vpop.f32.mrf.mxu0
    %v311 = vadd.f32 %v87, %v310
    %v312 = vpop.f32.mrf.mxu0
    %v313 = vadd.f32 %v91, %v312
    %314 = vmatprep.mubr.f32.mxu0 0.0
    %315 = vmatmul.mubr.f32.gmra.mxu0 %v130
    %v316 = vpop.f32.mrf.mxu0
    %v317 = vadd.f32 %v87, %v316
    %v318 = vpop.f32.mrf.mxu0
    %v319 = vadd.f32 %v91, %v318
    %320 = vmatprep.mubr.f32.mxu0 0.0
    %321 = vmatmul.mubr.f32.gmra.mxu0 %v133
    %v322 = vpop.f32.mrf.mxu0
    %v323 = vadd.f32 %v87, %v322
    %v324 = vpop.f32.mrf.mxu0
    %v325 = vadd.f32 %v91, %v324
    %326 = vmatprep.mubr.f32.mxu0 0.0
    %327 = vmatmul.mubr.f32.gmra.mxu0 %v136
    %v328 = vpop.f32.mrf.mxu0
    %v329 = vadd.f32 %v87, %v328
    %v330 = vpop.f32.mrf.mxu0
    %v331 = vadd.f32 %v91, %v330
    %332 = vmatprep.mubr.f32.mxu0 0.0
    %333 = vmatmul.mubr.f32.gmra.mxu0 %v139
    %v334 = vpop.f32.mrf.mxu0
    %v335 = vadd.f32 %v87, %v334
    %v336 = vpop.f32.mrf.mxu0
    %v337 = vadd.f32 %v91, %v336
    %338 = vmatprep.mubr.f32.mxu0 0.0
    %339 = vmatmul.mubr.f32.gmra.mxu0 %v142
    %v340 = vpop.f32.mrf.mxu0
    %v341 = vadd.f32 %v87, %v340
    %v342 = vpop.f32.mrf.mxu0
    %v343 = vadd.f32 %v91, %v342
    %344 = vmatprep.mubr.f32.mxu0 0.0
    %345 = vmatmul.mubr.f32.gmra.mxu0 %v145
    %v346 = vpop.f32.mrf.mxu0
    %v347 = vadd.f32 %v87, %v346
    %v348 = vpop.f32.mrf.mxu0
    %v349 = vadd.f32 %v91, %v348
    %350 = vmatprep.mubr.f32.mxu0 0.0
    %351 = vmatmul.mubr.f32.gmra.mxu0 %v148
    %v352 = vpop.f32.mrf.mxu0
    %v353 = vadd.f32 %v87, %v352
    %v354 = vpop.f32.mrf.mxu0
    %v355 = vadd.f32 %v91, %v354
    %356 = vmatprep.mubr.f32.mxu0 0.0
    %357 = vmatmul.mubr.f32.gmra.mxu0 %v151
    %v358 = vpop.f32.mrf.mxu0
    %v359 = vadd.f32 %v87, %v358
    %v360 = vpop.f32.mrf.mxu0
    %v361 = vadd.f32 %v91, %v360
    %362 = vmatprep.mubr.f32.mxu0 0.0
    %363 = vmatmul.mubr.f32.gmra.mxu0 %v154
    %v364 = vpop.f32.mrf.mxu0
    %v365 = vadd.f32 %v87, %v364
    %v366 = vpop.f32.mrf.mxu0
    %v367 = vadd.f32 %v91, %v366
    %368 = vmatprep.mubr.f32.mxu0 0.0
    %369 = vmatmul.mubr.f32.gmra.mxu0 %v157
    %v370 = vpop.f32.mrf.mxu0
    %v371 = vadd.f32 %v87, %v370
    %v372 = vpop.f32.mrf.mxu0
    %v373 = vadd.f32 %v91, %v372
    %374 = vmatprep.mubr.f32.mxu0 0.0
    %375 = vmatmul.mubr.f32.gmra.mxu0 %v160
    %v376 = vpop.f32.mrf.mxu0
    %v377 = vadd.f32 %v87, %v376
    %v378 = vpop.f32.mrf.mxu0
    %v379 = vadd.f32 %v91, %v378
    %380 = vmatprep.mubr.f32.mxu0 0.0
    %381 = vmatmul.mubr.f32.gmra.mxu0 %v163
    %v382 = vpop.f32.mrf.mxu0
    %v383 = vadd.f32 %v87, %v382
    %v384 = vpop.f32.mrf.mxu0
    %v385 = vadd.f32 %v91, %v384
    %386 = vmatprep.mubr.f32.mxu0 0.0
    %387 = vmatmul.mubr.f32.gmra.mxu0 %v166
    %v388 = vpop.f32.mrf.mxu0
    %v389 = vadd.f32 %v87, %v388
    %v390 = vpop.f32.mrf.mxu0
    %v391 = vadd.f32 %v91, %v390
    %392 = vmatprep.mubr.f32.mxu0 0.0
    %393 = vmatmul.mubr.f32.gmra.mxu0 %v169
    %v394 = vpop.f32.mrf.mxu0
    %v395 = vadd.f32 %v87, %v394
    %v396 = vpop.f32.mrf.mxu0
    %v397 = vadd.f32 %v91, %v396
    %398 = vmatprep.mubr.f32.mxu0 0.0
    %399 = vmatmul.mubr.f32.gmra.mxu0 %v172
    %v400 = vpop.f32.mrf.mxu0
    %v401 = vadd.f32 %v87, %v400
    %v402 = vpop.f32.mrf.mxu0
    %v403 = vadd.f32 %v91, %v402
    %404 = vmatprep.mubr.f32.mxu0 0.0
    %405 = vmatmul.mubr.f32.gmra.mxu0 %v175
    %v406 = vpop.f32.mrf.mxu0
    %v407 = vadd.f32 %v87, %v406
    %v408 = vpop.f32.mrf.mxu0
    %v409 = vadd.f32 %v91, %v408
    %410 = vmatprep.mubr.f32.mxu0 0.0
    %411 = vmatmul.mubr.f32.gmra.mxu0 %v178
    %v412 = vpop.f32.mrf.mxu0
    %v413 = vadd.f32 %v87, %v412
    %v414 = vpop.f32.mrf.mxu0
    %v415 = vadd.f32 %v91, %v414
    %416 = vmatprep.mubr.f32.mxu0 0.0
    %417 = vmatmul.mubr.f32.gmra.mxu0 %v181
    %v418 = vpop.f32.mrf.mxu0
    %v419 = vadd.f32 %v87, %v418
    %v420 = vpop.f32.mrf.mxu0
    %v421 = vadd.f32 %v91, %v420
    %422 = vmatprep.mubr.f32.mxu0 0.0
    %423 = vmatmul.mubr.f32.gmra.mxu0 %v184
    %v424 = vpop.f32.mrf.mxu0
    %v425 = vadd.f32 %v87, %v424
    %v426 = vpop.f32.mrf.mxu0
    %v427 = vadd.f32 %v91, %v426
    %428 = vmatprep.mubr.f32.mxu0 0.0
    %429 = vmatmul.mubr.f32.gmra.mxu0 %v187
    %v430 = vpop.f32.mrf.mxu0
    %v431 = vadd.f32 %v87, %v430
    %v432 = vpop.f32.mrf.mxu0
    %v433 = vadd.f32 %v91, %v432
    %434 = vdwg.mxu0
    %435 = vmatprep.subr.mxu0 0.0
    %436 = vmatpush1.msra.mxu0 0.0
    %437 = vmatprep.subr.mxu0 0.0
    %438 = vmatpush1.msra.mxu0 0.0
    %439 = vmatprep.subr.mxu0 0.0
    %440 = vmatpush1.msra.mxu0 0.0
    %441 = vmatprep.subr.mxu0 0.0
    %442 = vmatpush1.msra.mxu0 0.0
    %443 = vmatprep.subr.mxu0 0.0
    %444 = vmatpush1.msra.mxu0 0.0
    %445 = vmatprep.subr.mxu0 0.0
    %446 = vmatpush1.msra.mxu0 0.0
    %447 = vmatprep.subr.mxu0 0.0
    %448 = vmatpush1.msra.mxu0 0.0
    %449 = vmatprep.subr.mxu0 0.0
    %450 = vmatpush1.msra.mxu0 0.0
    %451 = vmatprep.subr.mxu0 0.0
    %452 = vmatpush1.msra.mxu0 0.0
    %453 = vmatprep.subr.mxu0 0.0
    %454 = vmatpush1.msra.mxu0 0.0
    %455 = vmatprep.subr.mxu0 0.0
    %456 = vmatpush1.msra.mxu0 0.0
    %457 = vmatprep.subr.mxu0 0.0
    %458 = vmatpush1.msra.mxu0 0.0
    %459 = vmatprep.subr.mxu0 %v200
    %460 = vmatpush1.msra.mxu0 %v197
    %461 = vmatprep.subr.mxu0 %v77
    %462 = vmatpush1.msra.mxu0 %v76
    %463 = vmatprep.subr.mxu0 %v73
    %464 = vmatpush1.msra.mxu0 %v72
    %465 = vmatprep.subr.mxu0 %v69
    %466 = vmatpush1.msra.mxu0 %v68
    %467 = vmatprep.subr.mxu0 0.0
    %468 = vmatpush2.msra.mxu0 0.0
    %469 = vmatprep.subr.mxu0 0.0
    %470 = vmatpush2.msra.mxu0 0.0
    %471 = vmatprep.subr.mxu0 0.0
    %472 = vmatpush2.msra.mxu0 0.0
    %473 = vmatprep.subr.mxu0 0.0
    %474 = vmatpush2.msra.mxu0 0.0
    %475 = vmatprep.subr.mxu0 0.0
    %476 = vmatpush2.msra.mxu0 0.0
    %477 = vmatprep.subr.mxu0 0.0
    %478 = vmatpush2.msra.mxu0 0.0
    %479 = vmatprep.subr.mxu0 0.0
    %480 = vmatpush2.msra.mxu0 0.0
    %481 = vmatprep.subr.mxu0 0.0
    %482 = vmatpush2.msra.mxu0 0.0
    %483 = vmatprep.subr.mxu0 0.0
    %484 = vmatpush2.msra.mxu0 0.0
    %485 = vmatprep.subr.mxu0 0.0
    %486 = vmatpush2.msra.mxu0 0.0
    %487 = vmatprep.subr.mxu0 0.0
    %488 = vmatpush2.msra.mxu0 0.0
    %489 = vmatprep.subr.mxu0 0.0
    %490 = vmatpush2.msra.mxu0 0.0
    %491 = vmatprep.subr.mxu0 0.0
    %492 = vmatpush2.msra.mxu0 0.0
    %493 = vmatprep.subr.mxu0 0.0
    %494 = vmatpush2.msra.mxu0 0.0
    %495 = vmatprep.subr.mxu0 0.0
    %496 = vmatpush2.msra.mxu0 0.0
    %497 = vmatprep.subr.mxu0 0.0
    %498 = vmatpush2.msra.mxu0 0.0
    %499 = vmatprep.mubr.f32.mxu0 0.0
    %500 = vmatmul.mubr.f32.gmra.mxu0 %v106
    %v501 = vpop.f32.mrf.mxu0
    %v502 = vadd.f32 %v95, %v501
    %v503 = vpop.f32.mrf.mxu0
    %v504 = vadd.f32 %v99, %v503
    %505 = vmatprep.mubr.f32.mxu0 0.0
    %506 = vmatmul.mubr.f32.gmra.mxu0 %v109
    %v507 = vpop.f32.mrf.mxu0
    %v508 = vadd.f32 %v95, %v507
    %v509 = vpop.f32.mrf.mxu0
    %v510 = vadd.f32 %v99, %v509
    %511 = vmatprep.mubr.f32.mxu0 0.0
    %512 = vmatmul.mubr.f32.gmra.mxu0 %v112
    %v513 = vpop.f32.mrf.mxu0
    %v514 = vadd.f32 %v95, %v513
    %v515 = vpop.f32.mrf.mxu0
    %v516 = vadd.f32 %v99, %v515
    %517 = vmatprep.mubr.f32.mxu0 0.0
    %518 = vmatmul.mubr.f32.gmra.mxu0 %v115
    %v519 = vpop.f32.mrf.mxu0
    %v520 = vadd.f32 %v95, %v519
    %v521 = vpop.f32.mrf.mxu0
    %v522 = vadd.f32 %v99, %v521
    %523 = vmatprep.mubr.f32.mxu0 0.0
    %524 = vmatmul.mubr.f32.gmra.mxu0 %v118
    %v525 = vpop.f32.mrf.mxu0
    %v526 = vadd.f32 %v95, %v525
    %v527 = vpop.f32.mrf.mxu0
    %v528 = vadd.f32 %v99, %v527
    %529 = vmatprep.mubr.f32.mxu0 0.0
    %530 = vmatmul.mubr.f32.gmra.mxu0 %v121
    %v531 = vpop.f32.mrf.mxu0
    %v532 = vadd.f32 %v95, %v531
    %v533 = vpop.f32.mrf.mxu0
    %v534 = vadd.f32 %v99, %v533
    %535 = vmatprep.mubr.f32.mxu0 0.0
    %536 = vmatmul.mubr.f32.gmra.mxu0 %v124
    %v537 = vpop.f32.mrf.mxu0
    %v538 = vadd.f32 %v95, %v537
    %v539 = vpop.f32.mrf.mxu0
    %v540 = vadd.f32 %v99, %v539
    %541 = vmatprep.mubr.f32.mxu0 0.0
    %542 = vmatmul.mubr.f32.gmra.mxu0 %v127
    %v543 = vpop.f32.mrf.mxu0
    %v544 = vadd.f32 %v95, %v543
    %v545 = vpop.f32.mrf.mxu0
    %v546 = vadd.f32 %v99, %v545
    %547 = vmatprep.mubr.f32.mxu0 0.0
    %548 = vmatmul.mubr.f32.gmra.mxu0 %v130
    %v549 = vpop.f32.mrf.mxu0
    %v550 = vadd.f32 %v95, %v549
    %v551 = vpop.f32.mrf.mxu0
    %v552 = vadd.f32 %v99, %v551
    %553 = vmatprep.mubr.f32.mxu0 0.0
    %554 = vmatmul.mubr.f32.gmra.mxu0 %v133
    %v555 = vpop.f32.mrf.mxu0
    %v556 = vadd.f32 %v95, %v555
    %v557 = vpop.f32.mrf.mxu0
    %v558 = vadd.f32 %v99, %v557
    %559 = vmatprep.mubr.f32.mxu0 0.0
    %560 = vmatmul.mubr.f32.gmra.mxu0 %v136
    %v561 = vpop.f32.mrf.mxu0
    %v562 = vadd.f32 %v95, %v561
    %v563 = vpop.f32.mrf.mxu0
    %v564 = vadd.f32 %v99, %v563
    %565 = vmatprep.mubr.f32.mxu0 0.0
    %566 = vmatmul.mubr.f32.gmra.mxu0 %v139
    %v567 = vpop.f32.mrf.mxu0
    %v568 = vadd.f32 %v95, %v567
    %v569 = vpop.f32.mrf.mxu0
    %v570 = vadd.f32 %v99, %v569
    %571 = vmatprep.mubr.f32.mxu0 0.0
    %572 = vmatmul.mubr.f32.gmra.mxu0 %v142
    %v573 = vpop.f32.mrf.mxu0
    %v574 = vadd.f32 %v95, %v573
    %v575 = vpop.f32.mrf.mxu0
    %v576 = vadd.f32 %v99, %v575
    %577 = vmatprep.mubr.f32.mxu0 0.0
    %578 = vmatmul.mubr.f32.gmra.mxu0 %v145
    %v579 = vpop.f32.mrf.mxu0
    %v580 = vadd.f32 %v95, %v579
    %v581 = vpop.f32.mrf.mxu0
    %v582 = vadd.f32 %v99, %v581
    %583 = vmatprep.mubr.f32.mxu0 0.0
    %584 = vmatmul.mubr.f32.gmra.mxu0 %v148
    %v585 = vpop.f32.mrf.mxu0
    %v586 = vadd.f32 %v95, %v585
    %v587 = vpop.f32.mrf.mxu0
    %v588 = vadd.f32 %v99, %v587
    %589 = vmatprep.mubr.f32.mxu0 0.0
    %590 = vmatmul.mubr.f32.gmra.mxu0 %v151
    %v591 = vpop.f32.mrf.mxu0
    %v592 = vadd.f32 %v95, %v591
    %v593 = vpop.f32.mrf.mxu0
    %v594 = vadd.f32 %v99, %v593
    %595 = vmatprep.mubr.f32.mxu0 0.0
    %596 = vmatmul.mubr.f32.gmra.mxu0 %v154
    %v597 = vpop.f32.mrf.mxu0
    %v598 = vadd.f32 %v95, %v597
    %v599 = vpop.f32.mrf.mxu0
    %v600 = vadd.f32 %v99, %v599
    %601 = vmatprep.mubr.f32.mxu0 0.0
    %602 = vmatmul.mubr.f32.gmra.mxu0 %v157
    %v603 = vpop.f32.mrf.mxu0
    %v604 = vadd.f32 %v95, %v603
    %v605 = vpop.f32.mrf.mxu0
    %v606 = vadd.f32 %v99, %v605
    %607 = vmatprep.mubr.f32.mxu0 0.0
    %608 = vmatmul.mubr.f32.gmra.mxu0 %v160
    %v609 = vpop.f32.mrf.mxu0
    %v610 = vadd.f32 %v95, %v609
    %v611 = vpop.f32.mrf.mxu0
    %v612 = vadd.f32 %v99, %v611
    %613 = vmatprep.mubr.f32.mxu0 0.0
    %614 = vmatmul.mubr.f32.gmra.mxu0 %v163
    %v615 = vpop.f32.mrf.mxu0
    %v616 = vadd.f32 %v95, %v615
    %v617 = vpop.f32.mrf.mxu0
    %v618 = vadd.f32 %v99, %v617
    %619 = vmatprep.mubr.f32.mxu0 0.0
    %620 = vmatmul.mubr.f32.gmra.mxu0 %v166
    %v621 = vpop.f32.mrf.mxu0
    %v622 = vadd.f32 %v95, %v621
    %v623 = vpop.f32.mrf.mxu0
    %v624 = vadd.f32 %v99, %v623
    %625 = vmatprep.mubr.f32.mxu0 0.0
    %626 = vmatmul.mubr.f32.gmra.mxu0 %v169
    %v627 = vpop.f32.mrf.mxu0
    %v628 = vadd.f32 %v95, %v627
    %v629 = vpop.f32.mrf.mxu0
    %v630 = vadd.f32 %v99, %v629
    %631 = vmatprep.mubr.f32.mxu0 0.0
    %632 = vmatmul.mubr.f32.gmra.mxu0 %v172
    %v633 = vpop.f32.mrf.mxu0
    %v634 = vadd.f32 %v95, %v633
    %v635 = vpop.f32.mrf.mxu0
    %v636 = vadd.f32 %v99, %v635
    %637 = vmatprep.mubr.f32.mxu0 0.0
    %638 = vmatmul.mubr.f32.gmra.mxu0 %v175
    %v639 = vpop.f32.mrf.mxu0
    %v640 = vadd.f32 %v95, %v639
    %v641 = vpop.f32.mrf.mxu0
    %v642 = vadd.f32 %v99, %v641
    %643 = vmatprep.mubr.f32.mxu0 0.0
    %644 = vmatmul.mubr.f32.gmra.mxu0 %v178
    %v645 = vpop.f32.mrf.mxu0
    %v646 = vadd.f32 %v95, %v645
    %v647 = vpop.f32.mrf.mxu0
    %v648 = vadd.f32 %v99, %v647
    %649 = vmatprep.mubr.f32.mxu0 0.0
    %650 = vmatmul.mubr.f32.gmra.mxu0 %v181
    %v651 = vpop.f32.mrf.mxu0
    %v652 = vadd.f32 %v95, %v651
    %v653 = vpop.f32.mrf.mxu0
    %v654 = vadd.f32 %v99, %v653
    %655 = vmatprep.mubr.f32.mxu0 0.0
    %656 = vmatmul.mubr.f32.gmra.mxu0 %v184
    %v657 = vpop.f32.mrf.mxu0
    %v658 = vadd.f32 %v95, %v657
    %v659 = vpop.f32.mrf.mxu0
    %v660 = vadd.f32 %v99, %v659
    %661 = vmatprep.mubr.f32.mxu0 0.0
    %662 = vmatmul.mubr.f32.gmra.mxu0 %v187
    %v663 = vpop.f32.mrf.mxu0
    %v664 = vadd.f32 %v95, %v663
    %v665 = vpop.f32.mrf.mxu0
    %v666 = vadd.f32 %v99, %v665
    %667 = vdwg.mxu0
    %668 = vst [vmem:[#allocation2] sm:$0xff] %v269
    %669 = vst [vmem:[#allocation2 + $0x8] sm:$0xff] %v271
    %670 = vst [vmem:[#allocation2 + $0x10] sm:$0xff] %v502
    %671 = vst [vmem:[#allocation2 + $0x18] sm:$0xff] %v504
    %672 = vst [vmem:[#allocation2 + $0x20] sm:$0xff] %v275
    %673 = vst [vmem:[#allocation2 + $0x28] sm:$0xff] %v277
    %674 = vst [vmem:[#allocation2 + $0x30] sm:$0xff] %v508
    %675 = vst [vmem:[#allocation2 + $0x38] sm:$0xff] %v510
    %676 = vst [vmem:[#allocation2 + $0x40] sm:$0xff] %v281
    %677 = vst [vmem:[#allocation2 + $0x48] sm:$0xff] %v283
    %678 = vst [vmem:[#allocation2 + $0x50] sm:$0xff] %v514
    %679 = vst [vmem:[#allocation2 + $0x58] sm:$0xff] %v516
    %680 = vst [vmem:[#allocation2 + $0x60] sm:$0xff] %v287
    %681 = vst [vmem:[#allocation2 + $0x68] sm:$0xff] %v289
    %682 = vst [vmem:[#allocation2 + $0x70] sm:$0xff] %v520
    %683 = vst [vmem:[#allocation2 + $0x78] sm:$0xff] %v522
    %684 = vst [vmem:[#allocation2 + $0x80] sm:$0xff] %v293
    %685 = vst [vmem:[#allocation2 + $0x88] sm:$0xff] %v295
    %686 = vst [vmem:[#allocation2 + $0x90] sm:$0xff] %v526
    %687 = vst [vmem:[#allocation2 + $0x98] sm:$0xff] %v528
    %688 = vst [vmem:[#allocation2 + $0xa0] sm:$0xff] %v299
    %689 = vst [vmem:[#allocation2 + $0xa8] sm:$0xff] %v301
    %690 = vst [vmem:[#allocation2 + $0xb0] sm:$0xff] %v532
    %691 = vst [vmem:[#allocation2 + $0xb8] sm:$0xff] %v534
    %692 = vst [vmem:[#allocation2 + $0xc0] sm:$0xff] %v305
    %693 = vst [vmem:[#allocation2 + $0xc8] sm:$0xff] %v307
    %694 = vst [vmem:[#allocation2 + $0xd0] sm:$0xff] %v538
    %695 = vst [vmem:[#allocation2 + $0xd8] sm:$0xff] %v540
    %696 = vst [vmem:[#allocation2 + $0xe0] sm:$0xff] %v311
    %697 = vst [vmem:[#allocation2 + $0xe8] sm:$0xff] %v313
    %698 = vst [vmem:[#allocation2 + $0xf0] sm:$0xff] %v544
    %699 = vst [vmem:[#allocation2 + $0xf8] sm:$0xff] %v546
    %700 = vst [vmem:[#allocation2 + $0x100] sm:$0xff] %v317
    %701 = vst [vmem:[#allocation2 + $0x108] sm:$0xff] %v319
    %702 = vst [vmem:[#allocation2 + $0x110] sm:$0xff] %v550
    %703 = vst [vmem:[#allocation2 + $0x118] sm:$0xff] %v552
    %704 = vst [vmem:[#allocation2 + $0x120] sm:$0xff] %v323
    %705 = vst [vmem:[#allocation2 + $0x128] sm:$0xff] %v325
    %706 = vst [vmem:[#allocation2 + $0x130] sm:$0xff] %v556
    %707 = vst [vmem:[#allocation2 + $0x138] sm:$0xff] %v558
    %708 = vst [vmem:[#allocation2 + $0x140] sm:$0xff] %v329
    %709 = vst [vmem:[#allocation2 + $0x148] sm:$0xff] %v331
    %710 = vst [vmem:[#allocation2 + $0x150] sm:$0xff] %v562
    %711 = vst [vmem:[#allocation2 + $0x158] sm:$0xff] %v564
    %712 = vst [vmem:[#allocation2 + $0x160] sm:$0xff] %v335
    %713 = vst [vmem:[#allocation2 + $0x168] sm:$0xff] %v337
    %714 = vst [vmem:[#allocation2 + $0x170] sm:$0xff] %v568
    %715 = vst [vmem:[#allocation2 + $0x178] sm:$0xff] %v570
    %716 = vst [vmem:[#allocation2 + $0x180] sm:$0xff] %v341
    %717 = vst [vmem:[#allocation2 + $0x188] sm:$0xff] %v343
    %718 = vst [vmem:[#allocation2 + $0x190] sm:$0xff] %v574
    %719 = vst [vmem:[#allocation2 + $0x198] sm:$0xff] %v576
    %720 = vst [vmem:[#allocation2 + $0x1a0] sm:$0xff] %v347
    %721 = vst [vmem:[#allocation2 + $0x1a8] sm:$0xff] %v349
    %722 = vst [vmem:[#allocation2 + $0x1b0] sm:$0xff] %v580
    %723 = vst [vmem:[#allocation2 + $0x1b8] sm:$0xff] %v582
    %724 = vst [vmem:[#allocation2 + $0x1c0] sm:$0xff] %v353
    %725 = vst [vmem:[#allocation2 + $0x1c8] sm:$0xff] %v355
    %726 = vst [vmem:[#allocation2 + $0x1d0] sm:$0xff] %v586
    %727 = vst [vmem:[#allocation2 + $0x1d8] sm:$0xff] %v588
    %728 = vst [vmem:[#allocation2 + $0x1e0] sm:$0xff] %v359
    %729 = vst [vmem:[#allocation2 + $0x1e8] sm:$0xff] %v361
    %730 = vst [vmem:[#allocation2 + $0x1f0] sm:$0xff] %v592
    %731 = vst [vmem:[#allocation2 + $0x1f8] sm:$0xff] %v594
    %732 = vst [vmem:[#allocation2 + $0x200] sm:$0xff] %v365
    %733 = vst [vmem:[#allocation2 + $0x208] sm:$0xff] %v367
    %734 = vst [vmem:[#allocation2 + $0x210] sm:$0xff] %v598
    %735 = vst [vmem:[#allocation2 + $0x218] sm:$0xff] %v600
    %736 = vst [vmem:[#allocation2 + $0x220] sm:$0xff] %v371
    %737 = vst [vmem:[#allocation2 + $0x228] sm:$0xff] %v373
    %738 = vst [vmem:[#allocation2 + $0x230] sm:$0xff] %v604
    %739 = vst [vmem:[#allocation2 + $0x238] sm:$0xff] %v606
    %740 = vst [vmem:[#allocation2 + $0x240] sm:$0xff] %v377
    %741 = vst [vmem:[#allocation2 + $0x248] sm:$0xff] %v379
    %742 = vst [vmem:[#allocation2 + $0x250] sm:$0xff] %v610
    %743 = vst [vmem:[#allocation2 + $0x258] sm:$0xff] %v612
    %744 = vst [vmem:[#allocation2 + $0x260] sm:$0xff] %v383
    %745 = vst [vmem:[#allocation2 + $0x268] sm:$0xff] %v385
    %746 = vst [vmem:[#allocation2 + $0x270] sm:$0xff] %v616
    %747 = vst [vmem:[#allocation2 + $0x278] sm:$0xff] %v618
    %748 = vst [vmem:[#allocation2 + $0x280] sm:$0xff] %v389
    %749 = vst [vmem:[#allocation2 + $0x288] sm:$0xff] %v391
    %750 = vst [vmem:[#allocation2 + $0x290] sm:$0xff] %v622
    %751 = vst [vmem:[#allocation2 + $0x298] sm:$0xff] %v624
    %752 = vst [vmem:[#allocation2 + $0x2a0] sm:$0xff] %v395
    %753 = vst [vmem:[#allocation2 + $0x2a8] sm:$0xff] %v397
    %754 = vst [vmem:[#allocation2 + $0x2b0] sm:$0xff] %v628
    %755 = vst [vmem:[#allocation2 + $0x2b8] sm:$0xff] %v630
    %756 = vst [vmem:[#allocation2 + $0x2c0] sm:$0xff] %v401
    %757 = vst [vmem:[#allocation2 + $0x2c8] sm:$0xff] %v403
    %758 = vst [vmem:[#allocation2 + $0x2d0] sm:$0xff] %v634
    %759 = vst [vmem:[#allocation2 + $0x2d8] sm:$0xff] %v636
    %760 = vst [vmem:[#allocation2 + $0x2e0] sm:$0xff] %v407
    %761 = vst [vmem:[#allocation2 + $0x2e8] sm:$0xff] %v409
    %762 = vst [vmem:[#allocation2 + $0x2f0] sm:$0xff] %v640
    %763 = vst [vmem:[#allocation2 + $0x2f8] sm:$0xff] %v642
    %764 = vst [vmem:[#allocation2 + $0x300] sm:$0xff] %v413
    %765 = vst [vmem:[#allocation2 + $0x308] sm:$0xff] %v415
    %766 = vst [vmem:[#allocation2 + $0x310] sm:$0xff] %v646
    %767 = vst [vmem:[#allocation2 + $0x318] sm:$0xff] %v648
    %768 = vst [vmem:[#allocation2 + $0x320] sm:$0xff] %v419
    %769 = vst [vmem:[#allocation2 + $0x328] sm:$0xff] %v421
    %770 = vst [vmem:[#allocation2 + $0x330] sm:$0xff] %v652
    %771 = vst [vmem:[#allocation2 + $0x338] sm:$0xff] %v654
    %772 = vst [vmem:[#allocation2 + $0x340] sm:$0xff] %v425
    %773 = vst [vmem:[#allocation2 + $0x348] sm:$0xff] %v427
    %774 = vst [vmem:[#allocation2 + $0x350] sm:$0xff] %v658
    %775 = vst [vmem:[#allocation2 + $0x358] sm:$0xff] %v660
    %776 = vst [vmem:[#allocation2 + $0x360] sm:$0xff] %v431
    %777 = vst [vmem:[#allocation2 + $0x368] sm:$0xff] %v433
    %778 = vst [vmem:[#allocation2 + $0x370] sm:$0xff] %v664
    %779 = vst [vmem:[#allocation2 + $0x378] sm:$0xff] %v666
    %v780 = vld [vmem:[#allocation2] sm:$0xff]
    %v781 = vld [vmem:[#allocation2 + $0x8] sm:$0xff]
    %v782 = vld [vmem:[#allocation2 + $0x10] sm:$0xff]
    %v783 = vld [vmem:[#allocation2 + $0x18] sm:$0xff]
    %v784 = vld [vmem:[#allocation3] sm:$0xff]
    %v785 = vld [vmem:[#allocation3 + $0x8] sm:$0xff]
    %v786 = vld [vmem:[#allocation3 + $0x10] sm:$0xff]
    %v787 = vld [vmem:[#allocation3 + $0x18] sm:$0xff]
    %v788 = vld [vmem:[#allocation3 + $0x20] sm:$0xff]
    %v789 = vld [vmem:[#allocation3 + $0x28] sm:$0xff]
    %v790 = vld [vmem:[#allocation3 + $0x30] sm:$0xff]
    %v791 = vld [vmem:[#allocation3 + $0x38] sm:$0xff]
    %v792 = vld [vmem:[#allocation3 + $0x40] sm:$0xff]
    %v793 = vld [vmem:[#allocation3 + $0x48] sm:$0xff]
    %v794 = vld [vmem:[#allocation3 + $0x50] sm:$0xff]
    %v795 = vld [vmem:[#allocation3 + $0x58] sm:$0xff]
    %v796 = vld [vmem:[#allocation3 + $0x60] sm:$0xff]
    %v797 = vld [vmem:[#allocation3 + $0x68] sm:$0xff]
    %v798 = vld [vmem:[#allocation3 + $0x70] sm:$0xff]
    %v799 = vld [vmem:[#allocation3 + $0x78] sm:$0xff]
    %v800 = vld [vmem:[#allocation3 + $0x80] sm:$0xff]
    %v801 = vld [vmem:[#allocation3 + $0x88] sm:$0xff]
    %v802 = vld [vmem:[#allocation3 + $0x90] sm:$0xff]
    %v803 = vld [vmem:[#allocation3 + $0x98] sm:$0xff]
    %v804 = vld [vmem:[#allocation3 + $0xa0] sm:$0xff]
    %v805 = vld [vmem:[#allocation3 + $0xa8] sm:$0xff]
    %v806 = vld [vmem:[#allocation3 + $0xb0] sm:$0xff]
    %v807 = vld [vmem:[#allocation3 + $0xb8] sm:$0xff]
    %v808 = vld [vmem:[#allocation3 + $0xc0] sm:$0xff]
    %v809 = vld [vmem:[#allocation3 + $0xc8] sm:$0xff]
    %v810 = vld [vmem:[#allocation3 + $0xd0] sm:$0xff]
    %v811 = vld [vmem:[#allocation3 + $0xd8] sm:$0xff]
    %v812 = vld [vmem:[#allocation3 + $0xe0] sm:$0xff]
    %v813 = vld [vmem:[#allocation3 + $0xe8] sm:$0xff]
    %v814 = vld [vmem:[#allocation3 + $0xf0] sm:$0xff]
    %v815 = vld [vmem:[#allocation3 + $0xf8] sm:$0xff]
    %v816 = vld [vmem:[#allocation3 + $0x100] sm:$0xff]
    %v817 = vld [vmem:[#allocation3 + $0x108] sm:$0xff]
    %v818 = vld [vmem:[#allocation3 + $0x110] sm:$0xff]
    %v819 = vld [vmem:[#allocation3 + $0x118] sm:$0xff]
    %v820 = vld [vmem:[#allocation3 + $0x120] sm:$0xff]
    %v821 = vld [vmem:[#allocation3 + $0x128] sm:$0xff]
    %v822 = vld [vmem:[#allocation3 + $0x130] sm:$0xff]
    %v823 = vld [vmem:[#allocation3 + $0x138] sm:$0xff]
    %v824 = vld [vmem:[#allocation3 + $0x140] sm:$0xff]
    %v825 = vld [vmem:[#allocation3 + $0x148] sm:$0xff]
    %v826 = vld [vmem:[#allocation3 + $0x150] sm:$0xff]
    %v827 = vld [vmem:[#allocation3 + $0x158] sm:$0xff]
    %v828 = vld [vmem:[#allocation3 + $0x160] sm:$0xff]
    %v829 = vld [vmem:[#allocation3 + $0x168] sm:$0xff]
    %v830 = vld [vmem:[#allocation3 + $0x170] sm:$0xff]
    %v831 = vld [vmem:[#allocation3 + $0x178] sm:$0xff]
    %v832 = vld [vmem:[#allocation3 + $0x180] sm:$0xff]
    %v833 = vld [vmem:[#allocation3 + $0x188] sm:$0xff]
    %v834 = vld [vmem:[#allocation3 + $0x190] sm:$0xff]
    %v835 = vld [vmem:[#allocation3 + $0x198] sm:$0xff]
    %v836 = vld [vmem:[#allocation3 + $0x1a0] sm:$0xff]
    %v837 = vld [vmem:[#allocation3 + $0x1a8] sm:$0xff]
    %v838 = vld [vmem:[#allocation3 + $0x1b0] sm:$0xff]
    %v839 = vld [vmem:[#allocation3 + $0x1b8] sm:$0xff]
    %v840 = vld [vmem:[#allocation3 + $0x1c0] sm:$0xff]
    %v841 = vld [vmem:[#allocation3 + $0x1c8] sm:$0xff]
    %v842 = vld [vmem:[#allocation3 + $0x1d0] sm:$0xff]
    %v843 = vld [vmem:[#allocation3 + $0x1d8] sm:$0xff]
    %v844 = vld [vmem:[#allocation3 + $0x1e0] sm:$0xff]
    %v845 = vld [vmem:[#allocation3 + $0x1e8] sm:$0xff]
    %v846 = vld [vmem:[#allocation3 + $0x1f0] sm:$0xff]
    %v847 = vld [vmem:[#allocation3 + $0x1f8] sm:$0xff]
    %848 = vmatprep.subr.mxu0 %v845
    %849 = vmatpush1.msra.mxu0 %v844
    %850 = vmatprep.subr.mxu0 %v841
    %851 = vmatpush1.msra.mxu0 %v840
    %852 = vmatprep.subr.mxu0 %v837
    %853 = vmatpush1.msra.mxu0 %v836
    %854 = vmatprep.subr.mxu0 %v833
    %855 = vmatpush1.msra.mxu0 %v832
    %856 = vmatprep.subr.mxu0 %v829
    %857 = vmatpush1.msra.mxu0 %v828
    %858 = vmatprep.subr.mxu0 %v825
    %859 = vmatpush1.msra.mxu0 %v824
    %860 = vmatprep.subr.mxu0 %v821
    %861 = vmatpush1.msra.mxu0 %v820
    %862 = vmatprep.subr.mxu0 %v817
    %863 = vmatpush1.msra.mxu0 %v816
    %864 = vmatprep.subr.mxu0 %v813
    %865 = vmatpush1.msra.mxu0 %v812
    %866 = vmatprep.subr.mxu0 %v809
    %867 = vmatpush1.msra.mxu0 %v808
    %868 = vmatprep.subr.mxu0 %v805
    %869 = vmatpush1.msra.mxu0 %v804
    %870 = vmatprep.subr.mxu0 %v801
    %871 = vmatpush1.msra.mxu0 %v800
    %872 = vmatprep.subr.mxu0 %v797
    %873 = vmatpush1.msra.mxu0 %v796
    %874 = vmatprep.subr.mxu0 %v793
    %875 = vmatpush1.msra.mxu0 %v792
    %876 = vmatprep.subr.mxu0 %v789
    %877 = vmatpush1.msra.mxu0 %v788
    %878 = vmatprep.subr.mxu0 %v785
    %879 = vmatpush1.msra.mxu0 %v784
    %880 = vmatprep.subr.mxu0 0.0
    %881 = vmatpush2.msra.mxu0 0.0
    %882 = vmatprep.subr.mxu0 0.0
    %883 = vmatpush2.msra.mxu0 0.0
    %884 = vmatprep.subr.mxu0 0.0
    %885 = vmatpush2.msra.mxu0 0.0
    %886 = vmatprep.subr.mxu0 0.0
    %887 = vmatpush2.msra.mxu0 0.0
    %888 = vmatprep.subr.mxu0 0.0
    %889 = vmatpush2.msra.mxu0 0.0
    %890 = vmatprep.subr.mxu0 0.0
    %891 = vmatpush2.msra.mxu0 0.0
    %892 = vmatprep.subr.mxu0 0.0
    %893 = vmatpush2.msra.mxu0 0.0
    %894 = vmatprep.subr.mxu0 0.0
    %895 = vmatpush2.msra.mxu0 0.0
    %896 = vmatprep.subr.mxu0 0.0
    %897 = vmatpush2.msra.mxu0 0.0
    %898 = vmatprep.subr.mxu0 0.0
    %899 = vmatpush2.msra.mxu0 0.0
    %900 = vmatprep.subr.mxu0 0.0
    %901 = vmatpush2.msra.mxu0 0.0
    %902 = vmatprep.subr.mxu0 0.0
    %903 = vmatpush2.msra.mxu0 0.0
    %904 = vmatprep.subr.mxu0 0.0
    %905 = vmatpush2.msra.mxu0 0.0
    %906 = vmatprep.subr.mxu0 0.0
    %907 = vmatpush2.msra.mxu0 0.0
    %908 = vmatprep.subr.mxu0 0.0
    %909 = vmatpush2.msra.mxu0 0.0
    %910 = vmatprep.subr.mxu0 0.0
    %911 = vmatpush2.msra.mxu0 0.0
    %912 = vmatprep.mubr.f32.mxu0 0.0
    %913 = vmatmul.mubr.f32.gmra.mxu0 0.0
    %v914 = vpop.f32.mrf.mxu0
    %v915 = vadd.f32 0.0, %v914
    %v916 = vpop.f32.mrf.mxu0
    %v917 = vadd.f32 0.0, %v916
    %918 = vdwg.mxu0
    %919 = vmatprep.subr.mxu0 %v847
    %920 = vmatpush1.msra.mxu0 %v846
    %921 = vmatprep.subr.mxu0 %v843
    %922 = vmatpush1.msra.mxu0 %v842
    %923 = vmatprep.subr.mxu0 %v839
    %924 = vmatpush1.msra.mxu0 %v838
    %925 = vmatprep.subr.mxu0 %v835
    %926 = vmatpush1.msra.mxu0 %v834
    %927 = vmatprep.subr.mxu0 %v831
    %928 = vmatpush1.msra.mxu0 %v830
    %929 = vmatprep.subr.mxu0 %v827
    %930 = vmatpush1.msra.mxu0 %v826
    %931 = vmatprep.subr.mxu0 %v823
    %932 = vmatpush1.msra.mxu0 %v822
    %933 = vmatprep.subr.mxu0 %v819
    %934 = vmatpush1.msra.mxu0 %v818
    %935 = vmatprep.subr.mxu0 %v815
    %936 = vmatpush1.msra.mxu0 %v814
    %937 = vmatprep.subr.mxu0 %v811
    %938 = vmatpush1.msra.mxu0 %v810
    %939 = vmatprep.subr.mxu0 %v807
    %940 = vmatpush1.msra.mxu0 %v806
    %941 = vmatprep.subr.mxu0 %v803
    %942 = vmatpush1.msra.mxu0 %v802
    %943 = vmatprep.subr.mxu0 %v799
    %944 = vmatpush1.msra.mxu0 %v798
    %945 = vmatprep.subr.mxu0 %v795
    %946 = vmatpush1.msra.mxu0 %v794
    %947 = vmatprep.subr.mxu0 %v791
    %948 = vmatpush1.msra.mxu0 %v790
    %949 = vmatprep.subr.mxu0 %v787
    %950 = vmatpush1.msra.mxu0 %v786
    %951 = vmatprep.subr.mxu0 0.0
    %952 = vmatpush2.msra.mxu0 0.0
    %953 = vmatprep.subr.mxu0 0.0
    %954 = vmatpush2.msra.mxu0 0.0
    %955 = vmatprep.subr.mxu0 0.0
    %956 = vmatpush2.msra.mxu0 0.0
    %957 = vmatprep.subr.mxu0 0.0
    %958 = vmatpush2.msra.mxu0 0.0
    %959 = vmatprep.subr.mxu0 0.0
    %960 = vmatpush2.msra.mxu0 0.0
    %961 = vmatprep.subr.mxu0 0.0
    %962 = vmatpush2.msra.mxu0 0.0
    %963 = vmatprep.subr.mxu0 0.0
    %964 = vmatpush2.msra.mxu0 0.0
    %965 = vmatprep.subr.mxu0 0.0
    %966 = vmatpush2.msra.mxu0 0.0
    %967 = vmatprep.subr.mxu0 0.0
    %968 = vmatpush2.msra.mxu0 0.0
    %969 = vmatprep.subr.mxu0 0.0
    %970 = vmatpush2.msra.mxu0 0.0
    %971 = vmatprep.subr.mxu0 0.0
    %972 = vmatpush2.msra.mxu0 0.0
    %973 = vmatprep.subr.mxu0 0.0
    %974 = vmatpush2.msra.mxu0 0.0
    %975 = vmatprep.subr.mxu0 0.0
    %976 = vmatpush2.msra.mxu0 0.0
    %977 = vmatprep.subr.mxu0 0.0
    %978 = vmatpush2.msra.mxu0 0.0
    %979 = vmatprep.subr.mxu0 0.0
    %980 = vmatpush2.msra.mxu0 0.0
    %981 = vmatprep.subr.mxu0 0.0
    %982 = vmatpush2.msra.mxu0 0.0
    %983 = vmatprep.mubr.f32.mxu0 0.0
    %984 = vmatmul.mubr.f32.gmra.mxu0 0.0
    %v985 = vpop.f32.mrf.mxu0
    %v986 = vadd.f32 0.0, %v985
    %v987 = vpop.f32.mrf.mxu0
    %v988 = vadd.f32 0.0, %v987
    %989 = vdwg.mxu0
    %v990 = vadd.f32 %v780, %v915
    %v991 = vadd.f32 %v781, %v917
    %v992 = vadd.f32 %v782, %v986
    %v993 = vadd.f32 %v783, %v988
    %v994 = vtanh.pop %v990
    %v995 = vmul.f32 %v994, 0.5
    %v996 = vadd.f32 %v995, 0.5
    %v997 = vtanh.pop %v991
    %v998 = vmul.f32 %v997, 0.5
    %v999 = vadd.f32 %v998, 0.5
    %v1000 = vtanh.pop %v992
    %v1001 = vtanh.pop %v993
    %v1002 = vmul.f32 %v1001, 0.5
    %v1003 = vadd.f32 %v1002, 0.5
    %v1004 = vmul.f32 %v999, 0.0
    %v1005 = vmul.f32 %v996, %v1000
    %v1006 = vadd.f32 %v1004, %v1005
    %v1007 = vtanh.pop %v1006
    %v1008 = vmul.f32 %v1003, %v1007
    %v1009 = vld [vmem:[#allocation2 + $0x20] sm:$0xff]
    %v1010 = vld [vmem:[#allocation2 + $0x28] sm:$0xff]
    %v1011 = vld [vmem:[#allocation2 + $0x30] sm:$0xff]
    %v1012 = vld [vmem:[#allocation2 + $0x38] sm:$0xff]
    %1013 = vmatprep.subr.mxu0 %v845
    %1014 = vmatpush1.msra.mxu0 %v844
    %1015 = vmatprep.subr.mxu0 %v841
    %1016 = vmatpush1.msra.mxu0 %v840
    %1017 = vmatprep.subr.mxu0 %v837
    %1018 = vmatpush1.msra.mxu0 %v836
    %1019 = vmatprep.subr.mxu0 %v833
    %1020 = vmatpush1.msra.mxu0 %v832
    %1021 = vmatprep.subr.mxu0 %v829
    %1022 = vmatpush1.msra.mxu0 %v828
    %1023 = vmatprep.subr.mxu0 %v825
    %1024 = vmatpush1.msra.mxu0 %v824
    %1025 = vmatprep.subr.mxu0 %v821
    %1026 = vmatpush1.msra.mxu0 %v820
    %1027 = vmatprep.subr.mxu0 %v817
    %1028 = vmatpush1.msra.mxu0 %v816
    %1029 = vmatprep.subr.mxu0 %v813
    %1030 = vmatpush1.msra.mxu0 %v812
    %1031 = vmatprep.subr.mxu0 %v809
    %1032 = vmatpush1.msra.mxu0 %v808
    %1033 = vmatprep.subr.mxu0 %v805
    %1034 = vmatpush1.msra.mxu0 %v804
    %1035 = vmatprep.subr.mxu0 %v801
    %1036 = vmatpush1.msra.mxu0 %v800
    %1037 = vmatprep.subr.mxu0 %v797
    %1038 = vmatpush1.msra.mxu0 %v796
    %1039 = vmatprep.subr.mxu0 %v793
    %1040 = vmatpush1.msra.mxu0 %v792
    %1041 = vmatprep.subr.mxu0 %v789
    %1042 = vmatpush1.msra.mxu0 %v788
    %1043 = vmatprep.subr.mxu0 %v785
    %1044 = vmatpush1.msra.mxu0 %v784
    %1045 = vmatprep.subr.mxu0 0.0
    %1046 = vmatpush2.msra.mxu0 0.0
    %1047 = vmatprep.subr.mxu0 0.0
    %1048 = vmatpush2.msra.mxu0 0.0
    %1049 = vmatprep.subr.mxu0 0.0
    %1050 = vmatpush2.msra.mxu0 0.0
    %1051 = vmatprep.subr.mxu0 0.0
    %1052 = vmatpush2.msra.mxu0 0.0
    %1053 = vmatprep.subr.mxu0 0.0
    %1054 = vmatpush2.msra.mxu0 0.0
    %1055 = vmatprep.subr.mxu0 0.0
    %1056 = vmatpush2.msra.mxu0 0.0
    %1057 = vmatprep.subr.mxu0 0.0
    %1058 = vmatpush2.msra.mxu0 0.0
    %1059 = vmatprep.subr.mxu0 0.0
    %1060 = vmatpush2.msra.mxu0 0.0
    %1061 = vmatprep.subr.mxu0 0.0
    %1062 = vmatpush2.msra.mxu0 0.0
    %1063 = vmatprep.subr.mxu0 0.0
    %1064 = vmatpush2.msra.mxu0 0.0
    %1065 = vmatprep.subr.mxu0 0.0
    %1066 = vmatpush2.msra.mxu0 0.0
    %1067 = vmatprep.subr.mxu0 0.0
    %1068 = vmatpush2.msra.mxu0 0.0
    %1069 = vmatprep.subr.mxu0 0.0
    %1070 = vmatpush2.msra.mxu0 0.0
    %1071 = vmatprep.subr.mxu0 0.0
    %1072 = vmatpush2.msra.mxu0 0.0
    %1073 = vmatprep.subr.mxu0 0.0
    %1074 = vmatpush2.msra.mxu0 0.0
    %1075 = vmatprep.subr.mxu0 0.0
    %1076 = vmatpush2.msra.mxu0 0.0
    %1077 = vmatprep.mubr.f32.mxu0 0.0
    %1078 = vmatmul.mubr.f32.gmra.mxu0 %v1008
    %v1079 = vpop.f32.mrf.mxu0
    %v1080 = vadd.f32 0.0, %v1079
    %v1081 = vpop.f32.mrf.mxu0
    %v1082 = vadd.f32 0.0, %v1081
    %1083 = vdwg.mxu0
    %1084 = vmatprep.subr.mxu0 %v847
    %1085 = vmatpush1.msra.mxu0 %v846
    %1086 = vmatprep.subr.mxu0 %v843
    %1087 = vmatpush1.msra.mxu0 %v842
    %1088 = vmatprep.subr.mxu0 %v839
    %1089 = vmatpush1.msra.mxu0 %v838
    %1090 = vmatprep.subr.mxu0 %v835
    %1091 = vmatpush1.msra.mxu0 %v834
    %1092 = vmatprep.subr.mxu0 %v831
    %1093 = vmatpush1.msra.mxu0 %v830
    %1094 = vmatprep.subr.mxu0 %v827
    %1095 = vmatpush1.msra.mxu0 %v826
    %1096 = vmatprep.subr.mxu0 %v823
    %1097 = vmatpush1.msra.mxu0 %v822
    %1098 = vmatprep.subr.mxu0 %v819
    %1099 = vmatpush1.msra.mxu0 %v818
    %1100 = vmatprep.subr.mxu0 %v815
    %1101 = vmatpush1.msra.mxu0 %v814
    %1102 = vmatprep.subr.mxu0 %v811
    %1103 = vmatpush1.msra.mxu0 %v810
    %1104 = vmatprep.subr.mxu0 %v807
    %1105 = vmatpush1.msra.mxu0 %v806
    %1106 = vmatprep.subr.mxu0 %v803
    %1107 = vmatpush1.msra.mxu0 %v802
    %1108 = vmatprep.subr.mxu0 %v799
    %1109 = vmatpush1.msra.mxu0 %v798
    %1110 = vmatprep.subr.mxu0 %v795
    %1111 = vmatpush1.msra.mxu0 %v794
    %1112 = vmatprep.subr.mxu0 %v791
    %1113 = vmatpush1.msra.mxu0 %v790
    %1114 = vmatprep.subr.mxu0 %v787
    %1115 = vmatpush1.msra.mxu0 %v786
    %1116 = vmatprep.subr.mxu0 0.0
    %1117 = vmatpush2.msra.mxu0 0.0
    %1118 = vmatprep.subr.mxu0 0.0
    %1119 = vmatpush2.msra.mxu0 0.0
    %1120 = vmatprep.subr.mxu0 0.0
    %1121 = vmatpush2.msra.mxu0 0.0
    %1122 = vmatprep.subr.mxu0 0.0
    %1123 = vmatpush2.msra.mxu0 0.0
    %1124 = vmatprep.subr.mxu0 0.0
    %1125 = vmatpush2.msra.mxu0 0.0
    %1126 = vmatprep.subr.mxu0 0.0
    %1127 = vmatpush2.msra.mxu0 0.0
    %1128 = vmatprep.subr.mxu0 0.0
    %1129 = vmatpush2.msra.mxu0 0.0
    %1130 = vmatprep.subr.mxu0 0.0
    %1131 = vmatpush2.msra.mxu0 0.0
    %1132 = vmatprep.subr.mxu0 0.0
    %1133 = vmatpush2.msra.mxu0 0.0
    %1134 = vmatprep.subr.mxu0 0.0
    %1135 = vmatpush2.msra.mxu0 0.0
    %1136 = vmatprep.subr.mxu0 0.0
    %1137 = vmatpush2.msra.mxu0 0.0
    %1138 = vmatprep.subr.mxu0 0.0
    %1139 = vmatpush2.msra.mxu0 0.0
    %1140 = vmatprep.subr.mxu0 0.0
    %1141 = vmatpush2.msra.mxu0 0.0
    %1142 = vmatprep.subr.mxu0 0.0
    %1143 = vmatpush2.msra.mxu0 0.0
    %1144 = vmatprep.subr.mxu0 0.0
    %1145 = vmatpush2.msra.mxu0 0.0
    %1146 = vmatprep.subr.mxu0 0.0
    %1147 = vmatpush2.msra.mxu0 0.0
    %1148 = vmatprep.mubr.f32.mxu0 0.0
    %1149 = vmatmul.mubr.f32.gmra.mxu0 %v1008
    %v1150 = vpop.f32.mrf.mxu0
    %v1151 = vadd.f32 0.0, %v1150
    %v1152 = vpop.f32.mrf.mxu0
    %v1153 = vadd.f32 0.0, %v1152
    %1154 = vdwg.mxu0
    %v1155 = vadd.f32 %v1009, %v1080
    %v1156 = vadd.f32 %v1010, %v1082
    %v1157 = vadd.f32 %v1011, %v1151
    %v1158 = vadd.f32 %v1012, %v1153
    %v1159 = vtanh.pop %v1155
    %v1160 = vmul.f32 %v1159, 0.5
    %v1161 = vadd.f32 %v1160, 0.5
    %v1162 = vtanh.pop %v1156
    %v1163 = vmul.f32 %v1162, 0.5
    %v1164 = vadd.f32 %v1163, 0.5
    %v1165 = vtanh.pop %v1157
    %v1166 = vtanh.pop %v1158
    %v1167 = vmul.f32 %v1166, 0.5
    %v1168 = vadd.f32 %v1167, 0.5
    %v1169 = vmul.f32 %v1164, %v1006
    %v1170 = vmul.f32 %v1161, %v1165
    %v1171 = vadd.f32 %v1169, %v1170
    %v1172 = vtanh.pop %v1171
    %v1173 = vmul.f32 %v1168, %v1172
    %v1174 = vld [vmem:[#allocation2 + $0x40] sm:$0xff]
    %v1175 = vld [vmem:[#allocation2 + $0x48] sm:$0xff]
    %v1176 = vld [vmem:[#allocation2 + $0x50] sm:$0xff]
    %v1177 = vld [vmem:[#allocation2 + $0x58] sm:$0xff]
    %1178 = vmatprep.subr.mxu0 %v845
    %1179 = vmatpush1.msra.mxu0 %v844
    %1180 = vmatprep.subr.mxu0 %v841
    %1181 = vmatpush1.msra.mxu0 %v840
    %1182 = vmatprep.subr.mxu0 %v837
    %1183 = vmatpush1.msra.mxu0 %v836
    %1184 = vmatprep.subr.mxu0 %v833
    %1185 = vmatpush1.msra.mxu0 %v832
    %1186 = vmatprep.subr.mxu0 %v829
    %1187 = vmatpush1.msra.mxu0 %v828
    %1188 = vmatprep.subr.mxu0 %v825
    %1189 = vmatpush1.msra.mxu0 %v824
    %1190 = vmatprep.subr.mxu0 %v821
    %1191 = vmatpush1.msra.mxu0 %v820
    %1192 = vmatprep.subr.mxu0 %v817
    %1193 = vmatpush1.msra.mxu0 %v816
    %1194 = vmatprep.subr.mxu0 %v813
    %1195 = vmatpush1.msra.mxu0 %v812
    %1196 = vmatprep.subr.mxu0 %v809
    %1197 = vmatpush1.msra.mxu0 %v808
    %1198 = vmatprep.subr.mxu0 %v805
    %1199 = vmatpush1.msra.mxu0 %v804
    %1200 = vmatprep.subr.mxu0 %v801
    %1201 = vmatpush1.msra.mxu0 %v800
    %1202 = vmatprep.subr.mxu0 %v797
    %1203 = vmatpush1.msra.mxu0 %v796
    %1204 = vmatprep.subr.mxu0 %v793
    %1205 = vmatpush1.msra.mxu0 %v792
    %1206 = vmatprep.subr.mxu0 %v789
    %1207 = vmatpush1.msra.mxu0 %v788
    %1208 = vmatprep.subr.mxu0 %v785
    %1209 = vmatpush1.msra.mxu0 %v784
    %1210 = vmatprep.subr.mxu0 0.0
    %1211 = vmatpush2.msra.mxu0 0.0
    %1212 = vmatprep.subr.mxu0 0.0
    %1213 = vmatpush2.msra.mxu0 0.0
    %1214 = vmatprep.subr.mxu0 0.0
    %1215 = vmatpush2.msra.mxu0 0.0
    %1216 = vmatprep.subr.mxu0 0.0
    %1217 = vmatpush2.msra.mxu0 0.0
    %1218 = vmatprep.subr.mxu0 0.0
    %1219 = vmatpush2.msra.mxu0 0.0
    %1220 = vmatprep.subr.mxu0 0.0
    %1221 = vmatpush2.msra.mxu0 0.0
    %1222 = vmatprep.subr.mxu0 0.0
    %1223 = vmatpush2.msra.mxu0 0.0
    %1224 = vmatprep.subr.mxu0 0.0
    %1225 = vmatpush2.msra.mxu0 0.0
    %1226 = vmatprep.subr.mxu0 0.0
    %1227 = vmatpush2.msra.mxu0 0.0
    %1228 = vmatprep.subr.mxu0 0.0
    %1229 = vmatpush2.msra.mxu0 0.0
    %1230 = vmatprep.subr.mxu0 0.0
    %1231 = vmatpush2.msra.mxu0 0.0
    %1232 = vmatprep.subr.mxu0 0.0
    %1233 = vmatpush2.msra.mxu0 0.0
    %1234 = vmatprep.subr.mxu0 0.0
    %1235 = vmatpush2.msra.mxu0 0.0
    %1236 = vmatprep.subr.mxu0 0.0
    %1237 = vmatpush2.msra.mxu0 0.0
    %1238 = vmatprep.subr.mxu0 0.0
    %1239 = vmatpush2.msra.mxu0 0.0
    %1240 = vmatprep.subr.mxu0 0.0
    %1241 = vmatpush2.msra.mxu0 0.0
    %1242 = vmatprep.mubr.f32.mxu0 0.0
    %1243 = vmatmul.mubr.f32.gmra.mxu0 %v1173
    %v1244 = vpop.f32.mrf.mxu0
    %v1245 = vadd.f32 0.0, %v1244
    %v1246 = vpop.f32.mrf.mxu0
    %v1247 = vadd.f32 0.0, %v1246
    %1248 = vdwg.mxu0
    %1249 = vmatprep.subr.mxu0 %v847
    %1250 = vmatpush1.msra.mxu0 %v846
    %1251 = vmatprep.subr.mxu0 %v843
    %1252 = vmatpush1.msra.mxu0 %v842
    %1253 = vmatprep.subr.mxu0 %v839
    %1254 = vmatpush1.msra.mxu0 %v838
    %1255 = vmatprep.subr.mxu0 %v835
    %1256 = vmatpush1.msra.mxu0 %v834
    %1257 = vmatprep.subr.mxu0 %v831
    %1258 = vmatpush1.msra.mxu0 %v830
    %1259 = vmatprep.subr.mxu0 %v827
    %1260 = vmatpush1.msra.mxu0 %v826
    %1261 = vmatprep.subr.mxu0 %v823
    %1262 = vmatpush1.msra.mxu0 %v822
    %1263 = vmatprep.subr.mxu0 %v819
    %1264 = vmatpush1.msra.mxu0 %v818
    %1265 = vmatprep.subr.mxu0 %v815
    %1266 = vmatpush1.msra.mxu0 %v814
    %1267 = vmatprep.subr.mxu0 %v811
    %1268 = vmatpush1.msra.mxu0 %v810
    %1269 = vmatprep.subr.mxu0 %v807
    %1270 = vmatpush1.msra.mxu0 %v806
    %1271 = vmatprep.subr.mxu0 %v803
    %1272 = vmatpush1.msra.mxu0 %v802
    %1273 = vmatprep.subr.mxu0 %v799
    %1274 = vmatpush1.msra.mxu0 %v798
    %1275 = vmatprep.subr.mxu0 %v795
    %1276 = vmatpush1.msra.mxu0 %v794
    %1277 = vmatprep.subr.mxu0 %v791
    %1278 = vmatpush1.msra.mxu0 %v790
    %1279 = vmatprep.subr.mxu0 %v787
    %1280 = vmatpush1.msra.mxu0 %v786
    %1281 = vmatprep.subr.mxu0 0.0
    %1282 = vmatpush2.msra.mxu0 0.0
    %1283 = vmatprep.subr.mxu0 0.0
    %1284 = vmatpush2.msra.mxu0 0.0
    %1285 = vmatprep.subr.mxu0 0.0
    %1286 = vmatpush2.msra.mxu0 0.0
    %1287 = vmatprep.subr.mxu0 0.0
    %1288 = vmatpush2.msra.mxu0 0.0
    %1289 = vmatprep.subr.mxu0 0.0
    %1290 = vmatpush2.msra.mxu0 0.0
    %1291 = vmatprep.subr.mxu0 0.0
    %1292 = vmatpush2.msra.mxu0 0.0
    %1293 = vmatprep.subr.mxu0 0.0
    %1294 = vmatpush2.msra.mxu0 0.0
    %1295 = vmatprep.subr.mxu0 0.0
    %1296 = vmatpush2.msra.mxu0 0.0
    %1297 = vmatprep.subr.mxu0 0.0
    %1298 = vmatpush2.msra.mxu0 0.0
    %1299 = vmatprep.subr.mxu0 0.0
    %1300 = vmatpush2.msra.mxu0 0.0
    %1301 = vmatprep.subr.mxu0 0.0
    %1302 = vmatpush2.msra.mxu0 0.0
    %1303 = vmatprep.subr.mxu0 0.0
    %1304 = vmatpush2.msra.mxu0 0.0
    %1305 = vmatprep.subr.mxu0 0.0
    %1306 = vmatpush2.msra.mxu0 0.0
    %1307 = vmatprep.subr.mxu0 0.0
    %1308 = vmatpush2.msra.mxu0 0.0
    %1309 = vmatprep.subr.mxu0 0.0
    %1310 = vmatpush2.msra.mxu0 0.0
    %1311 = vmatprep.subr.mxu0 0.0
    %1312 = vmatpush2.msra.mxu0 0.0
    %1313 = vmatprep.mubr.f32.mxu0 0.0
    %1314 = vmatmul.mubr.f32.gmra.mxu0 %v1173
    %v1315 = vpop.f32.mrf.mxu0
    %v1316 = vadd.f32 0.0, %v1315
    %v1317 = vpop.f32.mrf.mxu0
    %v1318 = vadd.f32 0.0, %v1317
    %1319 = vdwg.mxu0
    %v1320 = vadd.f32 %v1174, %v1245
    %v1321 = vadd.f32 %v1175, %v1247
    %v1322 = vadd.f32 %v1176, %v1316
    %v1323 = vadd.f32 %v1177, %v1318
    %v1324 = vtanh.pop %v1320
    %v1325 = vmul.f32 %v1324, 0.5
    %v1326 = vadd.f32 %v1325, 0.5
    %v1327 = vtanh.pop %v1321
    %v1328 = vmul.f32 %v1327, 0.5
    %v1329 = vadd.f32 %v1328, 0.5
    %v1330 = vtanh.pop %v1322
    %v1331 = vtanh.pop %v1323
    %v1332 = vmul.f32 %v1331, 0.5
    %v1333 = vadd.f32 %v1332, 0.5
    %v1334 = vmul.f32 %v1329, %v1171
    %v1335 = vmul.f32 %v1326, %v1330
    %v1336 = vadd.f32 %v1334, %v1335
    %v1337 = vtanh.pop %v1336
    %v1338 = vmul.f32 %v1333, %v1337
    %v1339 = vld [vmem:[#allocation2 + $0x60] sm:$0xff]
    %v1340 = vld [vmem:[#allocation2 + $0x68] sm:$0xff]
    %v1341 = vld [vmem:[#allocation2 + $0x70] sm:$0xff]
    %v1342 = vld [vmem:[#allocation2 + $0x78] sm:$0xff]
    %1343 = vmatprep.subr.mxu0 %v845
    %1344 = vmatpush1.msra.mxu0 %v844
    %1345 = vmatprep.subr.mxu0 %v841
    %1346 = vmatpush1.msra.mxu0 %v840
    %1347 = vmatprep.subr.mxu0 %v837
    %1348 = vmatpush1.msra.mxu0 %v836
    %1349 = vmatprep.subr.mxu0 %v833
    %1350 = vmatpush1.msra.mxu0 %v832
    %1351 = vmatprep.subr.mxu0 %v829
    %1352 = vmatpush1.msra.mxu0 %v828
    %1353 = vmatprep.subr.mxu0 %v825
    %1354 = vmatpush1.msra.mxu0 %v824
    %1355 = vmatprep.subr.mxu0 %v821
    %1356 = vmatpush1.msra.mxu0 %v820
    %1357 = vmatprep.subr.mxu0 %v817
    %1358 = vmatpush1.msra.mxu0 %v816
    %1359 = vmatprep.subr.mxu0 %v813
    %1360 = vmatpush1.msra.mxu0 %v812
    %1361 = vmatprep.subr.mxu0 %v809
    %1362 = vmatpush1.msra.mxu0 %v808
    %1363 = vmatprep.subr.mxu0 %v805
    %1364 = vmatpush1.msra.mxu0 %v804
    %1365 = vmatprep.subr.mxu0 %v801
    %1366 = vmatpush1.msra.mxu0 %v800
    %1367 = vmatprep.subr.mxu0 %v797
    %1368 = vmatpush1.msra.mxu0 %v796
    %1369 = vmatprep.subr.mxu0 %v793
    %1370 = vmatpush1.msra.mxu0 %v792
    %1371 = vmatprep.subr.mxu0 %v789
    %1372 = vmatpush1.msra.mxu0 %v788
    %1373 = vmatprep.subr.mxu0 %v785
    %1374 = vmatpush1.msra.mxu0 %v784
    %1375 = vmatprep.subr.mxu0 0.0
    %1376 = vmatpush2.msra.mxu0 0.0
    %1377 = vmatprep.subr.mxu0 0.0
    %1378 = vmatpush2.msra.mxu0 0.0
    %1379 = vmatprep.subr.mxu0 0.0
    %1380 = vmatpush2.msra.mxu0 0.0
    %1381 = vmatprep.subr.mxu0 0.0
    %1382 = vmatpush2.msra.mxu0 0.0
    %1383 = vmatprep.subr.mxu0 0.0
    %1384 = vmatpush2.msra.mxu0 0.0
    %1385 = vmatprep.subr.mxu0 0.0
    %1386 = vmatpush2.msra.mxu0 0.0
    %1387 = vmatprep.subr.mxu0 0.0
    %1388 = vmatpush2.msra.mxu0 0.0
    %1389 = vmatprep.subr.mxu0 0.0
    %1390 = vmatpush2.msra.mxu0 0.0
    %1391 = vmatprep.subr.mxu0 0.0
    %1392 = vmatpush2.msra.mxu0 0.0
    %1393 = vmatprep.subr.mxu0 0.0
    %1394 = vmatpush2.msra.mxu0 0.0
    %1395 = vmatprep.subr.mxu0 0.0
    %1396 = vmatpush2.msra.mxu0 0.0
    %1397 = vmatprep.subr.mxu0 0.0
    %1398 = vmatpush2.msra.mxu0 0.0
    %1399 = vmatprep.subr.mxu0 0.0
    %1400 = vmatpush2.msra.mxu0 0.0
    %1401 = vmatprep.subr.mxu0 0.0
    %1402 = vmatpush2.msra.mxu0 0.0
    %1403 = vmatprep.subr.mxu0 0.0
    %1404 = vmatpush2.msra.mxu0 0.0
    %1405 = vmatprep.subr.mxu0 0.0
    %1406 = vmatpush2.msra.mxu0 0.0
    %1407 = vmatprep.mubr.f32.mxu0 0.0
    %1408 = vmatmul.mubr.f32.gmra.mxu0 %v1338
    %v1409 = vpop.f32.mrf.mxu0
    %v1410 = vadd.f32 0.0, %v1409
    %v1411 = vpop.f32.mrf.mxu0
    %v1412 = vadd.f32 0.0, %v1411
    %1413 = vdwg.mxu0
    %1414 = vmatprep.subr.mxu0 %v847
    %1415 = vmatpush1.msra.mxu0 %v846
    %1416 = vmatprep.subr.mxu0 %v843
    %1417 = vmatpush1.msra.mxu0 %v842
    %1418 = vmatprep.subr.mxu0 %v839
    %1419 = vmatpush1.msra.mxu0 %v838
    %1420 = vmatprep.subr.mxu0 %v835
    %1421 = vmatpush1.msra.mxu0 %v834
    %1422 = vmatprep.subr.mxu0 %v831
    %1423 = vmatpush1.msra.mxu0 %v830
    %1424 = vmatprep.subr.mxu0 %v827
    %1425 = vmatpush1.msra.mxu0 %v826
    %1426 = vmatprep.subr.mxu0 %v823
    %1427 = vmatpush1.msra.mxu0 %v822
    %1428 = vmatprep.subr.mxu0 %v819
    %1429 = vmatpush1.msra.mxu0 %v818
    %1430 = vmatprep.subr.mxu0 %v815
    %1431 = vmatpush1.msra.mxu0 %v814
    %1432 = vmatprep.subr.mxu0 %v811
    %1433 = vmatpush1.msra.mxu0 %v810
    %1434 = vmatprep.subr.mxu0 %v807
    %1435 = vmatpush1.msra.mxu0 %v806
    %1436 = vmatprep.subr.mxu0 %v803
    %1437 = vmatpush1.msra.mxu0 %v802
    %1438 = vmatprep.subr.mxu0 %v799
    %1439 = vmatpush1.msra.mxu0 %v798
    %1440 = vmatprep.subr.mxu0 %v795
    %1441 = vmatpush1.msra.mxu0 %v794
    %1442 = vmatprep.subr.mxu0 %v791
    %1443 = vmatpush1.msra.mxu0 %v790
    %1444 = vmatprep.subr.mxu0 %v787
    %1445 = vmatpush1.msra.mxu0 %v786
    %1446 = vmatprep.subr.mxu0 0.0
    %1447 = vmatpush2.msra.mxu0 0.0
    %1448 = vmatprep.subr.mxu0 0.0
    %1449 = vmatpush2.msra.mxu0 0.0
    %1450 = vmatprep.subr.mxu0 0.0
    %1451 = vmatpush2.msra.mxu0 0.0
    %1452 = vmatprep.subr.mxu0 0.0
    %1453 = vmatpush2.msra.mxu0 0.0
    %1454 = vmatprep.subr.mxu0 0.0
    %1455 = vmatpush2.msra.mxu0 0.0
    %1456 = vmatprep.subr.mxu0 0.0
    %1457 = vmatpush2.msra.mxu0 0.0
    %1458 = vmatprep.subr.mxu0 0.0
    %1459 = vmatpush2.msra.mxu0 0.0
    %1460 = vmatprep.subr.mxu0 0.0
    %1461 = vmatpush2.msra.mxu0 0.0
    %1462 = vmatprep.subr.mxu0 0.0
    %1463 = vmatpush2.msra.mxu0 0.0
    %1464 = vmatprep.subr.mxu0 0.0
    %1465 = vmatpush2.msra.mxu0 0.0
    %1466 = vmatprep.subr.mxu0 0.0
    %1467 = vmatpush2.msra.mxu0 0.0
    %1468 = vmatprep.subr.mxu0 0.0
    %1469 = vmatpush2.msra.mxu0 0.0
    %1470 = vmatprep.subr.mxu0 0.0
    %1471 = vmatpush2.msra.mxu0 0.0
    %1472 = vmatprep.subr.mxu0 0.0
    %1473 = vmatpush2.msra.mxu0 0.0
    %1474 = vmatprep.subr.mxu0 0.0
    %1475 = vmatpush2.msra.mxu0 0.0
    %1476 = vmatprep.subr.mxu0 0.0
    %1477 = vmatpush2.msra.mxu0 0.0
    %1478 = vmatprep.mubr.f32.mxu0 0.0
    %1479 = vmatmul.mubr.f32.gmra.mxu0 %v1338
    %v1480 = vpop.f32.mrf.mxu0
    %v1481 = vadd.f32 0.0, %v1480
    %v1482 = vpop.f32.mrf.mxu0
    %v1483 = vadd.f32 0.0, %v1482
    %1484 = vdwg.mxu0
    %v1485 = vadd.f32 %v1339, %v1410
    %v1486 = vadd.f32 %v1340, %v1412
    %v1487 = vadd.f32 %v1341, %v1481
    %v1488 = vadd.f32 %v1342, %v1483
    %v1489 = vtanh.pop %v1485
    %v1490 = vmul.f32 %v1489, 0.5
    %v1491 = vadd.f32 %v1490, 0.5
    %v1492 = vtanh.pop %v1486
    %v1493 = vmul.f32 %v1492, 0.5
    %v1494 = vadd.f32 %v1493, 0.5
    %v1495 = vtanh.pop %v1487
    %v1496 = vtanh.pop %v1488
    %v1497 = vmul.f32 %v1496, 0.5
    %v1498 = vadd.f32 %v1497, 0.5
    %v1499 = vmul.f32 %v1494, %v1336
    %v1500 = vmul.f32 %v1491, %v1495
    %v1501 = vadd.f32 %v1499, %v1500
    %v1502 = vtanh.pop %v1501
    %v1503 = vmul.f32 %v1498, %v1502
    %v1504 = vld [vmem:[#allocation2 + $0x80] sm:$0xff]
    %v1505 = vld [vmem:[#allocation2 + $0x88] sm:$0xff]
    %v1506 = vld [vmem:[#allocation2 + $0x90] sm:$0xff]
    %v1507 = vld [vmem:[#allocation2 + $0x98] sm:$0xff]
    %1508 = vmatprep.subr.mxu0 %v845
    %1509 = vmatpush1.msra.mxu0 %v844
    %1510 = vmatprep.subr.mxu0 %v841
    %1511 = vmatpush1.msra.mxu0 %v840
    %1512 = vmatprep.subr.mxu0 %v837
    %1513 = vmatpush1.msra.mxu0 %v836
    %1514 = vmatprep.subr.mxu0 %v833
    %1515 = vmatpush1.msra.mxu0 %v832
    %1516 = vmatprep.subr.mxu0 %v829
    %1517 = vmatpush1.msra.mxu0 %v828
    %1518 = vmatprep.subr.mxu0 %v825
    %1519 = vmatpush1.msra.mxu0 %v824
    %1520 = vmatprep.subr.mxu0 %v821
    %1521 = vmatpush1.msra.mxu0 %v820
    %1522 = vmatprep.subr.mxu0 %v817
    %1523 = vmatpush1.msra.mxu0 %v816
    %1524 = vmatprep.subr.mxu0 %v813
    %1525 = vmatpush1.msra.mxu0 %v812
    %1526 = vmatprep.subr.mxu0 %v809
    %1527 = vmatpush1.msra.mxu0 %v808
    %1528 = vmatprep.subr.mxu0 %v805
    %1529 = vmatpush1.msra.mxu0 %v804
    %1530 = vmatprep.subr.mxu0 %v801
    %1531 = vmatpush1.msra.mxu0 %v800
    %1532 = vmatprep.subr.mxu0 %v797
    %1533 = vmatpush1.msra.mxu0 %v796
    %1534 = vmatprep.subr.mxu0 %v793
    %1535 = vmatpush1.msra.mxu0 %v792
    %1536 = vmatprep.subr.mxu0 %v789
    %1537 = vmatpush1.msra.mxu0 %v788
    %1538 = vmatprep.subr.mxu0 %v785
    %1539 = vmatpush1.msra.mxu0 %v784
    %1540 = vmatprep.subr.mxu0 0.0
    %1541 = vmatpush2.msra.mxu0 0.0
    %1542 = vmatprep.subr.mxu0 0.0
    %1543 = vmatpush2.msra.mxu0 0.0
    %1544 = vmatprep.subr.mxu0 0.0
    %1545 = vmatpush2.msra.mxu0 0.0
    %1546 = vmatprep.subr.mxu0 0.0
    %1547 = vmatpush2.msra.mxu0 0.0
    %1548 = vmatprep.subr.mxu0 0.0
    %1549 = vmatpush2.msra.mxu0 0.0
    %1550 = vmatprep.subr.mxu0 0.0
    %1551 = vmatpush2.msra.mxu0 0.0
    %1552 = vmatprep.subr.mxu0 0.0
    %1553 = vmatpush2.msra.mxu0 0.0
    %1554 = vmatprep.subr.mxu0 0.0
    %1555 = vmatpush2.msra.mxu0 0.0
    %1556 = vmatprep.subr.mxu0 0.0
    %1557 = vmatpush2.msra.mxu0 0.0
    %1558 = vmatprep.subr.mxu0 0.0
    %1559 = vmatpush2.msra.mxu0 0.0
    %1560 = vmatprep.subr.mxu0 0.0
    %1561 = vmatpush2.msra.mxu0 0.0
    %1562 = vmatprep.subr.mxu0 0.0
    %1563 = vmatpush2.msra.mxu0 0.0
    %1564 = vmatprep.subr.mxu0 0.0
    %1565 = vmatpush2.msra.mxu0 0.0
    %1566 = vmatprep.subr.mxu0 0.0
    %1567 = vmatpush2.msra.mxu0 0.0
    %1568 = vmatprep.subr.mxu0 0.0
    %1569 = vmatpush2.msra.mxu0 0.0
    %1570 = vmatprep.subr.mxu0 0.0
    %1571 = vmatpush2.msra.mxu0 0.0
    %1572 = vmatprep.mubr.f32.mxu0 0.0
    %1573 = vmatmul.mubr.f32.gmra.mxu0 %v1503
    %v1574 = vpop.f32.mrf.mxu0
    %v1575 = vadd.f32 0.0, %v1574
    %v1576 = vpop.f32.mrf.mxu0
    %v1577 = vadd.f32 0.0, %v1576
    %1578 = vdwg.mxu0
    %1579 = vmatprep.subr.mxu0 %v847
    %1580 = vmatpush1.msra.mxu0 %v846
    %1581 = vmatprep.subr.mxu0 %v843
    %1582 = vmatpush1.msra.mxu0 %v842
    %1583 = vmatprep.subr.mxu0 %v839
    %1584 = vmatpush1.msra.mxu0 %v838
    %1585 = vmatprep.subr.mxu0 %v835
    %1586 = vmatpush1.msra.mxu0 %v834
    %1587 = vmatprep.subr.mxu0 %v831
    %1588 = vmatpush1.msra.mxu0 %v830
    %1589 = vmatprep.subr.mxu0 %v827
    %1590 = vmatpush1.msra.mxu0 %v826
    %1591 = vmatprep.subr.mxu0 %v823
    %1592 = vmatpush1.msra.mxu0 %v822
    %1593 = vmatprep.subr.mxu0 %v819
    %1594 = vmatpush1.msra.mxu0 %v818
    %1595 = vmatprep.subr.mxu0 %v815
    %1596 = vmatpush1.msra.mxu0 %v814
    %1597 = vmatprep.subr.mxu0 %v811
    %1598 = vmatpush1.msra.mxu0 %v810
    %1599 = vmatprep.subr.mxu0 %v807
    %1600 = vmatpush1.msra.mxu0 %v806
    %1601 = vmatprep.subr.mxu0 %v803
    %1602 = vmatpush1.msra.mxu0 %v802
    %1603 = vmatprep.subr.mxu0 %v799
    %1604 = vmatpush1.msra.mxu0 %v798
    %1605 = vmatprep.subr.mxu0 %v795
    %1606 = vmatpush1.msra.mxu0 %v794
    %1607 = vmatprep.subr.mxu0 %v791
    %1608 = vmatpush1.msra.mxu0 %v790
    %1609 = vmatprep.subr.mxu0 %v787
    %1610 = vmatpush1.msra.mxu0 %v786
    %1611 = vmatprep.subr.mxu0 0.0
    %1612 = vmatpush2.msra.mxu0 0.0
    %1613 = vmatprep.subr.mxu0 0.0
    %1614 = vmatpush2.msra.mxu0 0.0
    %1615 = vmatprep.subr.mxu0 0.0
    %1616 = vmatpush2.msra.mxu0 0.0
    %1617 = vmatprep.subr.mxu0 0.0
    %1618 = vmatpush2.msra.mxu0 0.0
    %1619 = vmatprep.subr.mxu0 0.0
    %1620 = vmatpush2.msra.mxu0 0.0
    %1621 = vmatprep.subr.mxu0 0.0
    %1622 = vmatpush2.msra.mxu0 0.0
    %1623 = vmatprep.subr.mxu0 0.0
    %1624 = vmatpush2.msra.mxu0 0.0
    %1625 = vmatprep.subr.mxu0 0.0
    %1626 = vmatpush2.msra.mxu0 0.0
    %1627 = vmatprep.subr.mxu0 0.0
    %1628 = vmatpush2.msra.mxu0 0.0
    %1629 = vmatprep.subr.mxu0 0.0
    %1630 = vmatpush2.msra.mxu0 0.0
    %1631 = vmatprep.subr.mxu0 0.0
    %1632 = vmatpush2.msra.mxu0 0.0
    %1633 = vmatprep.subr.mxu0 0.0
    %1634 = vmatpush2.msra.mxu0 0.0
    %1635 = vmatprep.subr.mxu0 0.0
    %1636 = vmatpush2.msra.mxu0 0.0
    %1637 = vmatprep.subr.mxu0 0.0
    %1638 = vmatpush2.msra.mxu0 0.0
    %1639 = vmatprep.subr.mxu0 0.0
    %1640 = vmatpush2.msra.mxu0 0.0
    %1641 = vmatprep.subr.mxu0 0.0
    %1642 = vmatpush2.msra.mxu0 0.0
    %1643 = vmatprep.mubr.f32.mxu0 0.0
    %1644 = vmatmul.mubr.f32.gmra.mxu0 %v1503
    %v1645 = vpop.f32.mrf.mxu0
    %v1646 = vadd.f32 0.0, %v1645
    %v1647 = vpop.f32.mrf.mxu0
    %v1648 = vadd.f32 0.0, %v1647
    %1649 = vdwg.mxu0
    %v1650 = vadd.f32 %v1504, %v1575
    %v1651 = vadd.f32 %v1505, %v1577
    %v1652 = vadd.f32 %v1506, %v1646
    %v1653 = vadd.f32 %v1507, %v1648
    %v1654 = vtanh.pop %v1650
    %v1655 = vmul.f32 %v1654, 0.5
    %v1656 = vadd.f32 %v1655, 0.5
    %v1657 = vtanh.pop %v1651
    %v1658 = vmul.f32 %v1657, 0.5
    %v1659 = vadd.f32 %v1658, 0.5
    %v1660 = vtanh.pop %v1652
    %v1661 = vtanh.pop %v1653
    %v1662 = vmul.f32 %v1661, 0.5
    %v1663 = vadd.f32 %v1662, 0.5
    %v1664 = vmul.f32 %v1659, %v1501
    %v1665 = vmul.f32 %v1656, %v1660
    %v1666 = vadd.f32 %v1664, %v1665
    %v1667 = vtanh.pop %v1666
    %v1668 = vmul.f32 %v1663, %v1667
    %v1669 = vld [vmem:[#allocation2 + $0xa0] sm:$0xff]
    %v1670 = vld [vmem:[#allocation2 + $0xa8] sm:$0xff]
    %v1671 = vld [vmem:[#allocation2 + $0xb0] sm:$0xff]
    %v1672 = vld [vmem:[#allocation2 + $0xb8] sm:$0xff]
    %1673 = vmatprep.subr.mxu0 %v845
    %1674 = vmatpush1.msra.mxu0 %v844
    %1675 = vmatprep.subr.mxu0 %v841
    %1676 = vmatpush1.msra.mxu0 %v840
    %1677 = vmatprep.subr.mxu0 %v837
    %1678 = vmatpush1.msra.mxu0 %v836
    %1679 = vmatprep.subr.mxu0 %v833
    %1680 = vmatpush1.msra.mxu0 %v832
    %1681 = vmatprep.subr.mxu0 %v829
    %1682 = vmatpush1.msra.mxu0 %v828
    %1683 = vmatprep.subr.mxu0 %v825
    %1684 = vmatpush1.msra.mxu0 %v824
    %1685 = vmatprep.subr.mxu0 %v821
    %1686 = vmatpush1.msra.mxu0 %v820
    %1687 = vmatprep.subr.mxu0 %v817
    %1688 = vmatpush1.msra.mxu0 %v816
    %1689 = vmatprep.subr.mxu0 %v813
    %1690 = vmatpush1.msra.mxu0 %v812
    %1691 = vmatprep.subr.mxu0 %v809
    %1692 = vmatpush1.msra.mxu0 %v808
    %1693 = vmatprep.subr.mxu0 %v805
    %1694 = vmatpush1.msra.mxu0 %v804
    %1695 = vmatprep.subr.mxu0 %v801
    %1696 = vmatpush1.msra.mxu0 %v800
    %1697 = vmatprep.subr.mxu0 %v797
    %1698 = vmatpush1.msra.mxu0 %v796
    %1699 = vmatprep.subr.mxu0 %v793
    %1700 = vmatpush1.msra.mxu0 %v792
    %1701 = vmatprep.subr.mxu0 %v789
    %1702 = vmatpush1.msra.mxu0 %v788
    %1703 = vmatprep.subr.mxu0 %v785
    %1704 = vmatpush1.msra.mxu0 %v784
    %1705 = vmatprep.subr.mxu0 0.0
    %1706 = vmatpush2.msra.mxu0 0.0
    %1707 = vmatprep.subr.mxu0 0.0
    %1708 = vmatpush2.msra.mxu0 0.0
    %1709 = vmatprep.subr.mxu0 0.0
    %1710 = vmatpush2.msra.mxu0 0.0
    %1711 = vmatprep.subr.mxu0 0.0
    %1712 = vmatpush2.msra.mxu0 0.0
    %1713 = vmatprep.subr.mxu0 0.0
    %1714 = vmatpush2.msra.mxu0 0.0
    %1715 = vmatprep.subr.mxu0 0.0
    %1716 = vmatpush2.msra.mxu0 0.0
    %1717 = vmatprep.subr.mxu0 0.0
    %1718 = vmatpush2.msra.mxu0 0.0
    %1719 = vmatprep.subr.mxu0 0.0
    %1720 = vmatpush2.msra.mxu0 0.0
    %1721 = vmatprep.subr.mxu0 0.0
    %1722 = vmatpush2.msra.mxu0 0.0
    %1723 = vmatprep.subr.mxu0 0.0
    %1724 = vmatpush2.msra.mxu0 0.0
    %1725 = vmatprep.subr.mxu0 0.0
    %1726 = vmatpush2.msra.mxu0 0.0
    %1727 = vmatprep.subr.mxu0 0.0
    %1728 = vmatpush2.msra.mxu0 0.0
    %1729 = vmatprep.subr.mxu0 0.0
    %1730 = vmatpush2.msra.mxu0 0.0
    %1731 = vmatprep.subr.mxu0 0.0
    %1732 = vmatpush2.msra.mxu0 0.0
    %1733 = vmatprep.subr.mxu0 0.0
    %1734 = vmatpush2.msra.mxu0 0.0
    %1735 = vmatprep.subr.mxu0 0.0
    %1736 = vmatpush2.msra.mxu0 0.0
    %1737 = vmatprep.mubr.f32.mxu0 0.0
    %1738 = vmatmul.mubr.f32.gmra.mxu0 %v1668
    %v1739 = vpop.f32.mrf.mxu0
    %v1740 = vadd.f32 0.0, %v1739
    %v1741 = vpop.f32.mrf.mxu0
    %v1742 = vadd.f32 0.0, %v1741
    %1743 = vdwg.mxu0
    %1744 = vmatprep.subr.mxu0 %v847
    %1745 = vmatpush1.msra.mxu0 %v846
    %1746 = vmatprep.subr.mxu0 %v843
    %1747 = vmatpush1.msra.mxu0 %v842
    %1748 = vmatprep.subr.mxu0 %v839
    %1749 = vmatpush1.msra.mxu0 %v838
    %1750 = vmatprep.subr.mxu0 %v835
    %1751 = vmatpush1.msra.mxu0 %v834
    %1752 = vmatprep.subr.mxu0 %v831
    %1753 = vmatpush1.msra.mxu0 %v830
    %1754 = vmatprep.subr.mxu0 %v827
    %1755 = vmatpush1.msra.mxu0 %v826
    %1756 = vmatprep.subr.mxu0 %v823
    %1757 = vmatpush1.msra.mxu0 %v822
    %1758 = vmatprep.subr.mxu0 %v819
    %1759 = vmatpush1.msra.mxu0 %v818
    %1760 = vmatprep.subr.mxu0 %v815
    %1761 = vmatpush1.msra.mxu0 %v814
    %1762 = vmatprep.subr.mxu0 %v811
    %1763 = vmatpush1.msra.mxu0 %v810
    %1764 = vmatprep.subr.mxu0 %v807
    %1765 = vmatpush1.msra.mxu0 %v806
    %1766 = vmatprep.subr.mxu0 %v803
    %1767 = vmatpush1.msra.mxu0 %v802
    %1768 = vmatprep.subr.mxu0 %v799
    %1769 = vmatpush1.msra.mxu0 %v798
    %1770 = vmatprep.subr.mxu0 %v795
    %1771 = vmatpush1.msra.mxu0 %v794
    %1772 = vmatprep.subr.mxu0 %v791
    %1773 = vmatpush1.msra.mxu0 %v790
    %1774 = vmatprep.subr.mxu0 %v787
    %1775 = vmatpush1.msra.mxu0 %v786
    %1776 = vmatprep.subr.mxu0 0.0
    %1777 = vmatpush2.msra.mxu0 0.0
    %1778 = vmatprep.subr.mxu0 0.0
    %1779 = vmatpush2.msra.mxu0 0.0
    %1780 = vmatprep.subr.mxu0 0.0
    %1781 = vmatpush2.msra.mxu0 0.0
    %1782 = vmatprep.subr.mxu0 0.0
    %1783 = vmatpush2.msra.mxu0 0.0
    %1784 = vmatprep.subr.mxu0 0.0
    %1785 = vmatpush2.msra.mxu0 0.0
    %1786 = vmatprep.subr.mxu0 0.0
    %1787 = vmatpush2.msra.mxu0 0.0
    %1788 = vmatprep.subr.mxu0 0.0
    %1789 = vmatpush2.msra.mxu0 0.0
    %1790 = vmatprep.subr.mxu0 0.0
    %1791 = vmatpush2.msra.mxu0 0.0
    %1792 = vmatprep.subr.mxu0 0.0
    %1793 = vmatpush2.msra.mxu0 0.0
    %1794 = vmatprep.subr.mxu0 0.0
    %1795 = vmatpush2.msra.mxu0 0.0
    %1796 = vmatprep.subr.mxu0 0.0
    %1797 = vmatpush2.msra.mxu0 0.0
    %1798 = vmatprep.subr.mxu0 0.0
    %1799 = vmatpush2.msra.mxu0 0.0
    %1800 = vmatprep.subr.mxu0 0.0
    %1801 = vmatpush2.msra.mxu0 0.0
    %1802 = vmatprep.subr.mxu0 0.0
    %1803 = vmatpush2.msra.mxu0 0.0
    %1804 = vmatprep.subr.mxu0 0.0
    %1805 = vmatpush2.msra.mxu0 0.0
    %1806 = vmatprep.subr.mxu0 0.0
    %1807 = vmatpush2.msra.mxu0 0.0
    %1808 = vmatprep.mubr.f32.mxu0 0.0
    %1809 = vmatmul.mubr.f32.gmra.mxu0 %v1668
    %v1810 = vpop.f32.mrf.mxu0
    %v1811 = vadd.f32 0.0, %v1810
    %v1812 = vpop.f32.mrf.mxu0
    %v1813 = vadd.f32 0.0, %v1812
    %1814 = vdwg.mxu0
    %v1815 = vadd.f32 %v1669, %v1740
    %v1816 = vadd.f32 %v1670, %v1742
    %v1817 = vadd.f32 %v1671, %v1811
    %v1818 = vadd.f32 %v1672, %v1813
    %v1819 = vtanh.pop %v1815
    %v1820 = vmul.f32 %v1819, 0.5
    %v1821 = vadd.f32 %v1820, 0.5
    %v1822 = vtanh.pop %v1816
    %v1823 = vmul.f32 %v1822, 0.5
    %v1824 = vadd.f32 %v1823, 0.5
    %v1825 = vtanh.pop %v1817
    %v1826 = vtanh.pop %v1818
    %v1827 = vmul.f32 %v1826, 0.5
    %v1828 = vadd.f32 %v1827, 0.5
    %v1829 = vmul.f32 %v1824, %v1666
    %v1830 = vmul.f32 %v1821, %v1825
    %v1831 = vadd.f32 %v1829, %v1830
    %v1832 = vtanh.pop %v1831
    %v1833 = vmul.f32 %v1828, %v1832
    %v1834 = vld [vmem:[#allocation2 + $0xc0] sm:$0xff]
    %v1835 = vld [vmem:[#allocation2 + $0xc8] sm:$0xff]
    %v1836 = vld [vmem:[#allocation2 + $0xd0] sm:$0xff]
    %v1837 = vld [vmem:[#allocation2 + $0xd8] sm:$0xff]
    %1838 = vmatprep.subr.mxu0 %v845
    %1839 = vmatpush1.msra.mxu0 %v844
    %1840 = vmatprep.subr.mxu0 %v841
    %1841 = vmatpush1.msra.mxu0 %v840
    %1842 = vmatprep.subr.mxu0 %v837
    %1843 = vmatpush1.msra.mxu0 %v836
    %1844 = vmatprep.subr.mxu0 %v833
    %1845 = vmatpush1.msra.mxu0 %v832
    %1846 = vmatprep.subr.mxu0 %v829
    %1847 = vmatpush1.msra.mxu0 %v828
    %1848 = vmatprep.subr.mxu0 %v825
    %1849 = vmatpush1.msra.mxu0 %v824
    %1850 = vmatprep.subr.mxu0 %v821
    %1851 = vmatpush1.msra.mxu0 %v820
    %1852 = vmatprep.subr.mxu0 %v817
    %1853 = vmatpush1.msra.mxu0 %v816
    %1854 = vmatprep.subr.mxu0 %v813
    %1855 = vmatpush1.msra.mxu0 %v812
    %1856 = vmatprep.subr.mxu0 %v809
    %1857 = vmatpush1.msra.mxu0 %v808
    %1858 = vmatprep.subr.mxu0 %v805
    %1859 = vmatpush1.msra.mxu0 %v804
    %1860 = vmatprep.subr.mxu0 %v801
    %1861 = vmatpush1.msra.mxu0 %v800
    %1862 = vmatprep.subr.mxu0 %v797
    %1863 = vmatpush1.msra.mxu0 %v796
    %1864 = vmatprep.subr.mxu0 %v793
    %1865 = vmatpush1.msra.mxu0 %v792
    %1866 = vmatprep.subr.mxu0 %v789
    %1867 = vmatpush1.msra.mxu0 %v788
    %1868 = vmatprep.subr.mxu0 %v785
    %1869 = vmatpush1.msra.mxu0 %v784
    %1870 = vmatprep.subr.mxu0 0.0
    %1871 = vmatpush2.msra.mxu0 0.0
    %1872 = vmatprep.subr.mxu0 0.0
    %1873 = vmatpush2.msra.mxu0 0.0
    %1874 = vmatprep.subr.mxu0 0.0
    %1875 = vmatpush2.msra.mxu0 0.0
    %1876 = vmatprep.subr.mxu0 0.0
    %1877 = vmatpush2.msra.mxu0 0.0
    %1878 = vmatprep.subr.mxu0 0.0
    %1879 = vmatpush2.msra.mxu0 0.0
    %1880 = vmatprep.subr.mxu0 0.0
    %1881 = vmatpush2.msra.mxu0 0.0
    %1882 = vmatprep.subr.mxu0 0.0
    %1883 = vmatpush2.msra.mxu0 0.0
    %1884 = vmatprep.subr.mxu0 0.0
    %1885 = vmatpush2.msra.mxu0 0.0
    %1886 = vmatprep.subr.mxu0 0.0
    %1887 = vmatpush2.msra.mxu0 0.0
    %1888 = vmatprep.subr.mxu0 0.0
    %1889 = vmatpush2.msra.mxu0 0.0
    %1890 = vmatprep.subr.mxu0 0.0
    %1891 = vmatpush2.msra.mxu0 0.0
    %1892 = vmatprep.subr.mxu0 0.0
    %1893 = vmatpush2.msra.mxu0 0.0
    %1894 = vmatprep.subr.mxu0 0.0
    %1895 = vmatpush2.msra.mxu0 0.0
    %1896 = vmatprep.subr.mxu0 0.0
    %1897 = vmatpush2.msra.mxu0 0.0
    %1898 = vmatprep.subr.mxu0 0.0
    %1899 = vmatpush2.msra.mxu0 0.0
    %1900 = vmatprep.subr.mxu0 0.0
    %1901 = vmatpush2.msra.mxu0 0.0
    %1902 = vmatprep.mubr.f32.mxu0 0.0
    %1903 = vmatmul.mubr.f32.gmra.mxu0 %v1833
    %v1904 = vpop.f32.mrf.mxu0
    %v1905 = vadd.f32 0.0, %v1904
    %v1906 = vpop.f32.mrf.mxu0
    %v1907 = vadd.f32 0.0, %v1906
    %1908 = vdwg.mxu0
    %1909 = vmatprep.subr.mxu0 %v847
    %1910 = vmatpush1.msra.mxu0 %v846
    %1911 = vmatprep.subr.mxu0 %v843
    %1912 = vmatpush1.msra.mxu0 %v842
    %1913 = vmatprep.subr.mxu0 %v839
    %1914 = vmatpush1.msra.mxu0 %v838
    %1915 = vmatprep.subr.mxu0 %v835
    %1916 = vmatpush1.msra.mxu0 %v834
    %1917 = vmatprep.subr.mxu0 %v831
    %1918 = vmatpush1.msra.mxu0 %v830
    %1919 = vmatprep.subr.mxu0 %v827
    %1920 = vmatpush1.msra.mxu0 %v826
    %1921 = vmatprep.subr.mxu0 %v823
    %1922 = vmatpush1.msra.mxu0 %v822
    %1923 = vmatprep.subr.mxu0 %v819
    %1924 = vmatpush1.msra.mxu0 %v818
    %1925 = vmatprep.subr.mxu0 %v815
    %1926 = vmatpush1.msra.mxu0 %v814
    %1927 = vmatprep.subr.mxu0 %v811
    %1928 = vmatpush1.msra.mxu0 %v810
    %1929 = vmatprep.subr.mxu0 %v807
    %1930 = vmatpush1.msra.mxu0 %v806
    %1931 = vmatprep.subr.mxu0 %v803
    %1932 = vmatpush1.msra.mxu0 %v802
    %1933 = vmatprep.subr.mxu0 %v799
    %1934 = vmatpush1.msra.mxu0 %v798
    %1935 = vmatprep.subr.mxu0 %v795
    %1936 = vmatpush1.msra.mxu0 %v794
    %1937 = vmatprep.subr.mxu0 %v791
    %1938 = vmatpush1.msra.mxu0 %v790
    %1939 = vmatprep.subr.mxu0 %v787
    %1940 = vmatpush1.msra.mxu0 %v786
    %1941 = vmatprep.subr.mxu0 0.0
    %1942 = vmatpush2.msra.mxu0 0.0
    %1943 = vmatprep.subr.mxu0 0.0
    %1944 = vmatpush2.msra.mxu0 0.0
    %1945 = vmatprep.subr.mxu0 0.0
    %1946 = vmatpush2.msra.mxu0 0.0
    %1947 = vmatprep.subr.mxu0 0.0
    %1948 = vmatpush2.msra.mxu0 0.0
    %1949 = vmatprep.subr.mxu0 0.0
    %1950 = vmatpush2.msra.mxu0 0.0
    %1951 = vmatprep.subr.mxu0 0.0
    %1952 = vmatpush2.msra.mxu0 0.0
    %1953 = vmatprep.subr.mxu0 0.0
    %1954 = vmatpush2.msra.mxu0 0.0
    %1955 = vmatprep.subr.mxu0 0.0
    %1956 = vmatpush2.msra.mxu0 0.0
    %1957 = vmatprep.subr.mxu0 0.0
    %1958 = vmatpush2.msra.mxu0 0.0
    %1959 = vmatprep.subr.mxu0 0.0
    %1960 = vmatpush2.msra.mxu0 0.0
    %1961 = vmatprep.subr.mxu0 0.0
    %1962 = vmatpush2.msra.mxu0 0.0
    %1963 = vmatprep.subr.mxu0 0.0
    %1964 = vmatpush2.msra.mxu0 0.0
    %1965 = vmatprep.subr.mxu0 0.0
    %1966 = vmatpush2.msra.mxu0 0.0
    %1967 = vmatprep.subr.mxu0 0.0
    %1968 = vmatpush2.msra.mxu0 0.0
    %1969 = vmatprep.subr.mxu0 0.0
    %1970 = vmatpush2.msra.mxu0 0.0
    %1971 = vmatprep.subr.mxu0 0.0
    %1972 = vmatpush2.msra.mxu0 0.0
    %1973 = vmatprep.mubr.f32.mxu0 0.0
    %1974 = vmatmul.mubr.f32.gmra.mxu0 %v1833
    %v1975 = vpop.f32.mrf.mxu0
    %v1976 = vadd.f32 0.0, %v1975
    %v1977 = vpop.f32.mrf.mxu0
    %v1978 = vadd.f32 0.0, %v1977
    %1979 = vdwg.mxu0
    %v1980 = vadd.f32 %v1834, %v1905
    %v1981 = vadd.f32 %v1835, %v1907
    %v1982 = vadd.f32 %v1836, %v1976
    %v1983 = vadd.f32 %v1837, %v1978
    %v1984 = vtanh.pop %v1980
    %v1985 = vmul.f32 %v1984, 0.5
    %v1986 = vadd.f32 %v1985, 0.5
    %v1987 = vtanh.pop %v1981
    %v1988 = vmul.f32 %v1987, 0.5
    %v1989 = vadd.f32 %v1988, 0.5
    %v1990 = vtanh.pop %v1982
    %v1991 = vtanh.pop %v1983
    %v1992 = vmul.f32 %v1991, 0.5
    %v1993 = vadd.f32 %v1992, 0.5
    %v1994 = vmul.f32 %v1989, %v1831
    %v1995 = vmul.f32 %v1986, %v1990
    %v1996 = vadd.f32 %v1994, %v1995
    %v1997 = vtanh.pop %v1996
    %v1998 = vmul.f32 %v1993, %v1997
    %v1999 = vld [vmem:[#allocation2 + $0xe0] sm:$0xff]
    %v2000 = vld [vmem:[#allocation2 + $0xe8] sm:$0xff]
    %v2001 = vld [vmem:[#allocation2 + $0xf0] sm:$0xff]
    %v2002 = vld [vmem:[#allocation2 + $0xf8] sm:$0xff]
    %2003 = vmatprep.subr.mxu0 %v845
    %2004 = vmatpush1.msra.mxu0 %v844
    %2005 = vmatprep.subr.mxu0 %v841
    %2006 = vmatpush1.msra.mxu0 %v840
    %2007 = vmatprep.subr.mxu0 %v837
    %2008 = vmatpush1.msra.mxu0 %v836
    %2009 = vmatprep.subr.mxu0 %v833
    %2010 = vmatpush1.msra.mxu0 %v832
    %2011 = vmatprep.subr.mxu0 %v829
    %2012 = vmatpush1.msra.mxu0 %v828
    %2013 = vmatprep.subr.mxu0 %v825
    %2014 = vmatpush1.msra.mxu0 %v824
    %2015 = vmatprep.subr.mxu0 %v821
    %2016 = vmatpush1.msra.mxu0 %v820
    %2017 = vmatprep.subr.mxu0 %v817
    %2018 = vmatpush1.msra.mxu0 %v816
    %2019 = vmatprep.subr.mxu0 %v813
    %2020 = vmatpush1.msra.mxu0 %v812
    %2021 = vmatprep.subr.mxu0 %v809
    %2022 = vmatpush1.msra.mxu0 %v808
    %2023 = vmatprep.subr.mxu0 %v805
    %2024 = vmatpush1.msra.mxu0 %v804
    %2025 = vmatprep.subr.mxu0 %v801
    %2026 = vmatpush1.msra.mxu0 %v800
    %2027 = vmatprep.subr.mxu0 %v797
    %2028 = vmatpush1.msra.mxu0 %v796
    %2029 = vmatprep.subr.mxu0 %v793
    %2030 = vmatpush1.msra.mxu0 %v792
    %2031 = vmatprep.subr.mxu0 %v789
    %2032 = vmatpush1.msra.mxu0 %v788
    %2033 = vmatprep.subr.mxu0 %v785
    %2034 = vmatpush1.msra.mxu0 %v784
    %2035 = vmatprep.subr.mxu0 0.0
    %2036 = vmatpush2.msra.mxu0 0.0
    %2037 = vmatprep.subr.mxu0 0.0
    %2038 = vmatpush2.msra.mxu0 0.0
    %2039 = vmatprep.subr.mxu0 0.0
    %2040 = vmatpush2.msra.mxu0 0.0
    %2041 = vmatprep.subr.mxu0 0.0
    %2042 = vmatpush2.msra.mxu0 0.0
    %2043 = vmatprep.subr.mxu0 0.0
    %2044 = vmatpush2.msra.mxu0 0.0
    %2045 = vmatprep.subr.mxu0 0.0
    %2046 = vmatpush2.msra.mxu0 0.0
    %2047 = vmatprep.subr.mxu0 0.0
    %2048 = vmatpush2.msra.mxu0 0.0
    %2049 = vmatprep.subr.mxu0 0.0
    %2050 = vmatpush2.msra.mxu0 0.0
    %2051 = vmatprep.subr.mxu0 0.0
    %2052 = vmatpush2.msra.mxu0 0.0
    %2053 = vmatprep.subr.mxu0 0.0
    %2054 = vmatpush2.msra.mxu0 0.0
    %2055 = vmatprep.subr.mxu0 0.0
    %2056 = vmatpush2.msra.mxu0 0.0
    %2057 = vmatprep.subr.mxu0 0.0
    %2058 = vmatpush2.msra.mxu0 0.0
    %2059 = vmatprep.subr.mxu0 0.0
    %2060 = vmatpush2.msra.mxu0 0.0
    %2061 = vmatprep.subr.mxu0 0.0
    %2062 = vmatpush2.msra.mxu0 0.0
    %2063 = vmatprep.subr.mxu0 0.0
    %2064 = vmatpush2.msra.mxu0 0.0
    %2065 = vmatprep.subr.mxu0 0.0
    %2066 = vmatpush2.msra.mxu0 0.0
    %2067 = vmatprep.mubr.f32.mxu0 0.0
    %2068 = vmatmul.mubr.f32.gmra.mxu0 %v1998
    %v2069 = vpop.f32.mrf.mxu0
    %v2070 = vadd.f32 0.0, %v2069
    %v2071 = vpop.f32.mrf.mxu0
    %v2072 = vadd.f32 0.0, %v2071
    %2073 = vdwg.mxu0
    %2074 = vmatprep.subr.mxu0 %v847
    %2075 = vmatpush1.msra.mxu0 %v846
    %2076 = vmatprep.subr.mxu0 %v843
    %2077 = vmatpush1.msra.mxu0 %v842
    %2078 = vmatprep.subr.mxu0 %v839
    %2079 = vmatpush1.msra.mxu0 %v838
    %2080 = vmatprep.subr.mxu0 %v835
    %2081 = vmatpush1.msra.mxu0 %v834
    %2082 = vmatprep.subr.mxu0 %v831
    %2083 = vmatpush1.msra.mxu0 %v830
    %2084 = vmatprep.subr.mxu0 %v827
    %2085 = vmatpush1.msra.mxu0 %v826
    %2086 = vmatprep.subr.mxu0 %v823
    %2087 = vmatpush1.msra.mxu0 %v822
    %2088 = vmatprep.subr.mxu0 %v819
    %2089 = vmatpush1.msra.mxu0 %v818
    %2090 = vmatprep.subr.mxu0 %v815
    %2091 = vmatpush1.msra.mxu0 %v814
    %2092 = vmatprep.subr.mxu0 %v811
    %2093 = vmatpush1.msra.mxu0 %v810
    %2094 = vmatprep.subr.mxu0 %v807
    %2095 = vmatpush1.msra.mxu0 %v806
    %2096 = vmatprep.subr.mxu0 %v803
    %2097 = vmatpush1.msra.mxu0 %v802
    %2098 = vmatprep.subr.mxu0 %v799
    %2099 = vmatpush1.msra.mxu0 %v798
    %2100 = vmatprep.subr.mxu0 %v795
    %2101 = vmatpush1.msra.mxu0 %v794
    %2102 = vmatprep.subr.mxu0 %v791
    %2103 = vmatpush1.msra.mxu0 %v790
    %2104 = vmatprep.subr.mxu0 %v787
    %2105 = vmatpush1.msra.mxu0 %v786
    %2106 = vmatprep.subr.mxu0 0.0
    %2107 = vmatpush2.msra.mxu0 0.0
    %2108 = vmatprep.subr.mxu0 0.0
    %2109 = vmatpush2.msra.mxu0 0.0
    %2110 = vmatprep.subr.mxu0 0.0
    %2111 = vmatpush2.msra.mxu0 0.0
    %2112 = vmatprep.subr.mxu0 0.0
    %2113 = vmatpush2.msra.mxu0 0.0
    %2114 = vmatprep.subr.mxu0 0.0
    %2115 = vmatpush2.msra.mxu0 0.0
    %2116 = vmatprep.subr.mxu0 0.0
    %2117 = vmatpush2.msra.mxu0 0.0
    %2118 = vmatprep.subr.mxu0 0.0
    %2119 = vmatpush2.msra.mxu0 0.0
    %2120 = vmatprep.subr.mxu0 0.0
    %2121 = vmatpush2.msra.mxu0 0.0
    %2122 = vmatprep.subr.mxu0 0.0
    %2123 = vmatpush2.msra.mxu0 0.0
    %2124 = vmatprep.subr.mxu0 0.0
    %2125 = vmatpush2.msra.mxu0 0.0
    %2126 = vmatprep.subr.mxu0 0.0
    %2127 = vmatpush2.msra.mxu0 0.0
    %2128 = vmatprep.subr.mxu0 0.0
    %2129 = vmatpush2.msra.mxu0 0.0
    %2130 = vmatprep.subr.mxu0 0.0
    %2131 = vmatpush2.msra.mxu0 0.0
    %2132 = vmatprep.subr.mxu0 0.0
    %2133 = vmatpush2.msra.mxu0 0.0
    %2134 = vmatprep.subr.mxu0 0.0
    %2135 = vmatpush2.msra.mxu0 0.0
    %2136 = vmatprep.subr.mxu0 0.0
    %2137 = vmatpush2.msra.mxu0 0.0
    %2138 = vmatprep.mubr.f32.mxu0 0.0
    %2139 = vmatmul.mubr.f32.gmra.mxu0 %v1998
    %v2140 = vpop.f32.mrf.mxu0
    %v2141 = vadd.f32 0.0, %v2140
    %v2142 = vpop.f32.mrf.mxu0
    %v2143 = vadd.f32 0.0, %v2142
    %2144 = vdwg.mxu0
    %v2145 = vadd.f32 %v1999, %v2070
    %v2146 = vadd.f32 %v2000, %v2072
    %v2147 = vadd.f32 %v2001, %v2141
    %v2148 = vadd.f32 %v2002, %v2143
    %v2149 = vtanh.pop %v2145
    %v2150 = vmul.f32 %v2149, 0.5
    %v2151 = vadd.f32 %v2150, 0.5
    %v2152 = vtanh.pop %v2146
    %v2153 = vmul.f32 %v2152, 0.5
    %v2154 = vadd.f32 %v2153, 0.5
    %v2155 = vtanh.pop %v2147
    %v2156 = vtanh.pop %v2148
    %v2157 = vmul.f32 %v2156, 0.5
    %v2158 = vadd.f32 %v2157, 0.5
    %v2159 = vmul.f32 %v2154, %v1996
    %v2160 = vmul.f32 %v2151, %v2155
    %v2161 = vadd.f32 %v2159, %v2160
    %v2162 = vtanh.pop %v2161
    %v2163 = vmul.f32 %v2158, %v2162
    %v2164 = vld [vmem:[#allocation2 + $0x100] sm:$0xff]
    %v2165 = vld [vmem:[#allocation2 + $0x108] sm:$0xff]
    %v2166 = vld [vmem:[#allocation2 + $0x110] sm:$0xff]
    %v2167 = vld [vmem:[#allocation2 + $0x118] sm:$0xff]
    %2168 = vmatprep.subr.mxu0 %v845
    %2169 = vmatpush1.msra.mxu0 %v844
    %2170 = vmatprep.subr.mxu0 %v841
    %2171 = vmatpush1.msra.mxu0 %v840
    %2172 = vmatprep.subr.mxu0 %v837
    %2173 = vmatpush1.msra.mxu0 %v836
    %2174 = vmatprep.subr.mxu0 %v833
    %2175 = vmatpush1.msra.mxu0 %v832
    %2176 = vmatprep.subr.mxu0 %v829
    %2177 = vmatpush1.msra.mxu0 %v828
    %2178 = vmatprep.subr.mxu0 %v825
    %2179 = vmatpush1.msra.mxu0 %v824
    %2180 = vmatprep.subr.mxu0 %v821
    %2181 = vmatpush1.msra.mxu0 %v820
    %2182 = vmatprep.subr.mxu0 %v817
    %2183 = vmatpush1.msra.mxu0 %v816
    %2184 = vmatprep.subr.mxu0 %v813
    %2185 = vmatpush1.msra.mxu0 %v812
    %2186 = vmatprep.subr.mxu0 %v809
    %2187 = vmatpush1.msra.mxu0 %v808
    %2188 = vmatprep.subr.mxu0 %v805
    %2189 = vmatpush1.msra.mxu0 %v804
    %2190 = vmatprep.subr.mxu0 %v801
    %2191 = vmatpush1.msra.mxu0 %v800
    %2192 = vmatprep.subr.mxu0 %v797
    %2193 = vmatpush1.msra.mxu0 %v796
    %2194 = vmatprep.subr.mxu0 %v793
    %2195 = vmatpush1.msra.mxu0 %v792
    %2196 = vmatprep.subr.mxu0 %v789
    %2197 = vmatpush1.msra.mxu0 %v788
    %2198 = vmatprep.subr.mxu0 %v785
    %2199 = vmatpush1.msra.mxu0 %v784
    %2200 = vmatprep.subr.mxu0 0.0
    %2201 = vmatpush2.msra.mxu0 0.0
    %2202 = vmatprep.subr.mxu0 0.0
    %2203 = vmatpush2.msra.mxu0 0.0
    %2204 = vmatprep.subr.mxu0 0.0
    %2205 = vmatpush2.msra.mxu0 0.0
    %2206 = vmatprep.subr.mxu0 0.0
    %2207 = vmatpush2.msra.mxu0 0.0
    %2208 = vmatprep.subr.mxu0 0.0
    %2209 = vmatpush2.msra.mxu0 0.0
    %2210 = vmatprep.subr.mxu0 0.0
    %2211 = vmatpush2.msra.mxu0 0.0
    %2212 = vmatprep.subr.mxu0 0.0
    %2213 = vmatpush2.msra.mxu0 0.0
    %2214 = vmatprep.subr.mxu0 0.0
    %2215 = vmatpush2.msra.mxu0 0.0
    %2216 = vmatprep.subr.mxu0 0.0
    %2217 = vmatpush2.msra.mxu0 0.0
    %2218 = vmatprep.subr.mxu0 0.0
    %2219 = vmatpush2.msra.mxu0 0.0
    %2220 = vmatprep.subr.mxu0 0.0
    %2221 = vmatpush2.msra.mxu0 0.0
    %2222 = vmatprep.subr.mxu0 0.0
    %2223 = vmatpush2.msra.mxu0 0.0
    %2224 = vmatprep.subr.mxu0 0.0
    %2225 = vmatpush2.msra.mxu0 0.0
    %2226 = vmatprep.subr.mxu0 0.0
    %2227 = vmatpush2.msra.mxu0 0.0
    %2228 = vmatprep.subr.mxu0 0.0
    %2229 = vmatpush2.msra.mxu0 0.0
    %2230 = vmatprep.subr.mxu0 0.0
    %2231 = vmatpush2.msra.mxu0 0.0
    %2232 = vmatprep.mubr.f32.mxu0 0.0
    %2233 = vmatmul.mubr.f32.gmra.mxu0 %v2163
    %v2234 = vpop.f32.mrf.mxu0
    %v2235 = vadd.f32 0.0, %v2234
    %v2236 = vpop.f32.mrf.mxu0
    %v2237 = vadd.f32 0.0, %v2236
    %2238 = vdwg.mxu0
    %2239 = vmatprep.subr.mxu0 %v847
    %2240 = vmatpush1.msra.mxu0 %v846
    %2241 = vmatprep.subr.mxu0 %v843
    %2242 = vmatpush1.msra.mxu0 %v842
    %2243 = vmatprep.subr.mxu0 %v839
    %2244 = vmatpush1.msra.mxu0 %v838
    %2245 = vmatprep.subr.mxu0 %v835
    %2246 = vmatpush1.msra.mxu0 %v834
    %2247 = vmatprep.subr.mxu0 %v831
    %2248 = vmatpush1.msra.mxu0 %v830
    %2249 = vmatprep.subr.mxu0 %v827
    %2250 = vmatpush1.msra.mxu0 %v826
    %2251 = vmatprep.subr.mxu0 %v823
    %2252 = vmatpush1.msra.mxu0 %v822
    %2253 = vmatprep.subr.mxu0 %v819
    %2254 = vmatpush1.msra.mxu0 %v818
    %2255 = vmatprep.subr.mxu0 %v815
    %2256 = vmatpush1.msra.mxu0 %v814
    %2257 = vmatprep.subr.mxu0 %v811
    %2258 = vmatpush1.msra.mxu0 %v810
    %2259 = vmatprep.subr.mxu0 %v807
    %2260 = vmatpush1.msra.mxu0 %v806
    %2261 = vmatprep.subr.mxu0 %v803
    %2262 = vmatpush1.msra.mxu0 %v802
    %2263 = vmatprep.subr.mxu0 %v799
    %2264 = vmatpush1.msra.mxu0 %v798
    %2265 = vmatprep.subr.mxu0 %v795
    %2266 = vmatpush1.msra.mxu0 %v794
    %2267 = vmatprep.subr.mxu0 %v791
    %2268 = vmatpush1.msra.mxu0 %v790
    %2269 = vmatprep.subr.mxu0 %v787
    %2270 = vmatpush1.msra.mxu0 %v786
    %2271 = vmatprep.subr.mxu0 0.0
    %2272 = vmatpush2.msra.mxu0 0.0
    %2273 = vmatprep.subr.mxu0 0.0
    %2274 = vmatpush2.msra.mxu0 0.0
    %2275 = vmatprep.subr.mxu0 0.0
    %2276 = vmatpush2.msra.mxu0 0.0
    %2277 = vmatprep.subr.mxu0 0.0
    %2278 = vmatpush2.msra.mxu0 0.0
    %2279 = vmatprep.subr.mxu0 0.0
    %2280 = vmatpush2.msra.mxu0 0.0
    %2281 = vmatprep.subr.mxu0 0.0
    %2282 = vmatpush2.msra.mxu0 0.0
    %2283 = vmatprep.subr.mxu0 0.0
    %2284 = vmatpush2.msra.mxu0 0.0
    %2285 = vmatprep.subr.mxu0 0.0
    %2286 = vmatpush2.msra.mxu0 0.0
    %2287 = vmatprep.subr.mxu0 0.0
    %2288 = vmatpush2.msra.mxu0 0.0
    %2289 = vmatprep.subr.mxu0 0.0
    %2290 = vmatpush2.msra.mxu0 0.0
    %2291 = vmatprep.subr.mxu0 0.0
    %2292 = vmatpush2.msra.mxu0 0.0
    %2293 = vmatprep.subr.mxu0 0.0
    %2294 = vmatpush2.msra.mxu0 0.0
    %2295 = vmatprep.subr.mxu0 0.0
    %2296 = vmatpush2.msra.mxu0 0.0
    %2297 = vmatprep.subr.mxu0 0.0
    %2298 = vmatpush2.msra.mxu0 0.0
    %2299 = vmatprep.subr.mxu0 0.0
    %2300 = vmatpush2.msra.mxu0 0.0
    %2301 = vmatprep.subr.mxu0 0.0
    %2302 = vmatpush2.msra.mxu0 0.0
    %2303 = vmatprep.mubr.f32.mxu0 0.0
    %2304 = vmatmul.mubr.f32.gmra.mxu0 %v2163
    %v2305 = vpop.f32.mrf.mxu0
    %v2306 = vadd.f32 0.0, %v2305
    %v2307 = vpop.f32.mrf.mxu0
    %v2308 = vadd.f32 0.0, %v2307
    %2309 = vdwg.mxu0
    %v2310 = vadd.f32 %v2164, %v2235
    %v2311 = vadd.f32 %v2165, %v2237
    %v2312 = vadd.f32 %v2166, %v2306
    %v2313 = vadd.f32 %v2167, %v2308
    %v2314 = vtanh.pop %v2310
    %v2315 = vmul.f32 %v2314, 0.5
    %v2316 = vadd.f32 %v2315, 0.5
    %v2317 = vtanh.pop %v2311
    %v2318 = vmul.f32 %v2317, 0.5
    %v2319 = vadd.f32 %v2318, 0.5
    %v2320 = vtanh.pop %v2312
    %v2321 = vtanh.pop %v2313
    %v2322 = vmul.f32 %v2321, 0.5
    %v2323 = vadd.f32 %v2322, 0.5
    %v2324 = vmul.f32 %v2319, %v2161
    %v2325 = vmul.f32 %v2316, %v2320
    %v2326 = vadd.f32 %v2324, %v2325
    %v2327 = vtanh.pop %v2326
    %v2328 = vmul.f32 %v2323, %v2327
    %v2329 = vld [vmem:[#allocation2 + $0x120] sm:$0xff]
    %v2330 = vld [vmem:[#allocation2 + $0x128] sm:$0xff]
    %v2331 = vld [vmem:[#allocation2 + $0x130] sm:$0xff]
    %v2332 = vld [vmem:[#allocation2 + $0x138] sm:$0xff]
    %2333 = vmatprep.subr.mxu0 %v845
    %2334 = vmatpush1.msra.mxu0 %v844
    %2335 = vmatprep.subr.mxu0 %v841
    %2336 = vmatpush1.msra.mxu0 %v840
    %2337 = vmatprep.subr.mxu0 %v837
    %2338 = vmatpush1.msra.mxu0 %v836
    %2339 = vmatprep.subr.mxu0 %v833
    %2340 = vmatpush1.msra.mxu0 %v832
    %2341 = vmatprep.subr.mxu0 %v829
    %2342 = vmatpush1.msra.mxu0 %v828
    %2343 = vmatprep.subr.mxu0 %v825
    %2344 = vmatpush1.msra.mxu0 %v824
    %2345 = vmatprep.subr.mxu0 %v821
    %2346 = vmatpush1.msra.mxu0 %v820
    %2347 = vmatprep.subr.mxu0 %v817
    %2348 = vmatpush1.msra.mxu0 %v816
    %2349 = vmatprep.subr.mxu0 %v813
    %2350 = vmatpush1.msra.mxu0 %v812
    %2351 = vmatprep.subr.mxu0 %v809
    %2352 = vmatpush1.msra.mxu0 %v808
    %2353 = vmatprep.subr.mxu0 %v805
    %2354 = vmatpush1.msra.mxu0 %v804
    %2355 = vmatprep.subr.mxu0 %v801
    %2356 = vmatpush1.msra.mxu0 %v800
    %2357 = vmatprep.subr.mxu0 %v797
    %2358 = vmatpush1.msra.mxu0 %v796
    %2359 = vmatprep.subr.mxu0 %v793
    %2360 = vmatpush1.msra.mxu0 %v792
    %2361 = vmatprep.subr.mxu0 %v789
    %2362 = vmatpush1.msra.mxu0 %v788
    %2363 = vmatprep.subr.mxu0 %v785
    %2364 = vmatpush1.msra.mxu0 %v784
    %2365 = vmatprep.subr.mxu0 0.0
    %2366 = vmatpush2.msra.mxu0 0.0
    %2367 = vmatprep.subr.mxu0 0.0
    %2368 = vmatpush2.msra.mxu0 0.0
    %2369 = vmatprep.subr.mxu0 0.0
    %2370 = vmatpush2.msra.mxu0 0.0
    %2371 = vmatprep.subr.mxu0 0.0
    %2372 = vmatpush2.msra.mxu0 0.0
    %2373 = vmatprep.subr.mxu0 0.0
    %2374 = vmatpush2.msra.mxu0 0.0
    %2375 = vmatprep.subr.mxu0 0.0
    %2376 = vmatpush2.msra.mxu0 0.0
    %2377 = vmatprep.subr.mxu0 0.0
    %2378 = vmatpush2.msra.mxu0 0.0
    %2379 = vmatprep.subr.mxu0 0.0
    %2380 = vmatpush2.msra.mxu0 0.0
    %2381 = vmatprep.subr.mxu0 0.0
    %2382 = vmatpush2.msra.mxu0 0.0
    %2383 = vmatprep.subr.mxu0 0.0
    %2384 = vmatpush2.msra.mxu0 0.0
    %2385 = vmatprep.subr.mxu0 0.0
    %2386 = vmatpush2.msra.mxu0 0.0
    %2387 = vmatprep.subr.mxu0 0.0
    %2388 = vmatpush2.msra.mxu0 0.0
    %2389 = vmatprep.subr.mxu0 0.0
    %2390 = vmatpush2.msra.mxu0 0.0
    %2391 = vmatprep.subr.mxu0 0.0
    %2392 = vmatpush2.msra.mxu0 0.0
    %2393 = vmatprep.subr.mxu0 0.0
    %2394 = vmatpush2.msra.mxu0 0.0
    %2395 = vmatprep.subr.mxu0 0.0
    %2396 = vmatpush2.msra.mxu0 0.0
    %2397 = vmatprep.mubr.f32.mxu0 0.0
    %2398 = vmatmul.mubr.f32.gmra.mxu0 %v2328
    %v2399 = vpop.f32.mrf.mxu0
    %v2400 = vadd.f32 0.0, %v2399
    %v2401 = vpop.f32.mrf.mxu0
    %v2402 = vadd.f32 0.0, %v2401
    %2403 = vdwg.mxu0
    %2404 = vmatprep.subr.mxu0 %v847
    %2405 = vmatpush1.msra.mxu0 %v846
    %2406 = vmatprep.subr.mxu0 %v843
    %2407 = vmatpush1.msra.mxu0 %v842
    %2408 = vmatprep.subr.mxu0 %v839
    %2409 = vmatpush1.msra.mxu0 %v838
    %2410 = vmatprep.subr.mxu0 %v835
    %2411 = vmatpush1.msra.mxu0 %v834
    %2412 = vmatprep.subr.mxu0 %v831
    %2413 = vmatpush1.msra.mxu0 %v830
    %2414 = vmatprep.subr.mxu0 %v827
    %2415 = vmatpush1.msra.mxu0 %v826
    %2416 = vmatprep.subr.mxu0 %v823
    %2417 = vmatpush1.msra.mxu0 %v822
    %2418 = vmatprep.subr.mxu0 %v819
    %2419 = vmatpush1.msra.mxu0 %v818
    %2420 = vmatprep.subr.mxu0 %v815
    %2421 = vmatpush1.msra.mxu0 %v814
    %2422 = vmatprep.subr.mxu0 %v811
    %2423 = vmatpush1.msra.mxu0 %v810
    %2424 = vmatprep.subr.mxu0 %v807
    %2425 = vmatpush1.msra.mxu0 %v806
    %2426 = vmatprep.subr.mxu0 %v803
    %2427 = vmatpush1.msra.mxu0 %v802
    %2428 = vmatprep.subr.mxu0 %v799
    %2429 = vmatpush1.msra.mxu0 %v798
    %2430 = vmatprep.subr.mxu0 %v795
    %2431 = vmatpush1.msra.mxu0 %v794
    %2432 = vmatprep.subr.mxu0 %v791
    %2433 = vmatpush1.msra.mxu0 %v790
    %2434 = vmatprep.subr.mxu0 %v787
    %2435 = vmatpush1.msra.mxu0 %v786
    %2436 = vmatprep.subr.mxu0 0.0
    %2437 = vmatpush2.msra.mxu0 0.0
    %2438 = vmatprep.subr.mxu0 0.0
    %2439 = vmatpush2.msra.mxu0 0.0
    %2440 = vmatprep.subr.mxu0 0.0
    %2441 = vmatpush2.msra.mxu0 0.0
    %2442 = vmatprep.subr.mxu0 0.0
    %2443 = vmatpush2.msra.mxu0 0.0
    %2444 = vmatprep.subr.mxu0 0.0
    %2445 = vmatpush2.msra.mxu0 0.0
    %2446 = vmatprep.subr.mxu0 0.0
    %2447 = vmatpush2.msra.mxu0 0.0
    %2448 = vmatprep.subr.mxu0 0.0
    %2449 = vmatpush2.msra.mxu0 0.0
    %2450 = vmatprep.subr.mxu0 0.0
    %2451 = vmatpush2.msra.mxu0 0.0
    %2452 = vmatprep.subr.mxu0 0.0
    %2453 = vmatpush2.msra.mxu0 0.0
    %2454 = vmatprep.subr.mxu0 0.0
    %2455 = vmatpush2.msra.mxu0 0.0
    %2456 = vmatprep.subr.mxu0 0.0
    %2457 = vmatpush2.msra.mxu0 0.0
    %2458 = vmatprep.subr.mxu0 0.0
    %2459 = vmatpush2.msra.mxu0 0.0
    %2460 = vmatprep.subr.mxu0 0.0
    %2461 = vmatpush2.msra.mxu0 0.0
    %2462 = vmatprep.subr.mxu0 0.0
    %2463 = vmatpush2.msra.mxu0 0.0
    %2464 = vmatprep.subr.mxu0 0.0
    %2465 = vmatpush2.msra.mxu0 0.0
    %2466 = vmatprep.subr.mxu0 0.0
    %2467 = vmatpush2.msra.mxu0 0.0
    %2468 = vmatprep.mubr.f32.mxu0 0.0
    %2469 = vmatmul.mubr.f32.gmra.mxu0 %v2328
    %v2470 = vpop.f32.mrf.mxu0
    %v2471 = vadd.f32 0.0, %v2470
    %v2472 = vpop.f32.mrf.mxu0
    %v2473 = vadd.f32 0.0, %v2472
    %2474 = vdwg.mxu0
    %v2475 = vadd.f32 %v2329, %v2400
    %v2476 = vadd.f32 %v2330, %v2402
    %v2477 = vadd.f32 %v2331, %v2471
    %v2478 = vadd.f32 %v2332, %v2473
    %v2479 = vtanh.pop %v2475
    %v2480 = vmul.f32 %v2479, 0.5
    %v2481 = vadd.f32 %v2480, 0.5
    %v2482 = vtanh.pop %v2476
    %v2483 = vmul.f32 %v2482, 0.5
    %v2484 = vadd.f32 %v2483, 0.5
    %v2485 = vtanh.pop %v2477
    %v2486 = vtanh.pop %v2478
    %v2487 = vmul.f32 %v2486, 0.5
    %v2488 = vadd.f32 %v2487, 0.5
    %v2489 = vmul.f32 %v2484, %v2326
    %v2490 = vmul.f32 %v2481, %v2485
    %v2491 = vadd.f32 %v2489, %v2490
    %v2492 = vtanh.pop %v2491
    %v2493 = vmul.f32 %v2488, %v2492
    %v2494 = vld [vmem:[#allocation2 + $0x140] sm:$0xff]
    %v2495 = vld [vmem:[#allocation2 + $0x148] sm:$0xff]
    %v2496 = vld [vmem:[#allocation2 + $0x150] sm:$0xff]
    %v2497 = vld [vmem:[#allocation2 + $0x158] sm:$0xff]
    %2498 = vmatprep.subr.mxu0 %v845
    %2499 = vmatpush1.msra.mxu0 %v844
    %2500 = vmatprep.subr.mxu0 %v841
    %2501 = vmatpush1.msra.mxu0 %v840
    %2502 = vmatprep.subr.mxu0 %v837
    %2503 = vmatpush1.msra.mxu0 %v836
    %2504 = vmatprep.subr.mxu0 %v833
    %2505 = vmatpush1.msra.mxu0 %v832
    %2506 = vmatprep.subr.mxu0 %v829
    %2507 = vmatpush1.msra.mxu0 %v828
    %2508 = vmatprep.subr.mxu0 %v825
    %2509 = vmatpush1.msra.mxu0 %v824
    %2510 = vmatprep.subr.mxu0 %v821
    %2511 = vmatpush1.msra.mxu0 %v820
    %2512 = vmatprep.subr.mxu0 %v817
    %2513 = vmatpush1.msra.mxu0 %v816
    %2514 = vmatprep.subr.mxu0 %v813
    %2515 = vmatpush1.msra.mxu0 %v812
    %2516 = vmatprep.subr.mxu0 %v809
    %2517 = vmatpush1.msra.mxu0 %v808
    %2518 = vmatprep.subr.mxu0 %v805
    %2519 = vmatpush1.msra.mxu0 %v804
    %2520 = vmatprep.subr.mxu0 %v801
    %2521 = vmatpush1.msra.mxu0 %v800
    %2522 = vmatprep.subr.mxu0 %v797
    %2523 = vmatpush1.msra.mxu0 %v796
    %2524 = vmatprep.subr.mxu0 %v793
    %2525 = vmatpush1.msra.mxu0 %v792
    %2526 = vmatprep.subr.mxu0 %v789
    %2527 = vmatpush1.msra.mxu0 %v788
    %2528 = vmatprep.subr.mxu0 %v785
    %2529 = vmatpush1.msra.mxu0 %v784
    %2530 = vmatprep.subr.mxu0 0.0
    %2531 = vmatpush2.msra.mxu0 0.0
    %2532 = vmatprep.subr.mxu0 0.0
    %2533 = vmatpush2.msra.mxu0 0.0
    %2534 = vmatprep.subr.mxu0 0.0
    %2535 = vmatpush2.msra.mxu0 0.0
    %2536 = vmatprep.subr.mxu0 0.0
    %2537 = vmatpush2.msra.mxu0 0.0
    %2538 = vmatprep.subr.mxu0 0.0
    %2539 = vmatpush2.msra.mxu0 0.0
    %2540 = vmatprep.subr.mxu0 0.0
    %2541 = vmatpush2.msra.mxu0 0.0
    %2542 = vmatprep.subr.mxu0 0.0
    %2543 = vmatpush2.msra.mxu0 0.0
    %2544 = vmatprep.subr.mxu0 0.0
    %2545 = vmatpush2.msra.mxu0 0.0
    %2546 = vmatprep.subr.mxu0 0.0
    %2547 = vmatpush2.msra.mxu0 0.0
    %2548 = vmatprep.subr.mxu0 0.0
    %2549 = vmatpush2.msra.mxu0 0.0
    %2550 = vmatprep.subr.mxu0 0.0
    %2551 = vmatpush2.msra.mxu0 0.0
    %2552 = vmatprep.subr.mxu0 0.0
    %2553 = vmatpush2.msra.mxu0 0.0
    %2554 = vmatprep.subr.mxu0 0.0
    %2555 = vmatpush2.msra.mxu0 0.0
    %2556 = vmatprep.subr.mxu0 0.0
    %2557 = vmatpush2.msra.mxu0 0.0
    %2558 = vmatprep.subr.mxu0 0.0
    %2559 = vmatpush2.msra.mxu0 0.0
    %2560 = vmatprep.subr.mxu0 0.0
    %2561 = vmatpush2.msra.mxu0 0.0
    %2562 = vmatprep.mubr.f32.mxu0 0.0
    %2563 = vmatmul.mubr.f32.gmra.mxu0 %v2493
    %v2564 = vpop.f32.mrf.mxu0
    %v2565 = vadd.f32 0.0, %v2564
    %v2566 = vpop.f32.mrf.mxu0
    %v2567 = vadd.f32 0.0, %v2566
    %2568 = vdwg.mxu0
    %2569 = vmatprep.subr.mxu0 %v847
    %2570 = vmatpush1.msra.mxu0 %v846
    %2571 = vmatprep.subr.mxu0 %v843
    %2572 = vmatpush1.msra.mxu0 %v842
    %2573 = vmatprep.subr.mxu0 %v839
    %2574 = vmatpush1.msra.mxu0 %v838
    %2575 = vmatprep.subr.mxu0 %v835
    %2576 = vmatpush1.msra.mxu0 %v834
    %2577 = vmatprep.subr.mxu0 %v831
    %2578 = vmatpush1.msra.mxu0 %v830
    %2579 = vmatprep.subr.mxu0 %v827
    %2580 = vmatpush1.msra.mxu0 %v826
    %2581 = vmatprep.subr.mxu0 %v823
    %2582 = vmatpush1.msra.mxu0 %v822
    %2583 = vmatprep.subr.mxu0 %v819
    %2584 = vmatpush1.msra.mxu0 %v818
    %2585 = vmatprep.subr.mxu0 %v815
    %2586 = vmatpush1.msra.mxu0 %v814
    %2587 = vmatprep.subr.mxu0 %v811
    %2588 = vmatpush1.msra.mxu0 %v810
    %2589 = vmatprep.subr.mxu0 %v807
    %2590 = vmatpush1.msra.mxu0 %v806
    %2591 = vmatprep.subr.mxu0 %v803
    %2592 = vmatpush1.msra.mxu0 %v802
    %2593 = vmatprep.subr.mxu0 %v799
    %2594 = vmatpush1.msra.mxu0 %v798
    %2595 = vmatprep.subr.mxu0 %v795
    %2596 = vmatpush1.msra.mxu0 %v794
    %2597 = vmatprep.subr.mxu0 %v791
    %2598 = vmatpush1.msra.mxu0 %v790
    %2599 = vmatprep.subr.mxu0 %v787
    %2600 = vmatpush1.msra.mxu0 %v786
    %2601 = vmatprep.subr.mxu0 0.0
    %2602 = vmatpush2.msra.mxu0 0.0
    %2603 = vmatprep.subr.mxu0 0.0
    %2604 = vmatpush2.msra.mxu0 0.0
    %2605 = vmatprep.subr.mxu0 0.0
    %2606 = vmatpush2.msra.mxu0 0.0
    %2607 = vmatprep.subr.mxu0 0.0
    %2608 = vmatpush2.msra.mxu0 0.0
    %2609 = vmatprep.subr.mxu0 0.0
    %2610 = vmatpush2.msra.mxu0 0.0
    %2611 = vmatprep.subr.mxu0 0.0
    %2612 = vmatpush2.msra.mxu0 0.0
    %2613 = vmatprep.subr.mxu0 0.0
    %2614 = vmatpush2.msra.mxu0 0.0
    %2615 = vmatprep.subr.mxu0 0.0
    %2616 = vmatpush2.msra.mxu0 0.0
    %2617 = vmatprep.subr.mxu0 0.0
    %2618 = vmatpush2.msra.mxu0 0.0
    %2619 = vmatprep.subr.mxu0 0.0
    %2620 = vmatpush2.msra.mxu0 0.0
    %2621 = vmatprep.subr.mxu0 0.0
    %2622 = vmatpush2.msra.mxu0 0.0
    %2623 = vmatprep.subr.mxu0 0.0
    %2624 = vmatpush2.msra.mxu0 0.0
    %2625 = vmatprep.subr.mxu0 0.0
    %2626 = vmatpush2.msra.mxu0 0.0
    %2627 = vmatprep.subr.mxu0 0.0
    %2628 = vmatpush2.msra.mxu0 0.0
    %2629 = vmatprep.subr.mxu0 0.0
    %2630 = vmatpush2.msra.mxu0 0.0
    %2631 = vmatprep.subr.mxu0 0.0
    %2632 = vmatpush2.msra.mxu0 0.0
    %2633 = vmatprep.mubr.f32.mxu0 0.0
    %2634 = vmatmul.mubr.f32.gmra.mxu0 %v2493
    %v2635 = vpop.f32.mrf.mxu0
    %v2636 = vadd.f32 0.0, %v2635
    %v2637 = vpop.f32.mrf.mxu0
    %v2638 = vadd.f32 0.0, %v2637
    %2639 = vdwg.mxu0
    %v2640 = vadd.f32 %v2494, %v2565
    %v2641 = vadd.f32 %v2495, %v2567
    %v2642 = vadd.f32 %v2496, %v2636
    %v2643 = vadd.f32 %v2497, %v2638
    %v2644 = vtanh.pop %v2640
    %v2645 = vmul.f32 %v2644, 0.5
    %v2646 = vadd.f32 %v2645, 0.5
    %v2647 = vtanh.pop %v2641
    %v2648 = vmul.f32 %v2647, 0.5
    %v2649 = vadd.f32 %v2648, 0.5
    %v2650 = vtanh.pop %v2642
    %v2651 = vtanh.pop %v2643
    %v2652 = vmul.f32 %v2651, 0.5
    %v2653 = vadd.f32 %v2652, 0.5
    %v2654 = vmul.f32 %v2649, %v2491
    %v2655 = vmul.f32 %v2646, %v2650
    %v2656 = vadd.f32 %v2654, %v2655
    %v2657 = vtanh.pop %v2656
    %v2658 = vmul.f32 %v2653, %v2657
    %v2659 = vld [vmem:[#allocation2 + $0x160] sm:$0xff]
    %v2660 = vld [vmem:[#allocation2 + $0x168] sm:$0xff]
    %v2661 = vld [vmem:[#allocation2 + $0x170] sm:$0xff]
    %v2662 = vld [vmem:[#allocation2 + $0x178] sm:$0xff]
    %2663 = vmatprep.subr.mxu0 %v845
    %2664 = vmatpush1.msra.mxu0 %v844
    %2665 = vmatprep.subr.mxu0 %v841
    %2666 = vmatpush1.msra.mxu0 %v840
    %2667 = vmatprep.subr.mxu0 %v837
    %2668 = vmatpush1.msra.mxu0 %v836
    %2669 = vmatprep.subr.mxu0 %v833
    %2670 = vmatpush1.msra.mxu0 %v832
    %2671 = vmatprep.subr.mxu0 %v829
    %2672 = vmatpush1.msra.mxu0 %v828
    %2673 = vmatprep.subr.mxu0 %v825
    %2674 = vmatpush1.msra.mxu0 %v824
    %2675 = vmatprep.subr.mxu0 %v821
    %2676 = vmatpush1.msra.mxu0 %v820
    %2677 = vmatprep.subr.mxu0 %v817
    %2678 = vmatpush1.msra.mxu0 %v816
    %2679 = vmatprep.subr.mxu0 %v813
    %2680 = vmatpush1.msra.mxu0 %v812
    %2681 = vmatprep.subr.mxu0 %v809
    %2682 = vmatpush1.msra.mxu0 %v808
    %2683 = vmatprep.subr.mxu0 %v805
    %2684 = vmatpush1.msra.mxu0 %v804
    %2685 = vmatprep.subr.mxu0 %v801
    %2686 = vmatpush1.msra.mxu0 %v800
    %2687 = vmatprep.subr.mxu0 %v797
    %2688 = vmatpush1.msra.mxu0 %v796
    %2689 = vmatprep.subr.mxu0 %v793
    %2690 = vmatpush1.msra.mxu0 %v792
    %2691 = vmatprep.subr.mxu0 %v789
    %2692 = vmatpush1.msra.mxu0 %v788
    %2693 = vmatprep.subr.mxu0 %v785
    %2694 = vmatpush1.msra.mxu0 %v784
    %2695 = vmatprep.subr.mxu0 0.0
    %2696 = vmatpush2.msra.mxu0 0.0
    %2697 = vmatprep.subr.mxu0 0.0
    %2698 = vmatpush2.msra.mxu0 0.0
    %2699 = vmatprep.subr.mxu0 0.0
    %2700 = vmatpush2.msra.mxu0 0.0
    %2701 = vmatprep.subr.mxu0 0.0
    %2702 = vmatpush2.msra.mxu0 0.0
    %2703 = vmatprep.subr.mxu0 0.0
    %2704 = vmatpush2.msra.mxu0 0.0
    %2705 = vmatprep.subr.mxu0 0.0
    %2706 = vmatpush2.msra.mxu0 0.0
    %2707 = vmatprep.subr.mxu0 0.0
    %2708 = vmatpush2.msra.mxu0 0.0
    %2709 = vmatprep.subr.mxu0 0.0
    %2710 = vmatpush2.msra.mxu0 0.0
    %2711 = vmatprep.subr.mxu0 0.0
    %2712 = vmatpush2.msra.mxu0 0.0
    %2713 = vmatprep.subr.mxu0 0.0
    %2714 = vmatpush2.msra.mxu0 0.0
    %2715 = vmatprep.subr.mxu0 0.0
    %2716 = vmatpush2.msra.mxu0 0.0
    %2717 = vmatprep.subr.mxu0 0.0
    %2718 = vmatpush2.msra.mxu0 0.0
    %2719 = vmatprep.subr.mxu0 0.0
    %2720 = vmatpush2.msra.mxu0 0.0
    %2721 = vmatprep.subr.mxu0 0.0
    %2722 = vmatpush2.msra.mxu0 0.0
    %2723 = vmatprep.subr.mxu0 0.0
    %2724 = vmatpush2.msra.mxu0 0.0
    %2725 = vmatprep.subr.mxu0 0.0
    %2726 = vmatpush2.msra.mxu0 0.0
    %2727 = vmatprep.mubr.f32.mxu0 0.0
    %2728 = vmatmul.mubr.f32.gmra.mxu0 %v2658
    %v2729 = vpop.f32.mrf.mxu0
    %v2730 = vadd.f32 0.0, %v2729
    %v2731 = vpop.f32.mrf.mxu0
    %v2732 = vadd.f32 0.0, %v2731
    %2733 = vdwg.mxu0
    %2734 = vmatprep.subr.mxu0 %v847
    %2735 = vmatpush1.msra.mxu0 %v846
    %2736 = vmatprep.subr.mxu0 %v843
    %2737 = vmatpush1.msra.mxu0 %v842
    %2738 = vmatprep.subr.mxu0 %v839
    %2739 = vmatpush1.msra.mxu0 %v838
    %2740 = vmatprep.subr.mxu0 %v835
    %2741 = vmatpush1.msra.mxu0 %v834
    %2742 = vmatprep.subr.mxu0 %v831
    %2743 = vmatpush1.msra.mxu0 %v830
    %2744 = vmatprep.subr.mxu0 %v827
    %2745 = vmatpush1.msra.mxu0 %v826
    %2746 = vmatprep.subr.mxu0 %v823
    %2747 = vmatpush1.msra.mxu0 %v822
    %2748 = vmatprep.subr.mxu0 %v819
    %2749 = vmatpush1.msra.mxu0 %v818
    %2750 = vmatprep.subr.mxu0 %v815
    %2751 = vmatpush1.msra.mxu0 %v814
    %2752 = vmatprep.subr.mxu0 %v811
    %2753 = vmatpush1.msra.mxu0 %v810
    %2754 = vmatprep.subr.mxu0 %v807
    %2755 = vmatpush1.msra.mxu0 %v806
    %2756 = vmatprep.subr.mxu0 %v803
    %2757 = vmatpush1.msra.mxu0 %v802
    %2758 = vmatprep.subr.mxu0 %v799
    %2759 = vmatpush1.msra.mxu0 %v798
    %2760 = vmatprep.subr.mxu0 %v795
    %2761 = vmatpush1.msra.mxu0 %v794
    %2762 = vmatprep.subr.mxu0 %v791
    %2763 = vmatpush1.msra.mxu0 %v790
    %2764 = vmatprep.subr.mxu0 %v787
    %2765 = vmatpush1.msra.mxu0 %v786
    %2766 = vmatprep.subr.mxu0 0.0
    %2767 = vmatpush2.msra.mxu0 0.0
    %2768 = vmatprep.subr.mxu0 0.0
    %2769 = vmatpush2.msra.mxu0 0.0
    %2770 = vmatprep.subr.mxu0 0.0
    %2771 = vmatpush2.msra.mxu0 0.0
    %2772 = vmatprep.subr.mxu0 0.0
    %2773 = vmatpush2.msra.mxu0 0.0
    %2774 = vmatprep.subr.mxu0 0.0
    %2775 = vmatpush2.msra.mxu0 0.0
    %2776 = vmatprep.subr.mxu0 0.0
    %2777 = vmatpush2.msra.mxu0 0.0
    %2778 = vmatprep.subr.mxu0 0.0
    %2779 = vmatpush2.msra.mxu0 0.0
    %2780 = vmatprep.subr.mxu0 0.0
    %2781 = vmatpush2.msra.mxu0 0.0
    %2782 = vmatprep.subr.mxu0 0.0
    %2783 = vmatpush2.msra.mxu0 0.0
    %2784 = vmatprep.subr.mxu0 0.0
    %2785 = vmatpush2.msra.mxu0 0.0
    %2786 = vmatprep.subr.mxu0 0.0
    %2787 = vmatpush2.msra.mxu0 0.0
    %2788 = vmatprep.subr.mxu0 0.0
    %2789 = vmatpush2.msra.mxu0 0.0
    %2790 = vmatprep.subr.mxu0 0.0
    %2791 = vmatpush2.msra.mxu0 0.0
    %2792 = vmatprep.subr.mxu0 0.0
    %2793 = vmatpush2.msra.mxu0 0.0
    %2794 = vmatprep.subr.mxu0 0.0
    %2795 = vmatpush2.msra.mxu0 0.0
    %2796 = vmatprep.subr.mxu0 0.0
    %2797 = vmatpush2.msra.mxu0 0.0
    %2798 = vmatprep.mubr.f32.mxu0 0.0
    %2799 = vmatmul.mubr.f32.gmra.mxu0 %v2658
    %v2800 = vpop.f32.mrf.mxu0
    %v2801 = vadd.f32 0.0, %v2800
    %v2802 = vpop.f32.mrf.mxu0
    %v2803 = vadd.f32 0.0, %v2802
    %2804 = vdwg.mxu0
    %v2805 = vadd.f32 %v2659, %v2730
    %v2806 = vadd.f32 %v2660, %v2732
    %v2807 = vadd.f32 %v2661, %v2801
    %v2808 = vadd.f32 %v2662, %v2803
    %v2809 = vtanh.pop %v2805
    %v2810 = vmul.f32 %v2809, 0.5
    %v2811 = vadd.f32 %v2810, 0.5
    %v2812 = vtanh.pop %v2806
    %v2813 = vmul.f32 %v2812, 0.5
    %v2814 = vadd.f32 %v2813, 0.5
    %v2815 = vtanh.pop %v2807
    %v2816 = vtanh.pop %v2808
    %v2817 = vmul.f32 %v2816, 0.5
    %v2818 = vadd.f32 %v2817, 0.5
    %v2819 = vmul.f32 %v2814, %v2656
    %v2820 = vmul.f32 %v2811, %v2815
    %v2821 = vadd.f32 %v2819, %v2820
    %v2822 = vtanh.pop %v2821
    %v2823 = vmul.f32 %v2818, %v2822
    %v2824 = vld [vmem:[#allocation2 + $0x180] sm:$0xff]
    %v2825 = vld [vmem:[#allocation2 + $0x188] sm:$0xff]
    %v2826 = vld [vmem:[#allocation2 + $0x190] sm:$0xff]
    %v2827 = vld [vmem:[#allocation2 + $0x198] sm:$0xff]
    %2828 = vmatprep.subr.mxu0 %v845
    %2829 = vmatpush1.msra.mxu0 %v844
    %2830 = vmatprep.subr.mxu0 %v841
    %2831 = vmatpush1.msra.mxu0 %v840
    %2832 = vmatprep.subr.mxu0 %v837
    %2833 = vmatpush1.msra.mxu0 %v836
    %2834 = vmatprep.subr.mxu0 %v833
    %2835 = vmatpush1.msra.mxu0 %v832
    %2836 = vmatprep.subr.mxu0 %v829
    %2837 = vmatpush1.msra.mxu0 %v828
    %2838 = vmatprep.subr.mxu0 %v825
    %2839 = vmatpush1.msra.mxu0 %v824
    %2840 = vmatprep.subr.mxu0 %v821
    %2841 = vmatpush1.msra.mxu0 %v820
    %2842 = vmatprep.subr.mxu0 %v817
    %2843 = vmatpush1.msra.mxu0 %v816
    %2844 = vmatprep.subr.mxu0 %v813
    %2845 = vmatpush1.msra.mxu0 %v812
    %2846 = vmatprep.subr.mxu0 %v809
    %2847 = vmatpush1.msra.mxu0 %v808
    %2848 = vmatprep.subr.mxu0 %v805
    %2849 = vmatpush1.msra.mxu0 %v804
    %2850 = vmatprep.subr.mxu0 %v801
    %2851 = vmatpush1.msra.mxu0 %v800
    %2852 = vmatprep.subr.mxu0 %v797
    %2853 = vmatpush1.msra.mxu0 %v796
    %2854 = vmatprep.subr.mxu0 %v793
    %2855 = vmatpush1.msra.mxu0 %v792
    %2856 = vmatprep.subr.mxu0 %v789
    %2857 = vmatpush1.msra.mxu0 %v788
    %2858 = vmatprep.subr.mxu0 %v785
    %2859 = vmatpush1.msra.mxu0 %v784
    %2860 = vmatprep.subr.mxu0 0.0
    %2861 = vmatpush2.msra.mxu0 0.0
    %2862 = vmatprep.subr.mxu0 0.0
    %2863 = vmatpush2.msra.mxu0 0.0
    %2864 = vmatprep.subr.mxu0 0.0
    %2865 = vmatpush2.msra.mxu0 0.0
    %2866 = vmatprep.subr.mxu0 0.0
    %2867 = vmatpush2.msra.mxu0 0.0
    %2868 = vmatprep.subr.mxu0 0.0
    %2869 = vmatpush2.msra.mxu0 0.0
    %2870 = vmatprep.subr.mxu0 0.0
    %2871 = vmatpush2.msra.mxu0 0.0
    %2872 = vmatprep.subr.mxu0 0.0
    %2873 = vmatpush2.msra.mxu0 0.0
    %2874 = vmatprep.subr.mxu0 0.0
    %2875 = vmatpush2.msra.mxu0 0.0
    %2876 = vmatprep.subr.mxu0 0.0
    %2877 = vmatpush2.msra.mxu0 0.0
    %2878 = vmatprep.subr.mxu0 0.0
    %2879 = vmatpush2.msra.mxu0 0.0
    %2880 = vmatprep.subr.mxu0 0.0
    %2881 = vmatpush2.msra.mxu0 0.0
    %2882 = vmatprep.subr.mxu0 0.0
    %2883 = vmatpush2.msra.mxu0 0.0
    %2884 = vmatprep.subr.mxu0 0.0
    %2885 = vmatpush2.msra.mxu0 0.0
    %2886 = vmatprep.subr.mxu0 0.0
    %2887 = vmatpush2.msra.mxu0 0.0
    %2888 = vmatprep.subr.mxu0 0.0
    %2889 = vmatpush2.msra.mxu0 0.0
    %2890 = vmatprep.subr.mxu0 0.0
    %2891 = vmatpush2.msra.mxu0 0.0
    %2892 = vmatprep.mubr.f32.mxu0 0.0
    %2893 = vmatmul.mubr.f32.gmra.mxu0 %v2823
    %v2894 = vpop.f32.mrf.mxu0
    %v2895 = vadd.f32 0.0, %v2894
    %v2896 = vpop.f32.mrf.mxu0
    %v2897 = vadd.f32 0.0, %v2896
    %2898 = vdwg.mxu0
    %2899 = vmatprep.subr.mxu0 %v847
    %2900 = vmatpush1.msra.mxu0 %v846
    %2901 = vmatprep.subr.mxu0 %v843
    %2902 = vmatpush1.msra.mxu0 %v842
    %2903 = vmatprep.subr.mxu0 %v839
    %2904 = vmatpush1.msra.mxu0 %v838
    %2905 = vmatprep.subr.mxu0 %v835
    %2906 = vmatpush1.msra.mxu0 %v834
    %2907 = vmatprep.subr.mxu0 %v831
    %2908 = vmatpush1.msra.mxu0 %v830
    %2909 = vmatprep.subr.mxu0 %v827
    %2910 = vmatpush1.msra.mxu0 %v826
    %2911 = vmatprep.subr.mxu0 %v823
    %2912 = vmatpush1.msra.mxu0 %v822
    %2913 = vmatprep.subr.mxu0 %v819
    %2914 = vmatpush1.msra.mxu0 %v818
    %2915 = vmatprep.subr.mxu0 %v815
    %2916 = vmatpush1.msra.mxu0 %v814
    %2917 = vmatprep.subr.mxu0 %v811
    %2918 = vmatpush1.msra.mxu0 %v810
    %2919 = vmatprep.subr.mxu0 %v807
    %2920 = vmatpush1.msra.mxu0 %v806
    %2921 = vmatprep.subr.mxu0 %v803
    %2922 = vmatpush1.msra.mxu0 %v802
    %2923 = vmatprep.subr.mxu0 %v799
    %2924 = vmatpush1.msra.mxu0 %v798
    %2925 = vmatprep.subr.mxu0 %v795
    %2926 = vmatpush1.msra.mxu0 %v794
    %2927 = vmatprep.subr.mxu0 %v791
    %2928 = vmatpush1.msra.mxu0 %v790
    %2929 = vmatprep.subr.mxu0 %v787
    %2930 = vmatpush1.msra.mxu0 %v786
    %2931 = vmatprep.subr.mxu0 0.0
    %2932 = vmatpush2.msra.mxu0 0.0
    %2933 = vmatprep.subr.mxu0 0.0
    %2934 = vmatpush2.msra.mxu0 0.0
    %2935 = vmatprep.subr.mxu0 0.0
    %2936 = vmatpush2.msra.mxu0 0.0
    %2937 = vmatprep.subr.mxu0 0.0
    %2938 = vmatpush2.msra.mxu0 0.0
    %2939 = vmatprep.subr.mxu0 0.0
    %2940 = vmatpush2.msra.mxu0 0.0
    %2941 = vmatprep.subr.mxu0 0.0
    %2942 = vmatpush2.msra.mxu0 0.0
    %2943 = vmatprep.subr.mxu0 0.0
    %2944 = vmatpush2.msra.mxu0 0.0
    %2945 = vmatprep.subr.mxu0 0.0
    %2946 = vmatpush2.msra.mxu0 0.0
    %2947 = vmatprep.subr.mxu0 0.0
    %2948 = vmatpush2.msra.mxu0 0.0
    %2949 = vmatprep.subr.mxu0 0.0
    %2950 = vmatpush2.msra.mxu0 0.0
    %2951 = vmatprep.subr.mxu0 0.0
    %2952 = vmatpush2.msra.mxu0 0.0
    %2953 = vmatprep.subr.mxu0 0.0
    %2954 = vmatpush2.msra.mxu0 0.0
    %2955 = vmatprep.subr.mxu0 0.0
    %2956 = vmatpush2.msra.mxu0 0.0
    %2957 = vmatprep.subr.mxu0 0.0
    %2958 = vmatpush2.msra.mxu0 0.0
    %2959 = vmatprep.subr.mxu0 0.0
    %2960 = vmatpush2.msra.mxu0 0.0
    %2961 = vmatprep.subr.mxu0 0.0
    %2962 = vmatpush2.msra.mxu0 0.0
    %2963 = vmatprep.mubr.f32.mxu0 0.0
    %2964 = vmatmul.mubr.f32.gmra.mxu0 %v2823
    %v2965 = vpop.f32.mrf.mxu0
    %v2966 = vadd.f32 0.0, %v2965
    %v2967 = vpop.f32.mrf.mxu0
    %v2968 = vadd.f32 0.0, %v2967
    %2969 = vdwg.mxu0
    %v2970 = vadd.f32 %v2824, %v2895
    %v2971 = vadd.f32 %v2825, %v2897
    %v2972 = vadd.f32 %v2826, %v2966
    %v2973 = vadd.f32 %v2827, %v2968
    %v2974 = vtanh.pop %v2970
    %v2975 = vmul.f32 %v2974, 0.5
    %v2976 = vadd.f32 %v2975, 0.5
    %v2977 = vtanh.pop %v2971
    %v2978 = vmul.f32 %v2977, 0.5
    %v2979 = vadd.f32 %v2978, 0.5
    %v2980 = vtanh.pop %v2972
    %v2981 = vtanh.pop %v2973
    %v2982 = vmul.f32 %v2981, 0.5
    %v2983 = vadd.f32 %v2982, 0.5
    %v2984 = vmul.f32 %v2979, %v2821
    %v2985 = vmul.f32 %v2976, %v2980
    %v2986 = vadd.f32 %v2984, %v2985
    %v2987 = vtanh.pop %v2986
    %v2988 = vmul.f32 %v2983, %v2987
    %v2989 = vld [vmem:[#allocation2 + $0x1a0] sm:$0xff]
    %v2990 = vld [vmem:[#allocation2 + $0x1a8] sm:$0xff]
    %v2991 = vld [vmem:[#allocation2 + $0x1b0] sm:$0xff]
    %v2992 = vld [vmem:[#allocation2 + $0x1b8] sm:$0xff]
    %2993 = vmatprep.subr.mxu0 %v845
    %2994 = vmatpush1.msra.mxu0 %v844
    %2995 = vmatprep.subr.mxu0 %v841
    %2996 = vmatpush1.msra.mxu0 %v840
    %2997 = vmatprep.subr.mxu0 %v837
    %2998 = vmatpush1.msra.mxu0 %v836
    %2999 = vmatprep.subr.mxu0 %v833
    %3000 = vmatpush1.msra.mxu0 %v832
    %3001 = vmatprep.subr.mxu0 %v829
    %3002 = vmatpush1.msra.mxu0 %v828
    %3003 = vmatprep.subr.mxu0 %v825
    %3004 = vmatpush1.msra.mxu0 %v824
    %3005 = vmatprep.subr.mxu0 %v821
    %3006 = vmatpush1.msra.mxu0 %v820
    %3007 = vmatprep.subr.mxu0 %v817
    %3008 = vmatpush1.msra.mxu0 %v816
    %3009 = vmatprep.subr.mxu0 %v813
    %3010 = vmatpush1.msra.mxu0 %v812
    %3011 = vmatprep.subr.mxu0 %v809
    %3012 = vmatpush1.msra.mxu0 %v808
    %3013 = vmatprep.subr.mxu0 %v805
    %3014 = vmatpush1.msra.mxu0 %v804
    %3015 = vmatprep.subr.mxu0 %v801
    %3016 = vmatpush1.msra.mxu0 %v800
    %3017 = vmatprep.subr.mxu0 %v797
    %3018 = vmatpush1.msra.mxu0 %v796
    %3019 = vmatprep.subr.mxu0 %v793
    %3020 = vmatpush1.msra.mxu0 %v792
    %3021 = vmatprep.subr.mxu0 %v789
    %3022 = vmatpush1.msra.mxu0 %v788
    %3023 = vmatprep.subr.mxu0 %v785
    %3024 = vmatpush1.msra.mxu0 %v784
    %3025 = vmatprep.subr.mxu0 0.0
    %3026 = vmatpush2.msra.mxu0 0.0
    %3027 = vmatprep.subr.mxu0 0.0
    %3028 = vmatpush2.msra.mxu0 0.0
    %3029 = vmatprep.subr.mxu0 0.0
    %3030 = vmatpush2.msra.mxu0 0.0
    %3031 = vmatprep.subr.mxu0 0.0
    %3032 = vmatpush2.msra.mxu0 0.0
    %3033 = vmatprep.subr.mxu0 0.0
    %3034 = vmatpush2.msra.mxu0 0.0
    %3035 = vmatprep.subr.mxu0 0.0
    %3036 = vmatpush2.msra.mxu0 0.0
    %3037 = vmatprep.subr.mxu0 0.0
    %3038 = vmatpush2.msra.mxu0 0.0
    %3039 = vmatprep.subr.mxu0 0.0
    %3040 = vmatpush2.msra.mxu0 0.0
    %3041 = vmatprep.subr.mxu0 0.0
    %3042 = vmatpush2.msra.mxu0 0.0
    %3043 = vmatprep.subr.mxu0 0.0
    %3044 = vmatpush2.msra.mxu0 0.0
    %3045 = vmatprep.subr.mxu0 0.0
    %3046 = vmatpush2.msra.mxu0 0.0
    %3047 = vmatprep.subr.mxu0 0.0
    %3048 = vmatpush2.msra.mxu0 0.0
    %3049 = vmatprep.subr.mxu0 0.0
    %3050 = vmatpush2.msra.mxu0 0.0
    %3051 = vmatprep.subr.mxu0 0.0
    %3052 = vmatpush2.msra.mxu0 0.0
    %3053 = vmatprep.subr.mxu0 0.0
    %3054 = vmatpush2.msra.mxu0 0.0
    %3055 = vmatprep.subr.mxu0 0.0
    %3056 = vmatpush2.msra.mxu0 0.0
    %3057 = vmatprep.mubr.f32.mxu0 0.0
    %3058 = vmatmul.mubr.f32.gmra.mxu0 %v2988
    %v3059 = vpop.f32.mrf.mxu0
    %v3060 = vadd.f32 0.0, %v3059
    %v3061 = vpop.f32.mrf.mxu0
    %v3062 = vadd.f32 0.0, %v3061
    %3063 = vdwg.mxu0
    %3064 = vmatprep.subr.mxu0 %v847
    %3065 = vmatpush1.msra.mxu0 %v846
    %3066 = vmatprep.subr.mxu0 %v843
    %3067 = vmatpush1.msra.mxu0 %v842
    %3068 = vmatprep.subr.mxu0 %v839
    %3069 = vmatpush1.msra.mxu0 %v838
    %3070 = vmatprep.subr.mxu0 %v835
    %3071 = vmatpush1.msra.mxu0 %v834
    %3072 = vmatprep.subr.mxu0 %v831
    %3073 = vmatpush1.msra.mxu0 %v830
    %3074 = vmatprep.subr.mxu0 %v827
    %3075 = vmatpush1.msra.mxu0 %v826
    %3076 = vmatprep.subr.mxu0 %v823
    %3077 = vmatpush1.msra.mxu0 %v822
    %3078 = vmatprep.subr.mxu0 %v819
    %3079 = vmatpush1.msra.mxu0 %v818
    %3080 = vmatprep.subr.mxu0 %v815
    %3081 = vmatpush1.msra.mxu0 %v814
    %3082 = vmatprep.subr.mxu0 %v811
    %3083 = vmatpush1.msra.mxu0 %v810
    %3084 = vmatprep.subr.mxu0 %v807
    %3085 = vmatpush1.msra.mxu0 %v806
    %3086 = vmatprep.subr.mxu0 %v803
    %3087 = vmatpush1.msra.mxu0 %v802
    %3088 = vmatprep.subr.mxu0 %v799
    %3089 = vmatpush1.msra.mxu0 %v798
    %3090 = vmatprep.subr.mxu0 %v795
    %3091 = vmatpush1.msra.mxu0 %v794
    %3092 = vmatprep.subr.mxu0 %v791
    %3093 = vmatpush1.msra.mxu0 %v790
    %3094 = vmatprep.subr.mxu0 %v787
    %3095 = vmatpush1.msra.mxu0 %v786
    %3096 = vmatprep.subr.mxu0 0.0
    %3097 = vmatpush2.msra.mxu0 0.0
    %3098 = vmatprep.subr.mxu0 0.0
    %3099 = vmatpush2.msra.mxu0 0.0
    %3100 = vmatprep.subr.mxu0 0.0
    %3101 = vmatpush2.msra.mxu0 0.0
    %3102 = vmatprep.subr.mxu0 0.0
    %3103 = vmatpush2.msra.mxu0 0.0
    %3104 = vmatprep.subr.mxu0 0.0
    %3105 = vmatpush2.msra.mxu0 0.0
    %3106 = vmatprep.subr.mxu0 0.0
    %3107 = vmatpush2.msra.mxu0 0.0
    %3108 = vmatprep.subr.mxu0 0.0
    %3109 = vmatpush2.msra.mxu0 0.0
    %3110 = vmatprep.subr.mxu0 0.0
    %3111 = vmatpush2.msra.mxu0 0.0
    %3112 = vmatprep.subr.mxu0 0.0
    %3113 = vmatpush2.msra.mxu0 0.0
    %3114 = vmatprep.subr.mxu0 0.0
    %3115 = vmatpush2.msra.mxu0 0.0
    %3116 = vmatprep.subr.mxu0 0.0
    %3117 = vmatpush2.msra.mxu0 0.0
    %3118 = vmatprep.subr.mxu0 0.0
    %3119 = vmatpush2.msra.mxu0 0.0
    %3120 = vmatprep.subr.mxu0 0.0
    %3121 = vmatpush2.msra.mxu0 0.0
    %3122 = vmatprep.subr.mxu0 0.0
    %3123 = vmatpush2.msra.mxu0 0.0
    %3124 = vmatprep.subr.mxu0 0.0
    %3125 = vmatpush2.msra.mxu0 0.0
    %3126 = vmatprep.subr.mxu0 0.0
    %3127 = vmatpush2.msra.mxu0 0.0
    %3128 = vmatprep.mubr.f32.mxu0 0.0
    %3129 = vmatmul.mubr.f32.gmra.mxu0 %v2988
    %v3130 = vpop.f32.mrf.mxu0
    %v3131 = vadd.f32 0.0, %v3130
    %v3132 = vpop.f32.mrf.mxu0
    %v3133 = vadd.f32 0.0, %v3132
    %3134 = vdwg.mxu0
    %v3135 = vadd.f32 %v2989, %v3060
    %v3136 = vadd.f32 %v2990, %v3062
    %v3137 = vadd.f32 %v2991, %v3131
    %v3138 = vadd.f32 %v2992, %v3133
    %v3139 = vtanh.pop %v3135
    %v3140 = vmul.f32 %v3139, 0.5
    %v3141 = vadd.f32 %v3140, 0.5
    %v3142 = vtanh.pop %v3136
    %v3143 = vmul.f32 %v3142, 0.5
    %v3144 = vadd.f32 %v3143, 0.5
    %v3145 = vtanh.pop %v3137
    %v3146 = vtanh.pop %v3138
    %v3147 = vmul.f32 %v3146, 0.5
    %v3148 = vadd.f32 %v3147, 0.5
    %v3149 = vmul.f32 %v3144, %v2986
    %v3150 = vmul.f32 %v3141, %v3145
    %v3151 = vadd.f32 %v3149, %v3150
    %v3152 = vtanh.pop %v3151
    %v3153 = vmul.f32 %v3148, %v3152
    %v3154 = vld [vmem:[#allocation2 + $0x1c0] sm:$0xff]
    %v3155 = vld [vmem:[#allocation2 + $0x1c8] sm:$0xff]
    %v3156 = vld [vmem:[#allocation2 + $0x1d0] sm:$0xff]
    %v3157 = vld [vmem:[#allocation2 + $0x1d8] sm:$0xff]
    %3158 = vmatprep.subr.mxu0 %v845
    %3159 = vmatpush1.msra.mxu0 %v844
    %3160 = vmatprep.subr.mxu0 %v841
    %3161 = vmatpush1.msra.mxu0 %v840
    %3162 = vmatprep.subr.mxu0 %v837
    %3163 = vmatpush1.msra.mxu0 %v836
    %3164 = vmatprep.subr.mxu0 %v833
    %3165 = vmatpush1.msra.mxu0 %v832
    %3166 = vmatprep.subr.mxu0 %v829
    %3167 = vmatpush1.msra.mxu0 %v828
    %3168 = vmatprep.subr.mxu0 %v825
    %3169 = vmatpush1.msra.mxu0 %v824
    %3170 = vmatprep.subr.mxu0 %v821
    %3171 = vmatpush1.msra.mxu0 %v820
    %3172 = vmatprep.subr.mxu0 %v817
    %3173 = vmatpush1.msra.mxu0 %v816
    %3174 = vmatprep.subr.mxu0 %v813
    %3175 = vmatpush1.msra.mxu0 %v812
    %3176 = vmatprep.subr.mxu0 %v809
    %3177 = vmatpush1.msra.mxu0 %v808
    %3178 = vmatprep.subr.mxu0 %v805
    %3179 = vmatpush1.msra.mxu0 %v804
    %3180 = vmatprep.subr.mxu0 %v801
    %3181 = vmatpush1.msra.mxu0 %v800
    %3182 = vmatprep.subr.mxu0 %v797
    %3183 = vmatpush1.msra.mxu0 %v796
    %3184 = vmatprep.subr.mxu0 %v793
    %3185 = vmatpush1.msra.mxu0 %v792
    %3186 = vmatprep.subr.mxu0 %v789
    %3187 = vmatpush1.msra.mxu0 %v788
    %3188 = vmatprep.subr.mxu0 %v785
    %3189 = vmatpush1.msra.mxu0 %v784
    %3190 = vmatprep.subr.mxu0 0.0
    %3191 = vmatpush2.msra.mxu0 0.0
    %3192 = vmatprep.subr.mxu0 0.0
    %3193 = vmatpush2.msra.mxu0 0.0
    %3194 = vmatprep.subr.mxu0 0.0
    %3195 = vmatpush2.msra.mxu0 0.0
    %3196 = vmatprep.subr.mxu0 0.0
    %3197 = vmatpush2.msra.mxu0 0.0
    %3198 = vmatprep.subr.mxu0 0.0
    %3199 = vmatpush2.msra.mxu0 0.0
    %3200 = vmatprep.subr.mxu0 0.0
    %3201 = vmatpush2.msra.mxu0 0.0
    %3202 = vmatprep.subr.mxu0 0.0
    %3203 = vmatpush2.msra.mxu0 0.0
    %3204 = vmatprep.subr.mxu0 0.0
    %3205 = vmatpush2.msra.mxu0 0.0
    %3206 = vmatprep.subr.mxu0 0.0
    %3207 = vmatpush2.msra.mxu0 0.0
    %3208 = vmatprep.subr.mxu0 0.0
    %3209 = vmatpush2.msra.mxu0 0.0
    %3210 = vmatprep.subr.mxu0 0.0
    %3211 = vmatpush2.msra.mxu0 0.0
    %3212 = vmatprep.subr.mxu0 0.0
    %3213 = vmatpush2.msra.mxu0 0.0
    %3214 = vmatprep.subr.mxu0 0.0
    %3215 = vmatpush2.msra.mxu0 0.0
    %3216 = vmatprep.subr.mxu0 0.0
    %3217 = vmatpush2.msra.mxu0 0.0
    %3218 = vmatprep.subr.mxu0 0.0
    %3219 = vmatpush2.msra.mxu0 0.0
    %3220 = vmatprep.subr.mxu0 0.0
    %3221 = vmatpush2.msra.mxu0 0.0
    %3222 = vmatprep.mubr.f32.mxu0 0.0
    %3223 = vmatmul.mubr.f32.gmra.mxu0 %v3153
    %v3224 = vpop.f32.mrf.mxu0
    %v3225 = vadd.f32 0.0, %v3224
    %v3226 = vpop.f32.mrf.mxu0
    %v3227 = vadd.f32 0.0, %v3226
    %3228 = vdwg.mxu0
    %3229 = vmatprep.subr.mxu0 %v847
    %3230 = vmatpush1.msra.mxu0 %v846
    %3231 = vmatprep.subr.mxu0 %v843
    %3232 = vmatpush1.msra.mxu0 %v842
    %3233 = vmatprep.subr.mxu0 %v839
    %3234 = vmatpush1.msra.mxu0 %v838
    %3235 = vmatprep.subr.mxu0 %v835
    %3236 = vmatpush1.msra.mxu0 %v834
    %3237 = vmatprep.subr.mxu0 %v831
    %3238 = vmatpush1.msra.mxu0 %v830
    %3239 = vmatprep.subr.mxu0 %v827
    %3240 = vmatpush1.msra.mxu0 %v826
    %3241 = vmatprep.subr.mxu0 %v823
    %3242 = vmatpush1.msra.mxu0 %v822
    %3243 = vmatprep.subr.mxu0 %v819
    %3244 = vmatpush1.msra.mxu0 %v818
    %3245 = vmatprep.subr.mxu0 %v815
    %3246 = vmatpush1.msra.mxu0 %v814
    %3247 = vmatprep.subr.mxu0 %v811
    %3248 = vmatpush1.msra.mxu0 %v810
    %3249 = vmatprep.subr.mxu0 %v807
    %3250 = vmatpush1.msra.mxu0 %v806
    %3251 = vmatprep.subr.mxu0 %v803
    %3252 = vmatpush1.msra.mxu0 %v802
    %3253 = vmatprep.subr.mxu0 %v799
    %3254 = vmatpush1.msra.mxu0 %v798
    %3255 = vmatprep.subr.mxu0 %v795
    %3256 = vmatpush1.msra.mxu0 %v794
    %3257 = vmatprep.subr.mxu0 %v791
    %3258 = vmatpush1.msra.mxu0 %v790
    %3259 = vmatprep.subr.mxu0 %v787
    %3260 = vmatpush1.msra.mxu0 %v786
    %3261 = vmatprep.subr.mxu0 0.0
    %3262 = vmatpush2.msra.mxu0 0.0
    %3263 = vmatprep.subr.mxu0 0.0
    %3264 = vmatpush2.msra.mxu0 0.0
    %3265 = vmatprep.subr.mxu0 0.0
    %3266 = vmatpush2.msra.mxu0 0.0
    %3267 = vmatprep.subr.mxu0 0.0
    %3268 = vmatpush2.msra.mxu0 0.0
    %3269 = vmatprep.subr.mxu0 0.0
    %3270 = vmatpush2.msra.mxu0 0.0
    %3271 = vmatprep.subr.mxu0 0.0
    %3272 = vmatpush2.msra.mxu0 0.0
    %3273 = vmatprep.subr.mxu0 0.0
    %3274 = vmatpush2.msra.mxu0 0.0
    %3275 = vmatprep.subr.mxu0 0.0
    %3276 = vmatpush2.msra.mxu0 0.0
    %3277 = vmatprep.subr.mxu0 0.0
    %3278 = vmatpush2.msra.mxu0 0.0
    %3279 = vmatprep.subr.mxu0 0.0
    %3280 = vmatpush2.msra.mxu0 0.0
    %3281 = vmatprep.subr.mxu0 0.0
    %3282 = vmatpush2.msra.mxu0 0.0
    %3283 = vmatprep.subr.mxu0 0.0
    %3284 = vmatpush2.msra.mxu0 0.0
    %3285 = vmatprep.subr.mxu0 0.0
    %3286 = vmatpush2.msra.mxu0 0.0
    %3287 = vmatprep.subr.mxu0 0.0
    %3288 = vmatpush2.msra.mxu0 0.0
    %3289 = vmatprep.subr.mxu0 0.0
    %3290 = vmatpush2.msra.mxu0 0.0
    %3291 = vmatprep.subr.mxu0 0.0
    %3292 = vmatpush2.msra.mxu0 0.0
    %3293 = vmatprep.mubr.f32.mxu0 0.0
    %3294 = vmatmul.mubr.f32.gmra.mxu0 %v3153
    %v3295 = vpop.f32.mrf.mxu0
    %v3296 = vadd.f32 0.0, %v3295
    %v3297 = vpop.f32.mrf.mxu0
    %v3298 = vadd.f32 0.0, %v3297
    %3299 = vdwg.mxu0
    %v3300 = vadd.f32 %v3154, %v3225
    %v3301 = vadd.f32 %v3155, %v3227
    %v3302 = vadd.f32 %v3156, %v3296
    %v3303 = vadd.f32 %v3157, %v3298
    %v3304 = vtanh.pop %v3300
    %v3305 = vmul.f32 %v3304, 0.5
    %v3306 = vadd.f32 %v3305, 0.5
    %v3307 = vtanh.pop %v3301
    %v3308 = vmul.f32 %v3307, 0.5
    %v3309 = vadd.f32 %v3308, 0.5
    %v3310 = vtanh.pop %v3302
    %v3311 = vtanh.pop %v3303
    %v3312 = vmul.f32 %v3311, 0.5
    %v3313 = vadd.f32 %v3312, 0.5
    %v3314 = vmul.f32 %v3309, %v3151
    %v3315 = vmul.f32 %v3306, %v3310
    %v3316 = vadd.f32 %v3314, %v3315
    %v3317 = vtanh.pop %v3316
    %v3318 = vmul.f32 %v3313, %v3317
    %v3319 = vld [vmem:[#allocation2 + $0x1e0] sm:$0xff]
    %v3320 = vld [vmem:[#allocation2 + $0x1e8] sm:$0xff]
    %v3321 = vld [vmem:[#allocation2 + $0x1f0] sm:$0xff]
    %v3322 = vld [vmem:[#allocation2 + $0x1f8] sm:$0xff]
    %3323 = vmatprep.subr.mxu0 %v845
    %3324 = vmatpush1.msra.mxu0 %v844
    %3325 = vmatprep.subr.mxu0 %v841
    %3326 = vmatpush1.msra.mxu0 %v840
    %3327 = vmatprep.subr.mxu0 %v837
    %3328 = vmatpush1.msra.mxu0 %v836
    %3329 = vmatprep.subr.mxu0 %v833
    %3330 = vmatpush1.msra.mxu0 %v832
    %3331 = vmatprep.subr.mxu0 %v829
    %3332 = vmatpush1.msra.mxu0 %v828
    %3333 = vmatprep.subr.mxu0 %v825
    %3334 = vmatpush1.msra.mxu0 %v824
    %3335 = vmatprep.subr.mxu0 %v821
    %3336 = vmatpush1.msra.mxu0 %v820
    %3337 = vmatprep.subr.mxu0 %v817
    %3338 = vmatpush1.msra.mxu0 %v816
    %3339 = vmatprep.subr.mxu0 %v813
    %3340 = vmatpush1.msra.mxu0 %v812
    %3341 = vmatprep.subr.mxu0 %v809
    %3342 = vmatpush1.msra.mxu0 %v808
    %3343 = vmatprep.subr.mxu0 %v805
    %3344 = vmatpush1.msra.mxu0 %v804
    %3345 = vmatprep.subr.mxu0 %v801
    %3346 = vmatpush1.msra.mxu0 %v800
    %3347 = vmatprep.subr.mxu0 %v797
    %3348 = vmatpush1.msra.mxu0 %v796
    %3349 = vmatprep.subr.mxu0 %v793
    %3350 = vmatpush1.msra.mxu0 %v792
    %3351 = vmatprep.subr.mxu0 %v789
    %3352 = vmatpush1.msra.mxu0 %v788
    %3353 = vmatprep.subr.mxu0 %v785
    %3354 = vmatpush1.msra.mxu0 %v784
    %3355 = vmatprep.subr.mxu0 0.0
    %3356 = vmatpush2.msra.mxu0 0.0
    %3357 = vmatprep.subr.mxu0 0.0
    %3358 = vmatpush2.msra.mxu0 0.0
    %3359 = vmatprep.subr.mxu0 0.0
    %3360 = vmatpush2.msra.mxu0 0.0
    %3361 = vmatprep.subr.mxu0 0.0
    %3362 = vmatpush2.msra.mxu0 0.0
    %3363 = vmatprep.subr.mxu0 0.0
    %3364 = vmatpush2.msra.mxu0 0.0
    %3365 = vmatprep.subr.mxu0 0.0
    %3366 = vmatpush2.msra.mxu0 0.0
    %3367 = vmatprep.subr.mxu0 0.0
    %3368 = vmatpush2.msra.mxu0 0.0
    %3369 = vmatprep.subr.mxu0 0.0
    %3370 = vmatpush2.msra.mxu0 0.0
    %3371 = vmatprep.subr.mxu0 0.0
    %3372 = vmatpush2.msra.mxu0 0.0
    %3373 = vmatprep.subr.mxu0 0.0
    %3374 = vmatpush2.msra.mxu0 0.0
    %3375 = vmatprep.subr.mxu0 0.0
    %3376 = vmatpush2.msra.mxu0 0.0
    %3377 = vmatprep.subr.mxu0 0.0
    %3378 = vmatpush2.msra.mxu0 0.0
    %3379 = vmatprep.subr.mxu0 0.0
    %3380 = vmatpush2.msra.mxu0 0.0
    %3381 = vmatprep.subr.mxu0 0.0
    %3382 = vmatpush2.msra.mxu0 0.0
    %3383 = vmatprep.subr.mxu0 0.0
    %3384 = vmatpush2.msra.mxu0 0.0
    %3385 = vmatprep.subr.mxu0 0.0
    %3386 = vmatpush2.msra.mxu0 0.0
    %3387 = vmatprep.mubr.f32.mxu0 0.0
    %3388 = vmatmul.mubr.f32.gmra.mxu0 %v3318
    %v3389 = vpop.f32.mrf.mxu0
    %v3390 = vadd.f32 0.0, %v3389
    %v3391 = vpop.f32.mrf.mxu0
    %v3392 = vadd.f32 0.0, %v3391
    %3393 = vdwg.mxu0
    %3394 = vmatprep.subr.mxu0 %v847
    %3395 = vmatpush1.msra.mxu0 %v846
    %3396 = vmatprep.subr.mxu0 %v843
    %3397 = vmatpush1.msra.mxu0 %v842
    %3398 = vmatprep.subr.mxu0 %v839
    %3399 = vmatpush1.msra.mxu0 %v838
    %3400 = vmatprep.subr.mxu0 %v835
    %3401 = vmatpush1.msra.mxu0 %v834
    %3402 = vmatprep.subr.mxu0 %v831
    %3403 = vmatpush1.msra.mxu0 %v830
    %3404 = vmatprep.subr.mxu0 %v827
    %3405 = vmatpush1.msra.mxu0 %v826
    %3406 = vmatprep.subr.mxu0 %v823
    %3407 = vmatpush1.msra.mxu0 %v822
    %3408 = vmatprep.subr.mxu0 %v819
    %3409 = vmatpush1.msra.mxu0 %v818
    %3410 = vmatprep.subr.mxu0 %v815
    %3411 = vmatpush1.msra.mxu0 %v814
    %3412 = vmatprep.subr.mxu0 %v811
    %3413 = vmatpush1.msra.mxu0 %v810
    %3414 = vmatprep.subr.mxu0 %v807
    %3415 = vmatpush1.msra.mxu0 %v806
    %3416 = vmatprep.subr.mxu0 %v803
    %3417 = vmatpush1.msra.mxu0 %v802
    %3418 = vmatprep.subr.mxu0 %v799
    %3419 = vmatpush1.msra.mxu0 %v798
    %3420 = vmatprep.subr.mxu0 %v795
    %3421 = vmatpush1.msra.mxu0 %v794
    %3422 = vmatprep.subr.mxu0 %v791
    %3423 = vmatpush1.msra.mxu0 %v790
    %3424 = vmatprep.subr.mxu0 %v787
    %3425 = vmatpush1.msra.mxu0 %v786
    %3426 = vmatprep.subr.mxu0 0.0
    %3427 = vmatpush2.msra.mxu0 0.0
    %3428 = vmatprep.subr.mxu0 0.0
    %3429 = vmatpush2.msra.mxu0 0.0
    %3430 = vmatprep.subr.mxu0 0.0
    %3431 = vmatpush2.msra.mxu0 0.0
    %3432 = vmatprep.subr.mxu0 0.0
    %3433 = vmatpush2.msra.mxu0 0.0
    %3434 = vmatprep.subr.mxu0 0.0
    %3435 = vmatpush2.msra.mxu0 0.0
    %3436 = vmatprep.subr.mxu0 0.0
    %3437 = vmatpush2.msra.mxu0 0.0
    %3438 = vmatprep.subr.mxu0 0.0
    %3439 = vmatpush2.msra.mxu0 0.0
    %3440 = vmatprep.subr.mxu0 0.0
    %3441 = vmatpush2.msra.mxu0 0.0
    %3442 = vmatprep.subr.mxu0 0.0
    %3443 = vmatpush2.msra.mxu0 0.0
    %3444 = vmatprep.subr.mxu0 0.0
    %3445 = vmatpush2.msra.mxu0 0.0
    %3446 = vmatprep.subr.mxu0 0.0
    %3447 = vmatpush2.msra.mxu0 0.0
    %3448 = vmatprep.subr.mxu0 0.0
    %3449 = vmatpush2.msra.mxu0 0.0
    %3450 = vmatprep.subr.mxu0 0.0
    %3451 = vmatpush2.msra.mxu0 0.0
    %3452 = vmatprep.subr.mxu0 0.0
    %3453 = vmatpush2.msra.mxu0 0.0
    %3454 = vmatprep.subr.mxu0 0.0
    %3455 = vmatpush2.msra.mxu0 0.0
    %3456 = vmatprep.subr.mxu0 0.0
    %3457 = vmatpush2.msra.mxu0 0.0
    %3458 = vmatprep.mubr.f32.mxu0 0.0
    %3459 = vmatmul.mubr.f32.gmra.mxu0 %v3318
    %v3460 = vpop.f32.mrf.mxu0
    %v3461 = vadd.f32 0.0, %v3460
    %v3462 = vpop.f32.mrf.mxu0
    %v3463 = vadd.f32 0.0, %v3462
    %3464 = vdwg.mxu0
    %v3465 = vadd.f32 %v3319, %v3390
    %v3466 = vadd.f32 %v3320, %v3392
    %v3467 = vadd.f32 %v3321, %v3461
    %v3468 = vadd.f32 %v3322, %v3463
    %v3469 = vtanh.pop %v3465
    %v3470 = vmul.f32 %v3469, 0.5
    %v3471 = vadd.f32 %v3470, 0.5
    %v3472 = vtanh.pop %v3466
    %v3473 = vmul.f32 %v3472, 0.5
    %v3474 = vadd.f32 %v3473, 0.5
    %v3475 = vtanh.pop %v3467
    %v3476 = vtanh.pop %v3468
    %v3477 = vmul.f32 %v3476, 0.5
    %v3478 = vadd.f32 %v3477, 0.5
    %v3479 = vmul.f32 %v3474, %v3316
    %v3480 = vmul.f32 %v3471, %v3475
    %v3481 = vadd.f32 %v3479, %v3480
    %v3482 = vtanh.pop %v3481
    %v3483 = vmul.f32 %v3478, %v3482
    %v3484 = vld [vmem:[#allocation2 + $0x200] sm:$0xff]
    %v3485 = vld [vmem:[#allocation2 + $0x208] sm:$0xff]
    %v3486 = vld [vmem:[#allocation2 + $0x210] sm:$0xff]
    %v3487 = vld [vmem:[#allocation2 + $0x218] sm:$0xff]
    %3488 = vmatprep.subr.mxu0 %v845
    %3489 = vmatpush1.msra.mxu0 %v844
    %3490 = vmatprep.subr.mxu0 %v841
    %3491 = vmatpush1.msra.mxu0 %v840
    %3492 = vmatprep.subr.mxu0 %v837
    %3493 = vmatpush1.msra.mxu0 %v836
    %3494 = vmatprep.subr.mxu0 %v833
    %3495 = vmatpush1.msra.mxu0 %v832
    %3496 = vmatprep.subr.mxu0 %v829
    %3497 = vmatpush1.msra.mxu0 %v828
    %3498 = vmatprep.subr.mxu0 %v825
    %3499 = vmatpush1.msra.mxu0 %v824
    %3500 = vmatprep.subr.mxu0 %v821
    %3501 = vmatpush1.msra.mxu0 %v820
    %3502 = vmatprep.subr.mxu0 %v817
    %3503 = vmatpush1.msra.mxu0 %v816
    %3504 = vmatprep.subr.mxu0 %v813
    %3505 = vmatpush1.msra.mxu0 %v812
    %3506 = vmatprep.subr.mxu0 %v809
    %3507 = vmatpush1.msra.mxu0 %v808
    %3508 = vmatprep.subr.mxu0 %v805
    %3509 = vmatpush1.msra.mxu0 %v804
    %3510 = vmatprep.subr.mxu0 %v801
    %3511 = vmatpush1.msra.mxu0 %v800
    %3512 = vmatprep.subr.mxu0 %v797
    %3513 = vmatpush1.msra.mxu0 %v796
    %3514 = vmatprep.subr.mxu0 %v793
    %3515 = vmatpush1.msra.mxu0 %v792
    %3516 = vmatprep.subr.mxu0 %v789
    %3517 = vmatpush1.msra.mxu0 %v788
    %3518 = vmatprep.subr.mxu0 %v785
    %3519 = vmatpush1.msra.mxu0 %v784
    %3520 = vmatprep.subr.mxu0 0.0
    %3521 = vmatpush2.msra.mxu0 0.0
    %3522 = vmatprep.subr.mxu0 0.0
    %3523 = vmatpush2.msra.mxu0 0.0
    %3524 = vmatprep.subr.mxu0 0.0
    %3525 = vmatpush2.msra.mxu0 0.0
    %3526 = vmatprep.subr.mxu0 0.0
    %3527 = vmatpush2.msra.mxu0 0.0
    %3528 = vmatprep.subr.mxu0 0.0
    %3529 = vmatpush2.msra.mxu0 0.0
    %3530 = vmatprep.subr.mxu0 0.0
    %3531 = vmatpush2.msra.mxu0 0.0
    %3532 = vmatprep.subr.mxu0 0.0
    %3533 = vmatpush2.msra.mxu0 0.0
    %3534 = vmatprep.subr.mxu0 0.0
    %3535 = vmatpush2.msra.mxu0 0.0
    %3536 = vmatprep.subr.mxu0 0.0
    %3537 = vmatpush2.msra.mxu0 0.0
    %3538 = vmatprep.subr.mxu0 0.0
    %3539 = vmatpush2.msra.mxu0 0.0
    %3540 = vmatprep.subr.mxu0 0.0
    %3541 = vmatpush2.msra.mxu0 0.0
    %3542 = vmatprep.subr.mxu0 0.0
    %3543 = vmatpush2.msra.mxu0 0.0
    %3544 = vmatprep.subr.mxu0 0.0
    %3545 = vmatpush2.msra.mxu0 0.0
    %3546 = vmatprep.subr.mxu0 0.0
    %3547 = vmatpush2.msra.mxu0 0.0
    %3548 = vmatprep.subr.mxu0 0.0
    %3549 = vmatpush2.msra.mxu0 0.0
    %3550 = vmatprep.subr.mxu0 0.0
    %3551 = vmatpush2.msra.mxu0 0.0
    %3552 = vmatprep.mubr.f32.mxu0 0.0
    %3553 = vmatmul.mubr.f32.gmra.mxu0 %v3483
    %v3554 = vpop.f32.mrf.mxu0
    %v3555 = vadd.f32 0.0, %v3554
    %v3556 = vpop.f32.mrf.mxu0
    %v3557 = vadd.f32 0.0, %v3556
    %3558 = vdwg.mxu0
    %3559 = vmatprep.subr.mxu0 %v847
    %3560 = vmatpush1.msra.mxu0 %v846
    %3561 = vmatprep.subr.mxu0 %v843
    %3562 = vmatpush1.msra.mxu0 %v842
    %3563 = vmatprep.subr.mxu0 %v839
    %3564 = vmatpush1.msra.mxu0 %v838
    %3565 = vmatprep.subr.mxu0 %v835
    %3566 = vmatpush1.msra.mxu0 %v834
    %3567 = vmatprep.subr.mxu0 %v831
    %3568 = vmatpush1.msra.mxu0 %v830
    %3569 = vmatprep.subr.mxu0 %v827
    %3570 = vmatpush1.msra.mxu0 %v826
    %3571 = vmatprep.subr.mxu0 %v823
    %3572 = vmatpush1.msra.mxu0 %v822
    %3573 = vmatprep.subr.mxu0 %v819
    %3574 = vmatpush1.msra.mxu0 %v818
    %3575 = vmatprep.subr.mxu0 %v815
    %3576 = vmatpush1.msra.mxu0 %v814
    %3577 = vmatprep.subr.mxu0 %v811
    %3578 = vmatpush1.msra.mxu0 %v810
    %3579 = vmatprep.subr.mxu0 %v807
    %3580 = vmatpush1.msra.mxu0 %v806
    %3581 = vmatprep.subr.mxu0 %v803
    %3582 = vmatpush1.msra.mxu0 %v802
    %3583 = vmatprep.subr.mxu0 %v799
    %3584 = vmatpush1.msra.mxu0 %v798
    %3585 = vmatprep.subr.mxu0 %v795
    %3586 = vmatpush1.msra.mxu0 %v794
    %3587 = vmatprep.subr.mxu0 %v791
    %3588 = vmatpush1.msra.mxu0 %v790
    %3589 = vmatprep.subr.mxu0 %v787
    %3590 = vmatpush1.msra.mxu0 %v786
    %3591 = vmatprep.subr.mxu0 0.0
    %3592 = vmatpush2.msra.mxu0 0.0
    %3593 = vmatprep.subr.mxu0 0.0
    %3594 = vmatpush2.msra.mxu0 0.0
    %3595 = vmatprep.subr.mxu0 0.0
    %3596 = vmatpush2.msra.mxu0 0.0
    %3597 = vmatprep.subr.mxu0 0.0
    %3598 = vmatpush2.msra.mxu0 0.0
    %3599 = vmatprep.subr.mxu0 0.0
    %3600 = vmatpush2.msra.mxu0 0.0
    %3601 = vmatprep.subr.mxu0 0.0
    %3602 = vmatpush2.msra.mxu0 0.0
    %3603 = vmatprep.subr.mxu0 0.0
    %3604 = vmatpush2.msra.mxu0 0.0
    %3605 = vmatprep.subr.mxu0 0.0
    %3606 = vmatpush2.msra.mxu0 0.0
    %3607 = vmatprep.subr.mxu0 0.0
    %3608 = vmatpush2.msra.mxu0 0.0
    %3609 = vmatprep.subr.mxu0 0.0
    %3610 = vmatpush2.msra.mxu0 0.0
    %3611 = vmatprep.subr.mxu0 0.0
    %3612 = vmatpush2.msra.mxu0 0.0
    %3613 = vmatprep.subr.mxu0 0.0
    %3614 = vmatpush2.msra.mxu0 0.0
    %3615 = vmatprep.subr.mxu0 0.0
    %3616 = vmatpush2.msra.mxu0 0.0
    %3617 = vmatprep.subr.mxu0 0.0
    %3618 = vmatpush2.msra.mxu0 0.0
    %3619 = vmatprep.subr.mxu0 0.0
    %3620 = vmatpush2.msra.mxu0 0.0
    %3621 = vmatprep.subr.mxu0 0.0
    %3622 = vmatpush2.msra.mxu0 0.0
    %3623 = vmatprep.mubr.f32.mxu0 0.0
    %3624 = vmatmul.mubr.f32.gmra.mxu0 %v3483
    %v3625 = vpop.f32.mrf.mxu0
    %v3626 = vadd.f32 0.0, %v3625
    %v3627 = vpop.f32.mrf.mxu0
    %v3628 = vadd.f32 0.0, %v3627
    %3629 = vdwg.mxu0
    %v3630 = vadd.f32 %v3484, %v3555
    %v3631 = vadd.f32 %v3485, %v3557
    %v3632 = vadd.f32 %v3486, %v3626
    %v3633 = vadd.f32 %v3487, %v3628
    %v3634 = vtanh.pop %v3630
    %v3635 = vmul.f32 %v3634, 0.5
    %v3636 = vadd.f32 %v3635, 0.5
    %v3637 = vtanh.pop %v3631
    %v3638 = vmul.f32 %v3637, 0.5
    %v3639 = vadd.f32 %v3638, 0.5
    %v3640 = vtanh.pop %v3632
    %v3641 = vtanh.pop %v3633
    %v3642 = vmul.f32 %v3641, 0.5
    %v3643 = vadd.f32 %v3642, 0.5
    %v3644 = vmul.f32 %v3639, %v3481
    %v3645 = vmul.f32 %v3636, %v3640
    %v3646 = vadd.f32 %v3644, %v3645
    %v3647 = vtanh.pop %v3646
    %v3648 = vmul.f32 %v3643, %v3647
    %v3649 = vld [vmem:[#allocation2 + $0x220] sm:$0xff]
    %v3650 = vld [vmem:[#allocation2 + $0x228] sm:$0xff]
    %v3651 = vld [vmem:[#allocation2 + $0x230] sm:$0xff]
    %v3652 = vld [vmem:[#allocation2 + $0x238] sm:$0xff]
    %3653 = vmatprep.subr.mxu0 %v845
    %3654 = vmatpush1.msra.mxu0 %v844
    %3655 = vmatprep.subr.mxu0 %v841
    %3656 = vmatpush1.msra.mxu0 %v840
    %3657 = vmatprep.subr.mxu0 %v837
    %3658 = vmatpush1.msra.mxu0 %v836
    %3659 = vmatprep.subr.mxu0 %v833
    %3660 = vmatpush1.msra.mxu0 %v832
    %3661 = vmatprep.subr.mxu0 %v829
    %3662 = vmatpush1.msra.mxu0 %v828
    %3663 = vmatprep.subr.mxu0 %v825
    %3664 = vmatpush1.msra.mxu0 %v824
    %3665 = vmatprep.subr.mxu0 %v821
    %3666 = vmatpush1.msra.mxu0 %v820
    %3667 = vmatprep.subr.mxu0 %v817
    %3668 = vmatpush1.msra.mxu0 %v816
    %3669 = vmatprep.subr.mxu0 %v813
    %3670 = vmatpush1.msra.mxu0 %v812
    %3671 = vmatprep.subr.mxu0 %v809
    %3672 = vmatpush1.msra.mxu0 %v808
    %3673 = vmatprep.subr.mxu0 %v805
    %3674 = vmatpush1.msra.mxu0 %v804
    %3675 = vmatprep.subr.mxu0 %v801
    %3676 = vmatpush1.msra.mxu0 %v800
    %3677 = vmatprep.subr.mxu0 %v797
    %3678 = vmatpush1.msra.mxu0 %v796
    %3679 = vmatprep.subr.mxu0 %v793
    %3680 = vmatpush1.msra.mxu0 %v792
    %3681 = vmatprep.subr.mxu0 %v789
    %3682 = vmatpush1.msra.mxu0 %v788
    %3683 = vmatprep.subr.mxu0 %v785
    %3684 = vmatpush1.msra.mxu0 %v784
    %3685 = vmatprep.subr.mxu0 0.0
    %3686 = vmatpush2.msra.mxu0 0.0
    %3687 = vmatprep.subr.mxu0 0.0
    %3688 = vmatpush2.msra.mxu0 0.0
    %3689 = vmatprep.subr.mxu0 0.0
    %3690 = vmatpush2.msra.mxu0 0.0
    %3691 = vmatprep.subr.mxu0 0.0
    %3692 = vmatpush2.msra.mxu0 0.0
    %3693 = vmatprep.subr.mxu0 0.0
    %3694 = vmatpush2.msra.mxu0 0.0
    %3695 = vmatprep.subr.mxu0 0.0
    %3696 = vmatpush2.msra.mxu0 0.0
    %3697 = vmatprep.subr.mxu0 0.0
    %3698 = vmatpush2.msra.mxu0 0.0
    %3699 = vmatprep.subr.mxu0 0.0
    %3700 = vmatpush2.msra.mxu0 0.0
    %3701 = vmatprep.subr.mxu0 0.0
    %3702 = vmatpush2.msra.mxu0 0.0
    %3703 = vmatprep.subr.mxu0 0.0
    %3704 = vmatpush2.msra.mxu0 0.0
    %3705 = vmatprep.subr.mxu0 0.0
    %3706 = vmatpush2.msra.mxu0 0.0
    %3707 = vmatprep.subr.mxu0 0.0
    %3708 = vmatpush2.msra.mxu0 0.0
    %3709 = vmatprep.subr.mxu0 0.0
    %3710 = vmatpush2.msra.mxu0 0.0
    %3711 = vmatprep.subr.mxu0 0.0
    %3712 = vmatpush2.msra.mxu0 0.0
    %3713 = vmatprep.subr.mxu0 0.0
    %3714 = vmatpush2.msra.mxu0 0.0
    %3715 = vmatprep.subr.mxu0 0.0
    %3716 = vmatpush2.msra.mxu0 0.0
    %3717 = vmatprep.mubr.f32.mxu0 0.0
    %3718 = vmatmul.mubr.f32.gmra.mxu0 %v3648
    %v3719 = vpop.f32.mrf.mxu0
    %v3720 = vadd.f32 0.0, %v3719
    %v3721 = vpop.f32.mrf.mxu0
    %v3722 = vadd.f32 0.0, %v3721
    %3723 = vdwg.mxu0
    %3724 = vmatprep.subr.mxu0 %v847
    %3725 = vmatpush1.msra.mxu0 %v846
    %3726 = vmatprep.subr.mxu0 %v843
    %3727 = vmatpush1.msra.mxu0 %v842
    %3728 = vmatprep.subr.mxu0 %v839
    %3729 = vmatpush1.msra.mxu0 %v838
    %3730 = vmatprep.subr.mxu0 %v835
    %3731 = vmatpush1.msra.mxu0 %v834
    %3732 = vmatprep.subr.mxu0 %v831
    %3733 = vmatpush1.msra.mxu0 %v830
    %3734 = vmatprep.subr.mxu0 %v827
    %3735 = vmatpush1.msra.mxu0 %v826
    %3736 = vmatprep.subr.mxu0 %v823
    %3737 = vmatpush1.msra.mxu0 %v822
    %3738 = vmatprep.subr.mxu0 %v819
    %3739 = vmatpush1.msra.mxu0 %v818
    %3740 = vmatprep.subr.mxu0 %v815
    %3741 = vmatpush1.msra.mxu0 %v814
    %3742 = vmatprep.subr.mxu0 %v811
    %3743 = vmatpush1.msra.mxu0 %v810
    %3744 = vmatprep.subr.mxu0 %v807
    %3745 = vmatpush1.msra.mxu0 %v806
    %3746 = vmatprep.subr.mxu0 %v803
    %3747 = vmatpush1.msra.mxu0 %v802
    %3748 = vmatprep.subr.mxu0 %v799
    %3749 = vmatpush1.msra.mxu0 %v798
    %3750 = vmatprep.subr.mxu0 %v795
    %3751 = vmatpush1.msra.mxu0 %v794
    %3752 = vmatprep.subr.mxu0 %v791
    %3753 = vmatpush1.msra.mxu0 %v790
    %3754 = vmatprep.subr.mxu0 %v787
    %3755 = vmatpush1.msra.mxu0 %v786
    %3756 = vmatprep.subr.mxu0 0.0
    %3757 = vmatpush2.msra.mxu0 0.0
    %3758 = vmatprep.subr.mxu0 0.0
    %3759 = vmatpush2.msra.mxu0 0.0
    %3760 = vmatprep.subr.mxu0 0.0
    %3761 = vmatpush2.msra.mxu0 0.0
    %3762 = vmatprep.subr.mxu0 0.0
    %3763 = vmatpush2.msra.mxu0 0.0
    %3764 = vmatprep.subr.mxu0 0.0
    %3765 = vmatpush2.msra.mxu0 0.0
    %3766 = vmatprep.subr.mxu0 0.0
    %3767 = vmatpush2.msra.mxu0 0.0
    %3768 = vmatprep.subr.mxu0 0.0
    %3769 = vmatpush2.msra.mxu0 0.0
    %3770 = vmatprep.subr.mxu0 0.0
    %3771 = vmatpush2.msra.mxu0 0.0
    %3772 = vmatprep.subr.mxu0 0.0
    %3773 = vmatpush2.msra.mxu0 0.0
    %3774 = vmatprep.subr.mxu0 0.0
    %3775 = vmatpush2.msra.mxu0 0.0
    %3776 = vmatprep.subr.mxu0 0.0
    %3777 = vmatpush2.msra.mxu0 0.0
    %3778 = vmatprep.subr.mxu0 0.0
    %3779 = vmatpush2.msra.mxu0 0.0
    %3780 = vmatprep.subr.mxu0 0.0
    %3781 = vmatpush2.msra.mxu0 0.0
    %3782 = vmatprep.subr.mxu0 0.0
    %3783 = vmatpush2.msra.mxu0 0.0
    %3784 = vmatprep.subr.mxu0 0.0
    %3785 = vmatpush2.msra.mxu0 0.0
    %3786 = vmatprep.subr.mxu0 0.0
    %3787 = vmatpush2.msra.mxu0 0.0
    %3788 = vmatprep.mubr.f32.mxu0 0.0
    %3789 = vmatmul.mubr.f32.gmra.mxu0 %v3648
    %v3790 = vpop.f32.mrf.mxu0
    %v3791 = vadd.f32 0.0, %v3790
    %v3792 = vpop.f32.mrf.mxu0
    %v3793 = vadd.f32 0.0, %v3792
    %3794 = vdwg.mxu0
    %v3795 = vadd.f32 %v3649, %v3720
    %v3796 = vadd.f32 %v3650, %v3722
    %v3797 = vadd.f32 %v3651, %v3791
    %v3798 = vadd.f32 %v3652, %v3793
    %v3799 = vtanh.pop %v3795
    %v3800 = vmul.f32 %v3799, 0.5
    %v3801 = vadd.f32 %v3800, 0.5
    %v3802 = vtanh.pop %v3796
    %v3803 = vmul.f32 %v3802, 0.5
    %v3804 = vadd.f32 %v3803, 0.5
    %v3805 = vtanh.pop %v3797
    %v3806 = vtanh.pop %v3798
    %v3807 = vmul.f32 %v3806, 0.5
    %v3808 = vadd.f32 %v3807, 0.5
    %v3809 = vmul.f32 %v3804, %v3646
    %v3810 = vmul.f32 %v3801, %v3805
    %v3811 = vadd.f32 %v3809, %v3810
    %v3812 = vtanh.pop %v3811
    %v3813 = vmul.f32 %v3808, %v3812
    %v3814 = vld [vmem:[#allocation2 + $0x240] sm:$0xff]
    %v3815 = vld [vmem:[#allocation2 + $0x248] sm:$0xff]
    %v3816 = vld [vmem:[#allocation2 + $0x250] sm:$0xff]
    %v3817 = vld [vmem:[#allocation2 + $0x258] sm:$0xff]
    %3818 = vmatprep.subr.mxu0 %v845
    %3819 = vmatpush1.msra.mxu0 %v844
    %3820 = vmatprep.subr.mxu0 %v841
    %3821 = vmatpush1.msra.mxu0 %v840
    %3822 = vmatprep.subr.mxu0 %v837
    %3823 = vmatpush1.msra.mxu0 %v836
    %3824 = vmatprep.subr.mxu0 %v833
    %3825 = vmatpush1.msra.mxu0 %v832
    %3826 = vmatprep.subr.mxu0 %v829
    %3827 = vmatpush1.msra.mxu0 %v828
    %3828 = vmatprep.subr.mxu0 %v825
    %3829 = vmatpush1.msra.mxu0 %v824
    %3830 = vmatprep.subr.mxu0 %v821
    %3831 = vmatpush1.msra.mxu0 %v820
    %3832 = vmatprep.subr.mxu0 %v817
    %3833 = vmatpush1.msra.mxu0 %v816
    %3834 = vmatprep.subr.mxu0 %v813
    %3835 = vmatpush1.msra.mxu0 %v812
    %3836 = vmatprep.subr.mxu0 %v809
    %3837 = vmatpush1.msra.mxu0 %v808
    %3838 = vmatprep.subr.mxu0 %v805
    %3839 = vmatpush1.msra.mxu0 %v804
    %3840 = vmatprep.subr.mxu0 %v801
    %3841 = vmatpush1.msra.mxu0 %v800
    %3842 = vmatprep.subr.mxu0 %v797
    %3843 = vmatpush1.msra.mxu0 %v796
    %3844 = vmatprep.subr.mxu0 %v793
    %3845 = vmatpush1.msra.mxu0 %v792
    %3846 = vmatprep.subr.mxu0 %v789
    %3847 = vmatpush1.msra.mxu0 %v788
    %3848 = vmatprep.subr.mxu0 %v785
    %3849 = vmatpush1.msra.mxu0 %v784
    %3850 = vmatprep.subr.mxu0 0.0
    %3851 = vmatpush2.msra.mxu0 0.0
    %3852 = vmatprep.subr.mxu0 0.0
    %3853 = vmatpush2.msra.mxu0 0.0
    %3854 = vmatprep.subr.mxu0 0.0
    %3855 = vmatpush2.msra.mxu0 0.0
    %3856 = vmatprep.subr.mxu0 0.0
    %3857 = vmatpush2.msra.mxu0 0.0
    %3858 = vmatprep.subr.mxu0 0.0
    %3859 = vmatpush2.msra.mxu0 0.0
    %3860 = vmatprep.subr.mxu0 0.0
    %3861 = vmatpush2.msra.mxu0 0.0
    %3862 = vmatprep.subr.mxu0 0.0
    %3863 = vmatpush2.msra.mxu0 0.0
    %3864 = vmatprep.subr.mxu0 0.0
    %3865 = vmatpush2.msra.mxu0 0.0
    %3866 = vmatprep.subr.mxu0 0.0
    %3867 = vmatpush2.msra.mxu0 0.0
    %3868 = vmatprep.subr.mxu0 0.0
    %3869 = vmatpush2.msra.mxu0 0.0
    %3870 = vmatprep.subr.mxu0 0.0
    %3871 = vmatpush2.msra.mxu0 0.0
    %3872 = vmatprep.subr.mxu0 0.0
    %3873 = vmatpush2.msra.mxu0 0.0
    %3874 = vmatprep.subr.mxu0 0.0
    %3875 = vmatpush2.msra.mxu0 0.0
    %3876 = vmatprep.subr.mxu0 0.0
    %3877 = vmatpush2.msra.mxu0 0.0
    %3878 = vmatprep.subr.mxu0 0.0
    %3879 = vmatpush2.msra.mxu0 0.0
    %3880 = vmatprep.subr.mxu0 0.0
    %3881 = vmatpush2.msra.mxu0 0.0
    %3882 = vmatprep.mubr.f32.mxu0 0.0
    %3883 = vmatmul.mubr.f32.gmra.mxu0 %v3813
    %v3884 = vpop.f32.mrf.mxu0
    %v3885 = vadd.f32 0.0, %v3884
    %v3886 = vpop.f32.mrf.mxu0
    %v3887 = vadd.f32 0.0, %v3886
    %3888 = vdwg.mxu0
    %3889 = vmatprep.subr.mxu0 %v847
    %3890 = vmatpush1.msra.mxu0 %v846
    %3891 = vmatprep.subr.mxu0 %v843
    %3892 = vmatpush1.msra.mxu0 %v842
    %3893 = vmatprep.subr.mxu0 %v839
    %3894 = vmatpush1.msra.mxu0 %v838
    %3895 = vmatprep.subr.mxu0 %v835
    %3896 = vmatpush1.msra.mxu0 %v834
    %3897 = vmatprep.subr.mxu0 %v831
    %3898 = vmatpush1.msra.mxu0 %v830
    %3899 = vmatprep.subr.mxu0 %v827
    %3900 = vmatpush1.msra.mxu0 %v826
    %3901 = vmatprep.subr.mxu0 %v823
    %3902 = vmatpush1.msra.mxu0 %v822
    %3903 = vmatprep.subr.mxu0 %v819
    %3904 = vmatpush1.msra.mxu0 %v818
    %3905 = vmatprep.subr.mxu0 %v815
    %3906 = vmatpush1.msra.mxu0 %v814
    %3907 = vmatprep.subr.mxu0 %v811
    %3908 = vmatpush1.msra.mxu0 %v810
    %3909 = vmatprep.subr.mxu0 %v807
    %3910 = vmatpush1.msra.mxu0 %v806
    %3911 = vmatprep.subr.mxu0 %v803
    %3912 = vmatpush1.msra.mxu0 %v802
    %3913 = vmatprep.subr.mxu0 %v799
    %3914 = vmatpush1.msra.mxu0 %v798
    %3915 = vmatprep.subr.mxu0 %v795
    %3916 = vmatpush1.msra.mxu0 %v794
    %3917 = vmatprep.subr.mxu0 %v791
    %3918 = vmatpush1.msra.mxu0 %v790
    %3919 = vmatprep.subr.mxu0 %v787
    %3920 = vmatpush1.msra.mxu0 %v786
    %3921 = vmatprep.subr.mxu0 0.0
    %3922 = vmatpush2.msra.mxu0 0.0
    %3923 = vmatprep.subr.mxu0 0.0
    %3924 = vmatpush2.msra.mxu0 0.0
    %3925 = vmatprep.subr.mxu0 0.0
    %3926 = vmatpush2.msra.mxu0 0.0
    %3927 = vmatprep.subr.mxu0 0.0
    %3928 = vmatpush2.msra.mxu0 0.0
    %3929 = vmatprep.subr.mxu0 0.0
    %3930 = vmatpush2.msra.mxu0 0.0
    %3931 = vmatprep.subr.mxu0 0.0
    %3932 = vmatpush2.msra.mxu0 0.0
    %3933 = vmatprep.subr.mxu0 0.0
    %3934 = vmatpush2.msra.mxu0 0.0
    %3935 = vmatprep.subr.mxu0 0.0
    %3936 = vmatpush2.msra.mxu0 0.0
    %3937 = vmatprep.subr.mxu0 0.0
    %3938 = vmatpush2.msra.mxu0 0.0
    %3939 = vmatprep.subr.mxu0 0.0
    %3940 = vmatpush2.msra.mxu0 0.0
    %3941 = vmatprep.subr.mxu0 0.0
    %3942 = vmatpush2.msra.mxu0 0.0
    %3943 = vmatprep.subr.mxu0 0.0
    %3944 = vmatpush2.msra.mxu0 0.0
    %3945 = vmatprep.subr.mxu0 0.0
    %3946 = vmatpush2.msra.mxu0 0.0
    %3947 = vmatprep.subr.mxu0 0.0
    %3948 = vmatpush2.msra.mxu0 0.0
    %3949 = vmatprep.subr.mxu0 0.0
    %3950 = vmatpush2.msra.mxu0 0.0
    %3951 = vmatprep.subr.mxu0 0.0
    %3952 = vmatpush2.msra.mxu0 0.0
    %3953 = vmatprep.mubr.f32.mxu0 0.0
    %3954 = vmatmul.mubr.f32.gmra.mxu0 %v3813
    %v3955 = vpop.f32.mrf.mxu0
    %v3956 = vadd.f32 0.0, %v3955
    %v3957 = vpop.f32.mrf.mxu0
    %v3958 = vadd.f32 0.0, %v3957
    %3959 = vdwg.mxu0
    %v3960 = vadd.f32 %v3814, %v3885
    %v3961 = vadd.f32 %v3815, %v3887
    %v3962 = vadd.f32 %v3816, %v3956
    %v3963 = vadd.f32 %v3817, %v3958
    %v3964 = vtanh.pop %v3960
    %v3965 = vmul.f32 %v3964, 0.5
    %v3966 = vadd.f32 %v3965, 0.5
    %v3967 = vtanh.pop %v3961
    %v3968 = vmul.f32 %v3967, 0.5
    %v3969 = vadd.f32 %v3968, 0.5
    %v3970 = vtanh.pop %v3962
    %v3971 = vtanh.pop %v3963
    %v3972 = vmul.f32 %v3971, 0.5
    %v3973 = vadd.f32 %v3972, 0.5
    %v3974 = vmul.f32 %v3969, %v3811
    %v3975 = vmul.f32 %v3966, %v3970
    %v3976 = vadd.f32 %v3974, %v3975
    %v3977 = vtanh.pop %v3976
    %v3978 = vmul.f32 %v3973, %v3977
    %v3979 = vld [vmem:[#allocation2 + $0x260] sm:$0xff]
    %v3980 = vld [vmem:[#allocation2 + $0x268] sm:$0xff]
    %v3981 = vld [vmem:[#allocation2 + $0x270] sm:$0xff]
    %v3982 = vld [vmem:[#allocation2 + $0x278] sm:$0xff]
    %3983 = vmatprep.subr.mxu0 %v845
    %3984 = vmatpush1.msra.mxu0 %v844
    %3985 = vmatprep.subr.mxu0 %v841
    %3986 = vmatpush1.msra.mxu0 %v840
    %3987 = vmatprep.subr.mxu0 %v837
    %3988 = vmatpush1.msra.mxu0 %v836
    %3989 = vmatprep.subr.mxu0 %v833
    %3990 = vmatpush1.msra.mxu0 %v832
    %3991 = vmatprep.subr.mxu0 %v829
    %3992 = vmatpush1.msra.mxu0 %v828
    %3993 = vmatprep.subr.mxu0 %v825
    %3994 = vmatpush1.msra.mxu0 %v824
    %3995 = vmatprep.subr.mxu0 %v821
    %3996 = vmatpush1.msra.mxu0 %v820
    %3997 = vmatprep.subr.mxu0 %v817
    %3998 = vmatpush1.msra.mxu0 %v816
    %3999 = vmatprep.subr.mxu0 %v813
    %4000 = vmatpush1.msra.mxu0 %v812
    %4001 = vmatprep.subr.mxu0 %v809
    %4002 = vmatpush1.msra.mxu0 %v808
    %4003 = vmatprep.subr.mxu0 %v805
    %4004 = vmatpush1.msra.mxu0 %v804
    %4005 = vmatprep.subr.mxu0 %v801
    %4006 = vmatpush1.msra.mxu0 %v800
    %4007 = vmatprep.subr.mxu0 %v797
    %4008 = vmatpush1.msra.mxu0 %v796
    %4009 = vmatprep.subr.mxu0 %v793
    %4010 = vmatpush1.msra.mxu0 %v792
    %4011 = vmatprep.subr.mxu0 %v789
    %4012 = vmatpush1.msra.mxu0 %v788
    %4013 = vmatprep.subr.mxu0 %v785
    %4014 = vmatpush1.msra.mxu0 %v784
    %4015 = vmatprep.subr.mxu0 0.0
    %4016 = vmatpush2.msra.mxu0 0.0
    %4017 = vmatprep.subr.mxu0 0.0
    %4018 = vmatpush2.msra.mxu0 0.0
    %4019 = vmatprep.subr.mxu0 0.0
    %4020 = vmatpush2.msra.mxu0 0.0
    %4021 = vmatprep.subr.mxu0 0.0
    %4022 = vmatpush2.msra.mxu0 0.0
    %4023 = vmatprep.subr.mxu0 0.0
    %4024 = vmatpush2.msra.mxu0 0.0
    %4025 = vmatprep.subr.mxu0 0.0
    %4026 = vmatpush2.msra.mxu0 0.0
    %4027 = vmatprep.subr.mxu0 0.0
    %4028 = vmatpush2.msra.mxu0 0.0
    %4029 = vmatprep.subr.mxu0 0.0
    %4030 = vmatpush2.msra.mxu0 0.0
    %4031 = vmatprep.subr.mxu0 0.0
    %4032 = vmatpush2.msra.mxu0 0.0
    %4033 = vmatprep.subr.mxu0 0.0
    %4034 = vmatpush2.msra.mxu0 0.0
    %4035 = vmatprep.subr.mxu0 0.0
    %4036 = vmatpush2.msra.mxu0 0.0
    %4037 = vmatprep.subr.mxu0 0.0
    %4038 = vmatpush2.msra.mxu0 0.0
    %4039 = vmatprep.subr.mxu0 0.0
    %4040 = vmatpush2.msra.mxu0 0.0
    %4041 = vmatprep.subr.mxu0 0.0
    %4042 = vmatpush2.msra.mxu0 0.0
    %4043 = vmatprep.subr.mxu0 0.0
    %4044 = vmatpush2.msra.mxu0 0.0
    %4045 = vmatprep.subr.mxu0 0.0
    %4046 = vmatpush2.msra.mxu0 0.0
    %4047 = vmatprep.mubr.f32.mxu0 0.0
    %4048 = vmatmul.mubr.f32.gmra.mxu0 %v3978
    %v4049 = vpop.f32.mrf.mxu0
    %v4050 = vadd.f32 0.0, %v4049
    %v4051 = vpop.f32.mrf.mxu0
    %v4052 = vadd.f32 0.0, %v4051
    %4053 = vdwg.mxu0
    %4054 = vmatprep.subr.mxu0 %v847
    %4055 = vmatpush1.msra.mxu0 %v846
    %4056 = vmatprep.subr.mxu0 %v843
    %4057 = vmatpush1.msra.mxu0 %v842
    %4058 = vmatprep.subr.mxu0 %v839
    %4059 = vmatpush1.msra.mxu0 %v838
    %4060 = vmatprep.subr.mxu0 %v835
    %4061 = vmatpush1.msra.mxu0 %v834
    %4062 = vmatprep.subr.mxu0 %v831
    %4063 = vmatpush1.msra.mxu0 %v830
    %4064 = vmatprep.subr.mxu0 %v827
    %4065 = vmatpush1.msra.mxu0 %v826
    %4066 = vmatprep.subr.mxu0 %v823
    %4067 = vmatpush1.msra.mxu0 %v822
    %4068 = vmatprep.subr.mxu0 %v819
    %4069 = vmatpush1.msra.mxu0 %v818
    %4070 = vmatprep.subr.mxu0 %v815
    %4071 = vmatpush1.msra.mxu0 %v814
    %4072 = vmatprep.subr.mxu0 %v811
    %4073 = vmatpush1.msra.mxu0 %v810
    %4074 = vmatprep.subr.mxu0 %v807
    %4075 = vmatpush1.msra.mxu0 %v806
    %4076 = vmatprep.subr.mxu0 %v803
    %4077 = vmatpush1.msra.mxu0 %v802
    %4078 = vmatprep.subr.mxu0 %v799
    %4079 = vmatpush1.msra.mxu0 %v798
    %4080 = vmatprep.subr.mxu0 %v795
    %4081 = vmatpush1.msra.mxu0 %v794
    %4082 = vmatprep.subr.mxu0 %v791
    %4083 = vmatpush1.msra.mxu0 %v790
    %4084 = vmatprep.subr.mxu0 %v787
    %4085 = vmatpush1.msra.mxu0 %v786
    %4086 = vmatprep.subr.mxu0 0.0
    %4087 = vmatpush2.msra.mxu0 0.0
    %4088 = vmatprep.subr.mxu0 0.0
    %4089 = vmatpush2.msra.mxu0 0.0
    %4090 = vmatprep.subr.mxu0 0.0
    %4091 = vmatpush2.msra.mxu0 0.0
    %4092 = vmatprep.subr.mxu0 0.0
    %4093 = vmatpush2.msra.mxu0 0.0
    %4094 = vmatprep.subr.mxu0 0.0
    %4095 = vmatpush2.msra.mxu0 0.0
    %4096 = vmatprep.subr.mxu0 0.0
    %4097 = vmatpush2.msra.mxu0 0.0
    %4098 = vmatprep.subr.mxu0 0.0
    %4099 = vmatpush2.msra.mxu0 0.0
    %4100 = vmatprep.subr.mxu0 0.0
    %4101 = vmatpush2.msra.mxu0 0.0
    %4102 = vmatprep.subr.mxu0 0.0
    %4103 = vmatpush2.msra.mxu0 0.0
    %4104 = vmatprep.subr.mxu0 0.0
    %4105 = vmatpush2.msra.mxu0 0.0
    %4106 = vmatprep.subr.mxu0 0.0
    %4107 = vmatpush2.msra.mxu0 0.0
    %4108 = vmatprep.subr.mxu0 0.0
    %4109 = vmatpush2.msra.mxu0 0.0
    %4110 = vmatprep.subr.mxu0 0.0
    %4111 = vmatpush2.msra.mxu0 0.0
    %4112 = vmatprep.subr.mxu0 0.0
    %4113 = vmatpush2.msra.mxu0 0.0
    %4114 = vmatprep.subr.mxu0 0.0
    %4115 = vmatpush2.msra.mxu0 0.0
    %4116 = vmatprep.subr.mxu0 0.0
    %4117 = vmatpush2.msra.mxu0 0.0
    %4118 = vmatprep.mubr.f32.mxu0 0.0
    %4119 = vmatmul.mubr.f32.gmra.mxu0 %v3978
    %v4120 = vpop.f32.mrf.mxu0
    %v4121 = vadd.f32 0.0, %v4120
    %v4122 = vpop.f32.mrf.mxu0
    %v4123 = vadd.f32 0.0, %v4122
    %4124 = vdwg.mxu0
    %v4125 = vadd.f32 %v3979, %v4050
    %v4126 = vadd.f32 %v3980, %v4052
    %v4127 = vadd.f32 %v3981, %v4121
    %v4128 = vadd.f32 %v3982, %v4123
    %v4129 = vtanh.pop %v4125
    %v4130 = vmul.f32 %v4129, 0.5
    %v4131 = vadd.f32 %v4130, 0.5
    %v4132 = vtanh.pop %v4126
    %v4133 = vmul.f32 %v4132, 0.5
    %v4134 = vadd.f32 %v4133, 0.5
    %v4135 = vtanh.pop %v4127
    %v4136 = vtanh.pop %v4128
    %v4137 = vmul.f32 %v4136, 0.5
    %v4138 = vadd.f32 %v4137, 0.5
    %v4139 = vmul.f32 %v4134, %v3976
    %v4140 = vmul.f32 %v4131, %v4135
    %v4141 = vadd.f32 %v4139, %v4140
    %v4142 = vtanh.pop %v4141
    %v4143 = vmul.f32 %v4138, %v4142
    %v4144 = vld [vmem:[#allocation2 + $0x280] sm:$0xff]
    %v4145 = vld [vmem:[#allocation2 + $0x288] sm:$0xff]
    %v4146 = vld [vmem:[#allocation2 + $0x290] sm:$0xff]
    %v4147 = vld [vmem:[#allocation2 + $0x298] sm:$0xff]
    %4148 = vmatprep.subr.mxu0 %v845
    %4149 = vmatpush1.msra.mxu0 %v844
    %4150 = vmatprep.subr.mxu0 %v841
    %4151 = vmatpush1.msra.mxu0 %v840
    %4152 = vmatprep.subr.mxu0 %v837
    %4153 = vmatpush1.msra.mxu0 %v836
    %4154 = vmatprep.subr.mxu0 %v833
    %4155 = vmatpush1.msra.mxu0 %v832
    %4156 = vmatprep.subr.mxu0 %v829
    %4157 = vmatpush1.msra.mxu0 %v828
    %4158 = vmatprep.subr.mxu0 %v825
    %4159 = vmatpush1.msra.mxu0 %v824
    %4160 = vmatprep.subr.mxu0 %v821
    %4161 = vmatpush1.msra.mxu0 %v820
    %4162 = vmatprep.subr.mxu0 %v817
    %4163 = vmatpush1.msra.mxu0 %v816
    %4164 = vmatprep.subr.mxu0 %v813
    %4165 = vmatpush1.msra.mxu0 %v812
    %4166 = vmatprep.subr.mxu0 %v809
    %4167 = vmatpush1.msra.mxu0 %v808
    %4168 = vmatprep.subr.mxu0 %v805
    %4169 = vmatpush1.msra.mxu0 %v804
    %4170 = vmatprep.subr.mxu0 %v801
    %4171 = vmatpush1.msra.mxu0 %v800
    %4172 = vmatprep.subr.mxu0 %v797
    %4173 = vmatpush1.msra.mxu0 %v796
    %4174 = vmatprep.subr.mxu0 %v793
    %4175 = vmatpush1.msra.mxu0 %v792
    %4176 = vmatprep.subr.mxu0 %v789
    %4177 = vmatpush1.msra.mxu0 %v788
    %4178 = vmatprep.subr.mxu0 %v785
    %4179 = vmatpush1.msra.mxu0 %v784
    %4180 = vmatprep.subr.mxu0 0.0
    %4181 = vmatpush2.msra.mxu0 0.0
    %4182 = vmatprep.subr.mxu0 0.0
    %4183 = vmatpush2.msra.mxu0 0.0
    %4184 = vmatprep.subr.mxu0 0.0
    %4185 = vmatpush2.msra.mxu0 0.0
    %4186 = vmatprep.subr.mxu0 0.0
    %4187 = vmatpush2.msra.mxu0 0.0
    %4188 = vmatprep.subr.mxu0 0.0
    %4189 = vmatpush2.msra.mxu0 0.0
    %4190 = vmatprep.subr.mxu0 0.0
    %4191 = vmatpush2.msra.mxu0 0.0
    %4192 = vmatprep.subr.mxu0 0.0
    %4193 = vmatpush2.msra.mxu0 0.0
    %4194 = vmatprep.subr.mxu0 0.0
    %4195 = vmatpush2.msra.mxu0 0.0
    %4196 = vmatprep.subr.mxu0 0.0
    %4197 = vmatpush2.msra.mxu0 0.0
    %4198 = vmatprep.subr.mxu0 0.0
    %4199 = vmatpush2.msra.mxu0 0.0
    %4200 = vmatprep.subr.mxu0 0.0
    %4201 = vmatpush2.msra.mxu0 0.0
    %4202 = vmatprep.subr.mxu0 0.0
    %4203 = vmatpush2.msra.mxu0 0.0
    %4204 = vmatprep.subr.mxu0 0.0
    %4205 = vmatpush2.msra.mxu0 0.0
    %4206 = vmatprep.subr.mxu0 0.0
    %4207 = vmatpush2.msra.mxu0 0.0
    %4208 = vmatprep.subr.mxu0 0.0
    %4209 = vmatpush2.msra.mxu0 0.0
    %4210 = vmatprep.subr.mxu0 0.0
    %4211 = vmatpush2.msra.mxu0 0.0
    %4212 = vmatprep.mubr.f32.mxu0 0.0
    %4213 = vmatmul.mubr.f32.gmra.mxu0 %v4143
    %v4214 = vpop.f32.mrf.mxu0
    %v4215 = vadd.f32 0.0, %v4214
    %v4216 = vpop.f32.mrf.mxu0
    %v4217 = vadd.f32 0.0, %v4216
    %4218 = vdwg.mxu0
    %4219 = vmatprep.subr.mxu0 %v847
    %4220 = vmatpush1.msra.mxu0 %v846
    %4221 = vmatprep.subr.mxu0 %v843
    %4222 = vmatpush1.msra.mxu0 %v842
    %4223 = vmatprep.subr.mxu0 %v839
    %4224 = vmatpush1.msra.mxu0 %v838
    %4225 = vmatprep.subr.mxu0 %v835
    %4226 = vmatpush1.msra.mxu0 %v834
    %4227 = vmatprep.subr.mxu0 %v831
    %4228 = vmatpush1.msra.mxu0 %v830
    %4229 = vmatprep.subr.mxu0 %v827
    %4230 = vmatpush1.msra.mxu0 %v826
    %4231 = vmatprep.subr.mxu0 %v823
    %4232 = vmatpush1.msra.mxu0 %v822
    %4233 = vmatprep.subr.mxu0 %v819
    %4234 = vmatpush1.msra.mxu0 %v818
    %4235 = vmatprep.subr.mxu0 %v815
    %4236 = vmatpush1.msra.mxu0 %v814
    %4237 = vmatprep.subr.mxu0 %v811
    %4238 = vmatpush1.msra.mxu0 %v810
    %4239 = vmatprep.subr.mxu0 %v807
    %4240 = vmatpush1.msra.mxu0 %v806
    %4241 = vmatprep.subr.mxu0 %v803
    %4242 = vmatpush1.msra.mxu0 %v802
    %4243 = vmatprep.subr.mxu0 %v799
    %4244 = vmatpush1.msra.mxu0 %v798
    %4245 = vmatprep.subr.mxu0 %v795
    %4246 = vmatpush1.msra.mxu0 %v794
    %4247 = vmatprep.subr.mxu0 %v791
    %4248 = vmatpush1.msra.mxu0 %v790
    %4249 = vmatprep.subr.mxu0 %v787
    %4250 = vmatpush1.msra.mxu0 %v786
    %4251 = vmatprep.subr.mxu0 0.0
    %4252 = vmatpush2.msra.mxu0 0.0
    %4253 = vmatprep.subr.mxu0 0.0
    %4254 = vmatpush2.msra.mxu0 0.0
    %4255 = vmatprep.subr.mxu0 0.0
    %4256 = vmatpush2.msra.mxu0 0.0
    %4257 = vmatprep.subr.mxu0 0.0
    %4258 = vmatpush2.msra.mxu0 0.0
    %4259 = vmatprep.subr.mxu0 0.0
    %4260 = vmatpush2.msra.mxu0 0.0
    %4261 = vmatprep.subr.mxu0 0.0
    %4262 = vmatpush2.msra.mxu0 0.0
    %4263 = vmatprep.subr.mxu0 0.0
    %4264 = vmatpush2.msra.mxu0 0.0
    %4265 = vmatprep.subr.mxu0 0.0
    %4266 = vmatpush2.msra.mxu0 0.0
    %4267 = vmatprep.subr.mxu0 0.0
    %4268 = vmatpush2.msra.mxu0 0.0
    %4269 = vmatprep.subr.mxu0 0.0
    %4270 = vmatpush2.msra.mxu0 0.0
    %4271 = vmatprep.subr.mxu0 0.0
    %4272 = vmatpush2.msra.mxu0 0.0
    %4273 = vmatprep.subr.mxu0 0.0
    %4274 = vmatpush2.msra.mxu0 0.0
    %4275 = vmatprep.subr.mxu0 0.0
    %4276 = vmatpush2.msra.mxu0 0.0
    %4277 = vmatprep.subr.mxu0 0.0
    %4278 = vmatpush2.msra.mxu0 0.0
    %4279 = vmatprep.subr.mxu0 0.0
    %4280 = vmatpush2.msra.mxu0 0.0
    %4281 = vmatprep.subr.mxu0 0.0
    %4282 = vmatpush2.msra.mxu0 0.0
    %4283 = vmatprep.mubr.f32.mxu0 0.0
    %4284 = vmatmul.mubr.f32.gmra.mxu0 %v4143
    %v4285 = vpop.f32.mrf.mxu0
    %v4286 = vadd.f32 0.0, %v4285
    %v4287 = vpop.f32.mrf.mxu0
    %v4288 = vadd.f32 0.0, %v4287
    %4289 = vdwg.mxu0
    %v4290 = vadd.f32 %v4144, %v4215
    %v4291 = vadd.f32 %v4145, %v4217
    %v4292 = vadd.f32 %v4146, %v4286
    %v4293 = vadd.f32 %v4147, %v4288
    %v4294 = vtanh.pop %v4290
    %v4295 = vmul.f32 %v4294, 0.5
    %v4296 = vadd.f32 %v4295, 0.5
    %v4297 = vtanh.pop %v4291
    %v4298 = vmul.f32 %v4297, 0.5
    %v4299 = vadd.f32 %v4298, 0.5
    %v4300 = vtanh.pop %v4292
    %v4301 = vtanh.pop %v4293
    %v4302 = vmul.f32 %v4301, 0.5
    %v4303 = vadd.f32 %v4302, 0.5
    %v4304 = vmul.f32 %v4299, %v4141
    %v4305 = vmul.f32 %v4296, %v4300
    %v4306 = vadd.f32 %v4304, %v4305
    %v4307 = vtanh.pop %v4306
    %v4308 = vmul.f32 %v4303, %v4307
    %v4309 = vld [vmem:[#allocation2 + $0x2a0] sm:$0xff]
    %v4310 = vld [vmem:[#allocation2 + $0x2a8] sm:$0xff]
    %v4311 = vld [vmem:[#allocation2 + $0x2b0] sm:$0xff]
    %v4312 = vld [vmem:[#allocation2 + $0x2b8] sm:$0xff]
    %4313 = vmatprep.subr.mxu0 %v845
    %4314 = vmatpush1.msra.mxu0 %v844
    %4315 = vmatprep.subr.mxu0 %v841
    %4316 = vmatpush1.msra.mxu0 %v840
    %4317 = vmatprep.subr.mxu0 %v837
    %4318 = vmatpush1.msra.mxu0 %v836
    %4319 = vmatprep.subr.mxu0 %v833
    %4320 = vmatpush1.msra.mxu0 %v832
    %4321 = vmatprep.subr.mxu0 %v829
    %4322 = vmatpush1.msra.mxu0 %v828
    %4323 = vmatprep.subr.mxu0 %v825
    %4324 = vmatpush1.msra.mxu0 %v824
    %4325 = vmatprep.subr.mxu0 %v821
    %4326 = vmatpush1.msra.mxu0 %v820
    %4327 = vmatprep.subr.mxu0 %v817
    %4328 = vmatpush1.msra.mxu0 %v816
    %4329 = vmatprep.subr.mxu0 %v813
    %4330 = vmatpush1.msra.mxu0 %v812
    %4331 = vmatprep.subr.mxu0 %v809
    %4332 = vmatpush1.msra.mxu0 %v808
    %4333 = vmatprep.subr.mxu0 %v805
    %4334 = vmatpush1.msra.mxu0 %v804
    %4335 = vmatprep.subr.mxu0 %v801
    %4336 = vmatpush1.msra.mxu0 %v800
    %4337 = vmatprep.subr.mxu0 %v797
    %4338 = vmatpush1.msra.mxu0 %v796
    %4339 = vmatprep.subr.mxu0 %v793
    %4340 = vmatpush1.msra.mxu0 %v792
    %4341 = vmatprep.subr.mxu0 %v789
    %4342 = vmatpush1.msra.mxu0 %v788
    %4343 = vmatprep.subr.mxu0 %v785
    %4344 = vmatpush1.msra.mxu0 %v784
    %4345 = vmatprep.subr.mxu0 0.0
    %4346 = vmatpush2.msra.mxu0 0.0
    %4347 = vmatprep.subr.mxu0 0.0
    %4348 = vmatpush2.msra.mxu0 0.0
    %4349 = vmatprep.subr.mxu0 0.0
    %4350 = vmatpush2.msra.mxu0 0.0
    %4351 = vmatprep.subr.mxu0 0.0
    %4352 = vmatpush2.msra.mxu0 0.0
    %4353 = vmatprep.subr.mxu0 0.0
    %4354 = vmatpush2.msra.mxu0 0.0
    %4355 = vmatprep.subr.mxu0 0.0
    %4356 = vmatpush2.msra.mxu0 0.0
    %4357 = vmatprep.subr.mxu0 0.0
    %4358 = vmatpush2.msra.mxu0 0.0
    %4359 = vmatprep.subr.mxu0 0.0
    %4360 = vmatpush2.msra.mxu0 0.0
    %4361 = vmatprep.subr.mxu0 0.0
    %4362 = vmatpush2.msra.mxu0 0.0
    %4363 = vmatprep.subr.mxu0 0.0
    %4364 = vmatpush2.msra.mxu0 0.0
    %4365 = vmatprep.subr.mxu0 0.0
    %4366 = vmatpush2.msra.mxu0 0.0
    %4367 = vmatprep.subr.mxu0 0.0
    %4368 = vmatpush2.msra.mxu0 0.0
    %4369 = vmatprep.subr.mxu0 0.0
    %4370 = vmatpush2.msra.mxu0 0.0
    %4371 = vmatprep.subr.mxu0 0.0
    %4372 = vmatpush2.msra.mxu0 0.0
    %4373 = vmatprep.subr.mxu0 0.0
    %4374 = vmatpush2.msra.mxu0 0.0
    %4375 = vmatprep.subr.mxu0 0.0
    %4376 = vmatpush2.msra.mxu0 0.0
    %4377 = vmatprep.mubr.f32.mxu0 0.0
    %4378 = vmatmul.mubr.f32.gmra.mxu0 %v4308
    %v4379 = vpop.f32.mrf.mxu0
    %v4380 = vadd.f32 0.0, %v4379
    %v4381 = vpop.f32.mrf.mxu0
    %v4382 = vadd.f32 0.0, %v4381
    %4383 = vdwg.mxu0
    %4384 = vmatprep.subr.mxu0 %v847
    %4385 = vmatpush1.msra.mxu0 %v846
    %4386 = vmatprep.subr.mxu0 %v843
    %4387 = vmatpush1.msra.mxu0 %v842
    %4388 = vmatprep.subr.mxu0 %v839
    %4389 = vmatpush1.msra.mxu0 %v838
    %4390 = vmatprep.subr.mxu0 %v835
    %4391 = vmatpush1.msra.mxu0 %v834
    %4392 = vmatprep.subr.mxu0 %v831
    %4393 = vmatpush1.msra.mxu0 %v830
    %4394 = vmatprep.subr.mxu0 %v827
    %4395 = vmatpush1.msra.mxu0 %v826
    %4396 = vmatprep.subr.mxu0 %v823
    %4397 = vmatpush1.msra.mxu0 %v822
    %4398 = vmatprep.subr.mxu0 %v819
    %4399 = vmatpush1.msra.mxu0 %v818
    %4400 = vmatprep.subr.mxu0 %v815
    %4401 = vmatpush1.msra.mxu0 %v814
    %4402 = vmatprep.subr.mxu0 %v811
    %4403 = vmatpush1.msra.mxu0 %v810
    %4404 = vmatprep.subr.mxu0 %v807
    %4405 = vmatpush1.msra.mxu0 %v806
    %4406 = vmatprep.subr.mxu0 %v803
    %4407 = vmatpush1.msra.mxu0 %v802
    %4408 = vmatprep.subr.mxu0 %v799
    %4409 = vmatpush1.msra.mxu0 %v798
    %4410 = vmatprep.subr.mxu0 %v795
    %4411 = vmatpush1.msra.mxu0 %v794
    %4412 = vmatprep.subr.mxu0 %v791
    %4413 = vmatpush1.msra.mxu0 %v790
    %4414 = vmatprep.subr.mxu0 %v787
    %4415 = vmatpush1.msra.mxu0 %v786
    %4416 = vmatprep.subr.mxu0 0.0
    %4417 = vmatpush2.msra.mxu0 0.0
    %4418 = vmatprep.subr.mxu0 0.0
    %4419 = vmatpush2.msra.mxu0 0.0
    %4420 = vmatprep.subr.mxu0 0.0
    %4421 = vmatpush2.msra.mxu0 0.0
    %4422 = vmatprep.subr.mxu0 0.0
    %4423 = vmatpush2.msra.mxu0 0.0
    %4424 = vmatprep.subr.mxu0 0.0
    %4425 = vmatpush2.msra.mxu0 0.0
    %4426 = vmatprep.subr.mxu0 0.0
    %4427 = vmatpush2.msra.mxu0 0.0
    %4428 = vmatprep.subr.mxu0 0.0
    %4429 = vmatpush2.msra.mxu0 0.0
    %4430 = vmatprep.subr.mxu0 0.0
    %4431 = vmatpush2.msra.mxu0 0.0
    %4432 = vmatprep.subr.mxu0 0.0
    %4433 = vmatpush2.msra.mxu0 0.0
    %4434 = vmatprep.subr.mxu0 0.0
    %4435 = vmatpush2.msra.mxu0 0.0
    %4436 = vmatprep.subr.mxu0 0.0
    %4437 = vmatpush2.msra.mxu0 0.0
    %4438 = vmatprep.subr.mxu0 0.0
    %4439 = vmatpush2.msra.mxu0 0.0
    %4440 = vmatprep.subr.mxu0 0.0
    %4441 = vmatpush2.msra.mxu0 0.0
    %4442 = vmatprep.subr.mxu0 0.0
    %4443 = vmatpush2.msra.mxu0 0.0
    %4444 = vmatprep.subr.mxu0 0.0
    %4445 = vmatpush2.msra.mxu0 0.0
    %4446 = vmatprep.subr.mxu0 0.0
    %4447 = vmatpush2.msra.mxu0 0.0
    %4448 = vmatprep.mubr.f32.mxu0 0.0
    %4449 = vmatmul.mubr.f32.gmra.mxu0 %v4308
    %v4450 = vpop.f32.mrf.mxu0
    %v4451 = vadd.f32 0.0, %v4450
    %v4452 = vpop.f32.mrf.mxu0
    %v4453 = vadd.f32 0.0, %v4452
    %4454 = vdwg.mxu0
    %v4455 = vadd.f32 %v4309, %v4380
    %v4456 = vadd.f32 %v4310, %v4382
    %v4457 = vadd.f32 %v4311, %v4451
    %v4458 = vadd.f32 %v4312, %v4453
    %v4459 = vtanh.pop %v4455
    %v4460 = vmul.f32 %v4459, 0.5
    %v4461 = vadd.f32 %v4460, 0.5
    %v4462 = vtanh.pop %v4456
    %v4463 = vmul.f32 %v4462, 0.5
    %v4464 = vadd.f32 %v4463, 0.5
    %v4465 = vtanh.pop %v4457
    %v4466 = vtanh.pop %v4458
    %v4467 = vmul.f32 %v4466, 0.5
    %v4468 = vadd.f32 %v4467, 0.5
    %v4469 = vmul.f32 %v4464, %v4306
    %v4470 = vmul.f32 %v4461, %v4465
    %v4471 = vadd.f32 %v4469, %v4470
    %v4472 = vtanh.pop %v4471
    %v4473 = vmul.f32 %v4468, %v4472
    %v4474 = vld [vmem:[#allocation2 + $0x2c0] sm:$0xff]
    %v4475 = vld [vmem:[#allocation2 + $0x2c8] sm:$0xff]
    %v4476 = vld [vmem:[#allocation2 + $0x2d0] sm:$0xff]
    %v4477 = vld [vmem:[#allocation2 + $0x2d8] sm:$0xff]
    %4478 = vmatprep.subr.mxu0 %v845
    %4479 = vmatpush1.msra.mxu0 %v844
    %4480 = vmatprep.subr.mxu0 %v841
    %4481 = vmatpush1.msra.mxu0 %v840
    %4482 = vmatprep.subr.mxu0 %v837
    %4483 = vmatpush1.msra.mxu0 %v836
    %4484 = vmatprep.subr.mxu0 %v833
    %4485 = vmatpush1.msra.mxu0 %v832
    %4486 = vmatprep.subr.mxu0 %v829
    %4487 = vmatpush1.msra.mxu0 %v828
    %4488 = vmatprep.subr.mxu0 %v825
    %4489 = vmatpush1.msra.mxu0 %v824
    %4490 = vmatprep.subr.mxu0 %v821
    %4491 = vmatpush1.msra.mxu0 %v820
    %4492 = vmatprep.subr.mxu0 %v817
    %4493 = vmatpush1.msra.mxu0 %v816
    %4494 = vmatprep.subr.mxu0 %v813
    %4495 = vmatpush1.msra.mxu0 %v812
    %4496 = vmatprep.subr.mxu0 %v809
    %4497 = vmatpush1.msra.mxu0 %v808
    %4498 = vmatprep.subr.mxu0 %v805
    %4499 = vmatpush1.msra.mxu0 %v804
    %4500 = vmatprep.subr.mxu0 %v801
    %4501 = vmatpush1.msra.mxu0 %v800
    %4502 = vmatprep.subr.mxu0 %v797
    %4503 = vmatpush1.msra.mxu0 %v796
    %4504 = vmatprep.subr.mxu0 %v793
    %4505 = vmatpush1.msra.mxu0 %v792
    %4506 = vmatprep.subr.mxu0 %v789
    %4507 = vmatpush1.msra.mxu0 %v788
    %4508 = vmatprep.subr.mxu0 %v785
    %4509 = vmatpush1.msra.mxu0 %v784
    %4510 = vmatprep.subr.mxu0 0.0
    %4511 = vmatpush2.msra.mxu0 0.0
    %4512 = vmatprep.subr.mxu0 0.0
    %4513 = vmatpush2.msra.mxu0 0.0
    %4514 = vmatprep.subr.mxu0 0.0
    %4515 = vmatpush2.msra.mxu0 0.0
    %4516 = vmatprep.subr.mxu0 0.0
    %4517 = vmatpush2.msra.mxu0 0.0
    %4518 = vmatprep.subr.mxu0 0.0
    %4519 = vmatpush2.msra.mxu0 0.0
    %4520 = vmatprep.subr.mxu0 0.0
    %4521 = vmatpush2.msra.mxu0 0.0
    %4522 = vmatprep.subr.mxu0 0.0
    %4523 = vmatpush2.msra.mxu0 0.0
    %4524 = vmatprep.subr.mxu0 0.0
    %4525 = vmatpush2.msra.mxu0 0.0
    %4526 = vmatprep.subr.mxu0 0.0
    %4527 = vmatpush2.msra.mxu0 0.0
    %4528 = vmatprep.subr.mxu0 0.0
    %4529 = vmatpush2.msra.mxu0 0.0
    %4530 = vmatprep.subr.mxu0 0.0
    %4531 = vmatpush2.msra.mxu0 0.0
    %4532 = vmatprep.subr.mxu0 0.0
    %4533 = vmatpush2.msra.mxu0 0.0
    %4534 = vmatprep.subr.mxu0 0.0
    %4535 = vmatpush2.msra.mxu0 0.0
    %4536 = vmatprep.subr.mxu0 0.0
    %4537 = vmatpush2.msra.mxu0 0.0
    %4538 = vmatprep.subr.mxu0 0.0
    %4539 = vmatpush2.msra.mxu0 0.0
    %4540 = vmatprep.subr.mxu0 0.0
    %4541 = vmatpush2.msra.mxu0 0.0
    %4542 = vmatprep.mubr.f32.mxu0 0.0
    %4543 = vmatmul.mubr.f32.gmra.mxu0 %v4473
    %v4544 = vpop.f32.mrf.mxu0
    %v4545 = vadd.f32 0.0, %v4544
    %v4546 = vpop.f32.mrf.mxu0
    %v4547 = vadd.f32 0.0, %v4546
    %4548 = vdwg.mxu0
    %4549 = vmatprep.subr.mxu0 %v847
    %4550 = vmatpush1.msra.mxu0 %v846
    %4551 = vmatprep.subr.mxu0 %v843
    %4552 = vmatpush1.msra.mxu0 %v842
    %4553 = vmatprep.subr.mxu0 %v839
    %4554 = vmatpush1.msra.mxu0 %v838
    %4555 = vmatprep.subr.mxu0 %v835
    %4556 = vmatpush1.msra.mxu0 %v834
    %4557 = vmatprep.subr.mxu0 %v831
    %4558 = vmatpush1.msra.mxu0 %v830
    %4559 = vmatprep.subr.mxu0 %v827
    %4560 = vmatpush1.msra.mxu0 %v826
    %4561 = vmatprep.subr.mxu0 %v823
    %4562 = vmatpush1.msra.mxu0 %v822
    %4563 = vmatprep.subr.mxu0 %v819
    %4564 = vmatpush1.msra.mxu0 %v818
    %4565 = vmatprep.subr.mxu0 %v815
    %4566 = vmatpush1.msra.mxu0 %v814
    %4567 = vmatprep.subr.mxu0 %v811
    %4568 = vmatpush1.msra.mxu0 %v810
    %4569 = vmatprep.subr.mxu0 %v807
    %4570 = vmatpush1.msra.mxu0 %v806
    %4571 = vmatprep.subr.mxu0 %v803
    %4572 = vmatpush1.msra.mxu0 %v802
    %4573 = vmatprep.subr.mxu0 %v799
    %4574 = vmatpush1.msra.mxu0 %v798
    %4575 = vmatprep.subr.mxu0 %v795
    %4576 = vmatpush1.msra.mxu0 %v794
    %4577 = vmatprep.subr.mxu0 %v791
    %4578 = vmatpush1.msra.mxu0 %v790
    %4579 = vmatprep.subr.mxu0 %v787
    %4580 = vmatpush1.msra.mxu0 %v786
    %4581 = vmatprep.subr.mxu0 0.0
    %4582 = vmatpush2.msra.mxu0 0.0
    %4583 = vmatprep.subr.mxu0 0.0
    %4584 = vmatpush2.msra.mxu0 0.0
    %4585 = vmatprep.subr.mxu0 0.0
    %4586 = vmatpush2.msra.mxu0 0.0
    %4587 = vmatprep.subr.mxu0 0.0
    %4588 = vmatpush2.msra.mxu0 0.0
    %4589 = vmatprep.subr.mxu0 0.0
    %4590 = vmatpush2.msra.mxu0 0.0
    %4591 = vmatprep.subr.mxu0 0.0
    %4592 = vmatpush2.msra.mxu0 0.0
    %4593 = vmatprep.subr.mxu0 0.0
    %4594 = vmatpush2.msra.mxu0 0.0
    %4595 = vmatprep.subr.mxu0 0.0
    %4596 = vmatpush2.msra.mxu0 0.0
    %4597 = vmatprep.subr.mxu0 0.0
    %4598 = vmatpush2.msra.mxu0 0.0
    %4599 = vmatprep.subr.mxu0 0.0
    %4600 = vmatpush2.msra.mxu0 0.0
    %4601 = vmatprep.subr.mxu0 0.0
    %4602 = vmatpush2.msra.mxu0 0.0
    %4603 = vmatprep.subr.mxu0 0.0
    %4604 = vmatpush2.msra.mxu0 0.0
    %4605 = vmatprep.subr.mxu0 0.0
    %4606 = vmatpush2.msra.mxu0 0.0
    %4607 = vmatprep.subr.mxu0 0.0
    %4608 = vmatpush2.msra.mxu0 0.0
    %4609 = vmatprep.subr.mxu0 0.0
    %4610 = vmatpush2.msra.mxu0 0.0
    %4611 = vmatprep.subr.mxu0 0.0
    %4612 = vmatpush2.msra.mxu0 0.0
    %4613 = vmatprep.mubr.f32.mxu0 0.0
    %4614 = vmatmul.mubr.f32.gmra.mxu0 %v4473
    %v4615 = vpop.f32.mrf.mxu0
    %v4616 = vadd.f32 0.0, %v4615
    %v4617 = vpop.f32.mrf.mxu0
    %v4618 = vadd.f32 0.0, %v4617
    %4619 = vdwg.mxu0
    %v4620 = vadd.f32 %v4474, %v4545
    %v4621 = vadd.f32 %v4475, %v4547
    %v4622 = vadd.f32 %v4476, %v4616
    %v4623 = vadd.f32 %v4477, %v4618
    %v4624 = vtanh.pop %v4620
    %v4625 = vmul.f32 %v4624, 0.5
    %v4626 = vadd.f32 %v4625, 0.5
    %v4627 = vtanh.pop %v4621
    %v4628 = vmul.f32 %v4627, 0.5
    %v4629 = vadd.f32 %v4628, 0.5
    %v4630 = vtanh.pop %v4622
    %v4631 = vtanh.pop %v4623
    %v4632 = vmul.f32 %v4631, 0.5
    %v4633 = vadd.f32 %v4632, 0.5
    %v4634 = vmul.f32 %v4629, %v4471
    %v4635 = vmul.f32 %v4626, %v4630
    %v4636 = vadd.f32 %v4634, %v4635
    %v4637 = vtanh.pop %v4636
    %v4638 = vmul.f32 %v4633, %v4637
    %v4639 = vld [vmem:[#allocation2 + $0x2e0] sm:$0xff]
    %v4640 = vld [vmem:[#allocation2 + $0x2e8] sm:$0xff]
    %v4641 = vld [vmem:[#allocation2 + $0x2f0] sm:$0xff]
    %v4642 = vld [vmem:[#allocation2 + $0x2f8] sm:$0xff]
    %4643 = vmatprep.subr.mxu0 %v845
    %4644 = vmatpush1.msra.mxu0 %v844
    %4645 = vmatprep.subr.mxu0 %v841
    %4646 = vmatpush1.msra.mxu0 %v840
    %4647 = vmatprep.subr.mxu0 %v837
    %4648 = vmatpush1.msra.mxu0 %v836
    %4649 = vmatprep.subr.mxu0 %v833
    %4650 = vmatpush1.msra.mxu0 %v832
    %4651 = vmatprep.subr.mxu0 %v829
    %4652 = vmatpush1.msra.mxu0 %v828
    %4653 = vmatprep.subr.mxu0 %v825
    %4654 = vmatpush1.msra.mxu0 %v824
    %4655 = vmatprep.subr.mxu0 %v821
    %4656 = vmatpush1.msra.mxu0 %v820
    %4657 = vmatprep.subr.mxu0 %v817
    %4658 = vmatpush1.msra.mxu0 %v816
    %4659 = vmatprep.subr.mxu0 %v813
    %4660 = vmatpush1.msra.mxu0 %v812
    %4661 = vmatprep.subr.mxu0 %v809
    %4662 = vmatpush1.msra.mxu0 %v808
    %4663 = vmatprep.subr.mxu0 %v805
    %4664 = vmatpush1.msra.mxu0 %v804
    %4665 = vmatprep.subr.mxu0 %v801
    %4666 = vmatpush1.msra.mxu0 %v800
    %4667 = vmatprep.subr.mxu0 %v797
    %4668 = vmatpush1.msra.mxu0 %v796
    %4669 = vmatprep.subr.mxu0 %v793
    %4670 = vmatpush1.msra.mxu0 %v792
    %4671 = vmatprep.subr.mxu0 %v789
    %4672 = vmatpush1.msra.mxu0 %v788
    %4673 = vmatprep.subr.mxu0 %v785
    %4674 = vmatpush1.msra.mxu0 %v784
    %4675 = vmatprep.subr.mxu0 0.0
    %4676 = vmatpush2.msra.mxu0 0.0
    %4677 = vmatprep.subr.mxu0 0.0
    %4678 = vmatpush2.msra.mxu0 0.0
    %4679 = vmatprep.subr.mxu0 0.0
    %4680 = vmatpush2.msra.mxu0 0.0
    %4681 = vmatprep.subr.mxu0 0.0
    %4682 = vmatpush2.msra.mxu0 0.0
    %4683 = vmatprep.subr.mxu0 0.0
    %4684 = vmatpush2.msra.mxu0 0.0
    %4685 = vmatprep.subr.mxu0 0.0
    %4686 = vmatpush2.msra.mxu0 0.0
    %4687 = vmatprep.subr.mxu0 0.0
    %4688 = vmatpush2.msra.mxu0 0.0
    %4689 = vmatprep.subr.mxu0 0.0
    %4690 = vmatpush2.msra.mxu0 0.0
    %4691 = vmatprep.subr.mxu0 0.0
    %4692 = vmatpush2.msra.mxu0 0.0
    %4693 = vmatprep.subr.mxu0 0.0
    %4694 = vmatpush2.msra.mxu0 0.0
    %4695 = vmatprep.subr.mxu0 0.0
    %4696 = vmatpush2.msra.mxu0 0.0
    %4697 = vmatprep.subr.mxu0 0.0
    %4698 = vmatpush2.msra.mxu0 0.0
    %4699 = vmatprep.subr.mxu0 0.0
    %4700 = vmatpush2.msra.mxu0 0.0
    %4701 = vmatprep.subr.mxu0 0.0
    %4702 = vmatpush2.msra.mxu0 0.0
    %4703 = vmatprep.subr.mxu0 0.0
    %4704 = vmatpush2.msra.mxu0 0.0
    %4705 = vmatprep.subr.mxu0 0.0
    %4706 = vmatpush2.msra.mxu0 0.0
    %4707 = vmatprep.mubr.f32.mxu0 0.0
    %4708 = vmatmul.mubr.f32.gmra.mxu0 %v4638
    %v4709 = vpop.f32.mrf.mxu0
    %v4710 = vadd.f32 0.0, %v4709
    %v4711 = vpop.f32.mrf.mxu0
    %v4712 = vadd.f32 0.0, %v4711
    %4713 = vdwg.mxu0
    %4714 = vmatprep.subr.mxu0 %v847
    %4715 = vmatpush1.msra.mxu0 %v846
    %4716 = vmatprep.subr.mxu0 %v843
    %4717 = vmatpush1.msra.mxu0 %v842
    %4718 = vmatprep.subr.mxu0 %v839
    %4719 = vmatpush1.msra.mxu0 %v838
    %4720 = vmatprep.subr.mxu0 %v835
    %4721 = vmatpush1.msra.mxu0 %v834
    %4722 = vmatprep.subr.mxu0 %v831
    %4723 = vmatpush1.msra.mxu0 %v830
    %4724 = vmatprep.subr.mxu0 %v827
    %4725 = vmatpush1.msra.mxu0 %v826
    %4726 = vmatprep.subr.mxu0 %v823
    %4727 = vmatpush1.msra.mxu0 %v822
    %4728 = vmatprep.subr.mxu0 %v819
    %4729 = vmatpush1.msra.mxu0 %v818
    %4730 = vmatprep.subr.mxu0 %v815
    %4731 = vmatpush1.msra.mxu0 %v814
    %4732 = vmatprep.subr.mxu0 %v811
    %4733 = vmatpush1.msra.mxu0 %v810
    %4734 = vmatprep.subr.mxu0 %v807
    %4735 = vmatpush1.msra.mxu0 %v806
    %4736 = vmatprep.subr.mxu0 %v803
    %4737 = vmatpush1.msra.mxu0 %v802
    %4738 = vmatprep.subr.mxu0 %v799
    %4739 = vmatpush1.msra.mxu0 %v798
    %4740 = vmatprep.subr.mxu0 %v795
    %4741 = vmatpush1.msra.mxu0 %v794
    %4742 = vmatprep.subr.mxu0 %v791
    %4743 = vmatpush1.msra.mxu0 %v790
    %4744 = vmatprep.subr.mxu0 %v787
    %4745 = vmatpush1.msra.mxu0 %v786
    %4746 = vmatprep.subr.mxu0 0.0
    %4747 = vmatpush2.msra.mxu0 0.0
    %4748 = vmatprep.subr.mxu0 0.0
    %4749 = vmatpush2.msra.mxu0 0.0
    %4750 = vmatprep.subr.mxu0 0.0
    %4751 = vmatpush2.msra.mxu0 0.0
    %4752 = vmatprep.subr.mxu0 0.0
    %4753 = vmatpush2.msra.mxu0 0.0
    %4754 = vmatprep.subr.mxu0 0.0
    %4755 = vmatpush2.msra.mxu0 0.0
    %4756 = vmatprep.subr.mxu0 0.0
    %4757 = vmatpush2.msra.mxu0 0.0
    %4758 = vmatprep.subr.mxu0 0.0
    %4759 = vmatpush2.msra.mxu0 0.0
    %4760 = vmatprep.subr.mxu0 0.0
    %4761 = vmatpush2.msra.mxu0 0.0
    %4762 = vmatprep.subr.mxu0 0.0
    %4763 = vmatpush2.msra.mxu0 0.0
    %4764 = vmatprep.subr.mxu0 0.0
    %4765 = vmatpush2.msra.mxu0 0.0
    %4766 = vmatprep.subr.mxu0 0.0
    %4767 = vmatpush2.msra.mxu0 0.0
    %4768 = vmatprep.subr.mxu0 0.0
    %4769 = vmatpush2.msra.mxu0 0.0
    %4770 = vmatprep.subr.mxu0 0.0
    %4771 = vmatpush2.msra.mxu0 0.0
    %4772 = vmatprep.subr.mxu0 0.0
    %4773 = vmatpush2.msra.mxu0 0.0
    %4774 = vmatprep.subr.mxu0 0.0
    %4775 = vmatpush2.msra.mxu0 0.0
    %4776 = vmatprep.subr.mxu0 0.0
    %4777 = vmatpush2.msra.mxu0 0.0
    %4778 = vmatprep.mubr.f32.mxu0 0.0
    %4779 = vmatmul.mubr.f32.gmra.mxu0 %v4638
    %v4780 = vpop.f32.mrf.mxu0
    %v4781 = vadd.f32 0.0, %v4780
    %v4782 = vpop.f32.mrf.mxu0
    %v4783 = vadd.f32 0.0, %v4782
    %4784 = vdwg.mxu0
    %v4785 = vadd.f32 %v4639, %v4710
    %v4786 = vadd.f32 %v4640, %v4712
    %v4787 = vadd.f32 %v4641, %v4781
    %v4788 = vadd.f32 %v4642, %v4783
    %v4789 = vtanh.pop %v4785
    %v4790 = vmul.f32 %v4789, 0.5
    %v4791 = vadd.f32 %v4790, 0.5
    %v4792 = vtanh.pop %v4786
    %v4793 = vmul.f32 %v4792, 0.5
    %v4794 = vadd.f32 %v4793, 0.5
    %v4795 = vtanh.pop %v4787
    %v4796 = vtanh.pop %v4788
    %v4797 = vmul.f32 %v4796, 0.5
    %v4798 = vadd.f32 %v4797, 0.5
    %v4799 = vmul.f32 %v4794, %v4636
    %v4800 = vmul.f32 %v4791, %v4795
    %v4801 = vadd.f32 %v4799, %v4800
    %v4802 = vtanh.pop %v4801
    %v4803 = vmul.f32 %v4798, %v4802
    %v4804 = vld [vmem:[#allocation2 + $0x300] sm:$0xff]
    %v4805 = vld [vmem:[#allocation2 + $0x308] sm:$0xff]
    %v4806 = vld [vmem:[#allocation2 + $0x310] sm:$0xff]
    %v4807 = vld [vmem:[#allocation2 + $0x318] sm:$0xff]
    %4808 = vmatprep.subr.mxu0 %v845
    %4809 = vmatpush1.msra.mxu0 %v844
    %4810 = vmatprep.subr.mxu0 %v841
    %4811 = vmatpush1.msra.mxu0 %v840
    %4812 = vmatprep.subr.mxu0 %v837
    %4813 = vmatpush1.msra.mxu0 %v836
    %4814 = vmatprep.subr.mxu0 %v833
    %4815 = vmatpush1.msra.mxu0 %v832
    %4816 = vmatprep.subr.mxu0 %v829
    %4817 = vmatpush1.msra.mxu0 %v828
    %4818 = vmatprep.subr.mxu0 %v825
    %4819 = vmatpush1.msra.mxu0 %v824
    %4820 = vmatprep.subr.mxu0 %v821
    %4821 = vmatpush1.msra.mxu0 %v820
    %4822 = vmatprep.subr.mxu0 %v817
    %4823 = vmatpush1.msra.mxu0 %v816
    %4824 = vmatprep.subr.mxu0 %v813
    %4825 = vmatpush1.msra.mxu0 %v812
    %4826 = vmatprep.subr.mxu0 %v809
    %4827 = vmatpush1.msra.mxu0 %v808
    %4828 = vmatprep.subr.mxu0 %v805
    %4829 = vmatpush1.msra.mxu0 %v804
    %4830 = vmatprep.subr.mxu0 %v801
    %4831 = vmatpush1.msra.mxu0 %v800
    %4832 = vmatprep.subr.mxu0 %v797
    %4833 = vmatpush1.msra.mxu0 %v796
    %4834 = vmatprep.subr.mxu0 %v793
    %4835 = vmatpush1.msra.mxu0 %v792
    %4836 = vmatprep.subr.mxu0 %v789
    %4837 = vmatpush1.msra.mxu0 %v788
    %4838 = vmatprep.subr.mxu0 %v785
    %4839 = vmatpush1.msra.mxu0 %v784
    %4840 = vmatprep.subr.mxu0 0.0
    %4841 = vmatpush2.msra.mxu0 0.0
    %4842 = vmatprep.subr.mxu0 0.0
    %4843 = vmatpush2.msra.mxu0 0.0
    %4844 = vmatprep.subr.mxu0 0.0
    %4845 = vmatpush2.msra.mxu0 0.0
    %4846 = vmatprep.subr.mxu0 0.0
    %4847 = vmatpush2.msra.mxu0 0.0
    %4848 = vmatprep.subr.mxu0 0.0
    %4849 = vmatpush2.msra.mxu0 0.0
    %4850 = vmatprep.subr.mxu0 0.0
    %4851 = vmatpush2.msra.mxu0 0.0
    %4852 = vmatprep.subr.mxu0 0.0
    %4853 = vmatpush2.msra.mxu0 0.0
    %4854 = vmatprep.subr.mxu0 0.0
    %4855 = vmatpush2.msra.mxu0 0.0
    %4856 = vmatprep.subr.mxu0 0.0
    %4857 = vmatpush2.msra.mxu0 0.0
    %4858 = vmatprep.subr.mxu0 0.0
    %4859 = vmatpush2.msra.mxu0 0.0
    %4860 = vmatprep.subr.mxu0 0.0
    %4861 = vmatpush2.msra.mxu0 0.0
    %4862 = vmatprep.subr.mxu0 0.0
    %4863 = vmatpush2.msra.mxu0 0.0
    %4864 = vmatprep.subr.mxu0 0.0
    %4865 = vmatpush2.msra.mxu0 0.0
    %4866 = vmatprep.subr.mxu0 0.0
    %4867 = vmatpush2.msra.mxu0 0.0
    %4868 = vmatprep.subr.mxu0 0.0
    %4869 = vmatpush2.msra.mxu0 0.0
    %4870 = vmatprep.subr.mxu0 0.0
    %4871 = vmatpush2.msra.mxu0 0.0
    %4872 = vmatprep.mubr.f32.mxu0 0.0
    %4873 = vmatmul.mubr.f32.gmra.mxu0 %v4803
    %v4874 = vpop.f32.mrf.mxu0
    %v4875 = vadd.f32 0.0, %v4874
    %v4876 = vpop.f32.mrf.mxu0
    %v4877 = vadd.f32 0.0, %v4876
    %4878 = vdwg.mxu0
    %4879 = vmatprep.subr.mxu0 %v847
    %4880 = vmatpush1.msra.mxu0 %v846
    %4881 = vmatprep.subr.mxu0 %v843
    %4882 = vmatpush1.msra.mxu0 %v842
    %4883 = vmatprep.subr.mxu0 %v839
    %4884 = vmatpush1.msra.mxu0 %v838
    %4885 = vmatprep.subr.mxu0 %v835
    %4886 = vmatpush1.msra.mxu0 %v834
    %4887 = vmatprep.subr.mxu0 %v831
    %4888 = vmatpush1.msra.mxu0 %v830
    %4889 = vmatprep.subr.mxu0 %v827
    %4890 = vmatpush1.msra.mxu0 %v826
    %4891 = vmatprep.subr.mxu0 %v823
    %4892 = vmatpush1.msra.mxu0 %v822
    %4893 = vmatprep.subr.mxu0 %v819
    %4894 = vmatpush1.msra.mxu0 %v818
    %4895 = vmatprep.subr.mxu0 %v815
    %4896 = vmatpush1.msra.mxu0 %v814
    %4897 = vmatprep.subr.mxu0 %v811
    %4898 = vmatpush1.msra.mxu0 %v810
    %4899 = vmatprep.subr.mxu0 %v807
    %4900 = vmatpush1.msra.mxu0 %v806
    %4901 = vmatprep.subr.mxu0 %v803
    %4902 = vmatpush1.msra.mxu0 %v802
    %4903 = vmatprep.subr.mxu0 %v799
    %4904 = vmatpush1.msra.mxu0 %v798
    %4905 = vmatprep.subr.mxu0 %v795
    %4906 = vmatpush1.msra.mxu0 %v794
    %4907 = vmatprep.subr.mxu0 %v791
    %4908 = vmatpush1.msra.mxu0 %v790
    %4909 = vmatprep.subr.mxu0 %v787
    %4910 = vmatpush1.msra.mxu0 %v786
    %4911 = vmatprep.subr.mxu0 0.0
    %4912 = vmatpush2.msra.mxu0 0.0
    %4913 = vmatprep.subr.mxu0 0.0
    %4914 = vmatpush2.msra.mxu0 0.0
    %4915 = vmatprep.subr.mxu0 0.0
    %4916 = vmatpush2.msra.mxu0 0.0
    %4917 = vmatprep.subr.mxu0 0.0
    %4918 = vmatpush2.msra.mxu0 0.0
    %4919 = vmatprep.subr.mxu0 0.0
    %4920 = vmatpush2.msra.mxu0 0.0
    %4921 = vmatprep.subr.mxu0 0.0
    %4922 = vmatpush2.msra.mxu0 0.0
    %4923 = vmatprep.subr.mxu0 0.0
    %4924 = vmatpush2.msra.mxu0 0.0
    %4925 = vmatprep.subr.mxu0 0.0
    %4926 = vmatpush2.msra.mxu0 0.0
    %4927 = vmatprep.subr.mxu0 0.0
    %4928 = vmatpush2.msra.mxu0 0.0
    %4929 = vmatprep.subr.mxu0 0.0
    %4930 = vmatpush2.msra.mxu0 0.0
    %4931 = vmatprep.subr.mxu0 0.0
    %4932 = vmatpush2.msra.mxu0 0.0
    %4933 = vmatprep.subr.mxu0 0.0
    %4934 = vmatpush2.msra.mxu0 0.0
    %4935 = vmatprep.subr.mxu0 0.0
    %4936 = vmatpush2.msra.mxu0 0.0
    %4937 = vmatprep.subr.mxu0 0.0
    %4938 = vmatpush2.msra.mxu0 0.0
    %4939 = vmatprep.subr.mxu0 0.0
    %4940 = vmatpush2.msra.mxu0 0.0
    %4941 = vmatprep.subr.mxu0 0.0
    %4942 = vmatpush2.msra.mxu0 0.0
    %4943 = vmatprep.mubr.f32.mxu0 0.0
    %4944 = vmatmul.mubr.f32.gmra.mxu0 %v4803
    %v4945 = vpop.f32.mrf.mxu0
    %v4946 = vadd.f32 0.0, %v4945
    %v4947 = vpop.f32.mrf.mxu0
    %v4948 = vadd.f32 0.0, %v4947
    %4949 = vdwg.mxu0
    %v4950 = vadd.f32 %v4804, %v4875
    %v4951 = vadd.f32 %v4805, %v4877
    %v4952 = vadd.f32 %v4806, %v4946
    %v4953 = vadd.f32 %v4807, %v4948
    %v4954 = vtanh.pop %v4950
    %v4955 = vmul.f32 %v4954, 0.5
    %v4956 = vadd.f32 %v4955, 0.5
    %v4957 = vtanh.pop %v4951
    %v4958 = vmul.f32 %v4957, 0.5
    %v4959 = vadd.f32 %v4958, 0.5
    %v4960 = vtanh.pop %v4952
    %v4961 = vtanh.pop %v4953
    %v4962 = vmul.f32 %v4961, 0.5
    %v4963 = vadd.f32 %v4962, 0.5
    %v4964 = vmul.f32 %v4959, %v4801
    %v4965 = vmul.f32 %v4956, %v4960
    %v4966 = vadd.f32 %v4964, %v4965
    %v4967 = vtanh.pop %v4966
    %v4968 = vmul.f32 %v4963, %v4967
    %v4969 = vld [vmem:[#allocation2 + $0x320] sm:$0xff]
    %v4970 = vld [vmem:[#allocation2 + $0x328] sm:$0xff]
    %v4971 = vld [vmem:[#allocation2 + $0x330] sm:$0xff]
    %v4972 = vld [vmem:[#allocation2 + $0x338] sm:$0xff]
    %4973 = vmatprep.subr.mxu0 %v845
    %4974 = vmatpush1.msra.mxu0 %v844
    %4975 = vmatprep.subr.mxu0 %v841
    %4976 = vmatpush1.msra.mxu0 %v840
    %4977 = vmatprep.subr.mxu0 %v837
    %4978 = vmatpush1.msra.mxu0 %v836
    %4979 = vmatprep.subr.mxu0 %v833
    %4980 = vmatpush1.msra.mxu0 %v832
    %4981 = vmatprep.subr.mxu0 %v829
    %4982 = vmatpush1.msra.mxu0 %v828
    %4983 = vmatprep.subr.mxu0 %v825
    %4984 = vmatpush1.msra.mxu0 %v824
    %4985 = vmatprep.subr.mxu0 %v821
    %4986 = vmatpush1.msra.mxu0 %v820
    %4987 = vmatprep.subr.mxu0 %v817
    %4988 = vmatpush1.msra.mxu0 %v816
    %4989 = vmatprep.subr.mxu0 %v813
    %4990 = vmatpush1.msra.mxu0 %v812
    %4991 = vmatprep.subr.mxu0 %v809
    %4992 = vmatpush1.msra.mxu0 %v808
    %4993 = vmatprep.subr.mxu0 %v805
    %4994 = vmatpush1.msra.mxu0 %v804
    %4995 = vmatprep.subr.mxu0 %v801
    %4996 = vmatpush1.msra.mxu0 %v800
    %4997 = vmatprep.subr.mxu0 %v797
    %4998 = vmatpush1.msra.mxu0 %v796
    %4999 = vmatprep.subr.mxu0 %v793
    %5000 = vmatpush1.msra.mxu0 %v792
    %5001 = vmatprep.subr.mxu0 %v789
    %5002 = vmatpush1.msra.mxu0 %v788
    %5003 = vmatprep.subr.mxu0 %v785
    %5004 = vmatpush1.msra.mxu0 %v784
    %5005 = vmatprep.subr.mxu0 0.0
    %5006 = vmatpush2.msra.mxu0 0.0
    %5007 = vmatprep.subr.mxu0 0.0
    %5008 = vmatpush2.msra.mxu0 0.0
    %5009 = vmatprep.subr.mxu0 0.0
    %5010 = vmatpush2.msra.mxu0 0.0
    %5011 = vmatprep.subr.mxu0 0.0
    %5012 = vmatpush2.msra.mxu0 0.0
    %5013 = vmatprep.subr.mxu0 0.0
    %5014 = vmatpush2.msra.mxu0 0.0
    %5015 = vmatprep.subr.mxu0 0.0
    %5016 = vmatpush2.msra.mxu0 0.0
    %5017 = vmatprep.subr.mxu0 0.0
    %5018 = vmatpush2.msra.mxu0 0.0
    %5019 = vmatprep.subr.mxu0 0.0
    %5020 = vmatpush2.msra.mxu0 0.0
    %5021 = vmatprep.subr.mxu0 0.0
    %5022 = vmatpush2.msra.mxu0 0.0
    %5023 = vmatprep.subr.mxu0 0.0
    %5024 = vmatpush2.msra.mxu0 0.0
    %5025 = vmatprep.subr.mxu0 0.0
    %5026 = vmatpush2.msra.mxu0 0.0
    %5027 = vmatprep.subr.mxu0 0.0
    %5028 = vmatpush2.msra.mxu0 0.0
    %5029 = vmatprep.subr.mxu0 0.0
    %5030 = vmatpush2.msra.mxu0 0.0
    %5031 = vmatprep.subr.mxu0 0.0
    %5032 = vmatpush2.msra.mxu0 0.0
    %5033 = vmatprep.subr.mxu0 0.0
    %5034 = vmatpush2.msra.mxu0 0.0
    %5035 = vmatprep.subr.mxu0 0.0
    %5036 = vmatpush2.msra.mxu0 0.0
    %5037 = vmatprep.mubr.f32.mxu0 0.0
    %5038 = vmatmul.mubr.f32.gmra.mxu0 %v4968
    %v5039 = vpop.f32.mrf.mxu0
    %v5040 = vadd.f32 0.0, %v5039
    %v5041 = vpop.f32.mrf.mxu0
    %v5042 = vadd.f32 0.0, %v5041
    %5043 = vdwg.mxu0
    %5044 = vmatprep.subr.mxu0 %v847
    %5045 = vmatpush1.msra.mxu0 %v846
    %5046 = vmatprep.subr.mxu0 %v843
    %5047 = vmatpush1.msra.mxu0 %v842
    %5048 = vmatprep.subr.mxu0 %v839
    %5049 = vmatpush1.msra.mxu0 %v838
    %5050 = vmatprep.subr.mxu0 %v835
    %5051 = vmatpush1.msra.mxu0 %v834
    %5052 = vmatprep.subr.mxu0 %v831
    %5053 = vmatpush1.msra.mxu0 %v830
    %5054 = vmatprep.subr.mxu0 %v827
    %5055 = vmatpush1.msra.mxu0 %v826
    %5056 = vmatprep.subr.mxu0 %v823
    %5057 = vmatpush1.msra.mxu0 %v822
    %5058 = vmatprep.subr.mxu0 %v819
    %5059 = vmatpush1.msra.mxu0 %v818
    %5060 = vmatprep.subr.mxu0 %v815
    %5061 = vmatpush1.msra.mxu0 %v814
    %5062 = vmatprep.subr.mxu0 %v811
    %5063 = vmatpush1.msra.mxu0 %v810
    %5064 = vmatprep.subr.mxu0 %v807
    %5065 = vmatpush1.msra.mxu0 %v806
    %5066 = vmatprep.subr.mxu0 %v803
    %5067 = vmatpush1.msra.mxu0 %v802
    %5068 = vmatprep.subr.mxu0 %v799
    %5069 = vmatpush1.msra.mxu0 %v798
    %5070 = vmatprep.subr.mxu0 %v795
    %5071 = vmatpush1.msra.mxu0 %v794
    %5072 = vmatprep.subr.mxu0 %v791
    %5073 = vmatpush1.msra.mxu0 %v790
    %5074 = vmatprep.subr.mxu0 %v787
    %5075 = vmatpush1.msra.mxu0 %v786
    %5076 = vmatprep.subr.mxu0 0.0
    %5077 = vmatpush2.msra.mxu0 0.0
    %5078 = vmatprep.subr.mxu0 0.0
    %5079 = vmatpush2.msra.mxu0 0.0
    %5080 = vmatprep.subr.mxu0 0.0
    %5081 = vmatpush2.msra.mxu0 0.0
    %5082 = vmatprep.subr.mxu0 0.0
    %5083 = vmatpush2.msra.mxu0 0.0
    %5084 = vmatprep.subr.mxu0 0.0
    %5085 = vmatpush2.msra.mxu0 0.0
    %5086 = vmatprep.subr.mxu0 0.0
    %5087 = vmatpush2.msra.mxu0 0.0
    %5088 = vmatprep.subr.mxu0 0.0
    %5089 = vmatpush2.msra.mxu0 0.0
    %5090 = vmatprep.subr.mxu0 0.0
    %5091 = vmatpush2.msra.mxu0 0.0
    %5092 = vmatprep.subr.mxu0 0.0
    %5093 = vmatpush2.msra.mxu0 0.0
    %5094 = vmatprep.subr.mxu0 0.0
    %5095 = vmatpush2.msra.mxu0 0.0
    %5096 = vmatprep.subr.mxu0 0.0
    %5097 = vmatpush2.msra.mxu0 0.0
    %5098 = vmatprep.subr.mxu0 0.0
    %5099 = vmatpush2.msra.mxu0 0.0
    %5100 = vmatprep.subr.mxu0 0.0
    %5101 = vmatpush2.msra.mxu0 0.0
    %5102 = vmatprep.subr.mxu0 0.0
    %5103 = vmatpush2.msra.mxu0 0.0
    %5104 = vmatprep.subr.mxu0 0.0
    %5105 = vmatpush2.msra.mxu0 0.0
    %5106 = vmatprep.subr.mxu0 0.0
    %5107 = vmatpush2.msra.mxu0 0.0
    %5108 = vmatprep.mubr.f32.mxu0 0.0
    %5109 = vmatmul.mubr.f32.gmra.mxu0 %v4968
    %v5110 = vpop.f32.mrf.mxu0
    %v5111 = vadd.f32 0.0, %v5110
    %v5112 = vpop.f32.mrf.mxu0
    %v5113 = vadd.f32 0.0, %v5112
    %5114 = vdwg.mxu0
    %v5115 = vadd.f32 %v4969, %v5040
    %v5116 = vadd.f32 %v4970, %v5042
    %v5117 = vadd.f32 %v4971, %v5111
    %v5118 = vadd.f32 %v4972, %v5113
    %v5119 = vtanh.pop %v5115
    %v5120 = vmul.f32 %v5119, 0.5
    %v5121 = vadd.f32 %v5120, 0.5
    %v5122 = vtanh.pop %v5116
    %v5123 = vmul.f32 %v5122, 0.5
    %v5124 = vadd.f32 %v5123, 0.5
    %v5125 = vtanh.pop %v5117
    %v5126 = vtanh.pop %v5118
    %v5127 = vmul.f32 %v5126, 0.5
    %v5128 = vadd.f32 %v5127, 0.5
    %v5129 = vmul.f32 %v5124, %v4966
    %v5130 = vmul.f32 %v5121, %v5125
    %v5131 = vadd.f32 %v5129, %v5130
    %v5132 = vtanh.pop %v5131
    %v5133 = vmul.f32 %v5128, %v5132
    %v5134 = vld [vmem:[#allocation2 + $0x340] sm:$0xff]
    %v5135 = vld [vmem:[#allocation2 + $0x348] sm:$0xff]
    %v5136 = vld [vmem:[#allocation2 + $0x350] sm:$0xff]
    %v5137 = vld [vmem:[#allocation2 + $0x358] sm:$0xff]
    %5138 = vmatprep.subr.mxu0 %v845
    %5139 = vmatpush1.msra.mxu0 %v844
    %5140 = vmatprep.subr.mxu0 %v841
    %5141 = vmatpush1.msra.mxu0 %v840
    %5142 = vmatprep.subr.mxu0 %v837
    %5143 = vmatpush1.msra.mxu0 %v836
    %5144 = vmatprep.subr.mxu0 %v833
    %5145 = vmatpush1.msra.mxu0 %v832
    %5146 = vmatprep.subr.mxu0 %v829
    %5147 = vmatpush1.msra.mxu0 %v828
    %5148 = vmatprep.subr.mxu0 %v825
    %5149 = vmatpush1.msra.mxu0 %v824
    %5150 = vmatprep.subr.mxu0 %v821
    %5151 = vmatpush1.msra.mxu0 %v820
    %5152 = vmatprep.subr.mxu0 %v817
    %5153 = vmatpush1.msra.mxu0 %v816
    %5154 = vmatprep.subr.mxu0 %v813
    %5155 = vmatpush1.msra.mxu0 %v812
    %5156 = vmatprep.subr.mxu0 %v809
    %5157 = vmatpush1.msra.mxu0 %v808
    %5158 = vmatprep.subr.mxu0 %v805
    %5159 = vmatpush1.msra.mxu0 %v804
    %5160 = vmatprep.subr.mxu0 %v801
    %5161 = vmatpush1.msra.mxu0 %v800
    %5162 = vmatprep.subr.mxu0 %v797
    %5163 = vmatpush1.msra.mxu0 %v796
    %5164 = vmatprep.subr.mxu0 %v793
    %5165 = vmatpush1.msra.mxu0 %v792
    %5166 = vmatprep.subr.mxu0 %v789
    %5167 = vmatpush1.msra.mxu0 %v788
    %5168 = vmatprep.subr.mxu0 %v785
    %5169 = vmatpush1.msra.mxu0 %v784
    %5170 = vmatprep.subr.mxu0 0.0
    %5171 = vmatpush2.msra.mxu0 0.0
    %5172 = vmatprep.subr.mxu0 0.0
    %5173 = vmatpush2.msra.mxu0 0.0
    %5174 = vmatprep.subr.mxu0 0.0
    %5175 = vmatpush2.msra.mxu0 0.0
    %5176 = vmatprep.subr.mxu0 0.0
    %5177 = vmatpush2.msra.mxu0 0.0
    %5178 = vmatprep.subr.mxu0 0.0
    %5179 = vmatpush2.msra.mxu0 0.0
    %5180 = vmatprep.subr.mxu0 0.0
    %5181 = vmatpush2.msra.mxu0 0.0
    %5182 = vmatprep.subr.mxu0 0.0
    %5183 = vmatpush2.msra.mxu0 0.0
    %5184 = vmatprep.subr.mxu0 0.0
    %5185 = vmatpush2.msra.mxu0 0.0
    %5186 = vmatprep.subr.mxu0 0.0
    %5187 = vmatpush2.msra.mxu0 0.0
    %5188 = vmatprep.subr.mxu0 0.0
    %5189 = vmatpush2.msra.mxu0 0.0
    %5190 = vmatprep.subr.mxu0 0.0
    %5191 = vmatpush2.msra.mxu0 0.0
    %5192 = vmatprep.subr.mxu0 0.0
    %5193 = vmatpush2.msra.mxu0 0.0
    %5194 = vmatprep.subr.mxu0 0.0
    %5195 = vmatpush2.msra.mxu0 0.0
    %5196 = vmatprep.subr.mxu0 0.0
    %5197 = vmatpush2.msra.mxu0 0.0
    %5198 = vmatprep.subr.mxu0 0.0
    %5199 = vmatpush2.msra.mxu0 0.0
    %5200 = vmatprep.subr.mxu0 0.0
    %5201 = vmatpush2.msra.mxu0 0.0
    %5202 = vmatprep.mubr.f32.mxu0 0.0
    %5203 = vmatmul.mubr.f32.gmra.mxu0 %v5133
    %v5204 = vpop.f32.mrf.mxu0
    %v5205 = vadd.f32 0.0, %v5204
    %v5206 = vpop.f32.mrf.mxu0
    %v5207 = vadd.f32 0.0, %v5206
    %5208 = vdwg.mxu0
    %5209 = vmatprep.subr.mxu0 %v847
    %5210 = vmatpush1.msra.mxu0 %v846
    %5211 = vmatprep.subr.mxu0 %v843
    %5212 = vmatpush1.msra.mxu0 %v842
    %5213 = vmatprep.subr.mxu0 %v839
    %5214 = vmatpush1.msra.mxu0 %v838
    %5215 = vmatprep.subr.mxu0 %v835
    %5216 = vmatpush1.msra.mxu0 %v834
    %5217 = vmatprep.subr.mxu0 %v831
    %5218 = vmatpush1.msra.mxu0 %v830
    %5219 = vmatprep.subr.mxu0 %v827
    %5220 = vmatpush1.msra.mxu0 %v826
    %5221 = vmatprep.subr.mxu0 %v823
    %5222 = vmatpush1.msra.mxu0 %v822
    %5223 = vmatprep.subr.mxu0 %v819
    %5224 = vmatpush1.msra.mxu0 %v818
    %5225 = vmatprep.subr.mxu0 %v815
    %5226 = vmatpush1.msra.mxu0 %v814
    %5227 = vmatprep.subr.mxu0 %v811
    %5228 = vmatpush1.msra.mxu0 %v810
    %5229 = vmatprep.subr.mxu0 %v807
    %5230 = vmatpush1.msra.mxu0 %v806
    %5231 = vmatprep.subr.mxu0 %v803
    %5232 = vmatpush1.msra.mxu0 %v802
    %5233 = vmatprep.subr.mxu0 %v799
    %5234 = vmatpush1.msra.mxu0 %v798
    %5235 = vmatprep.subr.mxu0 %v795
    %5236 = vmatpush1.msra.mxu0 %v794
    %5237 = vmatprep.subr.mxu0 %v791
    %5238 = vmatpush1.msra.mxu0 %v790
    %5239 = vmatprep.subr.mxu0 %v787
    %5240 = vmatpush1.msra.mxu0 %v786
    %5241 = vmatprep.subr.mxu0 0.0
    %5242 = vmatpush2.msra.mxu0 0.0
    %5243 = vmatprep.subr.mxu0 0.0
    %5244 = vmatpush2.msra.mxu0 0.0
    %5245 = vmatprep.subr.mxu0 0.0
    %5246 = vmatpush2.msra.mxu0 0.0
    %5247 = vmatprep.subr.mxu0 0.0
    %5248 = vmatpush2.msra.mxu0 0.0
    %5249 = vmatprep.subr.mxu0 0.0
    %5250 = vmatpush2.msra.mxu0 0.0
    %5251 = vmatprep.subr.mxu0 0.0
    %5252 = vmatpush2.msra.mxu0 0.0
    %5253 = vmatprep.subr.mxu0 0.0
    %5254 = vmatpush2.msra.mxu0 0.0
    %5255 = vmatprep.subr.mxu0 0.0
    %5256 = vmatpush2.msra.mxu0 0.0
    %5257 = vmatprep.subr.mxu0 0.0
    %5258 = vmatpush2.msra.mxu0 0.0
    %5259 = vmatprep.subr.mxu0 0.0
    %5260 = vmatpush2.msra.mxu0 0.0
    %5261 = vmatprep.subr.mxu0 0.0
    %5262 = vmatpush2.msra.mxu0 0.0
    %5263 = vmatprep.subr.mxu0 0.0
    %5264 = vmatpush2.msra.mxu0 0.0
    %5265 = vmatprep.subr.mxu0 0.0
    %5266 = vmatpush2.msra.mxu0 0.0
    %5267 = vmatprep.subr.mxu0 0.0
    %5268 = vmatpush2.msra.mxu0 0.0
    %5269 = vmatprep.subr.mxu0 0.0
    %5270 = vmatpush2.msra.mxu0 0.0
    %5271 = vmatprep.subr.mxu0 0.0
    %5272 = vmatpush2.msra.mxu0 0.0
    %5273 = vmatprep.mubr.f32.mxu0 0.0
    %5274 = vmatmul.mubr.f32.gmra.mxu0 %v5133
    %v5275 = vpop.f32.mrf.mxu0
    %v5276 = vadd.f32 0.0, %v5275
    %v5277 = vpop.f32.mrf.mxu0
    %v5278 = vadd.f32 0.0, %v5277
    %5279 = vdwg.mxu0
    %v5280 = vadd.f32 %v5134, %v5205
    %v5281 = vadd.f32 %v5135, %v5207
    %v5282 = vadd.f32 %v5136, %v5276
    %v5283 = vadd.f32 %v5137, %v5278
    %v5284 = vtanh.pop %v5280
    %v5285 = vmul.f32 %v5284, 0.5
    %v5286 = vadd.f32 %v5285, 0.5
    %v5287 = vtanh.pop %v5281
    %v5288 = vmul.f32 %v5287, 0.5
    %v5289 = vadd.f32 %v5288, 0.5
    %v5290 = vtanh.pop %v5282
    %v5291 = vtanh.pop %v5283
    %v5292 = vmul.f32 %v5291, 0.5
    %v5293 = vadd.f32 %v5292, 0.5
    %v5294 = vmul.f32 %v5289, %v5131
    %v5295 = vmul.f32 %v5286, %v5290
    %v5296 = vadd.f32 %v5294, %v5295
    %v5297 = vtanh.pop %v5296
    %v5298 = vmul.f32 %v5293, %v5297
    %v5299 = vld [vmem:[#allocation2 + $0x360] sm:$0xff]
    %v5300 = vld [vmem:[#allocation2 + $0x368] sm:$0xff]
    %v5301 = vld [vmem:[#allocation2 + $0x370] sm:$0xff]
    %v5302 = vld [vmem:[#allocation2 + $0x378] sm:$0xff]
    %5303 = vmatprep.subr.mxu0 %v845
    %5304 = vmatpush1.msra.mxu0 %v844
    %5305 = vmatprep.subr.mxu0 %v841
    %5306 = vmatpush1.msra.mxu0 %v840
    %5307 = vmatprep.subr.mxu0 %v837
    %5308 = vmatpush1.msra.mxu0 %v836
    %5309 = vmatprep.subr.mxu0 %v833
    %5310 = vmatpush1.msra.mxu0 %v832
    %5311 = vmatprep.subr.mxu0 %v829
    %5312 = vmatpush1.msra.mxu0 %v828
    %5313 = vmatprep.subr.mxu0 %v825
    %5314 = vmatpush1.msra.mxu0 %v824
    %5315 = vmatprep.subr.mxu0 %v821
    %5316 = vmatpush1.msra.mxu0 %v820
    %5317 = vmatprep.subr.mxu0 %v817
    %5318 = vmatpush1.msra.mxu0 %v816
    %5319 = vmatprep.subr.mxu0 %v813
    %5320 = vmatpush1.msra.mxu0 %v812
    %5321 = vmatprep.subr.mxu0 %v809
    %5322 = vmatpush1.msra.mxu0 %v808
    %5323 = vmatprep.subr.mxu0 %v805
    %5324 = vmatpush1.msra.mxu0 %v804
    %5325 = vmatprep.subr.mxu0 %v801
    %5326 = vmatpush1.msra.mxu0 %v800
    %5327 = vmatprep.subr.mxu0 %v797
    %5328 = vmatpush1.msra.mxu0 %v796
    %5329 = vmatprep.subr.mxu0 %v793
    %5330 = vmatpush1.msra.mxu0 %v792
    %5331 = vmatprep.subr.mxu0 %v789
    %5332 = vmatpush1.msra.mxu0 %v788
    %5333 = vmatprep.subr.mxu0 %v785
    %5334 = vmatpush1.msra.mxu0 %v784
    %5335 = vmatprep.subr.mxu0 0.0
    %5336 = vmatpush2.msra.mxu0 0.0
    %5337 = vmatprep.subr.mxu0 0.0
    %5338 = vmatpush2.msra.mxu0 0.0
    %5339 = vmatprep.subr.mxu0 0.0
    %5340 = vmatpush2.msra.mxu0 0.0
    %5341 = vmatprep.subr.mxu0 0.0
    %5342 = vmatpush2.msra.mxu0 0.0
    %5343 = vmatprep.subr.mxu0 0.0
    %5344 = vmatpush2.msra.mxu0 0.0
    %5345 = vmatprep.subr.mxu0 0.0
    %5346 = vmatpush2.msra.mxu0 0.0
    %5347 = vmatprep.subr.mxu0 0.0
    %5348 = vmatpush2.msra.mxu0 0.0
    %5349 = vmatprep.subr.mxu0 0.0
    %5350 = vmatpush2.msra.mxu0 0.0
    %5351 = vmatprep.subr.mxu0 0.0
    %5352 = vmatpush2.msra.mxu0 0.0
    %5353 = vmatprep.subr.mxu0 0.0
    %5354 = vmatpush2.msra.mxu0 0.0
    %5355 = vmatprep.subr.mxu0 0.0
    %5356 = vmatpush2.msra.mxu0 0.0
    %5357 = vmatprep.subr.mxu0 0.0
    %5358 = vmatpush2.msra.mxu0 0.0
    %5359 = vmatprep.subr.mxu0 0.0
    %5360 = vmatpush2.msra.mxu0 0.0
    %5361 = vmatprep.subr.mxu0 0.0
    %5362 = vmatpush2.msra.mxu0 0.0
    %5363 = vmatprep.subr.mxu0 0.0
    %5364 = vmatpush2.msra.mxu0 0.0
    %5365 = vmatprep.subr.mxu0 0.0
    %5366 = vmatpush2.msra.mxu0 0.0
    %5367 = vmatprep.mubr.f32.mxu0 0.0
    %5368 = vmatmul.mubr.f32.gmra.mxu0 %v5298
    %v5369 = vpop.f32.mrf.mxu0
    %v5370 = vadd.f32 0.0, %v5369
    %v5371 = vpop.f32.mrf.mxu0
    %v5372 = vadd.f32 0.0, %v5371
    %5373 = vdwg.mxu0
    %5374 = vmatprep.subr.mxu0 %v847
    %5375 = vmatpush1.msra.mxu0 %v846
    %5376 = vmatprep.subr.mxu0 %v843
    %5377 = vmatpush1.msra.mxu0 %v842
    %5378 = vmatprep.subr.mxu0 %v839
    %5379 = vmatpush1.msra.mxu0 %v838
    %5380 = vmatprep.subr.mxu0 %v835
    %5381 = vmatpush1.msra.mxu0 %v834
    %5382 = vmatprep.subr.mxu0 %v831
    %5383 = vmatpush1.msra.mxu0 %v830
    %5384 = vmatprep.subr.mxu0 %v827
    %5385 = vmatpush1.msra.mxu0 %v826
    %5386 = vmatprep.subr.mxu0 %v823
    %5387 = vmatpush1.msra.mxu0 %v822
    %5388 = vmatprep.subr.mxu0 %v819
    %5389 = vmatpush1.msra.mxu0 %v818
    %5390 = vmatprep.subr.mxu0 %v815
    %5391 = vmatpush1.msra.mxu0 %v814
    %5392 = vmatprep.subr.mxu0 %v811
    %5393 = vmatpush1.msra.mxu0 %v810
    %5394 = vmatprep.subr.mxu0 %v807
    %5395 = vmatpush1.msra.mxu0 %v806
    %5396 = vmatprep.subr.mxu0 %v803
    %5397 = vmatpush1.msra.mxu0 %v802
    %5398 = vmatprep.subr.mxu0 %v799
    %5399 = vmatpush1.msra.mxu0 %v798
    %5400 = vmatprep.subr.mxu0 %v795
    %5401 = vmatpush1.msra.mxu0 %v794
    %5402 = vmatprep.subr.mxu0 %v791
    %5403 = vmatpush1.msra.mxu0 %v790
    %5404 = vmatprep.subr.mxu0 %v787
    %5405 = vmatpush1.msra.mxu0 %v786
    %5406 = vmatprep.subr.mxu0 0.0
    %5407 = vmatpush2.msra.mxu0 0.0
    %5408 = vmatprep.subr.mxu0 0.0
    %5409 = vmatpush2.msra.mxu0 0.0
    %5410 = vmatprep.subr.mxu0 0.0
    %5411 = vmatpush2.msra.mxu0 0.0
    %5412 = vmatprep.subr.mxu0 0.0
    %5413 = vmatpush2.msra.mxu0 0.0
    %5414 = vmatprep.subr.mxu0 0.0
    %5415 = vmatpush2.msra.mxu0 0.0
    %5416 = vmatprep.subr.mxu0 0.0
    %5417 = vmatpush2.msra.mxu0 0.0
    %5418 = vmatprep.subr.mxu0 0.0
    %5419 = vmatpush2.msra.mxu0 0.0
    %5420 = vmatprep.subr.mxu0 0.0
    %5421 = vmatpush2.msra.mxu0 0.0
    %5422 = vmatprep.subr.mxu0 0.0
    %5423 = vmatpush2.msra.mxu0 0.0
    %5424 = vmatprep.subr.mxu0 0.0
    %5425 = vmatpush2.msra.mxu0 0.0
    %5426 = vmatprep.subr.mxu0 0.0
    %5427 = vmatpush2.msra.mxu0 0.0
    %5428 = vmatprep.subr.mxu0 0.0
    %5429 = vmatpush2.msra.mxu0 0.0
    %5430 = vmatprep.subr.mxu0 0.0
    %5431 = vmatpush2.msra.mxu0 0.0
    %5432 = vmatprep.subr.mxu0 0.0
    %5433 = vmatpush2.msra.mxu0 0.0
    %5434 = vmatprep.subr.mxu0 0.0
    %5435 = vmatpush2.msra.mxu0 0.0
    %5436 = vmatprep.subr.mxu0 0.0
    %5437 = vmatpush2.msra.mxu0 0.0
    %5438 = vmatprep.mubr.f32.mxu0 0.0
    %5439 = vmatmul.mubr.f32.gmra.mxu0 %v5298
    %v5440 = vpop.f32.mrf.mxu0
    %v5441 = vadd.f32 0.0, %v5440
    %v5442 = vpop.f32.mrf.mxu0
    %v5443 = vadd.f32 0.0, %v5442
    %5444 = vdwg.mxu0
    %v5445 = vadd.f32 %v5299, %v5370
    %v5446 = vadd.f32 %v5300, %v5372
    %v5447 = vadd.f32 %v5301, %v5441
    %v5448 = vadd.f32 %v5302, %v5443
    %v5449 = vtanh.pop %v5445
    %v5450 = vmul.f32 %v5449, 0.5
    %v5451 = vadd.f32 %v5450, 0.5
    %v5452 = vtanh.pop %v5446
    %v5453 = vmul.f32 %v5452, 0.5
    %v5454 = vadd.f32 %v5453, 0.5
    %v5455 = vtanh.pop %v5447
    %v5456 = vtanh.pop %v5448
    %v5457 = vmul.f32 %v5456, 0.5
    %v5458 = vadd.f32 %v5457, 0.5
    %v5459 = vmul.f32 %v5454, %v5296
    %v5460 = vmul.f32 %v5451, %v5455
    %v5461 = vadd.f32 %v5459, %v5460
    %v5462 = vtanh.pop %v5461
    %v5463 = vmul.f32 %v5458, %v5462
    %v5464 = vld [vmem:[%s4] sm:$0xff]
    %v5465 = vld [vmem:[%s4 + $0x8] sm:$0xff]
    %v5466 = vld [vmem:[%s4 + $0x10] sm:$0xff]
    %v5467 = vld [vmem:[%s4 + $0x18] sm:$0xff]
    %v5468 = vld [vmem:[%s4 + $0x20] sm:$0xff]
    %v5469 = vld [vmem:[%s4 + $0x28] sm:$0xff]
    %v5470 = vld [vmem:[%s4 + $0x30] sm:$0xff]
    %v5471 = vld [vmem:[%s4 + $0x38] sm:$0xff]
    %v5472 = vld [vmem:[%s4 + $0x40] sm:$0xff]
    %v5473 = vld [vmem:[%s4 + $0x48] sm:$0xff]
    %v5474 = vld [vmem:[%s4 + $0x50] sm:$0xff]
    %v5475 = vld [vmem:[%s4 + $0x58] sm:$0xff]
    %v5476 = vld [vmem:[%s4 + $0x60] sm:$0xff]
    %v5477 = vld [vmem:[%s4 + $0x68] sm:$0xff]
    %v5478 = vld [vmem:[%s4 + $0x70] sm:$0xff]
    %v5479 = vld [vmem:[%s4 + $0x78] sm:$0xff]
    %v5480 = vld [vmem:[%s5] sm:$0x1]
    %v5482 = vlaneseq
    %v5483 = vshrl.u32 %v5482, 7
    %v5484 = vsub.s32 0, %v5483
    %v5485 = vrot.slane %v5480, %v5484
    %5487 = vmatprep.subr.mxu0 0.0
    %5488 = vmatpush1.msra.mxu0 %v5479
    %5489 = vmatprep.subr.mxu0 0.0
    %5490 = vmatpush1.msra.mxu0 %v5478
    %5491 = vmatprep.subr.mxu0 0.0
    %5492 = vmatpush1.msra.mxu0 %v5477
    %5493 = vmatprep.subr.mxu0 0.0
    %5494 = vmatpush1.msra.mxu0 %v5476
    %5495 = vmatprep.subr.mxu0 0.0
    %5496 = vmatpush1.msra.mxu0 %v5475
    %5497 = vmatprep.subr.mxu0 0.0
    %5498 = vmatpush1.msra.mxu0 %v5474
    %5499 = vmatprep.subr.mxu0 0.0
    %5500 = vmatpush1.msra.mxu0 %v5473
    %5501 = vmatprep.subr.mxu0 0.0
    %5502 = vmatpush1.msra.mxu0 %v5472
    %5503 = vmatprep.subr.mxu0 0.0
    %5504 = vmatpush1.msra.mxu0 %v5471
    %5505 = vmatprep.subr.mxu0 0.0
    %5506 = vmatpush1.msra.mxu0 %v5470
    %5507 = vmatprep.subr.mxu0 0.0
    %5508 = vmatpush1.msra.mxu0 %v5469
    %5509 = vmatprep.subr.mxu0 0.0
    %5510 = vmatpush1.msra.mxu0 %v5468
    %5511 = vmatprep.subr.mxu0 0.0
    %5512 = vmatpush1.msra.mxu0 %v5467
    %5513 = vmatprep.subr.mxu0 0.0
    %5514 = vmatpush1.msra.mxu0 %v5466
    %5515 = vmatprep.subr.mxu0 0.0
    %5516 = vmatpush1.msra.mxu0 %v5465
    %5517 = vmatprep.subr.mxu0 0.0
    %5518 = vmatpush1.msra.mxu0 %v5464
    %5519 = vmatprep.subr.mxu0 0.0
    %5520 = vmatpush2.msra.mxu0 0.0
    %5521 = vmatprep.subr.mxu0 0.0
    %5522 = vmatpush2.msra.mxu0 0.0
    %5523 = vmatprep.subr.mxu0 0.0
    %5524 = vmatpush2.msra.mxu0 0.0
    %5525 = vmatprep.subr.mxu0 0.0
    %5526 = vmatpush2.msra.mxu0 0.0
    %5527 = vmatprep.subr.mxu0 0.0
    %5528 = vmatpush2.msra.mxu0 0.0
    %5529 = vmatprep.subr.mxu0 0.0
    %5530 = vmatpush2.msra.mxu0 0.0
    %5531 = vmatprep.subr.mxu0 0.0
    %5532 = vmatpush2.msra.mxu0 0.0
    %5533 = vmatprep.subr.mxu0 0.0
    %5534 = vmatpush2.msra.mxu0 0.0
    %5535 = vmatprep.subr.mxu0 0.0
    %5536 = vmatpush2.msra.mxu0 0.0
    %5537 = vmatprep.subr.mxu0 0.0
    %5538 = vmatpush2.msra.mxu0 0.0
    %5539 = vmatprep.subr.mxu0 0.0
    %5540 = vmatpush2.msra.mxu0 0.0
    %5541 = vmatprep.subr.mxu0 0.0
    %5542 = vmatpush2.msra.mxu0 0.0
    %5543 = vmatprep.subr.mxu0 0.0
    %5544 = vmatpush2.msra.mxu0 0.0
    %5545 = vmatprep.subr.mxu0 0.0
    %5546 = vmatpush2.msra.mxu0 0.0
    %5547 = vmatprep.subr.mxu0 0.0
    %5548 = vmatpush2.msra.mxu0 0.0
    %5549 = vmatprep.subr.mxu0 0.0
    %5550 = vmatpush2.msra.mxu0 0.0
    %5551 = vmatprep.mubr.f32.mxu0 0.0
    %5552 = vmatmul.mubr.f32.gmra.mxu0 %v5463
    %v5553 = vpop.f32.mrf.mxu0
    %v5554 = vadd.f32 %v5485, %v5553
    %v5555 = vpop.f32.mrf.mxu0
    %5556 = vdwg.mxu0
    %5557 = vst [vmem:[#allocation6] sm:$0xff] %v5554
    // Predicated region
    $region30: #{tpu_custom_call.1} parent=1 // pred_check
      _
    $region31: #{tpu_custom_call.1} parent=1 // pred_check_branch
      %5559 = sbr.rel (0) target = $region33
    $region32: #{tpu_custom_call.1} parent=1 // pred_region
      %s5561 = ssub.s32 128, 128
      %5562 = vsyncadd [#allocation5], %s5561
      %s5564 = sshll.u32 [#allocation6], 4
      %s5565 = int_to_ptr.vmem [resolvable:$true] %s5564
      %5567 = dma.vmem_to_hbm [thread:$0]  %s5565, 128, %s6, [#allocation5]
    $region33: #{tpu_custom_call.1} parent=1 // pred_fallthru
      _
    // Predicated region
    $region34: #{tpu_custom_call.1} parent=1 // pred_check
      _
    $region35: #{tpu_custom_call.1} parent=1 // pred_check_branch
      %5569 = sbr.rel (0) target = $region37
    $region36: #{tpu_custom_call.1} parent=1 // pred_region
      %5570 = dma.done [#allocation5], 128
    $region37: #{tpu_custom_call.1} parent=1 // pred_fallthru
      _
    %5571 = vsyncpa [#allocation4], 1
    %5572 = vsyncpa [#allocation5], 1

</llo_original>
